<compile_context>
chip_gen: v7x
topology: tpu7x:2x2x1
jax: 0.10.0
libtpu: 0.0.40
codegen_flags: <defaults>
</compile_context>

<pallas_src>
import functools
import numpy as np

import jax
import jax.numpy as jnp
from jax.experimental import pallas as pl
from jax.experimental.pallas import tpu as pltpu


# ---------------------------------------------------------------------------
# Model hyper-parameters (small shapes consistent with the module __init__).
# ---------------------------------------------------------------------------
PATCH_SIZE = 4
IMAGE_SIZE = 16
EMBED_DIM = 32          # embedding_planes
BLOCK_NUMS = 2
HEAD_NUMS = 4
FEEDFORWARD_RATIO = 4
N_TOKENS = (IMAGE_SIZE // PATCH_SIZE) ** 2       # 16
HIDDEN_DIM = EMBED_DIM * FEEDFORWARD_RATIO       # 128
OUT_DIM = PATCH_SIZE * PATCH_SIZE * 3            # 48
OUT_PAD = 128                                    # lane-dense padded output width

WEIGHT_KEYS = [
    "ln1_w", "ln1_b",
    "q_w", "q_b", "k_w", "k_b", "v_w", "v_b", "proj_w", "proj_b",
    "ln2_w", "ln2_b", "fc1_w", "fc1_b", "fc2_w", "fc2_b",
    "norm_w", "norm_b", "fc_w", "fc_b",
]


# ---------------------------------------------------------------------------
# 2D sin-cos position encoding (same math as the PyTorch module, in numpy).
# ---------------------------------------------------------------------------
def _sincos_1d(dim, grid):
    omega = np.arange(dim // 2, dtype=np.float32)
    omega /= dim / 2.0
    omega = 1.0 / 10000 ** omega
    out = np.einsum("m,d->md", grid.reshape(-1), omega)
    return np.concatenate([np.sin(out), np.cos(out)], axis=1)


def get_2d_sincos_position_encoding(embed_dim, patch_nums):
    grid_h = np.arange(patch_nums, dtype=np.float32)
    grid_w = np.arange(patch_nums, dtype=np.float32)
    grid = np.stack(np.meshgrid(grid_w, grid_h), axis=0)
    grid = grid.reshape([2, 1, patch_nums, patch_nums])
    emb_h = _sincos_1d(embed_dim // 2, grid[0])
    emb_w = _sincos_1d(embed_dim // 2, grid[1])
    return np.concatenate([emb_h, emb_w], axis=1)   # (patch_nums**2, embed_dim)


# ---------------------------------------------------------------------------
# Shared math helpers (used by kernel and pure-JAX reference).
# ---------------------------------------------------------------------------
def _layernorm(x, w, b, eps=1e-5):
    mu = jnp.mean(x, axis=-1, keepdims=True)
    xc = x - mu
    var = jnp.mean(xc * xc, axis=-1, keepdims=True)
    return xc * jax.lax.rsqrt(var + eps) * w + b


def _gelu_tanh(x):
    # tanh-approximate GELU: EUP tanh instead of a long VPU erf polynomial.
    c = 0.7978845608028654  # sqrt(2/pi)
    return 0.5 * x * (1.0 + jnp.tanh(c * (x + 0.044715 * x * x * x)))


# ---------------------------------------------------------------------------
# Pallas kernel: one batch-tile of TB samples, full decoder stack.
# ---------------------------------------------------------------------------
def _decoder_kernel(ids_ref, x_ref, mask_ref, pos_ref,
                    ln1w, ln1b, qw, qb, kw, kb, vw, vb, projw, projb,
                    ln2w, ln2b, fc1w, fc1b, fc2w, fc2b,
                    nw, nb, fcw, fcb,
                    out_ref, *, block_nums, head_nums):
    TB, n_vis, D = x_ref.shape
    N = ids_ref.shape[1]
    dh = D // head_nums
    scale = float(dh) ** -0.5
    M = TB * N

    ids = ids_ref[...]                                   # (TB, N) int32
    x_vis = x_ref[...]                                   # (TB, n_vis, D)
    mask_row = mask_ref[...]                             # (1, D)
    pos = pos_ref[...]                                   # (N, D)

    # ---- fused mask-token concat + restore_ids gather (one-hot matmul) ----
    vis_iota = jax.lax.broadcasted_iota(jnp.int32, (TB, N, n_vis), 2)
    onehot = (ids[:, :, None] == vis_iota).astype(jnp.float32)      # (TB, N, n_vis)
    gathered = jax.lax.dot_general(
        onehot, x_vis, (((2,), (1,)), ((0,), (0,))),
        preferred_element_type=jnp.float32)                          # (TB, N, D)
    is_mask = (ids >= n_vis).astype(jnp.float32)[:, :, None]         # (TB, N, 1)
    gathered = gathered + is_mask * mask_row[None, :, :]

    # x = gathered + position_encoding, flattened to (TB*N, D) for the stack.
    h = (gathered + pos[None, :, :]).reshape(M, D)

    for l in range(block_nums):
        # ---- multi-head self-attention (pre-norm) -----------------------
        hn = _layernorm(h, ln1w[l], ln1b[l])                         # (M, D)
        attn = jnp.zeros((M, D), jnp.float32)
        for hd in range(head_nums):
            q = (jnp.dot(hn, qw[l, hd], preferred_element_type=jnp.float32)
                 + qb[l, hd]).reshape(TB, N, dh)
            k = (jnp.dot(hn, kw[l, hd], preferred_element_type=jnp.float32)
                 + kb[l, hd]).reshape(TB, N, dh)
            v = (jnp.dot(hn, vw[l, hd], preferred_element_type=jnp.float32)
                 + vb[l, hd]).reshape(TB, N, dh)
            # scores batched over TB: (TB, N, N)
            s = jax.lax.dot_general(
                q, k, (((2,), (2,)), ((0,), (0,))),
                preferred_element_type=jnp.float32) * scale
            s_max = jnp.max(s, axis=-1, keepdims=True)
            e = jnp.exp(s - s_max)
            denom = jnp.sum(e, axis=-1, keepdims=True)
            p = e * pl.reciprocal(denom, approx=True)
            o = jax.lax.dot_general(
                p, v, (((2,), (1,)), ((0,), (0,))),
                preferred_element_type=jnp.float32)                  # (TB, N, dh)
            # fold per-head output projection directly into the accumulator
            attn = attn + jnp.dot(o.reshape(M, dh), projw[l, hd],
                                  preferred_element_type=jnp.float32)
        h = h + attn + projb[l]        # dropout / drop_path = identity

        # ---- feed-forward (pre-norm) ------------------------------------
        hn = _layernorm(h, ln2w[l], ln2b[l])
        m1 = jnp.dot(hn, fc1w[l], preferred_element_type=jnp.float32) + fc1b[l]
        m1 = _gelu_tanh(m1)
        m2 = jnp.dot(m1, fc2w[l], preferred_element_type=jnp.float32) + fc2b[l]
        h = h + m2

    # ---- final LayerNorm + lane-padded fc (lane-dense 128-wide store) ----
    h = _layernorm(h, nw[...], nb[...])
    out = jnp.dot(h, fcw[...], preferred_element_type=jnp.float32) + fcb[...]
    out_ref[...] = out.reshape(TB, N, out_ref.shape[2])


# ---------------------------------------------------------------------------
# Wrapper
# ---------------------------------------------------------------------------
def decoder_forward(x, restore_ids, params, *, batch_tile=128,
                    block_nums=BLOCK_NUMS, head_nums=HEAD_NUMS,
                    out_dim=OUT_DIM):
    B, n_vis, D = x.shape
    N = restore_ids.shape[1]
    out_pad = params["fc_w"].shape[-1]          # 128 (lane-padded)

    TB = min(batch_tile, B)
    n_tiles = pl.cdiv(B, TB)
    B_pad = n_tiles * TB
    if B_pad != B:
        x = jnp.pad(x, ((0, B_pad - B), (0, 0), (0, 0)))
        restore_ids = jnp.pad(restore_ids, ((0, B_pad - B), (0, 0)))
    restore_ids = restore_ids.astype(jnp.int32)

    weight_args = [params[k] for k in WEIGHT_KEYS]

    def full_spec(shape):
        nd = len(shape)
        return pl.BlockSpec(shape, lambda b, _nd=nd: (0,) * _nd)

    in_specs = (
        [pl.BlockSpec((TB, N), lambda b: (b, 0)),
         pl.BlockSpec((TB, n_vis, D), lambda b: (b, 0, 0)),
         full_spec(params["mask_token"].shape),
         full_spec(params["pos"].shape)]
        + [full_spec(w.shape) for w in weight_args])
    out_specs = pl.BlockSpec((TB, N, out_pad), lambda b: (b, 0, 0))

    kernel = functools.partial(_decoder_kernel,
                               block_nums=block_nums, head_nums=head_nums)

    out = pl.pallas_call(
        kernel,
        out_shape=jax.ShapeDtypeStruct((B_pad, N, out_pad), jnp.float32),
        grid=(n_tiles,),
        in_specs=in_specs,
        out_specs=out_specs,
        compiler_params=pltpu.CompilerParams(
            dimension_semantics=("parallel",),
            vmem_limit_bytes=32 * 1024 * 1024),
    )(restore_ids, x, params["mask_token"], params["pos"], *weight_args)

    # Strip batch padding + the zero-weight output-lane padding.
    return out[:B, :, :out_dim]


# ---------------------------------------------------------------------------
# Pure-JAX reference (same approximations) for a loose correctness check.
# ---------------------------------------------------------------------------
def decoder_reference(x, restore_ids, params, *, block_nums=BLOCK_NUMS,
                      head_nums=HEAD_NUMS, out_dim=OUT_DIM):
    B, n_vis, D = x.shape
    N = restore_ids.shape[1]
    dh = D // head_nums
    scale = float(dh) ** -0.5

    mask_tok = jnp.broadcast_to(params["mask_token"][None], (B, N - n_vis, D))
    full = jnp.concatenate([x, mask_tok], axis=1)                    # (B, N, D)
    idx = jnp.broadcast_to(restore_ids[..., None], (B, N, D))
    h = jnp.take_along_axis(full, idx, axis=1) + params["pos"][None]

    for l in range(block_nums):
        hn = _layernorm(h, params["ln1_w"][l], params["ln1_b"][l])
        q = jnp.einsum("bnd,hde->bhne", hn, params["q_w"][l]) + params["q_b"][l][None]
        k = jnp.einsum("bnd,hde->bhne", hn, params["k_w"][l]) + params["k_b"][l][None]
        v = jnp.einsum("bnd,hde->bhne", hn, params["v_w"][l]) + params["v_b"][l][None]
        s = jnp.einsum("bhne,bhme->bhnm", q, k) * scale
        p = jax.nn.softmax(s, axis=-1)
        o = jnp.einsum("bhnm,bhme->bhne", p, v)
        attn = jnp.einsum("bhne,hed->bnd", o, params["proj_w"][l]) + params["proj_b"][l]
        h = h + attn
        hn = _layernorm(h, params["ln2_w"][l], params["ln2_b"][l])
        m1 = _gelu_tanh(hn @ params["fc1_w"][l] + params["fc1_b"][l])
        h = h + (m1 @ params["fc2_w"][l] + params["fc2_b"][l])

    h = _layernorm(h, params["norm_w"], params["norm_b"])
    out = h @ params["fc_w"] + params["fc_b"]
    return out[:, :, :out_dim]


# ---------------------------------------------------------------------------
# Deterministic parameter initialization (matches module __init__ semantics).
# Weights are pre-split per head so the kernel never lane-slices activations.
# ---------------------------------------------------------------------------
def init_params(key):
    D, L, H, HID, OUT = EMBED_DIM, BLOCK_NUMS, HEAD_NUMS, HIDDEN_DIM, OUT_DIM
    dh = D // H
    n = IMAGE_SIZE // PATCH_SIZE
    keys = iter(jax.random.split(key, 2 + 4 * L))

    def xavier(k, fan_out, fan_in):
        a = float(np.sqrt(6.0 / (fan_in + fan_out)))
        return jax.random.uniform(k, (fan_out, fan_in), jnp.float32, -a, a)

    params = {}
    params["mask_token"] = 0.02 * jax.random.normal(next(keys), (1, D), jnp.float32)
    params["pos"] = jnp.asarray(
        get_2d_sincos_position_encoding(D, n), jnp.float32)          # (N, D)

    # LayerNorm: weight=1, bias=0 ; Linear: xavier_uniform weight, bias=0.
    params["ln1_w"] = jnp.ones((L, 1, D), jnp.float32)
    params["ln1_b"] = jnp.zeros((L, 1, D), jnp.float32)
    params["ln2_w"] = jnp.ones((L, 1, D), jnp.float32)
    params["ln2_b"] = jnp.zeros((L, 1, D), jnp.float32)

    q_w, k_w, v_w, proj_w, fc1_w, fc2_w = [], [], [], [], [], []
    for _ in range(L):
        wt = xavier(next(keys), 3 * D, D).T           # (D, 3D), layout for x @ W^T
        q_w.append(jnp.stack([wt[:, 0 * D + h * dh: 0 * D + (h + 1) * dh]
                              for h in range(H)]))    # (H, D, dh)
        k_w.append(jnp.stack([wt[:, 1 * D + h * dh: 1 * D + (h + 1) * dh]
                              for h in range(H)]))
        v_w.append(jnp.stack([wt[:, 2 * D + h * dh: 2 * D + (h + 1) * dh]
                              for h in range(H)]))
        w_p = xavier(next(keys), D, D).T              # (D, D)
        proj_w.append(jnp.stack([w_p[h * dh:(h + 1) * dh, :]
                                 for h in range(H)])) # (H, dh, D)
        fc1_w.append(xavier(next(keys), HID, D).T)    # (D, HID)
        fc2_w.append(xavier(next(keys), D, HID).T)    # (HID, D)

    params["q_w"] = jnp.stack(q_w)                    # (L, H, D, dh)
    params["k_w"] = jnp.stack(k_w)
    params["v_w"] = jnp.stack(v_w)
    params["q_b"] = jnp.zeros((L, H, 1, dh), jnp.float32)
    params["k_b"] = jnp.zeros((L, H, 1, dh), jnp.float32)
    params["v_b"] = jnp.zeros((L, H, 1, dh), jnp.float32)
    params["proj_w"] = jnp.stack(proj_w)              # (L, H, dh, D)
    params["proj_b"] = jnp.zeros((L, 1, D), jnp.float32)
    params["fc1_w"] = jnp.stack(fc1_w)
    params["fc1_b"] = jnp.zeros((L, 1, HID), jnp.float32)
    params["fc2_w"] = jnp.stack(fc2_w)
    params["fc2_b"] = jnp.zeros((L, 1, D), jnp.float32)

    params["norm_w"] = jnp.ones((1, D), jnp.float32)
    params["norm_b"] = jnp.zeros((1, D), jnp.float32)

    fc_w = xavier(next(keys), OUT, D).T               # (D, OUT)
    # Lane-pad the output projection to 128 columns with exact zeros.
    params["fc_w"] = jnp.concatenate(
        [fc_w, jnp.zeros((D, OUT_PAD - OUT), jnp.float32)], axis=1)  # (D, 128)
    params["fc_b"] = jnp.zeros((1, OUT_PAD), jnp.float32)
    return params


# ---------------------------------------------------------------------------
if __name__ == "__main__":
    root = jax.random.PRNGKey(0)
    k_param, k_x, k_ids = jax.random.split(root, 3)

    B = 2
    N_VIS = 4  # visible (unmasked) tokens coming out of the encoder

    params = init_params(k_param)

    x = jax.random.normal(k_x, (B, N_VIS, EMBED_DIM), jnp.float32)
    restore_ids = jnp.stack(
        [jax.random.permutation(k, N_TOKENS)
         for k in jax.random.split(k_ids, B)]).astype(jnp.int32)     # (B, N)

    out = decoder_forward(x, restore_ids, params)
    out = jax.block_until_ready(out)

    assert out.shape == (B, N_TOKENS, OUT_DIM), out.shape
    assert out.dtype == jnp.float32
    assert bool(jnp.all(jnp.isfinite(out)))

    # Loose parity check against a pure-JAX reference (same GELU approx;
    # exact softmax divide vs approx reciprocal → tolerance is generous).
    ref = jax.block_until_ready(decoder_reference(x, restore_ids, params))
    max_err = float(jnp.max(jnp.abs(out - ref)))
    assert max_err < 2e-2, f"max abs err {max_err}"

    print("KERNEL_OK")
</pallas_src>

<mosaic_0001>
module attributes {stable_mosaic.version = 11 : i64} {
  func.func @_decoder_kernel(%arg0: i32, %arg1: memref<2x16xi32, #tpu.memory_space<vmem>>, %arg2: memref<2x4x32xf32, #tpu.memory_space<vmem>>, %arg3: memref<1x32xf32, #tpu.memory_space<vmem>>, %arg4: memref<16x32xf32, #tpu.memory_space<vmem>>, %arg5: memref<2x1x32xf32, #tpu.memory_space<vmem>>, %arg6: memref<2x1x32xf32, #tpu.memory_space<vmem>>, %arg7: memref<2x4x32x8xf32, #tpu.memory_space<vmem>>, %arg8: memref<2x4x1x8xf32, #tpu.memory_space<vmem>>, %arg9: memref<2x4x32x8xf32, #tpu.memory_space<vmem>>, %arg10: memref<2x4x1x8xf32, #tpu.memory_space<vmem>>, %arg11: memref<2x4x32x8xf32, #tpu.memory_space<vmem>>, %arg12: memref<2x4x1x8xf32, #tpu.memory_space<vmem>>, %arg13: memref<2x4x8x32xf32, #tpu.memory_space<vmem>>, %arg14: memref<2x1x32xf32, #tpu.memory_space<vmem>>, %arg15: memref<2x1x32xf32, #tpu.memory_space<vmem>>, %arg16: memref<2x1x32xf32, #tpu.memory_space<vmem>>, %arg17: memref<2x32x128xf32, #tpu.memory_space<vmem>>, %arg18: memref<2x1x128xf32, #tpu.memory_space<vmem>>, %arg19: memref<2x128x32xf32, #tpu.memory_space<vmem>>, %arg20: memref<2x1x32xf32, #tpu.memory_space<vmem>>, %arg21: memref<1x32xf32, #tpu.memory_space<vmem>>, %arg22: memref<1x32xf32, #tpu.memory_space<vmem>>, %arg23: memref<32x128xf32, #tpu.memory_space<vmem>>, %arg24: memref<1x128xf32, #tpu.memory_space<vmem>>, %arg25: memref<2x16x128xf32, #tpu.memory_space<vmem>>) attributes {dimension_semantics = [#tpu.dimension_semantics<parallel>], iteration_bounds = array<i64: 1>, scalar_prefetch = 0 : i64, scratch_operands = 0 : i64, tpu.core_type = #tpu.core_type<tc>, window_params = [{transform_indices = @transform_0, window_bounds = array<i64: 2, 16>}, {transform_indices = @transform_1, window_bounds = array<i64: 2, 4, 32>}, {pipeline_mode = #tpu.pipeline_mode<synchronous>, transform_indices = @transform_2, window_bounds = array<i64: 1, 32>}, {pipeline_mode = #tpu.pipeline_mode<synchronous>, transform_indices = @transform_3, window_bounds = array<i64: 16, 32>}, {pipeline_mode = #tpu.pipeline_mode<synchronous>, transform_indices = @transform_4, window_bounds = array<i64: 2, 1, 32>}, {pipeline_mode = #tpu.pipeline_mode<synchronous>, transform_indices = @transform_5, window_bounds = array<i64: 2, 1, 32>}, {pipeline_mode = #tpu.pipeline_mode<synchronous>, transform_indices = @transform_6, window_bounds = array<i64: 2, 4, 32, 8>}, {pipeline_mode = #tpu.pipeline_mode<synchronous>, transform_indices = @transform_7, window_bounds = array<i64: 2, 4, 1, 8>}, {pipeline_mode = #tpu.pipeline_mode<synchronous>, transform_indices = @transform_8, window_bounds = array<i64: 2, 4, 32, 8>}, {pipeline_mode = #tpu.pipeline_mode<synchronous>, transform_indices = @transform_9, window_bounds = array<i64: 2, 4, 1, 8>}, {pipeline_mode = #tpu.pipeline_mode<synchronous>, transform_indices = @transform_10, window_bounds = array<i64: 2, 4, 32, 8>}, {pipeline_mode = #tpu.pipeline_mode<synchronous>, transform_indices = @transform_11, window_bounds = array<i64: 2, 4, 1, 8>}, {pipeline_mode = #tpu.pipeline_mode<synchronous>, transform_indices = @transform_12, window_bounds = array<i64: 2, 4, 8, 32>}, {pipeline_mode = #tpu.pipeline_mode<synchronous>, transform_indices = @transform_13, window_bounds = array<i64: 2, 1, 32>}, {pipeline_mode = #tpu.pipeline_mode<synchronous>, transform_indices = @transform_14, window_bounds = array<i64: 2, 1, 32>}, {pipeline_mode = #tpu.pipeline_mode<synchronous>, transform_indices = @transform_15, window_bounds = array<i64: 2, 1, 32>}, {pipeline_mode = #tpu.pipeline_mode<synchronous>, transform_indices = @transform_16, window_bounds = array<i64: 2, 32, 128>}, {pipeline_mode = #tpu.pipeline_mode<synchronous>, transform_indices = @transform_17, window_bounds = array<i64: 2, 1, 128>}, {pipeline_mode = #tpu.pipeline_mode<synchronous>, transform_indices = @transform_18, window_bounds = array<i64: 2, 128, 32>}, {pipeline_mode = #tpu.pipeline_mode<synchronous>, transform_indices = @transform_19, window_bounds = array<i64: 2, 1, 32>}, {pipeline_mode = #tpu.pipeline_mode<synchronous>, transform_indices = @transform_20, window_bounds = array<i64: 1, 32>}, {pipeline_mode = #tpu.pipeline_mode<synchronous>, transform_indices = @transform_21, window_bounds = array<i64: 1, 32>}, {pipeline_mode = #tpu.pipeline_mode<synchronous>, transform_indices = @transform_22, window_bounds = array<i64: 32, 128>}, {pipeline_mode = #tpu.pipeline_mode<synchronous>, transform_indices = @transform_23, window_bounds = array<i64: 1, 128>}, {transform_indices = @transform_24, window_bounds = array<i64: 2, 16, 128>}]} {
    %c0 = arith.constant 0 : index
    %c0_0 = arith.constant 0 : index
    %0 = vector.load %arg1[%c0, %c0_0] : memref<2x16xi32, #tpu.memory_space<vmem>>, vector<2x16xi32>
    %c0_1 = arith.constant 0 : index
    %c0_2 = arith.constant 0 : index
    %c0_3 = arith.constant 0 : index
    %1 = vector.load %arg2[%c0_1, %c0_2, %c0_3] : memref<2x4x32xf32, #tpu.memory_space<vmem>>, vector<2x4x32xf32>
    %c0_4 = arith.constant 0 : index
    %c0_5 = arith.constant 0 : index
    %2 = vector.load %arg3[%c0_4, %c0_5] : memref<1x32xf32, #tpu.memory_space<vmem>>, vector<1x32xf32>
    %c0_6 = arith.constant 0 : index
    %c0_7 = arith.constant 0 : index
    %3 = vector.load %arg4[%c0_6, %c0_7] : memref<16x32xf32, #tpu.memory_space<vmem>>, vector<16x32xf32>
    %4 = tpu.iota {dimensions = array<i32: 2>} : vector<2x16x4xi32>
    %5 = vector.shape_cast %0 : vector<2x16xi32> to vector<2x16x1xi32>
    %6 = vector.broadcast %5 : vector<2x16x1xi32> to vector<2x16x4xi32>
    %7 = arith.cmpi eq, %6, %4 : vector<2x16x4xi32>
    %8 = arith.extui %7 : vector<2x16x4xi1> to vector<2x16x4xi32>
    %9 = arith.sitofp %8 : vector<2x16x4xi32> to vector<2x16x4xf32>
    %cst = arith.constant dense<0.000000e+00> : vector<2x16x32xf32>
    %10 = tpu.matmul %9, %1, %cst {dimension_numbers = #tpu.dot_dimension_numbers<[2], [1], [1], [2], [0, 0, 0, 1, 1, 2], [0], [0]>} : vector<2x16x4xf32>, vector<2x4x32xf32>, vector<2x16x32xf32> -> vector<2x16x32xf32>
    %c4_i32 = arith.constant 4 : i32
    %11 = vector.broadcast %c4_i32 : i32 to vector<2x16xi32>
    %12 = arith.cmpi sge, %0, %11 : vector<2x16xi32>
    %13 = arith.extui %12 : vector<2x16xi1> to vector<2x16xi32>
    %14 = arith.sitofp %13 : vector<2x16xi32> to vector<2x16xf32>
    %15 = vector.shape_cast %14 : vector<2x16xf32> to vector<2x16x1xf32>
    %16 = vector.shape_cast %2 : vector<1x32xf32> to vector<1x1x32xf32>
    %17 = vector.broadcast %15 : vector<2x16x1xf32> to vector<2x16x32xf32>
    %18 = vector.broadcast %16 : vector<1x1x32xf32> to vector<2x16x32xf32>
    %19 = arith.mulf %17, %18 : vector<2x16x32xf32>
    %20 = arith.addf %10, %19 : vector<2x16x32xf32>
    %21 = vector.shape_cast %3 : vector<16x32xf32> to vector<1x16x32xf32>
    %22 = vector.broadcast %21 : vector<1x16x32xf32> to vector<2x16x32xf32>
    %23 = arith.addf %20, %22 : vector<2x16x32xf32>
    %24 = vector.shape_cast %23 : vector<2x16x32xf32> to vector<32x32xf32>
    %c0_8 = arith.constant 0 : index
    %c0_9 = arith.constant 0 : index
    %c0_10 = arith.constant 0 : index
    %25 = vector.load %arg5[%c0_8, %c0_9, %c0_10] : memref<2x1x32xf32, #tpu.memory_space<vmem>>, vector<1x1x32xf32>
    %26 = vector.shape_cast %25 : vector<1x1x32xf32> to vector<1x32xf32>
    %c0_11 = arith.constant 0 : index
    %c0_12 = arith.constant 0 : index
    %c0_13 = arith.constant 0 : index
    %27 = vector.load %arg6[%c0_11, %c0_12, %c0_13] : memref<2x1x32xf32, #tpu.memory_space<vmem>>, vector<1x1x32xf32>
    %28 = vector.shape_cast %27 : vector<1x1x32xf32> to vector<1x32xf32>
    %cst_14 = arith.constant dense<0.000000e+00> : vector<32xf32>
    %29 = vector.multi_reduction <add>, %24, %cst_14 [1] : vector<32x32xf32> to vector<32xf32>
    %30 = vector.shape_cast %29 : vector<32xf32> to vector<32x1xf32>
    %cst_15 = arith.constant 3.200000e+01 : f32
    %31 = vector.broadcast %cst_15 : f32 to vector<32x1xf32>
    %32 = arith.divf %30, %31 : vector<32x1xf32>
    %33 = vector.broadcast %32 : vector<32x1xf32> to vector<32x32xf32>
    %34 = arith.subf %24, %33 : vector<32x32xf32>
    %35 = arith.mulf %34, %34 : vector<32x32xf32>
    %cst_16 = arith.constant dense<0.000000e+00> : vector<32xf32>
    %36 = vector.multi_reduction <add>, %35, %cst_16 [1] : vector<32x32xf32> to vector<32xf32>
    %37 = vector.shape_cast %36 : vector<32xf32> to vector<32x1xf32>
    %cst_17 = arith.constant 3.200000e+01 : f32
    %38 = vector.broadcast %cst_17 : f32 to vector<32x1xf32>
    %39 = arith.divf %37, %38 : vector<32x1xf32>
    %cst_18 = arith.constant 9.99999974E-6 : f32
    %40 = vector.broadcast %cst_18 : f32 to vector<32x1xf32>
    %41 = arith.addf %39, %40 : vector<32x1xf32>
    %42 = math.rsqrt %41 : vector<32x1xf32>
    %43 = vector.broadcast %42 : vector<32x1xf32> to vector<32x32xf32>
    %44 = arith.mulf %34, %43 : vector<32x32xf32>
    %45 = vector.broadcast %26 : vector<1x32xf32> to vector<32x32xf32>
    %46 = arith.mulf %44, %45 : vector<32x32xf32>
    %47 = vector.broadcast %28 : vector<1x32xf32> to vector<32x32xf32>
    %48 = arith.addf %46, %47 : vector<32x32xf32>
    %cst_19 = arith.constant 0.000000e+00 : f32
    %49 = vector.broadcast %cst_19 : f32 to vector<32x32xf32>
    %c0_20 = arith.constant 0 : index
    %c0_21 = arith.constant 0 : index
    %c0_22 = arith.constant 0 : index
    %c0_23 = arith.constant 0 : index
    %50 = vector.load %arg7[%c0_20, %c0_21, %c0_22, %c0_23] : memref<2x4x32x8xf32, #tpu.memory_space<vmem>>, vector<1x1x32x8xf32>
    %51 = vector.shape_cast %50 : vector<1x1x32x8xf32> to vector<32x8xf32>
    %cst_24 = arith.constant dense<0.000000e+00> : vector<32x8xf32>
    %52 = tpu.matmul %48, %51, %cst_24 {dimension_numbers = #tpu.dot_dimension_numbers<[1], [0], [0], [1], [0, 0, 1, 1], [], []>} : vector<32x32xf32>, vector<32x8xf32>, vector<32x8xf32> -> vector<32x8xf32>
    %c0_25 = arith.constant 0 : index
    %c0_26 = arith.constant 0 : index
    %c0_27 = arith.constant 0 : index
    %c0_28 = arith.constant 0 : index
    %53 = vector.load %arg8[%c0_25, %c0_26, %c0_27, %c0_28] : memref<2x4x1x8xf32, #tpu.memory_space<vmem>>, vector<1x1x1x8xf32>
    %54 = vector.shape_cast %53 : vector<1x1x1x8xf32> to vector<1x8xf32>
    %55 = vector.broadcast %54 : vector<1x8xf32> to vector<32x8xf32>
    %56 = arith.addf %52, %55 : vector<32x8xf32>
    %57 = vector.shape_cast %56 : vector<32x8xf32> to vector<2x16x8xf32>
    %c0_29 = arith.constant 0 : index
    %c0_30 = arith.constant 0 : index
    %c0_31 = arith.constant 0 : index
    %c0_32 = arith.constant 0 : index
    %58 = vector.load %arg9[%c0_29, %c0_30, %c0_31, %c0_32] : memref<2x4x32x8xf32, #tpu.memory_space<vmem>>, vector<1x1x32x8xf32>
    %59 = vector.shape_cast %58 : vector<1x1x32x8xf32> to vector<32x8xf32>
    %cst_33 = arith.constant dense<0.000000e+00> : vector<32x8xf32>
    %60 = tpu.matmul %48, %59, %cst_33 {dimension_numbers = #tpu.dot_dimension_numbers<[1], [0], [0], [1], [0, 0, 1, 1], [], []>} : vector<32x32xf32>, vector<32x8xf32>, vector<32x8xf32> -> vector<32x8xf32>
    %c0_34 = arith.constant 0 : index
    %c0_35 = arith.constant 0 : index
    %c0_36 = arith.constant 0 : index
    %c0_37 = arith.constant 0 : index
    %61 = vector.load %arg10[%c0_34, %c0_35, %c0_36, %c0_37] : memref<2x4x1x8xf32, #tpu.memory_space<vmem>>, vector<1x1x1x8xf32>
    %62 = vector.shape_cast %61 : vector<1x1x1x8xf32> to vector<1x8xf32>
    %63 = vector.broadcast %62 : vector<1x8xf32> to vector<32x8xf32>
    %64 = arith.addf %60, %63 : vector<32x8xf32>
    %65 = vector.shape_cast %64 : vector<32x8xf32> to vector<2x16x8xf32>
    %c0_38 = arith.constant 0 : index
    %c0_39 = arith.constant 0 : index
    %c0_40 = arith.constant 0 : index
    %c0_41 = arith.constant 0 : index
    %66 = vector.load %arg11[%c0_38, %c0_39, %c0_40, %c0_41] : memref<2x4x32x8xf32, #tpu.memory_space<vmem>>, vector<1x1x32x8xf32>
    %67 = vector.shape_cast %66 : vector<1x1x32x8xf32> to vector<32x8xf32>
    %cst_42 = arith.constant dense<0.000000e+00> : vector<32x8xf32>
    %68 = tpu.matmul %48, %67, %cst_42 {dimension_numbers = #tpu.dot_dimension_numbers<[1], [0], [0], [1], [0, 0, 1, 1], [], []>} : vector<32x32xf32>, vector<32x8xf32>, vector<32x8xf32> -> vector<32x8xf32>
    %c0_43 = arith.constant 0 : index
    %c0_44 = arith.constant 0 : index
    %c0_45 = arith.constant 0 : index
    %c0_46 = arith.constant 0 : index
    %69 = vector.load %arg12[%c0_43, %c0_44, %c0_45, %c0_46] : memref<2x4x1x8xf32, #tpu.memory_space<vmem>>, vector<1x1x1x8xf32>
    %70 = vector.shape_cast %69 : vector<1x1x1x8xf32> to vector<1x8xf32>
    %71 = vector.broadcast %70 : vector<1x8xf32> to vector<32x8xf32>
    %72 = arith.addf %68, %71 : vector<32x8xf32>
    %73 = vector.shape_cast %72 : vector<32x8xf32> to vector<2x16x8xf32>
    %cst_47 = arith.constant dense<0.000000e+00> : vector<2x16x16xf32>
    %74 = tpu.matmul %57, %65, %cst_47 {dimension_numbers = #tpu.dot_dimension_numbers<[2], [2], [1], [1], [0, 0, 0, 1, 1, 1], [0], [0]>} : vector<2x16x8xf32>, vector<2x16x8xf32>, vector<2x16x16xf32> -> vector<2x16x16xf32>
    %cst_48 = arith.constant 0.353553385 : f32
    %75 = vector.broadcast %cst_48 : f32 to vector<2x16x16xf32>
    %76 = arith.mulf %74, %75 : vector<2x16x16xf32>
    %cst_49 = arith.constant dense<0xFF800000> : vector<2x16xf32>
    %77 = vector.multi_reduction <maximumf>, %76, %cst_49 [2] : vector<2x16x16xf32> to vector<2x16xf32>
    %78 = vector.shape_cast %77 : vector<2x16xf32> to vector<2x16x1xf32>
    %79 = vector.broadcast %78 : vector<2x16x1xf32> to vector<2x16x16xf32>
    %80 = arith.subf %76, %79 : vector<2x16x16xf32>
    %81 = math.exp %80 : vector<2x16x16xf32>
    %cst_50 = arith.constant dense<0.000000e+00> : vector<2x16xf32>
    %82 = vector.multi_reduction <add>, %81, %cst_50 [2] : vector<2x16x16xf32> to vector<2x16xf32>
    %83 = vector.shape_cast %82 : vector<2x16xf32> to vector<2x16x1xf32>
    %84 = tpu.reciprocal %83 {approx = true} : vector<2x16x1xf32> -> vector<2x16x1xf32>
    %85 = vector.broadcast %84 : vector<2x16x1xf32> to vector<2x16x16xf32>
    %86 = arith.mulf %81, %85 : vector<2x16x16xf32>
    %cst_51 = arith.constant dense<0.000000e+00> : vector<2x16x8xf32>
    %87 = tpu.matmul %86, %73, %cst_51 {dimension_numbers = #tpu.dot_dimension_numbers<[2], [1], [1], [2], [0, 0, 0, 1, 1, 2], [0], [0]>} : vector<2x16x16xf32>, vector<2x16x8xf32>, vector<2x16x8xf32> -> vector<2x16x8xf32>
    %88 = vector.shape_cast %87 : vector<2x16x8xf32> to vector<32x8xf32>
    %c0_52 = arith.constant 0 : index
    %c0_53 = arith.constant 0 : index
    %c0_54 = arith.constant 0 : index
    %c0_55 = arith.constant 0 : index
    %89 = vector.load %arg13[%c0_52, %c0_53, %c0_54, %c0_55] : memref<2x4x8x32xf32, #tpu.memory_space<vmem>>, vector<1x1x8x32xf32>
    %90 = vector.shape_cast %89 : vector<1x1x8x32xf32> to vector<8x32xf32>
    %cst_56 = arith.constant dense<0.000000e+00> : vector<32x32xf32>
    %91 = tpu.matmul %88, %90, %cst_56 {dimension_numbers = #tpu.dot_dimension_numbers<[1], [0], [0], [1], [0, 0, 1, 1], [], []>} : vector<32x8xf32>, vector<8x32xf32>, vector<32x32xf32> -> vector<32x32xf32>
    %92 = arith.addf %49, %91 : vector<32x32xf32>
    %c0_57 = arith.constant 0 : index
    %c1 = arith.constant 1 : index
    %c0_58 = arith.constant 0 : index
    %c0_59 = arith.constant 0 : index
    %93 = vector.load %arg7[%c0_57, %c1, %c0_58, %c0_59] : memref<2x4x32x8xf32, #tpu.memory_space<vmem>>, vector<1x1x32x8xf32>
    %94 = vector.shape_cast %93 : vector<1x1x32x8xf32> to vector<32x8xf32>
    %cst_60 = arith.constant dense<0.000000e+00> : vector<32x8xf32>
    %95 = tpu.matmul %48, %94, %cst_60 {dimension_numbers = #tpu.dot_dimension_numbers<[1], [0], [0], [1], [0, 0, 1, 1], [], []>} : vector<32x32xf32>, vector<32x8xf32>, vector<32x8xf32> -> vector<32x8xf32>
    %c0_61 = arith.constant 0 : index
    %c1_62 = arith.constant 1 : index
    %c0_63 = arith.constant 0 : index
    %c0_64 = arith.constant 0 : index
    %96 = vector.load %arg8[%c0_61, %c1_62, %c0_63, %c0_64] : memref<2x4x1x8xf32, #tpu.memory_space<vmem>>, vector<1x1x1x8xf32>
    %97 = vector.shape_cast %96 : vector<1x1x1x8xf32> to vector<1x8xf32>
    %98 = vector.broadcast %97 : vector<1x8xf32> to vector<32x8xf32>
    %99 = arith.addf %95, %98 : vector<32x8xf32>
    %100 = vector.shape_cast %99 : vector<32x8xf32> to vector<2x16x8xf32>
    %c0_65 = arith.constant 0 : index
    %c1_66 = arith.constant 1 : index
    %c0_67 = arith.constant 0 : index
    %c0_68 = arith.constant 0 : index
    %101 = vector.load %arg9[%c0_65, %c1_66, %c0_67, %c0_68] : memref<2x4x32x8xf32, #tpu.memory_space<vmem>>, vector<1x1x32x8xf32>
    %102 = vector.shape_cast %101 : vector<1x1x32x8xf32> to vector<32x8xf32>
    %cst_69 = arith.constant dense<0.000000e+00> : vector<32x8xf32>
    %103 = tpu.matmul %48, %102, %cst_69 {dimension_numbers = #tpu.dot_dimension_numbers<[1], [0], [0], [1], [0, 0, 1, 1], [], []>} : vector<32x32xf32>, vector<32x8xf32>, vector<32x8xf32> -> vector<32x8xf32>
    %c0_70 = arith.constant 0 : index
    %c1_71 = arith.constant 1 : index
    %c0_72 = arith.constant 0 : index
    %c0_73 = arith.constant 0 : index
    %104 = vector.load %arg10[%c0_70, %c1_71, %c0_72, %c0_73] : memref<2x4x1x8xf32, #tpu.memory_space<vmem>>, vector<1x1x1x8xf32>
    %105 = vector.shape_cast %104 : vector<1x1x1x8xf32> to vector<1x8xf32>
    %106 = vector.broadcast %105 : vector<1x8xf32> to vector<32x8xf32>
    %107 = arith.addf %103, %106 : vector<32x8xf32>
    %108 = vector.shape_cast %107 : vector<32x8xf32> to vector<2x16x8xf32>
    %c0_74 = arith.constant 0 : index
    %c1_75 = arith.constant 1 : index
    %c0_76 = arith.constant 0 : index
    %c0_77 = arith.constant 0 : index
    %109 = vector.load %arg11[%c0_74, %c1_75, %c0_76, %c0_77] : memref<2x4x32x8xf32, #tpu.memory_space<vmem>>, vector<1x1x32x8xf32>
    %110 = vector.shape_cast %109 : vector<1x1x32x8xf32> to vector<32x8xf32>
    %cst_78 = arith.constant dense<0.000000e+00> : vector<32x8xf32>
    %111 = tpu.matmul %48, %110, %cst_78 {dimension_numbers = #tpu.dot_dimension_numbers<[1], [0], [0], [1], [0, 0, 1, 1], [], []>} : vector<32x32xf32>, vector<32x8xf32>, vector<32x8xf32> -> vector<32x8xf32>
    %c0_79 = arith.constant 0 : index
    %c1_80 = arith.constant 1 : index
    %c0_81 = arith.constant 0 : index
    %c0_82 = arith.constant 0 : index
    %112 = vector.load %arg12[%c0_79, %c1_80, %c0_81, %c0_82] : memref<2x4x1x8xf32, #tpu.memory_space<vmem>>, vector<1x1x1x8xf32>
    %113 = vector.shape_cast %112 : vector<1x1x1x8xf32> to vector<1x8xf32>
    %114 = vector.broadcast %113 : vector<1x8xf32> to vector<32x8xf32>
    %115 = arith.addf %111, %114 : vector<32x8xf32>
    %116 = vector.shape_cast %115 : vector<32x8xf32> to vector<2x16x8xf32>
    %cst_83 = arith.constant dense<0.000000e+00> : vector<2x16x16xf32>
    %117 = tpu.matmul %100, %108, %cst_83 {dimension_numbers = #tpu.dot_dimension_numbers<[2], [2], [1], [1], [0, 0, 0, 1, 1, 1], [0], [0]>} : vector<2x16x8xf32>, vector<2x16x8xf32>, vector<2x16x16xf32> -> vector<2x16x16xf32>
    %cst_84 = arith.constant 0.353553385 : f32
    %118 = vector.broadcast %cst_84 : f32 to vector<2x16x16xf32>
    %119 = arith.mulf %117, %118 : vector<2x16x16xf32>
    %cst_85 = arith.constant dense<0xFF800000> : vector<2x16xf32>
    %120 = vector.multi_reduction <maximumf>, %119, %cst_85 [2] : vector<2x16x16xf32> to vector<2x16xf32>
    %121 = vector.shape_cast %120 : vector<2x16xf32> to vector<2x16x1xf32>
    %122 = vector.broadcast %121 : vector<2x16x1xf32> to vector<2x16x16xf32>
    %123 = arith.subf %119, %122 : vector<2x16x16xf32>
    %124 = math.exp %123 : vector<2x16x16xf32>
    %cst_86 = arith.constant dense<0.000000e+00> : vector<2x16xf32>
    %125 = vector.multi_reduction <add>, %124, %cst_86 [2] : vector<2x16x16xf32> to vector<2x16xf32>
    %126 = vector.shape_cast %125 : vector<2x16xf32> to vector<2x16x1xf32>
    %127 = tpu.reciprocal %126 {approx = true} : vector<2x16x1xf32> -> vector<2x16x1xf32>
    %128 = vector.broadcast %127 : vector<2x16x1xf32> to vector<2x16x16xf32>
    %129 = arith.mulf %124, %128 : vector<2x16x16xf32>
    %cst_87 = arith.constant dense<0.000000e+00> : vector<2x16x8xf32>
    %130 = tpu.matmul %129, %116, %cst_87 {dimension_numbers = #tpu.dot_dimension_numbers<[2], [1], [1], [2], [0, 0, 0, 1, 1, 2], [0], [0]>} : vector<2x16x16xf32>, vector<2x16x8xf32>, vector<2x16x8xf32> -> vector<2x16x8xf32>
    %131 = vector.shape_cast %130 : vector<2x16x8xf32> to vector<32x8xf32>
    %c0_88 = arith.constant 0 : index
    %c1_89 = arith.constant 1 : index
    %c0_90 = arith.constant 0 : index
    %c0_91 = arith.constant 0 : index
    %132 = vector.load %arg13[%c0_88, %c1_89, %c0_90, %c0_91] : memref<2x4x8x32xf32, #tpu.memory_space<vmem>>, vector<1x1x8x32xf32>
    %133 = vector.shape_cast %132 : vector<1x1x8x32xf32> to vector<8x32xf32>
    %cst_92 = arith.constant dense<0.000000e+00> : vector<32x32xf32>
    %134 = tpu.matmul %131, %133, %cst_92 {dimension_numbers = #tpu.dot_dimension_numbers<[1], [0], [0], [1], [0, 0, 1, 1], [], []>} : vector<32x8xf32>, vector<8x32xf32>, vector<32x32xf32> -> vector<32x32xf32>
    %135 = arith.addf %92, %134 : vector<32x32xf32>
    %c0_93 = arith.constant 0 : index
    %c2 = arith.constant 2 : index
    %c0_94 = arith.constant 0 : index
    %c0_95 = arith.constant 0 : index
    %136 = vector.load %arg7[%c0_93, %c2, %c0_94, %c0_95] : memref<2x4x32x8xf32, #tpu.memory_space<vmem>>, vector<1x1x32x8xf32>
    %137 = vector.shape_cast %136 : vector<1x1x32x8xf32> to vector<32x8xf32>
    %cst_96 = arith.constant dense<0.000000e+00> : vector<32x8xf32>
    %138 = tpu.matmul %48, %137, %cst_96 {dimension_numbers = #tpu.dot_dimension_numbers<[1], [0], [0], [1], [0, 0, 1, 1], [], []>} : vector<32x32xf32>, vector<32x8xf32>, vector<32x8xf32> -> vector<32x8xf32>
    %c0_97 = arith.constant 0 : index
    %c2_98 = arith.constant 2 : index
    %c0_99 = arith.constant 0 : index
    %c0_100 = arith.constant 0 : index
    %139 = vector.load %arg8[%c0_97, %c2_98, %c0_99, %c0_100] : memref<2x4x1x8xf32, #tpu.memory_space<vmem>>, vector<1x1x1x8xf32>
    %140 = vector.shape_cast %139 : vector<1x1x1x8xf32> to vector<1x8xf32>
    %141 = vector.broadcast %140 : vector<1x8xf32> to vector<32x8xf32>
    %142 = arith.addf %138, %141 : vector<32x8xf32>
    %143 = vector.shape_cast %142 : vector<32x8xf32> to vector<2x16x8xf32>
    %c0_101 = arith.constant 0 : index
    %c2_102 = arith.constant 2 : index
    %c0_103 = arith.constant 0 : index
    %c0_104 = arith.constant 0 : index
    %144 = vector.load %arg9[%c0_101, %c2_102, %c0_103, %c0_104] : memref<2x4x32x8xf32, #tpu.memory_space<vmem>>, vector<1x1x32x8xf32>
    %145 = vector.shape_cast %144 : vector<1x1x32x8xf32> to vector<32x8xf32>
    %cst_105 = arith.constant dense<0.000000e+00> : vector<32x8xf32>
    %146 = tpu.matmul %48, %145, %cst_105 {dimension_numbers = #tpu.dot_dimension_numbers<[1], [0], [0], [1], [0, 0, 1, 1], [], []>} : vector<32x32xf32>, vector<32x8xf32>, vector<32x8xf32> -> vector<32x8xf32>
    %c0_106 = arith.constant 0 : index
    %c2_107 = arith.constant 2 : index
    %c0_108 = arith.constant 0 : index
    %c0_109 = arith.constant 0 : index
    %147 = vector.load %arg10[%c0_106, %c2_107, %c0_108, %c0_109] : memref<2x4x1x8xf32, #tpu.memory_space<vmem>>, vector<1x1x1x8xf32>
    %148 = vector.shape_cast %147 : vector<1x1x1x8xf32> to vector<1x8xf32>
    %149 = vector.broadcast %148 : vector<1x8xf32> to vector<32x8xf32>
    %150 = arith.addf %146, %149 : vector<32x8xf32>
    %151 = vector.shape_cast %150 : vector<32x8xf32> to vector<2x16x8xf32>
    %c0_110 = arith.constant 0 : index
    %c2_111 = arith.constant 2 : index
    %c0_112 = arith.constant 0 : index
    %c0_113 = arith.constant 0 : index
    %152 = vector.load %arg11[%c0_110, %c2_111, %c0_112, %c0_113] : memref<2x4x32x8xf32, #tpu.memory_space<vmem>>, vector<1x1x32x8xf32>
    %153 = vector.shape_cast %152 : vector<1x1x32x8xf32> to vector<32x8xf32>
    %cst_114 = arith.constant dense<0.000000e+00> : vector<32x8xf32>
    %154 = tpu.matmul %48, %153, %cst_114 {dimension_numbers = #tpu.dot_dimension_numbers<[1], [0], [0], [1], [0, 0, 1, 1], [], []>} : vector<32x32xf32>, vector<32x8xf32>, vector<32x8xf32> -> vector<32x8xf32>
    %c0_115 = arith.constant 0 : index
    %c2_116 = arith.constant 2 : index
    %c0_117 = arith.constant 0 : index
    %c0_118 = arith.constant 0 : index
    %155 = vector.load %arg12[%c0_115, %c2_116, %c0_117, %c0_118] : memref<2x4x1x8xf32, #tpu.memory_space<vmem>>, vector<1x1x1x8xf32>
    %156 = vector.shape_cast %155 : vector<1x1x1x8xf32> to vector<1x8xf32>
    %157 = vector.broadcast %156 : vector<1x8xf32> to vector<32x8xf32>
    %158 = arith.addf %154, %157 : vector<32x8xf32>
    %159 = vector.shape_cast %158 : vector<32x8xf32> to vector<2x16x8xf32>
    %cst_119 = arith.constant dense<0.000000e+00> : vector<2x16x16xf32>
    %160 = tpu.matmul %143, %151, %cst_119 {dimension_numbers = #tpu.dot_dimension_numbers<[2], [2], [1], [1], [0, 0, 0, 1, 1, 1], [0], [0]>} : vector<2x16x8xf32>, vector<2x16x8xf32>, vector<2x16x16xf32> -> vector<2x16x16xf32>
    %cst_120 = arith.constant 0.353553385 : f32
    %161 = vector.broadcast %cst_120 : f32 to vector<2x16x16xf32>
    %162 = arith.mulf %160, %161 : vector<2x16x16xf32>
    %cst_121 = arith.constant dense<0xFF800000> : vector<2x16xf32>
    %163 = vector.multi_reduction <maximumf>, %162, %cst_121 [2] : vector<2x16x16xf32> to vector<2x16xf32>
    %164 = vector.shape_cast %163 : vector<2x16xf32> to vector<2x16x1xf32>
    %165 = vector.broadcast %164 : vector<2x16x1xf32> to vector<2x16x16xf32>
    %166 = arith.subf %162, %165 : vector<2x16x16xf32>
    %167 = math.exp %166 : vector<2x16x16xf32>
    %cst_122 = arith.constant dense<0.000000e+00> : vector<2x16xf32>
    %168 = vector.multi_reduction <add>, %167, %cst_122 [2] : vector<2x16x16xf32> to vector<2x16xf32>
    %169 = vector.shape_cast %168 : vector<2x16xf32> to vector<2x16x1xf32>
    %170 = tpu.reciprocal %169 {approx = true} : vector<2x16x1xf32> -> vector<2x16x1xf32>
    %171 = vector.broadcast %170 : vector<2x16x1xf32> to vector<2x16x16xf32>
    %172 = arith.mulf %167, %171 : vector<2x16x16xf32>
    %cst_123 = arith.constant dense<0.000000e+00> : vector<2x16x8xf32>
    %173 = tpu.matmul %172, %159, %cst_123 {dimension_numbers = #tpu.dot_dimension_numbers<[2], [1], [1], [2], [0, 0, 0, 1, 1, 2], [0], [0]>} : vector<2x16x16xf32>, vector<2x16x8xf32>, vector<2x16x8xf32> -> vector<2x16x8xf32>
    %174 = vector.shape_cast %173 : vector<2x16x8xf32> to vector<32x8xf32>
    %c0_124 = arith.constant 0 : index
    %c2_125 = arith.constant 2 : index
    %c0_126 = arith.constant 0 : index
    %c0_127 = arith.constant 0 : index
    %175 = vector.load %arg13[%c0_124, %c2_125, %c0_126, %c0_127] : memref<2x4x8x32xf32, #tpu.memory_space<vmem>>, vector<1x1x8x32xf32>
    %176 = vector.shape_cast %175 : vector<1x1x8x32xf32> to vector<8x32xf32>
    %cst_128 = arith.constant dense<0.000000e+00> : vector<32x32xf32>
    %177 = tpu.matmul %174, %176, %cst_128 {dimension_numbers = #tpu.dot_dimension_numbers<[1], [0], [0], [1], [0, 0, 1, 1], [], []>} : vector<32x8xf32>, vector<8x32xf32>, vector<32x32xf32> -> vector<32x32xf32>
    %178 = arith.addf %135, %177 : vector<32x32xf32>
    %c0_129 = arith.constant 0 : index
    %c3 = arith.constant 3 : index
    %c0_130 = arith.constant 0 : index
    %c0_131 = arith.constant 0 : index
    %179 = vector.load %arg7[%c0_129, %c3, %c0_130, %c0_131] : memref<2x4x32x8xf32, #tpu.memory_space<vmem>>, vector<1x1x32x8xf32>
    %180 = vector.shape_cast %179 : vector<1x1x32x8xf32> to vector<32x8xf32>
    %cst_132 = arith.constant dense<0.000000e+00> : vector<32x8xf32>
    %181 = tpu.matmul %48, %180, %cst_132 {dimension_numbers = #tpu.dot_dimension_numbers<[1], [0], [0], [1], [0, 0, 1, 1], [], []>} : vector<32x32xf32>, vector<32x8xf32>, vector<32x8xf32> -> vector<32x8xf32>
    %c0_133 = arith.constant 0 : index
    %c3_134 = arith.constant 3 : index
    %c0_135 = arith.constant 0 : index
    %c0_136 = arith.constant 0 : index
    %182 = vector.load %arg8[%c0_133, %c3_134, %c0_135, %c0_136] : memref<2x4x1x8xf32, #tpu.memory_space<vmem>>, vector<1x1x1x8xf32>
    %183 = vector.shape_cast %182 : vector<1x1x1x8xf32> to vector<1x8xf32>
    %184 = vector.broadcast %183 : vector<1x8xf32> to vector<32x8xf32>
    %185 = arith.addf %181, %184 : vector<32x8xf32>
    %186 = vector.shape_cast %185 : vector<32x8xf32> to vector<2x16x8xf32>
    %c0_137 = arith.constant 0 : index
    %c3_138 = arith.constant 3 : index
    %c0_139 = arith.constant 0 : index
    %c0_140 = arith.constant 0 : index
    %187 = vector.load %arg9[%c0_137, %c3_138, %c0_139, %c0_140] : memref<2x4x32x8xf32, #tpu.memory_space<vmem>>, vector<1x1x32x8xf32>
    %188 = vector.shape_cast %187 : vector<1x1x32x8xf32> to vector<32x8xf32>
    %cst_141 = arith.constant dense<0.000000e+00> : vector<32x8xf32>
    %189 = tpu.matmul %48, %188, %cst_141 {dimension_numbers = #tpu.dot_dimension_numbers<[1], [0], [0], [1], [0, 0, 1, 1], [], []>} : vector<32x32xf32>, vector<32x8xf32>, vector<32x8xf32> -> vector<32x8xf32>
    %c0_142 = arith.constant 0 : index
    %c3_143 = arith.constant 3 : index
    %c0_144 = arith.constant 0 : index
    %c0_145 = arith.constant 0 : index
    %190 = vector.load %arg10[%c0_142, %c3_143, %c0_144, %c0_145] : memref<2x4x1x8xf32, #tpu.memory_space<vmem>>, vector<1x1x1x8xf32>
    %191 = vector.shape_cast %190 : vector<1x1x1x8xf32> to vector<1x8xf32>
    %192 = vector.broadcast %191 : vector<1x8xf32> to vector<32x8xf32>
    %193 = arith.addf %189, %192 : vector<32x8xf32>
    %194 = vector.shape_cast %193 : vector<32x8xf32> to vector<2x16x8xf32>
    %c0_146 = arith.constant 0 : index
    %c3_147 = arith.constant 3 : index
    %c0_148 = arith.constant 0 : index
    %c0_149 = arith.constant 0 : index
    %195 = vector.load %arg11[%c0_146, %c3_147, %c0_148, %c0_149] : memref<2x4x32x8xf32, #tpu.memory_space<vmem>>, vector<1x1x32x8xf32>
    %196 = vector.shape_cast %195 : vector<1x1x32x8xf32> to vector<32x8xf32>
    %cst_150 = arith.constant dense<0.000000e+00> : vector<32x8xf32>
    %197 = tpu.matmul %48, %196, %cst_150 {dimension_numbers = #tpu.dot_dimension_numbers<[1], [0], [0], [1], [0, 0, 1, 1], [], []>} : vector<32x32xf32>, vector<32x8xf32>, vector<32x8xf32> -> vector<32x8xf32>
    %c0_151 = arith.constant 0 : index
    %c3_152 = arith.constant 3 : index
    %c0_153 = arith.constant 0 : index
    %c0_154 = arith.constant 0 : index
    %198 = vector.load %arg12[%c0_151, %c3_152, %c0_153, %c0_154] : memref<2x4x1x8xf32, #tpu.memory_space<vmem>>, vector<1x1x1x8xf32>
    %199 = vector.shape_cast %198 : vector<1x1x1x8xf32> to vector<1x8xf32>
    %200 = vector.broadcast %199 : vector<1x8xf32> to vector<32x8xf32>
    %201 = arith.addf %197, %200 : vector<32x8xf32>
    %202 = vector.shape_cast %201 : vector<32x8xf32> to vector<2x16x8xf32>
    %cst_155 = arith.constant dense<0.000000e+00> : vector<2x16x16xf32>
    %203 = tpu.matmul %186, %194, %cst_155 {dimension_numbers = #tpu.dot_dimension_numbers<[2], [2], [1], [1], [0, 0, 0, 1, 1, 1], [0], [0]>} : vector<2x16x8xf32>, vector<2x16x8xf32>, vector<2x16x16xf32> -> vector<2x16x16xf32>
    %cst_156 = arith.constant 0.353553385 : f32
    %204 = vector.broadcast %cst_156 : f32 to vector<2x16x16xf32>
    %205 = arith.mulf %203, %204 : vector<2x16x16xf32>
    %cst_157 = arith.constant dense<0xFF800000> : vector<2x16xf32>
    %206 = vector.multi_reduction <maximumf>, %205, %cst_157 [2] : vector<2x16x16xf32> to vector<2x16xf32>
    %207 = vector.shape_cast %206 : vector<2x16xf32> to vector<2x16x1xf32>
    %208 = vector.broadcast %207 : vector<2x16x1xf32> to vector<2x16x16xf32>
    %209 = arith.subf %205, %208 : vector<2x16x16xf32>
    %210 = math.exp %209 : vector<2x16x16xf32>
    %cst_158 = arith.constant dense<0.000000e+00> : vector<2x16xf32>
    %211 = vector.multi_reduction <add>, %210, %cst_158 [2] : vector<2x16x16xf32> to vector<2x16xf32>
    %212 = vector.shape_cast %211 : vector<2x16xf32> to vector<2x16x1xf32>
    %213 = tpu.reciprocal %212 {approx = true} : vector<2x16x1xf32> -> vector<2x16x1xf32>
    %214 = vector.broadcast %213 : vector<2x16x1xf32> to vector<2x16x16xf32>
    %215 = arith.mulf %210, %214 : vector<2x16x16xf32>
    %cst_159 = arith.constant dense<0.000000e+00> : vector<2x16x8xf32>
    %216 = tpu.matmul %215, %202, %cst_159 {dimension_numbers = #tpu.dot_dimension_numbers<[2], [1], [1], [2], [0, 0, 0, 1, 1, 2], [0], [0]>} : vector<2x16x16xf32>, vector<2x16x8xf32>, vector<2x16x8xf32> -> vector<2x16x8xf32>
    %217 = vector.shape_cast %216 : vector<2x16x8xf32> to vector<32x8xf32>
    %c0_160 = arith.constant 0 : index
    %c3_161 = arith.constant 3 : index
    %c0_162 = arith.constant 0 : index
    %c0_163 = arith.constant 0 : index
    %218 = vector.load %arg13[%c0_160, %c3_161, %c0_162, %c0_163] : memref<2x4x8x32xf32, #tpu.memory_space<vmem>>, vector<1x1x8x32xf32>
    %219 = vector.shape_cast %218 : vector<1x1x8x32xf32> to vector<8x32xf32>
    %cst_164 = arith.constant dense<0.000000e+00> : vector<32x32xf32>
    %220 = tpu.matmul %217, %219, %cst_164 {dimension_numbers = #tpu.dot_dimension_numbers<[1], [0], [0], [1], [0, 0, 1, 1], [], []>} : vector<32x8xf32>, vector<8x32xf32>, vector<32x32xf32> -> vector<32x32xf32>
    %221 = arith.addf %178, %220 : vector<32x32xf32>
    %222 = arith.addf %24, %221 : vector<32x32xf32>
    %c0_165 = arith.constant 0 : index
    %c0_166 = arith.constant 0 : index
    %c0_167 = arith.constant 0 : index
    %223 = vector.load %arg14[%c0_165, %c0_166, %c0_167] : memref<2x1x32xf32, #tpu.memory_space<vmem>>, vector<1x1x32xf32>
    %224 = vector.shape_cast %223 : vector<1x1x32xf32> to vector<1x32xf32>
    %225 = vector.broadcast %224 : vector<1x32xf32> to vector<32x32xf32>
    %226 = arith.addf %222, %225 : vector<32x32xf32>
    %c0_168 = arith.constant 0 : index
    %c0_169 = arith.constant 0 : index
    %c0_170 = arith.constant 0 : index
    %227 = vector.load %arg15[%c0_168, %c0_169, %c0_170] : memref<2x1x32xf32, #tpu.memory_space<vmem>>, vector<1x1x32xf32>
    %228 = vector.shape_cast %227 : vector<1x1x32xf32> to vector<1x32xf32>
    %c0_171 = arith.constant 0 : index
    %c0_172 = arith.constant 0 : index
    %c0_173 = arith.constant 0 : index
    %229 = vector.load %arg16[%c0_171, %c0_172, %c0_173] : memref<2x1x32xf32, #tpu.memory_space<vmem>>, vector<1x1x32xf32>
    %230 = vector.shape_cast %229 : vector<1x1x32xf32> to vector<1x32xf32>
    %cst_174 = arith.constant dense<0.000000e+00> : vector<32xf32>
    %231 = vector.multi_reduction <add>, %226, %cst_174 [1] : vector<32x32xf32> to vector<32xf32>
    %232 = vector.shape_cast %231 : vector<32xf32> to vector<32x1xf32>
    %cst_175 = arith.constant 3.200000e+01 : f32
    %233 = vector.broadcast %cst_175 : f32 to vector<32x1xf32>
    %234 = arith.divf %232, %233 : vector<32x1xf32>
    %235 = vector.broadcast %234 : vector<32x1xf32> to vector<32x32xf32>
    %236 = arith.subf %226, %235 : vector<32x32xf32>
    %237 = arith.mulf %236, %236 : vector<32x32xf32>
    %cst_176 = arith.constant dense<0.000000e+00> : vector<32xf32>
    %238 = vector.multi_reduction <add>, %237, %cst_176 [1] : vector<32x32xf32> to vector<32xf32>
    %239 = vector.shape_cast %238 : vector<32xf32> to vector<32x1xf32>
    %cst_177 = arith.constant 3.200000e+01 : f32
    %240 = vector.broadcast %cst_177 : f32 to vector<32x1xf32>
    %241 = arith.divf %239, %240 : vector<32x1xf32>
    %cst_178 = arith.constant 9.99999974E-6 : f32
    %242 = vector.broadcast %cst_178 : f32 to vector<32x1xf32>
    %243 = arith.addf %241, %242 : vector<32x1xf32>
    %244 = math.rsqrt %243 : vector<32x1xf32>
    %245 = vector.broadcast %244 : vector<32x1xf32> to vector<32x32xf32>
    %246 = arith.mulf %236, %245 : vector<32x32xf32>
    %247 = vector.broadcast %228 : vector<1x32xf32> to vector<32x32xf32>
    %248 = arith.mulf %246, %247 : vector<32x32xf32>
    %249 = vector.broadcast %230 : vector<1x32xf32> to vector<32x32xf32>
    %250 = arith.addf %248, %249 : vector<32x32xf32>
    %c0_179 = arith.constant 0 : index
    %c0_180 = arith.constant 0 : index
    %c0_181 = arith.constant 0 : index
    %251 = vector.load %arg17[%c0_179, %c0_180, %c0_181] : memref<2x32x128xf32, #tpu.memory_space<vmem>>, vector<1x32x128xf32>
    %252 = vector.shape_cast %251 : vector<1x32x128xf32> to vector<32x128xf32>
    %cst_182 = arith.constant dense<0.000000e+00> : vector<32x128xf32>
    %253 = tpu.matmul %250, %252, %cst_182 {dimension_numbers = #tpu.dot_dimension_numbers<[1], [0], [0], [1], [0, 0, 1, 1], [], []>} : vector<32x32xf32>, vector<32x128xf32>, vector<32x128xf32> -> vector<32x128xf32>
    %c0_183 = arith.constant 0 : index
    %c0_184 = arith.constant 0 : index
    %c0_185 = arith.constant 0 : index
    %254 = vector.load %arg18[%c0_183, %c0_184, %c0_185] : memref<2x1x128xf32, #tpu.memory_space<vmem>>, vector<1x1x128xf32>
    %255 = vector.shape_cast %254 : vector<1x1x128xf32> to vector<1x128xf32>
    %256 = vector.broadcast %255 : vector<1x128xf32> to vector<32x128xf32>
    %257 = arith.addf %253, %256 : vector<32x128xf32>
    %cst_186 = arith.constant 5.000000e-01 : f32
    %258 = vector.broadcast %cst_186 : f32 to vector<32x128xf32>
    %259 = arith.mulf %258, %257 : vector<32x128xf32>
    %cst_187 = arith.constant 4.471500e-02 : f32
    %260 = vector.broadcast %cst_187 : f32 to vector<32x128xf32>
    %261 = arith.mulf %260, %257 : vector<32x128xf32>
    %262 = arith.mulf %261, %257 : vector<32x128xf32>
    %263 = arith.mulf %262, %257 : vector<32x128xf32>
    %264 = arith.addf %257, %263 : vector<32x128xf32>
    %cst_188 = arith.constant 0.797884583 : f32
    %265 = vector.broadcast %cst_188 : f32 to vector<32x128xf32>
    %266 = arith.mulf %265, %264 : vector<32x128xf32>
    %267 = math.tanh %266 : vector<32x128xf32>
    %cst_189 = arith.constant 1.000000e+00 : f32
    %268 = vector.broadcast %cst_189 : f32 to vector<32x128xf32>
    %269 = arith.addf %268, %267 : vector<32x128xf32>
    %270 = arith.mulf %259, %269 : vector<32x128xf32>
    %c0_190 = arith.constant 0 : index
    %c0_191 = arith.constant 0 : index
    %c0_192 = arith.constant 0 : index
    %271 = vector.load %arg19[%c0_190, %c0_191, %c0_192] : memref<2x128x32xf32, #tpu.memory_space<vmem>>, vector<1x128x32xf32>
    %272 = vector.shape_cast %271 : vector<1x128x32xf32> to vector<128x32xf32>
    %cst_193 = arith.constant dense<0.000000e+00> : vector<32x32xf32>
    %273 = tpu.matmul %270, %272, %cst_193 {dimension_numbers = #tpu.dot_dimension_numbers<[1], [0], [0], [1], [0, 0, 1, 1], [], []>} : vector<32x128xf32>, vector<128x32xf32>, vector<32x32xf32> -> vector<32x32xf32>
    %c0_194 = arith.constant 0 : index
    %c0_195 = arith.constant 0 : index
    %c0_196 = arith.constant 0 : index
    %274 = vector.load %arg20[%c0_194, %c0_195, %c0_196] : memref<2x1x32xf32, #tpu.memory_space<vmem>>, vector<1x1x32xf32>
    %275 = vector.shape_cast %274 : vector<1x1x32xf32> to vector<1x32xf32>
    %276 = vector.broadcast %275 : vector<1x32xf32> to vector<32x32xf32>
    %277 = arith.addf %273, %276 : vector<32x32xf32>
    %278 = arith.addf %226, %277 : vector<32x32xf32>
    %c1_197 = arith.constant 1 : index
    %c0_198 = arith.constant 0 : index
    %c0_199 = arith.constant 0 : index
    %279 = vector.load %arg5[%c1_197, %c0_198, %c0_199] : memref<2x1x32xf32, #tpu.memory_space<vmem>>, vector<1x1x32xf32>
    %280 = vector.shape_cast %279 : vector<1x1x32xf32> to vector<1x32xf32>
    %c1_200 = arith.constant 1 : index
    %c0_201 = arith.constant 0 : index
    %c0_202 = arith.constant 0 : index
    %281 = vector.load %arg6[%c1_200, %c0_201, %c0_202] : memref<2x1x32xf32, #tpu.memory_space<vmem>>, vector<1x1x32xf32>
    %282 = vector.shape_cast %281 : vector<1x1x32xf32> to vector<1x32xf32>
    %cst_203 = arith.constant dense<0.000000e+00> : vector<32xf32>
    %283 = vector.multi_reduction <add>, %278, %cst_203 [1] : vector<32x32xf32> to vector<32xf32>
    %284 = vector.shape_cast %283 : vector<32xf32> to vector<32x1xf32>
    %cst_204 = arith.constant 3.200000e+01 : f32
    %285 = vector.broadcast %cst_204 : f32 to vector<32x1xf32>
    %286 = arith.divf %284, %285 : vector<32x1xf32>
    %287 = vector.broadcast %286 : vector<32x1xf32> to vector<32x32xf32>
    %288 = arith.subf %278, %287 : vector<32x32xf32>
    %289 = arith.mulf %288, %288 : vector<32x32xf32>
    %cst_205 = arith.constant dense<0.000000e+00> : vector<32xf32>
    %290 = vector.multi_reduction <add>, %289, %cst_205 [1] : vector<32x32xf32> to vector<32xf32>
    %291 = vector.shape_cast %290 : vector<32xf32> to vector<32x1xf32>
    %cst_206 = arith.constant 3.200000e+01 : f32
    %292 = vector.broadcast %cst_206 : f32 to vector<32x1xf32>
    %293 = arith.divf %291, %292 : vector<32x1xf32>
    %cst_207 = arith.constant 9.99999974E-6 : f32
    %294 = vector.broadcast %cst_207 : f32 to vector<32x1xf32>
    %295 = arith.addf %293, %294 : vector<32x1xf32>
    %296 = math.rsqrt %295 : vector<32x1xf32>
    %297 = vector.broadcast %296 : vector<32x1xf32> to vector<32x32xf32>
    %298 = arith.mulf %288, %297 : vector<32x32xf32>
    %299 = vector.broadcast %280 : vector<1x32xf32> to vector<32x32xf32>
    %300 = arith.mulf %298, %299 : vector<32x32xf32>
    %301 = vector.broadcast %282 : vector<1x32xf32> to vector<32x32xf32>
    %302 = arith.addf %300, %301 : vector<32x32xf32>
    %cst_208 = arith.constant 0.000000e+00 : f32
    %303 = vector.broadcast %cst_208 : f32 to vector<32x32xf32>
    %c1_209 = arith.constant 1 : index
    %c0_210 = arith.constant 0 : index
    %c0_211 = arith.constant 0 : index
    %c0_212 = arith.constant 0 : index
    %304 = vector.load %arg7[%c1_209, %c0_210, %c0_211, %c0_212] : memref<2x4x32x8xf32, #tpu.memory_space<vmem>>, vector<1x1x32x8xf32>
    %305 = vector.shape_cast %304 : vector<1x1x32x8xf32> to vector<32x8xf32>
    %cst_213 = arith.constant dense<0.000000e+00> : vector<32x8xf32>
    %306 = tpu.matmul %302, %305, %cst_213 {dimension_numbers = #tpu.dot_dimension_numbers<[1], [0], [0], [1], [0, 0, 1, 1], [], []>} : vector<32x32xf32>, vector<32x8xf32>, vector<32x8xf32> -> vector<32x8xf32>
    %c1_214 = arith.constant 1 : index
    %c0_215 = arith.constant 0 : index
    %c0_216 = arith.constant 0 : index
    %c0_217 = arith.constant 0 : index
    %307 = vector.load %arg8[%c1_214, %c0_215, %c0_216, %c0_217] : memref<2x4x1x8xf32, #tpu.memory_space<vmem>>, vector<1x1x1x8xf32>
    %308 = vector.shape_cast %307 : vector<1x1x1x8xf32> to vector<1x8xf32>
    %309 = vector.broadcast %308 : vector<1x8xf32> to vector<32x8xf32>
    %310 = arith.addf %306, %309 : vector<32x8xf32>
    %311 = vector.shape_cast %310 : vector<32x8xf32> to vector<2x16x8xf32>
    %c1_218 = arith.constant 1 : index
    %c0_219 = arith.constant 0 : index
    %c0_220 = arith.constant 0 : index
    %c0_221 = arith.constant 0 : index
    %312 = vector.load %arg9[%c1_218, %c0_219, %c0_220, %c0_221] : memref<2x4x32x8xf32, #tpu.memory_space<vmem>>, vector<1x1x32x8xf32>
    %313 = vector.shape_cast %312 : vector<1x1x32x8xf32> to vector<32x8xf32>
    %cst_222 = arith.constant dense<0.000000e+00> : vector<32x8xf32>
    %314 = tpu.matmul %302, %313, %cst_222 {dimension_numbers = #tpu.dot_dimension_numbers<[1], [0], [0], [1], [0, 0, 1, 1], [], []>} : vector<32x32xf32>, vector<32x8xf32>, vector<32x8xf32> -> vector<32x8xf32>
    %c1_223 = arith.constant 1 : index
    %c0_224 = arith.constant 0 : index
    %c0_225 = arith.constant 0 : index
    %c0_226 = arith.constant 0 : index
    %315 = vector.load %arg10[%c1_223, %c0_224, %c0_225, %c0_226] : memref<2x4x1x8xf32, #tpu.memory_space<vmem>>, vector<1x1x1x8xf32>
    %316 = vector.shape_cast %315 : vector<1x1x1x8xf32> to vector<1x8xf32>
    %317 = vector.broadcast %316 : vector<1x8xf32> to vector<32x8xf32>
    %318 = arith.addf %314, %317 : vector<32x8xf32>
    %319 = vector.shape_cast %318 : vector<32x8xf32> to vector<2x16x8xf32>
    %c1_227 = arith.constant 1 : index
    %c0_228 = arith.constant 0 : index
    %c0_229 = arith.constant 0 : index
    %c0_230 = arith.constant 0 : index
    %320 = vector.load %arg11[%c1_227, %c0_228, %c0_229, %c0_230] : memref<2x4x32x8xf32, #tpu.memory_space<vmem>>, vector<1x1x32x8xf32>
    %321 = vector.shape_cast %320 : vector<1x1x32x8xf32> to vector<32x8xf32>
    %cst_231 = arith.constant dense<0.000000e+00> : vector<32x8xf32>
    %322 = tpu.matmul %302, %321, %cst_231 {dimension_numbers = #tpu.dot_dimension_numbers<[1], [0], [0], [1], [0, 0, 1, 1], [], []>} : vector<32x32xf32>, vector<32x8xf32>, vector<32x8xf32> -> vector<32x8xf32>
    %c1_232 = arith.constant 1 : index
    %c0_233 = arith.constant 0 : index
    %c0_234 = arith.constant 0 : index
    %c0_235 = arith.constant 0 : index
    %323 = vector.load %arg12[%c1_232, %c0_233, %c0_234, %c0_235] : memref<2x4x1x8xf32, #tpu.memory_space<vmem>>, vector<1x1x1x8xf32>
    %324 = vector.shape_cast %323 : vector<1x1x1x8xf32> to vector<1x8xf32>
    %325 = vector.broadcast %324 : vector<1x8xf32> to vector<32x8xf32>
    %326 = arith.addf %322, %325 : vector<32x8xf32>
    %327 = vector.shape_cast %326 : vector<32x8xf32> to vector<2x16x8xf32>
    %cst_236 = arith.constant dense<0.000000e+00> : vector<2x16x16xf32>
    %328 = tpu.matmul %311, %319, %cst_236 {dimension_numbers = #tpu.dot_dimension_numbers<[2], [2], [1], [1], [0, 0, 0, 1, 1, 1], [0], [0]>} : vector<2x16x8xf32>, vector<2x16x8xf32>, vector<2x16x16xf32> -> vector<2x16x16xf32>
    %cst_237 = arith.constant 0.353553385 : f32
    %329 = vector.broadcast %cst_237 : f32 to vector<2x16x16xf32>
    %330 = arith.mulf %328, %329 : vector<2x16x16xf32>
    %cst_238 = arith.constant dense<0xFF800000> : vector<2x16xf32>
    %331 = vector.multi_reduction <maximumf>, %330, %cst_238 [2] : vector<2x16x16xf32> to vector<2x16xf32>
    %332 = vector.shape_cast %331 : vector<2x16xf32> to vector<2x16x1xf32>
    %333 = vector.broadcast %332 : vector<2x16x1xf32> to vector<2x16x16xf32>
    %334 = arith.subf %330, %333 : vector<2x16x16xf32>
    %335 = math.exp %334 : vector<2x16x16xf32>
    %cst_239 = arith.constant dense<0.000000e+00> : vector<2x16xf32>
    %336 = vector.multi_reduction <add>, %335, %cst_239 [2] : vector<2x16x16xf32> to vector<2x16xf32>
    %337 = vector.shape_cast %336 : vector<2x16xf32> to vector<2x16x1xf32>
    %338 = tpu.reciprocal %337 {approx = true} : vector<2x16x1xf32> -> vector<2x16x1xf32>
    %339 = vector.broadcast %338 : vector<2x16x1xf32> to vector<2x16x16xf32>
    %340 = arith.mulf %335, %339 : vector<2x16x16xf32>
    %cst_240 = arith.constant dense<0.000000e+00> : vector<2x16x8xf32>
    %341 = tpu.matmul %340, %327, %cst_240 {dimension_numbers = #tpu.dot_dimension_numbers<[2], [1], [1], [2], [0, 0, 0, 1, 1, 2], [0], [0]>} : vector<2x16x16xf32>, vector<2x16x8xf32>, vector<2x16x8xf32> -> vector<2x16x8xf32>
    %342 = vector.shape_cast %341 : vector<2x16x8xf32> to vector<32x8xf32>
    %c1_241 = arith.constant 1 : index
    %c0_242 = arith.constant 0 : index
    %c0_243 = arith.constant 0 : index
    %c0_244 = arith.constant 0 : index
    %343 = vector.load %arg13[%c1_241, %c0_242, %c0_243, %c0_244] : memref<2x4x8x32xf32, #tpu.memory_space<vmem>>, vector<1x1x8x32xf32>
    %344 = vector.shape_cast %343 : vector<1x1x8x32xf32> to vector<8x32xf32>
    %cst_245 = arith.constant dense<0.000000e+00> : vector<32x32xf32>
    %345 = tpu.matmul %342, %344, %cst_245 {dimension_numbers = #tpu.dot_dimension_numbers<[1], [0], [0], [1], [0, 0, 1, 1], [], []>} : vector<32x8xf32>, vector<8x32xf32>, vector<32x32xf32> -> vector<32x32xf32>
    %346 = arith.addf %303, %345 : vector<32x32xf32>
    %c1_246 = arith.constant 1 : index
    %c1_247 = arith.constant 1 : index
    %c0_248 = arith.constant 0 : index
    %c0_249 = arith.constant 0 : index
    %347 = vector.load %arg7[%c1_246, %c1_247, %c0_248, %c0_249] : memref<2x4x32x8xf32, #tpu.memory_space<vmem>>, vector<1x1x32x8xf32>
    %348 = vector.shape_cast %347 : vector<1x1x32x8xf32> to vector<32x8xf32>
    %cst_250 = arith.constant dense<0.000000e+00> : vector<32x8xf32>
    %349 = tpu.matmul %302, %348, %cst_250 {dimension_numbers = #tpu.dot_dimension_numbers<[1], [0], [0], [1], [0, 0, 1, 1], [], []>} : vector<32x32xf32>, vector<32x8xf32>, vector<32x8xf32> -> vector<32x8xf32>
    %c1_251 = arith.constant 1 : index
    %c1_252 = arith.constant 1 : index
    %c0_253 = arith.constant 0 : index
    %c0_254 = arith.constant 0 : index
    %350 = vector.load %arg8[%c1_251, %c1_252, %c0_253, %c0_254] : memref<2x4x1x8xf32, #tpu.memory_space<vmem>>, vector<1x1x1x8xf32>
    %351 = vector.shape_cast %350 : vector<1x1x1x8xf32> to vector<1x8xf32>
    %352 = vector.broadcast %351 : vector<1x8xf32> to vector<32x8xf32>
    %353 = arith.addf %349, %352 : vector<32x8xf32>
    %354 = vector.shape_cast %353 : vector<32x8xf32> to vector<2x16x8xf32>
    %c1_255 = arith.constant 1 : index
    %c1_256 = arith.constant 1 : index
    %c0_257 = arith.constant 0 : index
    %c0_258 = arith.constant 0 : index
    %355 = vector.load %arg9[%c1_255, %c1_256, %c0_257, %c0_258] : memref<2x4x32x8xf32, #tpu.memory_space<vmem>>, vector<1x1x32x8xf32>
    %356 = vector.shape_cast %355 : vector<1x1x32x8xf32> to vector<32x8xf32>
    %cst_259 = arith.constant dense<0.000000e+00> : vector<32x8xf32>
    %357 = tpu.matmul %302, %356, %cst_259 {dimension_numbers = #tpu.dot_dimension_numbers<[1], [0], [0], [1], [0, 0, 1, 1], [], []>} : vector<32x32xf32>, vector<32x8xf32>, vector<32x8xf32> -> vector<32x8xf32>
    %c1_260 = arith.constant 1 : index
    %c1_261 = arith.constant 1 : index
    %c0_262 = arith.constant 0 : index
    %c0_263 = arith.constant 0 : index
    %358 = vector.load %arg10[%c1_260, %c1_261, %c0_262, %c0_263] : memref<2x4x1x8xf32, #tpu.memory_space<vmem>>, vector<1x1x1x8xf32>
    %359 = vector.shape_cast %358 : vector<1x1x1x8xf32> to vector<1x8xf32>
    %360 = vector.broadcast %359 : vector<1x8xf32> to vector<32x8xf32>
    %361 = arith.addf %357, %360 : vector<32x8xf32>
    %362 = vector.shape_cast %361 : vector<32x8xf32> to vector<2x16x8xf32>
    %c1_264 = arith.constant 1 : index
    %c1_265 = arith.constant 1 : index
    %c0_266 = arith.constant 0 : index
    %c0_267 = arith.constant 0 : index
    %363 = vector.load %arg11[%c1_264, %c1_265, %c0_266, %c0_267] : memref<2x4x32x8xf32, #tpu.memory_space<vmem>>, vector<1x1x32x8xf32>
    %364 = vector.shape_cast %363 : vector<1x1x32x8xf32> to vector<32x8xf32>
    %cst_268 = arith.constant dense<0.000000e+00> : vector<32x8xf32>
    %365 = tpu.matmul %302, %364, %cst_268 {dimension_numbers = #tpu.dot_dimension_numbers<[1], [0], [0], [1], [0, 0, 1, 1], [], []>} : vector<32x32xf32>, vector<32x8xf32>, vector<32x8xf32> -> vector<32x8xf32>
    %c1_269 = arith.constant 1 : index
    %c1_270 = arith.constant 1 : index
    %c0_271 = arith.constant 0 : index
    %c0_272 = arith.constant 0 : index
    %366 = vector.load %arg12[%c1_269, %c1_270, %c0_271, %c0_272] : memref<2x4x1x8xf32, #tpu.memory_space<vmem>>, vector<1x1x1x8xf32>
    %367 = vector.shape_cast %366 : vector<1x1x1x8xf32> to vector<1x8xf32>
    %368 = vector.broadcast %367 : vector<1x8xf32> to vector<32x8xf32>
    %369 = arith.addf %365, %368 : vector<32x8xf32>
    %370 = vector.shape_cast %369 : vector<32x8xf32> to vector<2x16x8xf32>
    %cst_273 = arith.constant dense<0.000000e+00> : vector<2x16x16xf32>
    %371 = tpu.matmul %354, %362, %cst_273 {dimension_numbers = #tpu.dot_dimension_numbers<[2], [2], [1], [1], [0, 0, 0, 1, 1, 1], [0], [0]>} : vector<2x16x8xf32>, vector<2x16x8xf32>, vector<2x16x16xf32> -> vector<2x16x16xf32>
    %cst_274 = arith.constant 0.353553385 : f32
    %372 = vector.broadcast %cst_274 : f32 to vector<2x16x16xf32>
    %373 = arith.mulf %371, %372 : vector<2x16x16xf32>
    %cst_275 = arith.constant dense<0xFF800000> : vector<2x16xf32>
    %374 = vector.multi_reduction <maximumf>, %373, %cst_275 [2] : vector<2x16x16xf32> to vector<2x16xf32>
    %375 = vector.shape_cast %374 : vector<2x16xf32> to vector<2x16x1xf32>
    %376 = vector.broadcast %375 : vector<2x16x1xf32> to vector<2x16x16xf32>
    %377 = arith.subf %373, %376 : vector<2x16x16xf32>
    %378 = math.exp %377 : vector<2x16x16xf32>
    %cst_276 = arith.constant dense<0.000000e+00> : vector<2x16xf32>
    %379 = vector.multi_reduction <add>, %378, %cst_276 [2] : vector<2x16x16xf32> to vector<2x16xf32>
    %380 = vector.shape_cast %379 : vector<2x16xf32> to vector<2x16x1xf32>
    %381 = tpu.reciprocal %380 {approx = true} : vector<2x16x1xf32> -> vector<2x16x1xf32>
    %382 = vector.broadcast %381 : vector<2x16x1xf32> to vector<2x16x16xf32>
    %383 = arith.mulf %378, %382 : vector<2x16x16xf32>
    %cst_277 = arith.constant dense<0.000000e+00> : vector<2x16x8xf32>
    %384 = tpu.matmul %383, %370, %cst_277 {dimension_numbers = #tpu.dot_dimension_numbers<[2], [1], [1], [2], [0, 0, 0, 1, 1, 2], [0], [0]>} : vector<2x16x16xf32>, vector<2x16x8xf32>, vector<2x16x8xf32> -> vector<2x16x8xf32>
    %385 = vector.shape_cast %384 : vector<2x16x8xf32> to vector<32x8xf32>
    %c1_278 = arith.constant 1 : index
    %c1_279 = arith.constant 1 : index
    %c0_280 = arith.constant 0 : index
    %c0_281 = arith.constant 0 : index
    %386 = vector.load %arg13[%c1_278, %c1_279, %c0_280, %c0_281] : memref<2x4x8x32xf32, #tpu.memory_space<vmem>>, vector<1x1x8x32xf32>
    %387 = vector.shape_cast %386 : vector<1x1x8x32xf32> to vector<8x32xf32>
    %cst_282 = arith.constant dense<0.000000e+00> : vector<32x32xf32>
    %388 = tpu.matmul %385, %387, %cst_282 {dimension_numbers = #tpu.dot_dimension_numbers<[1], [0], [0], [1], [0, 0, 1, 1], [], []>} : vector<32x8xf32>, vector<8x32xf32>, vector<32x32xf32> -> vector<32x32xf32>
    %389 = arith.addf %346, %388 : vector<32x32xf32>
    %c1_283 = arith.constant 1 : index
    %c2_284 = arith.constant 2 : index
    %c0_285 = arith.constant 0 : index
    %c0_286 = arith.constant 0 : index
    %390 = vector.load %arg7[%c1_283, %c2_284, %c0_285, %c0_286] : memref<2x4x32x8xf32, #tpu.memory_space<vmem>>, vector<1x1x32x8xf32>
    %391 = vector.shape_cast %390 : vector<1x1x32x8xf32> to vector<32x8xf32>
    %cst_287 = arith.constant dense<0.000000e+00> : vector<32x8xf32>
    %392 = tpu.matmul %302, %391, %cst_287 {dimension_numbers = #tpu.dot_dimension_numbers<[1], [0], [0], [1], [0, 0, 1, 1], [], []>} : vector<32x32xf32>, vector<32x8xf32>, vector<32x8xf32> -> vector<32x8xf32>
    %c1_288 = arith.constant 1 : index
    %c2_289 = arith.constant 2 : index
    %c0_290 = arith.constant 0 : index
    %c0_291 = arith.constant 0 : index
    %393 = vector.load %arg8[%c1_288, %c2_289, %c0_290, %c0_291] : memref<2x4x1x8xf32, #tpu.memory_space<vmem>>, vector<1x1x1x8xf32>
    %394 = vector.shape_cast %393 : vector<1x1x1x8xf32> to vector<1x8xf32>
    %395 = vector.broadcast %394 : vector<1x8xf32> to vector<32x8xf32>
    %396 = arith.addf %392, %395 : vector<32x8xf32>
    %397 = vector.shape_cast %396 : vector<32x8xf32> to vector<2x16x8xf32>
    %c1_292 = arith.constant 1 : index
    %c2_293 = arith.constant 2 : index
    %c0_294 = arith.constant 0 : index
    %c0_295 = arith.constant 0 : index
    %398 = vector.load %arg9[%c1_292, %c2_293, %c0_294, %c0_295] : memref<2x4x32x8xf32, #tpu.memory_space<vmem>>, vector<1x1x32x8xf32>
    %399 = vector.shape_cast %398 : vector<1x1x32x8xf32> to vector<32x8xf32>
    %cst_296 = arith.constant dense<0.000000e+00> : vector<32x8xf32>
    %400 = tpu.matmul %302, %399, %cst_296 {dimension_numbers = #tpu.dot_dimension_numbers<[1], [0], [0], [1], [0, 0, 1, 1], [], []>} : vector<32x32xf32>, vector<32x8xf32>, vector<32x8xf32> -> vector<32x8xf32>
    %c1_297 = arith.constant 1 : index
    %c2_298 = arith.constant 2 : index
    %c0_299 = arith.constant 0 : index
    %c0_300 = arith.constant 0 : index
    %401 = vector.load %arg10[%c1_297, %c2_298, %c0_299, %c0_300] : memref<2x4x1x8xf32, #tpu.memory_space<vmem>>, vector<1x1x1x8xf32>
    %402 = vector.shape_cast %401 : vector<1x1x1x8xf32> to vector<1x8xf32>
    %403 = vector.broadcast %402 : vector<1x8xf32> to vector<32x8xf32>
    %404 = arith.addf %400, %403 : vector<32x8xf32>
    %405 = vector.shape_cast %404 : vector<32x8xf32> to vector<2x16x8xf32>
    %c1_301 = arith.constant 1 : index
    %c2_302 = arith.constant 2 : index
    %c0_303 = arith.constant 0 : index
    %c0_304 = arith.constant 0 : index
    %406 = vector.load %arg11[%c1_301, %c2_302, %c0_303, %c0_304] : memref<2x4x32x8xf32, #tpu.memory_space<vmem>>, vector<1x1x32x8xf32>
    %407 = vector.shape_cast %406 : vector<1x1x32x8xf32> to vector<32x8xf32>
    %cst_305 = arith.constant dense<0.000000e+00> : vector<32x8xf32>
    %408 = tpu.matmul %302, %407, %cst_305 {dimension_numbers = #tpu.dot_dimension_numbers<[1], [0], [0], [1], [0, 0, 1, 1], [], []>} : vector<32x32xf32>, vector<32x8xf32>, vector<32x8xf32> -> vector<32x8xf32>
    %c1_306 = arith.constant 1 : index
    %c2_307 = arith.constant 2 : index
    %c0_308 = arith.constant 0 : index
    %c0_309 = arith.constant 0 : index
    %409 = vector.load %arg12[%c1_306, %c2_307, %c0_308, %c0_309] : memref<2x4x1x8xf32, #tpu.memory_space<vmem>>, vector<1x1x1x8xf32>
    %410 = vector.shape_cast %409 : vector<1x1x1x8xf32> to vector<1x8xf32>
    %411 = vector.broadcast %410 : vector<1x8xf32> to vector<32x8xf32>
    %412 = arith.addf %408, %411 : vector<32x8xf32>
    %413 = vector.shape_cast %412 : vector<32x8xf32> to vector<2x16x8xf32>
    %cst_310 = arith.constant dense<0.000000e+00> : vector<2x16x16xf32>
    %414 = tpu.matmul %397, %405, %cst_310 {dimension_numbers = #tpu.dot_dimension_numbers<[2], [2], [1], [1], [0, 0, 0, 1, 1, 1], [0], [0]>} : vector<2x16x8xf32>, vector<2x16x8xf32>, vector<2x16x16xf32> -> vector<2x16x16xf32>
    %cst_311 = arith.constant 0.353553385 : f32
    %415 = vector.broadcast %cst_311 : f32 to vector<2x16x16xf32>
    %416 = arith.mulf %414, %415 : vector<2x16x16xf32>
    %cst_312 = arith.constant dense<0xFF800000> : vector<2x16xf32>
    %417 = vector.multi_reduction <maximumf>, %416, %cst_312 [2] : vector<2x16x16xf32> to vector<2x16xf32>
    %418 = vector.shape_cast %417 : vector<2x16xf32> to vector<2x16x1xf32>
    %419 = vector.broadcast %418 : vector<2x16x1xf32> to vector<2x16x16xf32>
    %420 = arith.subf %416, %419 : vector<2x16x16xf32>
    %421 = math.exp %420 : vector<2x16x16xf32>
    %cst_313 = arith.constant dense<0.000000e+00> : vector<2x16xf32>
    %422 = vector.multi_reduction <add>, %421, %cst_313 [2] : vector<2x16x16xf32> to vector<2x16xf32>
    %423 = vector.shape_cast %422 : vector<2x16xf32> to vector<2x16x1xf32>
    %424 = tpu.reciprocal %423 {approx = true} : vector<2x16x1xf32> -> vector<2x16x1xf32>
    %425 = vector.broadcast %424 : vector<2x16x1xf32> to vector<2x16x16xf32>
    %426 = arith.mulf %421, %425 : vector<2x16x16xf32>
    %cst_314 = arith.constant dense<0.000000e+00> : vector<2x16x8xf32>
    %427 = tpu.matmul %426, %413, %cst_314 {dimension_numbers = #tpu.dot_dimension_numbers<[2], [1], [1], [2], [0, 0, 0, 1, 1, 2], [0], [0]>} : vector<2x16x16xf32>, vector<2x16x8xf32>, vector<2x16x8xf32> -> vector<2x16x8xf32>
    %428 = vector.shape_cast %427 : vector<2x16x8xf32> to vector<32x8xf32>
    %c1_315 = arith.constant 1 : index
    %c2_316 = arith.constant 2 : index
    %c0_317 = arith.constant 0 : index
    %c0_318 = arith.constant 0 : index
    %429 = vector.load %arg13[%c1_315, %c2_316, %c0_317, %c0_318] : memref<2x4x8x32xf32, #tpu.memory_space<vmem>>, vector<1x1x8x32xf32>
    %430 = vector.shape_cast %429 : vector<1x1x8x32xf32> to vector<8x32xf32>
    %cst_319 = arith.constant dense<0.000000e+00> : vector<32x32xf32>
    %431 = tpu.matmul %428, %430, %cst_319 {dimension_numbers = #tpu.dot_dimension_numbers<[1], [0], [0], [1], [0, 0, 1, 1], [], []>} : vector<32x8xf32>, vector<8x32xf32>, vector<32x32xf32> -> vector<32x32xf32>
    %432 = arith.addf %389, %431 : vector<32x32xf32>
    %c1_320 = arith.constant 1 : index
    %c3_321 = arith.constant 3 : index
    %c0_322 = arith.constant 0 : index
    %c0_323 = arith.constant 0 : index
    %433 = vector.load %arg7[%c1_320, %c3_321, %c0_322, %c0_323] : memref<2x4x32x8xf32, #tpu.memory_space<vmem>>, vector<1x1x32x8xf32>
    %434 = vector.shape_cast %433 : vector<1x1x32x8xf32> to vector<32x8xf32>
    %cst_324 = arith.constant dense<0.000000e+00> : vector<32x8xf32>
    %435 = tpu.matmul %302, %434, %cst_324 {dimension_numbers = #tpu.dot_dimension_numbers<[1], [0], [0], [1], [0, 0, 1, 1], [], []>} : vector<32x32xf32>, vector<32x8xf32>, vector<32x8xf32> -> vector<32x8xf32>
    %c1_325 = arith.constant 1 : index
    %c3_326 = arith.constant 3 : index
    %c0_327 = arith.constant 0 : index
    %c0_328 = arith.constant 0 : index
    %436 = vector.load %arg8[%c1_325, %c3_326, %c0_327, %c0_328] : memref<2x4x1x8xf32, #tpu.memory_space<vmem>>, vector<1x1x1x8xf32>
    %437 = vector.shape_cast %436 : vector<1x1x1x8xf32> to vector<1x8xf32>
    %438 = vector.broadcast %437 : vector<1x8xf32> to vector<32x8xf32>
    %439 = arith.addf %435, %438 : vector<32x8xf32>
    %440 = vector.shape_cast %439 : vector<32x8xf32> to vector<2x16x8xf32>
    %c1_329 = arith.constant 1 : index
    %c3_330 = arith.constant 3 : index
    %c0_331 = arith.constant 0 : index
    %c0_332 = arith.constant 0 : index
    %441 = vector.load %arg9[%c1_329, %c3_330, %c0_331, %c0_332] : memref<2x4x32x8xf32, #tpu.memory_space<vmem>>, vector<1x1x32x8xf32>
    %442 = vector.shape_cast %441 : vector<1x1x32x8xf32> to vector<32x8xf32>
    %cst_333 = arith.constant dense<0.000000e+00> : vector<32x8xf32>
    %443 = tpu.matmul %302, %442, %cst_333 {dimension_numbers = #tpu.dot_dimension_numbers<[1], [0], [0], [1], [0, 0, 1, 1], [], []>} : vector<32x32xf32>, vector<32x8xf32>, vector<32x8xf32> -> vector<32x8xf32>
    %c1_334 = arith.constant 1 : index
    %c3_335 = arith.constant 3 : index
    %c0_336 = arith.constant 0 : index
    %c0_337 = arith.constant 0 : index
    %444 = vector.load %arg10[%c1_334, %c3_335, %c0_336, %c0_337] : memref<2x4x1x8xf32, #tpu.memory_space<vmem>>, vector<1x1x1x8xf32>
    %445 = vector.shape_cast %444 : vector<1x1x1x8xf32> to vector<1x8xf32>
    %446 = vector.broadcast %445 : vector<1x8xf32> to vector<32x8xf32>
    %447 = arith.addf %443, %446 : vector<32x8xf32>
    %448 = vector.shape_cast %447 : vector<32x8xf32> to vector<2x16x8xf32>
    %c1_338 = arith.constant 1 : index
    %c3_339 = arith.constant 3 : index
    %c0_340 = arith.constant 0 : index
    %c0_341 = arith.constant 0 : index
    %449 = vector.load %arg11[%c1_338, %c3_339, %c0_340, %c0_341] : memref<2x4x32x8xf32, #tpu.memory_space<vmem>>, vector<1x1x32x8xf32>
    %450 = vector.shape_cast %449 : vector<1x1x32x8xf32> to vector<32x8xf32>
    %cst_342 = arith.constant dense<0.000000e+00> : vector<32x8xf32>
    %451 = tpu.matmul %302, %450, %cst_342 {dimension_numbers = #tpu.dot_dimension_numbers<[1], [0], [0], [1], [0, 0, 1, 1], [], []>} : vector<32x32xf32>, vector<32x8xf32>, vector<32x8xf32> -> vector<32x8xf32>
    %c1_343 = arith.constant 1 : index
    %c3_344 = arith.constant 3 : index
    %c0_345 = arith.constant 0 : index
    %c0_346 = arith.constant 0 : index
    %452 = vector.load %arg12[%c1_343, %c3_344, %c0_345, %c0_346] : memref<2x4x1x8xf32, #tpu.memory_space<vmem>>, vector<1x1x1x8xf32>
    %453 = vector.shape_cast %452 : vector<1x1x1x8xf32> to vector<1x8xf32>
    %454 = vector.broadcast %453 : vector<1x8xf32> to vector<32x8xf32>
    %455 = arith.addf %451, %454 : vector<32x8xf32>
    %456 = vector.shape_cast %455 : vector<32x8xf32> to vector<2x16x8xf32>
    %cst_347 = arith.constant dense<0.000000e+00> : vector<2x16x16xf32>
    %457 = tpu.matmul %440, %448, %cst_347 {dimension_numbers = #tpu.dot_dimension_numbers<[2], [2], [1], [1], [0, 0, 0, 1, 1, 1], [0], [0]>} : vector<2x16x8xf32>, vector<2x16x8xf32>, vector<2x16x16xf32> -> vector<2x16x16xf32>
    %cst_348 = arith.constant 0.353553385 : f32
    %458 = vector.broadcast %cst_348 : f32 to vector<2x16x16xf32>
    %459 = arith.mulf %457, %458 : vector<2x16x16xf32>
    %cst_349 = arith.constant dense<0xFF800000> : vector<2x16xf32>
    %460 = vector.multi_reduction <maximumf>, %459, %cst_349 [2] : vector<2x16x16xf32> to vector<2x16xf32>
    %461 = vector.shape_cast %460 : vector<2x16xf32> to vector<2x16x1xf32>
    %462 = vector.broadcast %461 : vector<2x16x1xf32> to vector<2x16x16xf32>
    %463 = arith.subf %459, %462 : vector<2x16x16xf32>
    %464 = math.exp %463 : vector<2x16x16xf32>
    %cst_350 = arith.constant dense<0.000000e+00> : vector<2x16xf32>
    %465 = vector.multi_reduction <add>, %464, %cst_350 [2] : vector<2x16x16xf32> to vector<2x16xf32>
    %466 = vector.shape_cast %465 : vector<2x16xf32> to vector<2x16x1xf32>
    %467 = tpu.reciprocal %466 {approx = true} : vector<2x16x1xf32> -> vector<2x16x1xf32>
    %468 = vector.broadcast %467 : vector<2x16x1xf32> to vector<2x16x16xf32>
    %469 = arith.mulf %464, %468 : vector<2x16x16xf32>
    %cst_351 = arith.constant dense<0.000000e+00> : vector<2x16x8xf32>
    %470 = tpu.matmul %469, %456, %cst_351 {dimension_numbers = #tpu.dot_dimension_numbers<[2], [1], [1], [2], [0, 0, 0, 1, 1, 2], [0], [0]>} : vector<2x16x16xf32>, vector<2x16x8xf32>, vector<2x16x8xf32> -> vector<2x16x8xf32>
    %471 = vector.shape_cast %470 : vector<2x16x8xf32> to vector<32x8xf32>
    %c1_352 = arith.constant 1 : index
    %c3_353 = arith.constant 3 : index
    %c0_354 = arith.constant 0 : index
    %c0_355 = arith.constant 0 : index
    %472 = vector.load %arg13[%c1_352, %c3_353, %c0_354, %c0_355] : memref<2x4x8x32xf32, #tpu.memory_space<vmem>>, vector<1x1x8x32xf32>
    %473 = vector.shape_cast %472 : vector<1x1x8x32xf32> to vector<8x32xf32>
    %cst_356 = arith.constant dense<0.000000e+00> : vector<32x32xf32>
    %474 = tpu.matmul %471, %473, %cst_356 {dimension_numbers = #tpu.dot_dimension_numbers<[1], [0], [0], [1], [0, 0, 1, 1], [], []>} : vector<32x8xf32>, vector<8x32xf32>, vector<32x32xf32> -> vector<32x32xf32>
    %475 = arith.addf %432, %474 : vector<32x32xf32>
    %476 = arith.addf %278, %475 : vector<32x32xf32>
    %c1_357 = arith.constant 1 : index
    %c0_358 = arith.constant 0 : index
    %c0_359 = arith.constant 0 : index
    %477 = vector.load %arg14[%c1_357, %c0_358, %c0_359] : memref<2x1x32xf32, #tpu.memory_space<vmem>>, vector<1x1x32xf32>
    %478 = vector.shape_cast %477 : vector<1x1x32xf32> to vector<1x32xf32>
    %479 = vector.broadcast %478 : vector<1x32xf32> to vector<32x32xf32>
    %480 = arith.addf %476, %479 : vector<32x32xf32>
    %c1_360 = arith.constant 1 : index
    %c0_361 = arith.constant 0 : index
    %c0_362 = arith.constant 0 : index
    %481 = vector.load %arg15[%c1_360, %c0_361, %c0_362] : memref<2x1x32xf32, #tpu.memory_space<vmem>>, vector<1x1x32xf32>
    %482 = vector.shape_cast %481 : vector<1x1x32xf32> to vector<1x32xf32>
    %c1_363 = arith.constant 1 : index
    %c0_364 = arith.constant 0 : index
    %c0_365 = arith.constant 0 : index
    %483 = vector.load %arg16[%c1_363, %c0_364, %c0_365] : memref<2x1x32xf32, #tpu.memory_space<vmem>>, vector<1x1x32xf32>
    %484 = vector.shape_cast %483 : vector<1x1x32xf32> to vector<1x32xf32>
    %cst_366 = arith.constant dense<0.000000e+00> : vector<32xf32>
    %485 = vector.multi_reduction <add>, %480, %cst_366 [1] : vector<32x32xf32> to vector<32xf32>
    %486 = vector.shape_cast %485 : vector<32xf32> to vector<32x1xf32>
    %cst_367 = arith.constant 3.200000e+01 : f32
    %487 = vector.broadcast %cst_367 : f32 to vector<32x1xf32>
    %488 = arith.divf %486, %487 : vector<32x1xf32>
    %489 = vector.broadcast %488 : vector<32x1xf32> to vector<32x32xf32>
    %490 = arith.subf %480, %489 : vector<32x32xf32>
    %491 = arith.mulf %490, %490 : vector<32x32xf32>
    %cst_368 = arith.constant dense<0.000000e+00> : vector<32xf32>
    %492 = vector.multi_reduction <add>, %491, %cst_368 [1] : vector<32x32xf32> to vector<32xf32>
    %493 = vector.shape_cast %492 : vector<32xf32> to vector<32x1xf32>
    %cst_369 = arith.constant 3.200000e+01 : f32
    %494 = vector.broadcast %cst_369 : f32 to vector<32x1xf32>
    %495 = arith.divf %493, %494 : vector<32x1xf32>
    %cst_370 = arith.constant 9.99999974E-6 : f32
    %496 = vector.broadcast %cst_370 : f32 to vector<32x1xf32>
    %497 = arith.addf %495, %496 : vector<32x1xf32>
    %498 = math.rsqrt %497 : vector<32x1xf32>
    %499 = vector.broadcast %498 : vector<32x1xf32> to vector<32x32xf32>
    %500 = arith.mulf %490, %499 : vector<32x32xf32>
    %501 = vector.broadcast %482 : vector<1x32xf32> to vector<32x32xf32>
    %502 = arith.mulf %500, %501 : vector<32x32xf32>
    %503 = vector.broadcast %484 : vector<1x32xf32> to vector<32x32xf32>
    %504 = arith.addf %502, %503 : vector<32x32xf32>
    %c1_371 = arith.constant 1 : index
    %c0_372 = arith.constant 0 : index
    %c0_373 = arith.constant 0 : index
    %505 = vector.load %arg17[%c1_371, %c0_372, %c0_373] : memref<2x32x128xf32, #tpu.memory_space<vmem>>, vector<1x32x128xf32>
    %506 = vector.shape_cast %505 : vector<1x32x128xf32> to vector<32x128xf32>
    %cst_374 = arith.constant dense<0.000000e+00> : vector<32x128xf32>
    %507 = tpu.matmul %504, %506, %cst_374 {dimension_numbers = #tpu.dot_dimension_numbers<[1], [0], [0], [1], [0, 0, 1, 1], [], []>} : vector<32x32xf32>, vector<32x128xf32>, vector<32x128xf32> -> vector<32x128xf32>
    %c1_375 = arith.constant 1 : index
    %c0_376 = arith.constant 0 : index
    %c0_377 = arith.constant 0 : index
    %508 = vector.load %arg18[%c1_375, %c0_376, %c0_377] : memref<2x1x128xf32, #tpu.memory_space<vmem>>, vector<1x1x128xf32>
    %509 = vector.shape_cast %508 : vector<1x1x128xf32> to vector<1x128xf32>
    %510 = vector.broadcast %509 : vector<1x128xf32> to vector<32x128xf32>
    %511 = arith.addf %507, %510 : vector<32x128xf32>
    %cst_378 = arith.constant 5.000000e-01 : f32
    %512 = vector.broadcast %cst_378 : f32 to vector<32x128xf32>
    %513 = arith.mulf %512, %511 : vector<32x128xf32>
    %cst_379 = arith.constant 4.471500e-02 : f32
    %514 = vector.broadcast %cst_379 : f32 to vector<32x128xf32>
    %515 = arith.mulf %514, %511 : vector<32x128xf32>
    %516 = arith.mulf %515, %511 : vector<32x128xf32>
    %517 = arith.mulf %516, %511 : vector<32x128xf32>
    %518 = arith.addf %511, %517 : vector<32x128xf32>
    %cst_380 = arith.constant 0.797884583 : f32
    %519 = vector.broadcast %cst_380 : f32 to vector<32x128xf32>
    %520 = arith.mulf %519, %518 : vector<32x128xf32>
    %521 = math.tanh %520 : vector<32x128xf32>
    %cst_381 = arith.constant 1.000000e+00 : f32
    %522 = vector.broadcast %cst_381 : f32 to vector<32x128xf32>
    %523 = arith.addf %522, %521 : vector<32x128xf32>
    %524 = arith.mulf %513, %523 : vector<32x128xf32>
    %c1_382 = arith.constant 1 : index
    %c0_383 = arith.constant 0 : index
    %c0_384 = arith.constant 0 : index
    %525 = vector.load %arg19[%c1_382, %c0_383, %c0_384] : memref<2x128x32xf32, #tpu.memory_space<vmem>>, vector<1x128x32xf32>
    %526 = vector.shape_cast %525 : vector<1x128x32xf32> to vector<128x32xf32>
    %cst_385 = arith.constant dense<0.000000e+00> : vector<32x32xf32>
    %527 = tpu.matmul %524, %526, %cst_385 {dimension_numbers = #tpu.dot_dimension_numbers<[1], [0], [0], [1], [0, 0, 1, 1], [], []>} : vector<32x128xf32>, vector<128x32xf32>, vector<32x32xf32> -> vector<32x32xf32>
    %c1_386 = arith.constant 1 : index
    %c0_387 = arith.constant 0 : index
    %c0_388 = arith.constant 0 : index
    %528 = vector.load %arg20[%c1_386, %c0_387, %c0_388] : memref<2x1x32xf32, #tpu.memory_space<vmem>>, vector<1x1x32xf32>
    %529 = vector.shape_cast %528 : vector<1x1x32xf32> to vector<1x32xf32>
    %530 = vector.broadcast %529 : vector<1x32xf32> to vector<32x32xf32>
    %531 = arith.addf %527, %530 : vector<32x32xf32>
    %532 = arith.addf %480, %531 : vector<32x32xf32>
    %c0_389 = arith.constant 0 : index
    %c0_390 = arith.constant 0 : index
    %533 = vector.load %arg21[%c0_389, %c0_390] : memref<1x32xf32, #tpu.memory_space<vmem>>, vector<1x32xf32>
    %c0_391 = arith.constant 0 : index
    %c0_392 = arith.constant 0 : index
    %534 = vector.load %arg22[%c0_391, %c0_392] : memref<1x32xf32, #tpu.memory_space<vmem>>, vector<1x32xf32>
    %cst_393 = arith.constant dense<0.000000e+00> : vector<32xf32>
    %535 = vector.multi_reduction <add>, %532, %cst_393 [1] : vector<32x32xf32> to vector<32xf32>
    %536 = vector.shape_cast %535 : vector<32xf32> to vector<32x1xf32>
    %cst_394 = arith.constant 3.200000e+01 : f32
    %537 = vector.broadcast %cst_394 : f32 to vector<32x1xf32>
    %538 = arith.divf %536, %537 : vector<32x1xf32>
    %539 = vector.broadcast %538 : vector<32x1xf32> to vector<32x32xf32>
    %540 = arith.subf %532, %539 : vector<32x32xf32>
    %541 = arith.mulf %540, %540 : vector<32x32xf32>
    %cst_395 = arith.constant dense<0.000000e+00> : vector<32xf32>
    %542 = vector.multi_reduction <add>, %541, %cst_395 [1] : vector<32x32xf32> to vector<32xf32>
    %543 = vector.shape_cast %542 : vector<32xf32> to vector<32x1xf32>
    %cst_396 = arith.constant 3.200000e+01 : f32
    %544 = vector.broadcast %cst_396 : f32 to vector<32x1xf32>
    %545 = arith.divf %543, %544 : vector<32x1xf32>
    %cst_397 = arith.constant 9.99999974E-6 : f32
    %546 = vector.broadcast %cst_397 : f32 to vector<32x1xf32>
    %547 = arith.addf %545, %546 : vector<32x1xf32>
    %548 = math.rsqrt %547 : vector<32x1xf32>
    %549 = vector.broadcast %548 : vector<32x1xf32> to vector<32x32xf32>
    %550 = arith.mulf %540, %549 : vector<32x32xf32>
    %551 = vector.broadcast %533 : vector<1x32xf32> to vector<32x32xf32>
    %552 = arith.mulf %550, %551 : vector<32x32xf32>
    %553 = vector.broadcast %534 : vector<1x32xf32> to vector<32x32xf32>
    %554 = arith.addf %552, %553 : vector<32x32xf32>
    %c0_398 = arith.constant 0 : index
    %c0_399 = arith.constant 0 : index
    %555 = vector.load %arg23[%c0_398, %c0_399] : memref<32x128xf32, #tpu.memory_space<vmem>>, vector<32x128xf32>
    %cst_400 = arith.constant dense<0.000000e+00> : vector<32x128xf32>
    %556 = tpu.matmul %554, %555, %cst_400 {dimension_numbers = #tpu.dot_dimension_numbers<[1], [0], [0], [1], [0, 0, 1, 1], [], []>} : vector<32x32xf32>, vector<32x128xf32>, vector<32x128xf32> -> vector<32x128xf32>
    %c0_401 = arith.constant 0 : index
    %c0_402 = arith.constant 0 : index
    %557 = vector.load %arg24[%c0_401, %c0_402] : memref<1x128xf32, #tpu.memory_space<vmem>>, vector<1x128xf32>
    %558 = vector.broadcast %557 : vector<1x128xf32> to vector<32x128xf32>
    %559 = arith.addf %556, %558 : vector<32x128xf32>
    %560 = vector.shape_cast %559 : vector<32x128xf32> to vector<2x16x128xf32>
    %c0_403 = arith.constant 0 : index
    %c0_404 = arith.constant 0 : index
    %c0_405 = arith.constant 0 : index
    %561 = vector.load %arg25[%c0_403, %c0_404, %c0_405] : memref<2x16x128xf32, #tpu.memory_space<vmem>>, vector<2x16x128xf32>
    tpu.vector_store %arg25[%c0_403, %c0_404, %c0_405], %560 {strides = array<i32>} : memref<2x16x128xf32, #tpu.memory_space<vmem>>, vector<2x16x128xf32>,
    return
  }
  func.func @transform_0(%arg0: i32) -> (i32, i32) {
    %c0_i32 = arith.constant 0 : i32
    %c0_i32_0 = arith.constant 0 : i32
    return %arg0, %c0_i32 : i32, i32
  }
  func.func @transform_1(%arg0: i32) -> (i32, i32, i32) {
    %c0_i32 = arith.constant 0 : i32
    %c0_i32_0 = arith.constant 0 : i32
    %c0_i32_1 = arith.constant 0 : i32
    return %arg0, %c0_i32, %c0_i32_0 : i32, i32, i32
  }
  func.func @transform_2(%arg0: i32) -> (i32, i32) {
    %c0_i32 = arith.constant 0 : i32
    %c0_i32_0 = arith.constant 0 : i32
    %c0_i32_1 = arith.constant 0 : i32
    return %c0_i32, %c0_i32_0 : i32, i32
  }
  func.func @transform_3(%arg0: i32) -> (i32, i32) {
    %c0_i32 = arith.constant 0 : i32
    %c0_i32_0 = arith.constant 0 : i32
    %c0_i32_1 = arith.constant 0 : i32
    return %c0_i32, %c0_i32_0 : i32, i32
  }
  func.func @transform_4(%arg0: i32) -> (i32, i32, i32) {
    %c0_i32 = arith.constant 0 : i32
    %c0_i32_0 = arith.constant 0 : i32
    %c0_i32_1 = arith.constant 0 : i32
    %c0_i32_2 = arith.constant 0 : i32
    return %c0_i32, %c0_i32_0, %c0_i32_1 : i32, i32, i32
  }
  func.func @transform_5(%arg0: i32) -> (i32, i32, i32) {
    %c0_i32 = arith.constant 0 : i32
    %c0_i32_0 = arith.constant 0 : i32
    %c0_i32_1 = arith.constant 0 : i32
    %c0_i32_2 = arith.constant 0 : i32
    return %c0_i32, %c0_i32_0, %c0_i32_1 : i32, i32, i32
  }
  func.func @transform_6(%arg0: i32) -> (i32, i32, i32, i32) {
    %c0_i32 = arith.constant 0 : i32
    %c0_i32_0 = arith.constant 0 : i32
    %c0_i32_1 = arith.constant 0 : i32
    %c0_i32_2 = arith.constant 0 : i32
    %c0_i32_3 = arith.constant 0 : i32
    return %c0_i32, %c0_i32_0, %c0_i32_1, %c0_i32_2 : i32, i32, i32, i32
  }
  func.func @transform_7(%arg0: i32) -> (i32, i32, i32, i32) {
    %c0_i32 = arith.constant 0 : i32
    %c0_i32_0 = arith.constant 0 : i32
    %c0_i32_1 = arith.constant 0 : i32
    %c0_i32_2 = arith.constant 0 : i32
    %c0_i32_3 = arith.constant 0 : i32
    return %c0_i32, %c0_i32_0, %c0_i32_1, %c0_i32_2 : i32, i32, i32, i32
  }
  func.func @transform_8(%arg0: i32) -> (i32, i32, i32, i32) {
    %c0_i32 = arith.constant 0 : i32
    %c0_i32_0 = arith.constant 0 : i32
    %c0_i32_1 = arith.constant 0 : i32
    %c0_i32_2 = arith.constant 0 : i32
    %c0_i32_3 = arith.constant 0 : i32
    return %c0_i32, %c0_i32_0, %c0_i32_1, %c0_i32_2 : i32, i32, i32, i32
  }
  func.func @transform_9(%arg0: i32) -> (i32, i32, i32, i32) {
    %c0_i32 = arith.constant 0 : i32
    %c0_i32_0 = arith.constant 0 : i32
    %c0_i32_1 = arith.constant 0 : i32
    %c0_i32_2 = arith.constant 0 : i32
    %c0_i32_3 = arith.constant 0 : i32
    return %c0_i32, %c0_i32_0, %c0_i32_1, %c0_i32_2 : i32, i32, i32, i32
  }
  func.func @transform_10(%arg0: i32) -> (i32, i32, i32, i32) {
    %c0_i32 = arith.constant 0 : i32
    %c0_i32_0 = arith.constant 0 : i32
    %c0_i32_1 = arith.constant 0 : i32
    %c0_i32_2 = arith.constant 0 : i32
    %c0_i32_3 = arith.constant 0 : i32
    return %c0_i32, %c0_i32_0, %c0_i32_1, %c0_i32_2 : i32, i32, i32, i32
  }
  func.func @transform_11(%arg0: i32) -> (i32, i32, i32, i32) {
    %c0_i32 = arith.constant 0 : i32
    %c0_i32_0 = arith.constant 0 : i32
    %c0_i32_1 = arith.constant 0 : i32
    %c0_i32_2 = arith.constant 0 : i32
    %c0_i32_3 = arith.constant 0 : i32
    return %c0_i32, %c0_i32_0, %c0_i32_1, %c0_i32_2 : i32, i32, i32, i32
  }
  func.func @transform_12(%arg0: i32) -> (i32, i32, i32, i32) {
    %c0_i32 = arith.constant 0 : i32
    %c0_i32_0 = arith.constant 0 : i32
    %c0_i32_1 = arith.constant 0 : i32
    %c0_i32_2 = arith.constant 0 : i32
    %c0_i32_3 = arith.constant 0 : i32
    return %c0_i32, %c0_i32_0, %c0_i32_1, %c0_i32_2 : i32, i32, i32, i32
  }
  func.func @transform_13(%arg0: i32) -> (i32, i32, i32) {
    %c0_i32 = arith.constant 0 : i32
    %c0_i32_0 = arith.constant 0 : i32
    %c0_i32_1 = arith.constant 0 : i32
    %c0_i32_2 = arith.constant 0 : i32
    return %c0_i32, %c0_i32_0, %c0_i32_1 : i32, i32, i32
  }
  func.func @transform_14(%arg0: i32) -> (i32, i32, i32) {
    %c0_i32 = arith.constant 0 : i32
    %c0_i32_0 = arith.constant 0 : i32
    %c0_i32_1 = arith.constant 0 : i32
    %c0_i32_2 = arith.constant 0 : i32
    return %c0_i32, %c0_i32_0, %c0_i32_1 : i32, i32, i32
  }
  func.func @transform_15(%arg0: i32) -> (i32, i32, i32) {
    %c0_i32 = arith.constant 0 : i32
    %c0_i32_0 = arith.constant 0 : i32
    %c0_i32_1 = arith.constant 0 : i32
    %c0_i32_2 = arith.constant 0 : i32
    return %c0_i32, %c0_i32_0, %c0_i32_1 : i32, i32, i32
  }
  func.func @transform_16(%arg0: i32) -> (i32, i32, i32) {
    %c0_i32 = arith.constant 0 : i32
    %c0_i32_0 = arith.constant 0 : i32
    %c0_i32_1 = arith.constant 0 : i32
    %c0_i32_2 = arith.constant 0 : i32
    return %c0_i32, %c0_i32_0, %c0_i32_1 : i32, i32, i32
  }
  func.func @transform_17(%arg0: i32) -> (i32, i32, i32) {
    %c0_i32 = arith.constant 0 : i32
    %c0_i32_0 = arith.constant 0 : i32
    %c0_i32_1 = arith.constant 0 : i32
    %c0_i32_2 = arith.constant 0 : i32
    return %c0_i32, %c0_i32_0, %c0_i32_1 : i32, i32, i32
  }
  func.func @transform_18(%arg0: i32) -> (i32, i32, i32) {
    %c0_i32 = arith.constant 0 : i32
    %c0_i32_0 = arith.constant 0 : i32
    %c0_i32_1 = arith.constant 0 : i32
    %c0_i32_2 = arith.constant 0 : i32
    return %c0_i32, %c0_i32_0, %c0_i32_1 : i32, i32, i32
  }
  func.func @transform_19(%arg0: i32) -> (i32, i32, i32) {
    %c0_i32 = arith.constant 0 : i32
    %c0_i32_0 = arith.constant 0 : i32
    %c0_i32_1 = arith.constant 0 : i32
    %c0_i32_2 = arith.constant 0 : i32
    return %c0_i32, %c0_i32_0, %c0_i32_1 : i32, i32, i32
  }
  func.func @transform_20(%arg0: i32) -> (i32, i32) {
    %c0_i32 = arith.constant 0 : i32
    %c0_i32_0 = arith.constant 0 : i32
    %c0_i32_1 = arith.constant 0 : i32
    return %c0_i32, %c0_i32_0 : i32, i32
  }
  func.func @transform_21(%arg0: i32) -> (i32, i32) {
    %c0_i32 = arith.constant 0 : i32
    %c0_i32_0 = arith.constant 0 : i32
    %c0_i32_1 = arith.constant 0 : i32
    return %c0_i32, %c0_i32_0 : i32, i32
  }
  func.func @transform_22(%arg0: i32) -> (i32, i32) {
    %c0_i32 = arith.constant 0 : i32
    %c0_i32_0 = arith.constant 0 : i32
    %c0_i32_1 = arith.constant 0 : i32
    return %c0_i32, %c0_i32_0 : i32, i32
  }
  func.func @transform_23(%arg0: i32) -> (i32, i32) {
    %c0_i32 = arith.constant 0 : i32
    %c0_i32_0 = arith.constant 0 : i32
    %c0_i32_1 = arith.constant 0 : i32
    return %c0_i32, %c0_i32_0 : i32, i32
  }
  func.func @transform_24(%arg0: i32) -> (i32, i32, i32) {
    %c0_i32 = arith.constant 0 : i32
    %c0_i32_0 = arith.constant 0 : i32
    %c0_i32_1 = arith.constant 0 : i32
    return %arg0, %c0_i32, %c0_i32_0 : i32, i32, i32
  }
}

</mosaic_0001>

<llo_original>
// kernel: tpu_custom_call.1
$region0: #{tpu_custom_call.1}
  #allocation0 [shape = 'u32[]', space=smem, size = 0x4, offset = 0x4, fixed_abs, tag = 'smem constant byte address 0x4 - core index']
  #allocation1 [shape = 'u32[144,128]{1,0:T(1,128)}', space=vmem, size = 0x12000, scoped, tag = 'internal scratch']
  %s0 = inlined_call_operand.vmem [shape: s32[2,16], index: 0, kind: input, shape index: {}]
  %s1 = inlined_call_operand.vmem [shape: f32[2,4,32], index: 1, kind: input, shape index: {}]
  %s2 = inlined_call_operand.vmem [shape: f32[1,32], index: 2, kind: input, shape index: {}]
  %s3 = inlined_call_operand.vmem [shape: f32[16,32], index: 3, kind: input, shape index: {}]
  %s4 = inlined_call_operand.vmem [shape: f32[2,1,32], index: 4, kind: input, shape index: {}]
  %s5 = inlined_call_operand.vmem [shape: f32[2,1,32], index: 5, kind: input, shape index: {}]
  %s6 = inlined_call_operand.vmem [shape: f32[2,4,32,8], index: 6, kind: input, shape index: {}]
  %s7 = inlined_call_operand.vmem [shape: f32[2,4,1,8], index: 7, kind: input, shape index: {}]
  %s8 = inlined_call_operand.vmem [shape: f32[2,4,32,8], index: 8, kind: input, shape index: {}]
  %s9 = inlined_call_operand.vmem [shape: f32[2,4,1,8], index: 9, kind: input, shape index: {}]
  %s10 = inlined_call_operand.vmem [shape: f32[2,4,32,8], index: 10, kind: input, shape index: {}]
  %s11 = inlined_call_operand.vmem [shape: f32[2,4,1,8], index: 11, kind: input, shape index: {}]
  %s12 = inlined_call_operand.vmem [shape: f32[2,4,8,32], index: 12, kind: input, shape index: {}]
  %s13 = inlined_call_operand.vmem [shape: f32[2,1,32], index: 13, kind: input, shape index: {}]
  %s14 = inlined_call_operand.vmem [shape: f32[2,1,32], index: 14, kind: input, shape index: {}]
  %s15 = inlined_call_operand.vmem [shape: f32[2,1,32], index: 15, kind: input, shape index: {}]
  %s16 = inlined_call_operand.vmem [shape: f32[2,32,128], index: 16, kind: input, shape index: {}]
  %s17 = inlined_call_operand.vmem [shape: f32[2,1,128], index: 17, kind: input, shape index: {}]
  %s18 = inlined_call_operand.vmem [shape: f32[2,128,32], index: 18, kind: input, shape index: {}]
  %s19 = inlined_call_operand.vmem [shape: f32[2,1,32], index: 19, kind: input, shape index: {}]
  %s20 = inlined_call_operand.vmem [shape: f32[1,32], index: 20, kind: input, shape index: {}]
  %s21 = inlined_call_operand.vmem [shape: f32[1,32], index: 21, kind: input, shape index: {}]
  %s22 = inlined_call_operand.vmem [shape: f32[32,128], index: 22, kind: input, shape index: {}]
  %s23 = inlined_call_operand.vmem [shape: f32[1,128], index: 23, kind: input, shape index: {}]
  %s24 = inlined_call_operand.hbm [shape: f32[2,16,128], index: 24, kind: output, shape index: {}]
  %s25 = sld [smem:[#allocation0]]
  $region106: #{tpu_custom_call.1} parent=0
    _
  %s27 = ssub.s32 1, %s25
  %s28 = scalar_select 0, %s27, %s25
  $region1: #{tpu_custom_call.1} parent=0
    #allocation2 [shape = 'u8[16384]{0}', space=vmem, size = 0x4000, scoped, tag = 'output window, operand 0, single buffered']
    #allocation3 [shape = 's32[1]{0}', space=sflag, size = 0x4, scoped, tag = 'scoped memory for tpu_custom_call.1']
    %29 = vsyncpa [#allocation3], 0
    // Predicated region
    $region2: #{tpu_custom_call.1} parent=1 // pred_check
      _
    $region3: #{tpu_custom_call.1} parent=1 // pred_check_branch
      %31 = sbr.rel (0) target = $region5
    $region4: #{tpu_custom_call.1} parent=1 // pred_region
      _
    $region5: #{tpu_custom_call.1} parent=1 // pred_fallthru
      _
    // Predicated region
    $region6: #{tpu_custom_call.1} parent=1 // pred_check
      _
    $region7: #{tpu_custom_call.1} parent=1 // pred_check_branch
      %33 = sbr.rel (0) target = $region9
    $region8: #{tpu_custom_call.1} parent=1 // pred_region
      _
    $region9: #{tpu_custom_call.1} parent=1 // pred_fallthru
      _
    // Predicated region
    $region10: #{tpu_custom_call.1} parent=1 // pred_check
      _
    $region11: #{tpu_custom_call.1} parent=1 // pred_check_branch
      %35 = sbr.rel (0) target = $region13
    $region12: #{tpu_custom_call.1} parent=1 // pred_region
      _
    $region13: #{tpu_custom_call.1} parent=1 // pred_fallthru
      _
    // Predicated region
    $region14: #{tpu_custom_call.1} parent=1 // pred_check
      _
    $region15: #{tpu_custom_call.1} parent=1 // pred_check_branch
      %37 = sbr.rel (0) target = $region17
    $region16: #{tpu_custom_call.1} parent=1 // pred_region
      _
    $region17: #{tpu_custom_call.1} parent=1 // pred_fallthru
      _
    // Predicated region
    $region18: #{tpu_custom_call.1} parent=1 // pred_check
      _
    $region19: #{tpu_custom_call.1} parent=1 // pred_check_branch
      %39 = sbr.rel (0) target = $region21
    $region20: #{tpu_custom_call.1} parent=1 // pred_region
      _
    $region21: #{tpu_custom_call.1} parent=1 // pred_fallthru
      _
    // Predicated region
    $region22: #{tpu_custom_call.1} parent=1 // pred_check
      _
    $region23: #{tpu_custom_call.1} parent=1 // pred_check_branch
      %41 = sbr.rel (0) target = $region25
    $region24: #{tpu_custom_call.1} parent=1 // pred_region
      _
    $region25: #{tpu_custom_call.1} parent=1 // pred_fallthru
      _
    // Predicated region
    $region26: #{tpu_custom_call.1} parent=1 // pred_check
      _
    $region27: #{tpu_custom_call.1} parent=1 // pred_check_branch
      %43 = sbr.rel (0) target = $region29
    $region28: #{tpu_custom_call.1} parent=1 // pred_region
      _
    $region29: #{tpu_custom_call.1} parent=1 // pred_fallthru
      _
    // Predicated region
    $region30: #{tpu_custom_call.1} parent=1 // pred_check
      _
    $region31: #{tpu_custom_call.1} parent=1 // pred_check_branch
      %45 = sbr.rel (0) target = $region33
    $region32: #{tpu_custom_call.1} parent=1 // pred_region
      _
    $region33: #{tpu_custom_call.1} parent=1 // pred_fallthru
      _
    // Predicated region
    $region34: #{tpu_custom_call.1} parent=1 // pred_check
      _
    $region35: #{tpu_custom_call.1} parent=1 // pred_check_branch
      %47 = sbr.rel (0) target = $region37
    $region36: #{tpu_custom_call.1} parent=1 // pred_region
      _
    $region37: #{tpu_custom_call.1} parent=1 // pred_fallthru
      _
    // Predicated region
    $region38: #{tpu_custom_call.1} parent=1 // pred_check
      _
    $region39: #{tpu_custom_call.1} parent=1 // pred_check_branch
      %49 = sbr.rel (0) target = $region41
    $region40: #{tpu_custom_call.1} parent=1 // pred_region
      _
    $region41: #{tpu_custom_call.1} parent=1 // pred_fallthru
      _
    // Predicated region
    $region42: #{tpu_custom_call.1} parent=1 // pred_check
      _
    $region43: #{tpu_custom_call.1} parent=1 // pred_check_branch
      %51 = sbr.rel (0) target = $region45
    $region44: #{tpu_custom_call.1} parent=1 // pred_region
      _
    $region45: #{tpu_custom_call.1} parent=1 // pred_fallthru
      _
    // Predicated region
    $region46: #{tpu_custom_call.1} parent=1 // pred_check
      _
    $region47: #{tpu_custom_call.1} parent=1 // pred_check_branch
      %53 = sbr.rel (0) target = $region49
    $region48: #{tpu_custom_call.1} parent=1 // pred_region
      _
    $region49: #{tpu_custom_call.1} parent=1 // pred_fallthru
      _
    // Predicated region
    $region50: #{tpu_custom_call.1} parent=1 // pred_check
      _
    $region51: #{tpu_custom_call.1} parent=1 // pred_check_branch
      %55 = sbr.rel (0) target = $region53
    $region52: #{tpu_custom_call.1} parent=1 // pred_region
      _
    $region53: #{tpu_custom_call.1} parent=1 // pred_fallthru
      _
    // Predicated region
    $region54: #{tpu_custom_call.1} parent=1 // pred_check
      _
    $region55: #{tpu_custom_call.1} parent=1 // pred_check_branch
      %57 = sbr.rel (0) target = $region57
    $region56: #{tpu_custom_call.1} parent=1 // pred_region
      _
    $region57: #{tpu_custom_call.1} parent=1 // pred_fallthru
      _
    // Predicated region
    $region58: #{tpu_custom_call.1} parent=1 // pred_check
      _
    $region59: #{tpu_custom_call.1} parent=1 // pred_check_branch
      %59 = sbr.rel (0) target = $region61
    $region60: #{tpu_custom_call.1} parent=1 // pred_region
      _
    $region61: #{tpu_custom_call.1} parent=1 // pred_fallthru
      _
    // Predicated region
    $region62: #{tpu_custom_call.1} parent=1 // pred_check
      _
    $region63: #{tpu_custom_call.1} parent=1 // pred_check_branch
      %61 = sbr.rel (0) target = $region65
    $region64: #{tpu_custom_call.1} parent=1 // pred_region
      _
    $region65: #{tpu_custom_call.1} parent=1 // pred_fallthru
      _
    // Predicated region
    $region66: #{tpu_custom_call.1} parent=1 // pred_check
      _
    $region67: #{tpu_custom_call.1} parent=1 // pred_check_branch
      %63 = sbr.rel (0) target = $region69
    $region68: #{tpu_custom_call.1} parent=1 // pred_region
      _
    $region69: #{tpu_custom_call.1} parent=1 // pred_fallthru
      _
    // Predicated region
    $region70: #{tpu_custom_call.1} parent=1 // pred_check
      _
    $region71: #{tpu_custom_call.1} parent=1 // pred_check_branch
      %65 = sbr.rel (0) target = $region73
    $region72: #{tpu_custom_call.1} parent=1 // pred_region
      _
    $region73: #{tpu_custom_call.1} parent=1 // pred_fallthru
      _
    // Predicated region
    $region74: #{tpu_custom_call.1} parent=1 // pred_check
      _
    $region75: #{tpu_custom_call.1} parent=1 // pred_check_branch
      %67 = sbr.rel (0) target = $region77
    $region76: #{tpu_custom_call.1} parent=1 // pred_region
      _
    $region77: #{tpu_custom_call.1} parent=1 // pred_fallthru
      _
    // Predicated region
    $region78: #{tpu_custom_call.1} parent=1 // pred_check
      _
    $region79: #{tpu_custom_call.1} parent=1 // pred_check_branch
      %69 = sbr.rel (0) target = $region81
    $region80: #{tpu_custom_call.1} parent=1 // pred_region
      _
    $region81: #{tpu_custom_call.1} parent=1 // pred_fallthru
      _
    // Predicated region
    $region82: #{tpu_custom_call.1} parent=1 // pred_check
      _
    $region83: #{tpu_custom_call.1} parent=1 // pred_check_branch
      %71 = sbr.rel (0) target = $region85
    $region84: #{tpu_custom_call.1} parent=1 // pred_region
      _
    $region85: #{tpu_custom_call.1} parent=1 // pred_fallthru
      _
    // Predicated region
    $region86: #{tpu_custom_call.1} parent=1 // pred_check
      _
    $region87: #{tpu_custom_call.1} parent=1 // pred_check_branch
      %73 = sbr.rel (0) target = $region89
    $region88: #{tpu_custom_call.1} parent=1 // pred_region
      _
    $region89: #{tpu_custom_call.1} parent=1 // pred_fallthru
      _
    // Predicated region
    $region90: #{tpu_custom_call.1} parent=1 // pred_check
      _
    $region91: #{tpu_custom_call.1} parent=1 // pred_check_branch
      %75 = sbr.rel (0) target = $region93
    $region92: #{tpu_custom_call.1} parent=1 // pred_region
      _
    $region93: #{tpu_custom_call.1} parent=1 // pred_fallthru
      _
    // Predicated region
    $region94: #{tpu_custom_call.1} parent=1 // pred_check
      _
    $region95: #{tpu_custom_call.1} parent=1 // pred_check_branch
      %77 = sbr.rel (0) target = $region97
    $region96: #{tpu_custom_call.1} parent=1 // pred_region
      _
    $region97: #{tpu_custom_call.1} parent=1 // pred_fallthru
      _
    %v78 = vld [vmem:[%s0] sm:$0x3]
    %v79 = vld [vmem:[%s1] sm:$0xf]
    %v80 = vld [vmem:[%s1 + $0x4] sm:$0xf]
    %v81 = vld [vmem:[%s2] sm:$0x1]
    %v82 = vld [vmem:[%s3] sm:$0xff]
    %v83 = vld [vmem:[%s3 + $0x8] sm:$0xff]
    %v84 = vlaneseq
    %v85 = vand.u32 %v84, 127
    %v86 = vlaneseq
    %v87 = vshrl.u32 %v86, 7
    %v88 = vsub.s32 0, %v87
    %v89 = vrot.slane %v78, %v88
    %91 = vbcast.lane.b32.xlu0 %v89, 256
    %v92 = vpop.permute.xlu0 %91
    %s94 = sor.u32 256, 8
    %95 = vbcast.lane.b32.xlu0 %v89, %s94
    %v96 = vpop.permute.xlu0 %95
    %v97 = vlaneseq
    %v98 = vshrl.u32 %v97, 7
    %v99 = vsub.s32 1, %v98
    %v100 = vrot.slane %v78, %v99
    %102 = vbcast.lane.b32.xlu0 %v100, 256
    %v103 = vpop.permute.xlu0 %102
    %s105 = sor.u32 256, 8
    %106 = vbcast.lane.b32.xlu0 %v100, %s105
    %v107 = vpop.permute.xlu0 %106
    %vm108 = vcmp.eq.s32.totalorder %v92, %v85
    %vm109 = vcmp.eq.s32.totalorder %v96, %v85
    %vm110 = vcmp.eq.s32.totalorder %v103, %v85
    %vm111 = vcmp.eq.s32.totalorder %v107, %v85
    %v112 = vsel %vm108, 1, 0
    %v113 = vsel %vm109, 1, 0
    %v114 = vsel %vm110, 1, 0
    %v115 = vsel %vm111, 1, 0
    %v116 = vcvt.s32.f32 %v112
    %v117 = vcvt.s32.f32 %v113
    %v118 = vcvt.s32.f32 %v114
    %v119 = vcvt.s32.f32 %v115
    %vm120 = vcmp.ge.s32.totalorder %v78, 4
    %v121 = vsel %vm120, 1, 0
    %v122 = vcvt.s32.f32 %v121
    %v123 = vlaneseq
    %v124 = vshrl.u32 %v123, 7
    %v125 = vsub.s32 0, %v124
    %v126 = vrot.slane %v122, %v125
    %128 = vbcast.lane.b32.xlu0 %v126, 256
    %v129 = vpop.permute.xlu0 %128
    %s131 = sor.u32 256, 8
    %132 = vbcast.lane.b32.xlu0 %v126, %s131
    %v133 = vpop.permute.xlu0 %132
    %v134 = vlaneseq
    %v135 = vshrl.u32 %v134, 7
    %v136 = vsub.s32 1, %v135
    %v137 = vrot.slane %v122, %v136
    %139 = vbcast.lane.b32.xlu0 %v137, 256
    %v140 = vpop.permute.xlu0 %139
    %s142 = sor.u32 256, 8
    %143 = vbcast.lane.b32.xlu0 %v137, %s142
    %v144 = vpop.permute.xlu0 %143
    %v146 = vlaneseq
    %v147 = vshrl.u32 %v146, 7
    %v148 = vsub.s32 0, %v147
    %v149 = vrot.slane %v81, %v148
    %v151 = vmul.f32 %v129, %v149
    %v152 = vmul.f32 %v133, %v149
    %v153 = vmul.f32 %v140, %v149
    %v154 = vmul.f32 %v144, %v149
    %vm155 = vcmask 31744
    %v157 = vsel %vm155, %v116, 0
    %v160 = vsel %vm155, %v117, 0
    %vm162 = vcmask 1043456
    %v164 = vsel %vm162, %v79, 0
    %166 = vmatprep.subr.mxu0 0.0
    %167 = vmatpush1.msra.mxu0 %v164
    %168 = vmatprep.subr.mxu0 0.0
    %169 = vmatpush1.msra.mxu0 0.0
    %170 = vmatprep.subr.mxu0 0.0
    %171 = vmatpush1.msra.mxu0 0.0
    %172 = vmatprep.subr.mxu0 0.0
    %173 = vmatpush1.msra.mxu0 0.0
    %174 = vmatprep.subr.mxu0 0.0
    %175 = vmatpush1.msra.mxu0 0.0
    %176 = vmatprep.subr.mxu0 0.0
    %177 = vmatpush1.msra.mxu0 0.0
    %178 = vmatprep.subr.mxu0 0.0
    %179 = vmatpush1.msra.mxu0 0.0
    %180 = vmatprep.subr.mxu0 0.0
    %181 = vmatpush1.msra.mxu0 0.0
    %182 = vmatprep.subr.mxu0 0.0
    %183 = vmatpush1.msra.mxu0 0.0
    %184 = vmatprep.subr.mxu0 0.0
    %185 = vmatpush1.msra.mxu0 0.0
    %186 = vmatprep.subr.mxu0 0.0
    %187 = vmatpush1.msra.mxu0 0.0
    %188 = vmatprep.subr.mxu0 0.0
    %189 = vmatpush1.msra.mxu0 0.0
    %190 = vmatprep.subr.mxu0 0.0
    %191 = vmatpush1.msra.mxu0 0.0
    %192 = vmatprep.subr.mxu0 0.0
    %193 = vmatpush1.msra.mxu0 0.0
    %194 = vmatprep.subr.mxu0 0.0
    %195 = vmatpush1.msra.mxu0 0.0
    %196 = vmatprep.subr.mxu0 0.0
    %197 = vmatpush1.msra.mxu0 0.0
    %198 = vmatprep.subr.mxu0 0.0
    %199 = vmatpush1.msra.mxu0 0.0
    %200 = vmatprep.subr.mxu0 0.0
    %201 = vmatpush1.msra.mxu0 0.0
    %202 = vmatprep.subr.mxu0 0.0
    %203 = vmatpush1.msra.mxu0 0.0
    %204 = vmatprep.subr.mxu0 0.0
    %205 = vmatpush1.msra.mxu0 0.0
    %206 = vmatprep.subr.mxu0 0.0
    %207 = vmatpush1.msra.mxu0 0.0
    %208 = vmatprep.subr.mxu0 0.0
    %209 = vmatpush1.msra.mxu0 0.0
    %210 = vmatprep.subr.mxu0 0.0
    %211 = vmatpush1.msra.mxu0 0.0
    %212 = vmatprep.subr.mxu0 0.0
    %213 = vmatpush1.msra.mxu0 0.0
    %214 = vmatprep.subr.mxu0 0.0
    %215 = vmatpush1.msra.mxu0 0.0
    %216 = vmatprep.subr.mxu0 0.0
    %217 = vmatpush1.msra.mxu0 0.0
    %218 = vmatprep.subr.mxu0 0.0
    %219 = vmatpush1.msra.mxu0 0.0
    %220 = vmatprep.subr.mxu0 0.0
    %221 = vmatpush1.msra.mxu0 0.0
    %222 = vmatprep.subr.mxu0 0.0
    %223 = vmatpush1.msra.mxu0 0.0
    %224 = vmatprep.subr.mxu0 0.0
    %225 = vmatpush1.msra.mxu0 0.0
    %226 = vmatprep.subr.mxu0 0.0
    %227 = vmatpush1.msra.mxu0 0.0
    %228 = vmatprep.subr.mxu0 0.0
    %229 = vmatpush1.msra.mxu0 0.0
    %230 = vmatprep.mubr.f32.mxu0 0.0
    %231 = vmatmul.mubr.f32.gmra.mrb[0].mxu0 %v157
    %v232 = vpop.f32.mrb[0].mxu0
    %v233 = vadd.f32 %v151, %v232
    %v234 = vpop.f32.mrb[0].mxu0
    %235 = vmatprep.mubr.f32.mxu0 0.0
    %236 = vmatmul.mubr.f32.gmra.mrb[0].mxu0 %v160
    %v237 = vpop.f32.mrb[0].mxu0
    %v238 = vadd.f32 %v152, %v237
    %v239 = vpop.f32.mrb[0].mxu0
    %240 = vdwg.mxu0
    %v242 = vsel %vm155, %v118, 0
    %v245 = vsel %vm155, %v119, 0
    %v248 = vsel %vm162, %v80, 0
    %250 = vmatprep.subr.mxu0 0.0
    %251 = vmatpush1.msra.mxu0 %v248
    %252 = vmatprep.subr.mxu0 0.0
    %253 = vmatpush1.msra.mxu0 0.0
    %254 = vmatprep.subr.mxu0 0.0
    %255 = vmatpush1.msra.mxu0 0.0
    %256 = vmatprep.subr.mxu0 0.0
    %257 = vmatpush1.msra.mxu0 0.0
    %258 = vmatprep.subr.mxu0 0.0
    %259 = vmatpush1.msra.mxu0 0.0
    %260 = vmatprep.subr.mxu0 0.0
    %261 = vmatpush1.msra.mxu0 0.0
    %262 = vmatprep.subr.mxu0 0.0
    %263 = vmatpush1.msra.mxu0 0.0
    %264 = vmatprep.subr.mxu0 0.0
    %265 = vmatpush1.msra.mxu0 0.0
    %266 = vmatprep.subr.mxu0 0.0
    %267 = vmatpush1.msra.mxu0 0.0
    %268 = vmatprep.subr.mxu0 0.0
    %269 = vmatpush1.msra.mxu0 0.0
    %270 = vmatprep.subr.mxu0 0.0
    %271 = vmatpush1.msra.mxu0 0.0
    %272 = vmatprep.subr.mxu0 0.0
    %273 = vmatpush1.msra.mxu0 0.0
    %274 = vmatprep.subr.mxu0 0.0
    %275 = vmatpush1.msra.mxu0 0.0
    %276 = vmatprep.subr.mxu0 0.0
    %277 = vmatpush1.msra.mxu0 0.0
    %278 = vmatprep.subr.mxu0 0.0
    %279 = vmatpush1.msra.mxu0 0.0
    %280 = vmatprep.subr.mxu0 0.0
    %281 = vmatpush1.msra.mxu0 0.0
    %282 = vmatprep.subr.mxu0 0.0
    %283 = vmatpush1.msra.mxu0 0.0
    %284 = vmatprep.subr.mxu0 0.0
    %285 = vmatpush1.msra.mxu0 0.0
    %286 = vmatprep.subr.mxu0 0.0
    %287 = vmatpush1.msra.mxu0 0.0
    %288 = vmatprep.subr.mxu0 0.0
    %289 = vmatpush1.msra.mxu0 0.0
    %290 = vmatprep.subr.mxu0 0.0
    %291 = vmatpush1.msra.mxu0 0.0
    %292 = vmatprep.subr.mxu0 0.0
    %293 = vmatpush1.msra.mxu0 0.0
    %294 = vmatprep.subr.mxu0 0.0
    %295 = vmatpush1.msra.mxu0 0.0
    %296 = vmatprep.subr.mxu0 0.0
    %297 = vmatpush1.msra.mxu0 0.0
    %298 = vmatprep.subr.mxu0 0.0
    %299 = vmatpush1.msra.mxu0 0.0
    %300 = vmatprep.subr.mxu0 0.0
    %301 = vmatpush1.msra.mxu0 0.0
    %302 = vmatprep.subr.mxu0 0.0
    %303 = vmatpush1.msra.mxu0 0.0
    %304 = vmatprep.subr.mxu0 0.0
    %305 = vmatpush1.msra.mxu0 0.0
    %306 = vmatprep.subr.mxu0 0.0
    %307 = vmatpush1.msra.mxu0 0.0
    %308 = vmatprep.subr.mxu0 0.0
    %309 = vmatpush1.msra.mxu0 0.0
    %310 = vmatprep.subr.mxu0 0.0
    %311 = vmatpush1.msra.mxu0 0.0
    %312 = vmatprep.subr.mxu0 0.0
    %313 = vmatpush1.msra.mxu0 0.0
    %314 = vmatprep.mubr.f32.mxu0 0.0
    %315 = vmatmul.mubr.f32.gmra.mrb[0].mxu0 %v242
    %v316 = vpop.f32.mrb[0].mxu0
    %v317 = vadd.f32 %v153, %v316
    %v318 = vpop.f32.mrb[0].mxu0
    %319 = vmatprep.mubr.f32.mxu0 0.0
    %320 = vmatmul.mubr.f32.gmra.mrb[0].mxu0 %v245
    %v321 = vpop.f32.mrb[0].mxu0
    %v322 = vadd.f32 %v154, %v321
    %v323 = vpop.f32.mrb[0].mxu0
    %324 = vdwg.mxu0
    %v325 = vadd.f32 %v233, %v82
    %v326 = vadd.f32 %v238, %v83
    %v327 = vadd.f32 %v317, %v82
    %v328 = vadd.f32 %v322, %v83
    %v329 = vld [vmem:[%s4] sm:$0x1]
    %v330 = vld [vmem:[%s5] sm:$0x1]
    %vm331 = vcmask 261120
    %v332 = vsel %vm331, %v325, 0.0
    %333 = vadd.xlane.f32.xlu0 %v332
    %v334 = vpop.xlane.xlu0 %333
    %v335 = vsel %vm331, %v326, 0.0
    %336 = vadd.xlane.f32.xlu0 %v335
    %v337 = vpop.xlane.xlu0 %336
    %v338 = vsel %vm331, %v327, 0.0
    %339 = vadd.xlane.f32.xlu0 %v338
    %v340 = vpop.xlane.xlu0 %339
    %v341 = vsel %vm331, %v328, 0.0
    %342 = vadd.xlane.f32.xlu0 %v341
    %v343 = vpop.xlane.xlu0 %342
    %v344 = vrcp.pop 32.0
    %v345 = vmul.f32 %v334, %v344
    %v346 = vmul.f32 %v337, %v344
    %v347 = vmul.f32 %v340, %v344
    %v348 = vmul.f32 %v343, %v344
    %v349 = vsub.f32 %v325, %v345
    %v350 = vsub.f32 %v326, %v346
    %v351 = vsub.f32 %v327, %v347
    %v352 = vsub.f32 %v328, %v348
    %v353 = vmul.f32 %v349, %v349
    %v354 = vmul.f32 %v350, %v350
    %v355 = vmul.f32 %v351, %v351
    %v356 = vmul.f32 %v352, %v352
    %v357 = vsel %vm331, %v353, 0.0
    %358 = vadd.xlane.f32.xlu0 %v357
    %v359 = vpop.xlane.xlu0 %358
    %v360 = vsel %vm331, %v354, 0.0
    %361 = vadd.xlane.f32.xlu0 %v360
    %v362 = vpop.xlane.xlu0 %361
    %v363 = vsel %vm331, %v355, 0.0
    %364 = vadd.xlane.f32.xlu0 %v363
    %v365 = vpop.xlane.xlu0 %364
    %v366 = vsel %vm331, %v356, 0.0
    %367 = vadd.xlane.f32.xlu0 %v366
    %v368 = vpop.xlane.xlu0 %367
    %v369 = vmul.f32 %v359, %v344
    %v370 = vmul.f32 %v362, %v344
    %v371 = vmul.f32 %v365, %v344
    %v372 = vmul.f32 %v368, %v344
    %v373 = vadd.f32 %v369, 1e-05
    %v374 = vadd.f32 %v370, 1e-05
    %v375 = vadd.f32 %v371, 1e-05
    %v376 = vadd.f32 %v372, 1e-05
    %v377 = vrsqrt.pop %v373
    %v378 = vrsqrt.pop %v374
    %v379 = vrsqrt.pop %v375
    %v380 = vrsqrt.pop %v376
    %v381 = vmul.f32 %v349, %v377
    %v382 = vmul.f32 %v350, %v378
    %v383 = vmul.f32 %v351, %v379
    %v384 = vmul.f32 %v352, %v380
    %v386 = vlaneseq
    %v387 = vshrl.u32 %v386, 7
    %v388 = vsub.s32 0, %v387
    %v389 = vrot.slane %v329, %v388
    %v391 = vmul.f32 %v381, %v389
    %v392 = vmul.f32 %v382, %v389
    %v393 = vmul.f32 %v383, %v389
    %v394 = vmul.f32 %v384, %v389
    %v396 = vlaneseq
    %v397 = vshrl.u32 %v396, 7
    %v398 = vsub.s32 0, %v397
    %v399 = vrot.slane %v330, %v398
    %v401 = vadd.f32 %v391, %v399
    %v402 = vadd.f32 %v392, %v399
    %v403 = vadd.f32 %v393, %v399
    %v404 = vadd.f32 %v394, %v399
    %v405 = vld [vmem:[%s6] sm:$0xff]
    %v406 = vld [vmem:[%s6 + $0x8] sm:$0xff]
    %v407 = vld [vmem:[%s6 + $0x10] sm:$0xff]
    %v408 = vld [vmem:[%s6 + $0x18] sm:$0xff]
    %v409 = vld [vmem:[%s7] sm:$0x1]
    %v411 = vlaneseq
    %v412 = vshrl.u32 %v411, 7
    %v413 = vsub.s32 0, %v412
    %v414 = vrot.slane %v409, %v413
    %v417 = vsel %vm331, %v401, 0
    %v420 = vsel %vm331, %v402, 0
    %v423 = vsel %vm331, %v403, 0
    %v426 = vsel %vm331, %v404, 0
    %428 = vmatprep.subr.mxu0 0.0
    %429 = vmatpush1.msra.mxu0 %v405
    %430 = vmatprep.subr.mxu0 0.0
    %431 = vmatpush1.msra.mxu0 %v406
    %432 = vmatprep.subr.mxu0 0.0
    %433 = vmatpush1.msra.mxu0 %v407
    %434 = vmatprep.subr.mxu0 0.0
    %435 = vmatpush1.msra.mxu0 %v408
    %436 = vmatprep.subr.mxu0 0.0
    %437 = vmatpush1.msra.mxu0 0.0
    %438 = vmatprep.subr.mxu0 0.0
    %439 = vmatpush1.msra.mxu0 0.0
    %440 = vmatprep.subr.mxu0 0.0
    %441 = vmatpush1.msra.mxu0 0.0
    %442 = vmatprep.subr.mxu0 0.0
    %443 = vmatpush1.msra.mxu0 0.0
    %444 = vmatprep.subr.mxu0 0.0
    %445 = vmatpush1.msra.mxu0 0.0
    %446 = vmatprep.subr.mxu0 0.0
    %447 = vmatpush1.msra.mxu0 0.0
    %448 = vmatprep.subr.mxu0 0.0
    %449 = vmatpush1.msra.mxu0 0.0
    %450 = vmatprep.subr.mxu0 0.0
    %451 = vmatpush1.msra.mxu0 0.0
    %452 = vmatprep.subr.mxu0 0.0
    %453 = vmatpush1.msra.mxu0 0.0
    %454 = vmatprep.subr.mxu0 0.0
    %455 = vmatpush1.msra.mxu0 0.0
    %456 = vmatprep.subr.mxu0 0.0
    %457 = vmatpush1.msra.mxu0 0.0
    %458 = vmatprep.subr.mxu0 0.0
    %459 = vmatpush1.msra.mxu0 0.0
    %460 = vmatprep.subr.mxu0 0.0
    %461 = vmatpush1.msra.mxu0 0.0
    %462 = vmatprep.subr.mxu0 0.0
    %463 = vmatpush1.msra.mxu0 0.0
    %464 = vmatprep.subr.mxu0 0.0
    %465 = vmatpush1.msra.mxu0 0.0
    %466 = vmatprep.subr.mxu0 0.0
    %467 = vmatpush1.msra.mxu0 0.0
    %468 = vmatprep.subr.mxu0 0.0
    %469 = vmatpush1.msra.mxu0 0.0
    %470 = vmatprep.subr.mxu0 0.0
    %471 = vmatpush1.msra.mxu0 0.0
    %472 = vmatprep.subr.mxu0 0.0
    %473 = vmatpush1.msra.mxu0 0.0
    %474 = vmatprep.subr.mxu0 0.0
    %475 = vmatpush1.msra.mxu0 0.0
    %476 = vmatprep.subr.mxu0 0.0
    %477 = vmatpush1.msra.mxu0 0.0
    %478 = vmatprep.subr.mxu0 0.0
    %479 = vmatpush1.msra.mxu0 0.0
    %480 = vmatprep.subr.mxu0 0.0
    %481 = vmatpush1.msra.mxu0 0.0
    %482 = vmatprep.subr.mxu0 0.0
    %483 = vmatpush1.msra.mxu0 0.0
    %484 = vmatprep.subr.mxu0 0.0
    %485 = vmatpush1.msra.mxu0 0.0
    %486 = vmatprep.subr.mxu0 0.0
    %487 = vmatpush1.msra.mxu0 0.0
    %488 = vmatprep.subr.mxu0 0.0
    %489 = vmatpush1.msra.mxu0 0.0
    %490 = vmatprep.subr.mxu0 0.0
    %491 = vmatpush1.msra.mxu0 0.0
    %492 = vmatprep.mubr.f32.mxu0 0.0
    %493 = vmatmul.mubr.f32.gmra.mrb[0].mxu0 %v417
    %v494 = vpop.f32.mrb[0].mxu0
    %v495 = vadd.f32 %v414, %v494
    %v496 = vpop.f32.mrb[0].mxu0
    %497 = vmatprep.mubr.f32.mxu0 0.0
    %498 = vmatmul.mubr.f32.gmra.mrb[0].mxu0 %v420
    %v499 = vpop.f32.mrb[0].mxu0
    %v500 = vadd.f32 %v414, %v499
    %v501 = vpop.f32.mrb[0].mxu0
    %502 = vmatprep.mubr.f32.mxu0 0.0
    %503 = vmatmul.mubr.f32.gmra.mrb[0].mxu0 %v423
    %v504 = vpop.f32.mrb[0].mxu0
    %v505 = vadd.f32 %v414, %v504
    %v506 = vpop.f32.mrb[0].mxu0
    %507 = vmatprep.mubr.f32.mxu0 0.0
    %508 = vmatmul.mubr.f32.gmra.mrb[0].mxu0 %v426
    %v509 = vpop.f32.mrb[0].mxu0
    %v510 = vadd.f32 %v414, %v509
    %v511 = vpop.f32.mrb[0].mxu0
    %512 = vdwg.mxu0
    %v513 = vld [vmem:[%s8] sm:$0xff]
    %v514 = vld [vmem:[%s8 + $0x8] sm:$0xff]
    %v515 = vld [vmem:[%s8 + $0x10] sm:$0xff]
    %v516 = vld [vmem:[%s8 + $0x18] sm:$0xff]
    %v517 = vld [vmem:[%s9] sm:$0x1]
    %v519 = vlaneseq
    %v520 = vshrl.u32 %v519, 7
    %v521 = vsub.s32 0, %v520
    %v522 = vrot.slane %v517, %v521
    %524 = vmatprep.subr.mxu0 0.0
    %525 = vmatpush1.msra.mxu0 %v513
    %526 = vmatprep.subr.mxu0 0.0
    %527 = vmatpush1.msra.mxu0 %v514
    %528 = vmatprep.subr.mxu0 0.0
    %529 = vmatpush1.msra.mxu0 %v515
    %530 = vmatprep.subr.mxu0 0.0
    %531 = vmatpush1.msra.mxu0 %v516
    %532 = vmatprep.subr.mxu0 0.0
    %533 = vmatpush1.msra.mxu0 0.0
    %534 = vmatprep.subr.mxu0 0.0
    %535 = vmatpush1.msra.mxu0 0.0
    %536 = vmatprep.subr.mxu0 0.0
    %537 = vmatpush1.msra.mxu0 0.0
    %538 = vmatprep.subr.mxu0 0.0
    %539 = vmatpush1.msra.mxu0 0.0
    %540 = vmatprep.subr.mxu0 0.0
    %541 = vmatpush1.msra.mxu0 0.0
    %542 = vmatprep.subr.mxu0 0.0
    %543 = vmatpush1.msra.mxu0 0.0
    %544 = vmatprep.subr.mxu0 0.0
    %545 = vmatpush1.msra.mxu0 0.0
    %546 = vmatprep.subr.mxu0 0.0
    %547 = vmatpush1.msra.mxu0 0.0
    %548 = vmatprep.subr.mxu0 0.0
    %549 = vmatpush1.msra.mxu0 0.0
    %550 = vmatprep.subr.mxu0 0.0
    %551 = vmatpush1.msra.mxu0 0.0
    %552 = vmatprep.subr.mxu0 0.0
    %553 = vmatpush1.msra.mxu0 0.0
    %554 = vmatprep.subr.mxu0 0.0
    %555 = vmatpush1.msra.mxu0 0.0
    %556 = vmatprep.subr.mxu0 0.0
    %557 = vmatpush1.msra.mxu0 0.0
    %558 = vmatprep.subr.mxu0 0.0
    %559 = vmatpush1.msra.mxu0 0.0
    %560 = vmatprep.subr.mxu0 0.0
    %561 = vmatpush1.msra.mxu0 0.0
    %562 = vmatprep.subr.mxu0 0.0
    %563 = vmatpush1.msra.mxu0 0.0
    %564 = vmatprep.subr.mxu0 0.0
    %565 = vmatpush1.msra.mxu0 0.0
    %566 = vmatprep.subr.mxu0 0.0
    %567 = vmatpush1.msra.mxu0 0.0
    %568 = vmatprep.subr.mxu0 0.0
    %569 = vmatpush1.msra.mxu0 0.0
    %570 = vmatprep.subr.mxu0 0.0
    %571 = vmatpush1.msra.mxu0 0.0
    %572 = vmatprep.subr.mxu0 0.0
    %573 = vmatpush1.msra.mxu0 0.0
    %574 = vmatprep.subr.mxu0 0.0
    %575 = vmatpush1.msra.mxu0 0.0
    %576 = vmatprep.subr.mxu0 0.0
    %577 = vmatpush1.msra.mxu0 0.0
    %578 = vmatprep.subr.mxu0 0.0
    %579 = vmatpush1.msra.mxu0 0.0
    %580 = vmatprep.subr.mxu0 0.0
    %581 = vmatpush1.msra.mxu0 0.0
    %582 = vmatprep.subr.mxu0 0.0
    %583 = vmatpush1.msra.mxu0 0.0
    %584 = vmatprep.subr.mxu0 0.0
    %585 = vmatpush1.msra.mxu0 0.0
    %586 = vmatprep.subr.mxu0 0.0
    %587 = vmatpush1.msra.mxu0 0.0
    %588 = vmatprep.mubr.f32.mxu0 0.0
    %589 = vmatmul.mubr.f32.gmra.mrb[0].mxu0 %v417
    %v590 = vpop.f32.mrb[0].mxu0
    %v591 = vadd.f32 %v522, %v590
    %v592 = vpop.f32.mrb[0].mxu0
    %593 = vmatprep.mubr.f32.mxu0 0.0
    %594 = vmatmul.mubr.f32.gmra.mrb[0].mxu0 %v420
    %v595 = vpop.f32.mrb[0].mxu0
    %v596 = vadd.f32 %v522, %v595
    %v597 = vpop.f32.mrb[0].mxu0
    %598 = vmatprep.mubr.f32.mxu0 0.0
    %599 = vmatmul.mubr.f32.gmra.mrb[0].mxu0 %v423
    %v600 = vpop.f32.mrb[0].mxu0
    %v601 = vadd.f32 %v522, %v600
    %v602 = vpop.f32.mrb[0].mxu0
    %603 = vmatprep.mubr.f32.mxu0 0.0
    %604 = vmatmul.mubr.f32.gmra.mrb[0].mxu0 %v426
    %v605 = vpop.f32.mrb[0].mxu0
    %v606 = vadd.f32 %v522, %v605
    %v607 = vpop.f32.mrb[0].mxu0
    %608 = vdwg.mxu0
    %v609 = vld [vmem:[%s10] sm:$0xff]
    %v610 = vld [vmem:[%s10 + $0x8] sm:$0xff]
    %v611 = vld [vmem:[%s10 + $0x10] sm:$0xff]
    %v612 = vld [vmem:[%s10 + $0x18] sm:$0xff]
    %v613 = vld [vmem:[%s11] sm:$0x1]
    %v615 = vlaneseq
    %v616 = vshrl.u32 %v615, 7
    %v617 = vsub.s32 0, %v616
    %v618 = vrot.slane %v613, %v617
    %620 = vmatprep.subr.mxu0 0.0
    %621 = vmatpush1.msra.mxu0 %v609
    %622 = vmatprep.subr.mxu0 0.0
    %623 = vmatpush1.msra.mxu0 %v610
    %624 = vmatprep.subr.mxu0 0.0
    %625 = vmatpush1.msra.mxu0 %v611
    %626 = vmatprep.subr.mxu0 0.0
    %627 = vmatpush1.msra.mxu0 %v612
    %628 = vmatprep.subr.mxu0 0.0
    %629 = vmatpush1.msra.mxu0 0.0
    %630 = vmatprep.subr.mxu0 0.0
    %631 = vmatpush1.msra.mxu0 0.0
    %632 = vmatprep.subr.mxu0 0.0
    %633 = vmatpush1.msra.mxu0 0.0
    %634 = vmatprep.subr.mxu0 0.0
    %635 = vmatpush1.msra.mxu0 0.0
    %636 = vmatprep.subr.mxu0 0.0
    %637 = vmatpush1.msra.mxu0 0.0
    %638 = vmatprep.subr.mxu0 0.0
    %639 = vmatpush1.msra.mxu0 0.0
    %640 = vmatprep.subr.mxu0 0.0
    %641 = vmatpush1.msra.mxu0 0.0
    %642 = vmatprep.subr.mxu0 0.0
    %643 = vmatpush1.msra.mxu0 0.0
    %644 = vmatprep.subr.mxu0 0.0
    %645 = vmatpush1.msra.mxu0 0.0
    %646 = vmatprep.subr.mxu0 0.0
    %647 = vmatpush1.msra.mxu0 0.0
    %648 = vmatprep.subr.mxu0 0.0
    %649 = vmatpush1.msra.mxu0 0.0
    %650 = vmatprep.subr.mxu0 0.0
    %651 = vmatpush1.msra.mxu0 0.0
    %652 = vmatprep.subr.mxu0 0.0
    %653 = vmatpush1.msra.mxu0 0.0
    %654 = vmatprep.subr.mxu0 0.0
    %655 = vmatpush1.msra.mxu0 0.0
    %656 = vmatprep.subr.mxu0 0.0
    %657 = vmatpush1.msra.mxu0 0.0
    %658 = vmatprep.subr.mxu0 0.0
    %659 = vmatpush1.msra.mxu0 0.0
    %660 = vmatprep.subr.mxu0 0.0
    %661 = vmatpush1.msra.mxu0 0.0
    %662 = vmatprep.subr.mxu0 0.0
    %663 = vmatpush1.msra.mxu0 0.0
    %664 = vmatprep.subr.mxu0 0.0
    %665 = vmatpush1.msra.mxu0 0.0
    %666 = vmatprep.subr.mxu0 0.0
    %667 = vmatpush1.msra.mxu0 0.0
    %668 = vmatprep.subr.mxu0 0.0
    %669 = vmatpush1.msra.mxu0 0.0
    %670 = vmatprep.subr.mxu0 0.0
    %671 = vmatpush1.msra.mxu0 0.0
    %672 = vmatprep.subr.mxu0 0.0
    %673 = vmatpush1.msra.mxu0 0.0
    %674 = vmatprep.subr.mxu0 0.0
    %675 = vmatpush1.msra.mxu0 0.0
    %676 = vmatprep.subr.mxu0 0.0
    %677 = vmatpush1.msra.mxu0 0.0
    %678 = vmatprep.subr.mxu0 0.0
    %679 = vmatpush1.msra.mxu0 0.0
    %680 = vmatprep.subr.mxu0 0.0
    %681 = vmatpush1.msra.mxu0 0.0
    %682 = vmatprep.subr.mxu0 0.0
    %683 = vmatpush1.msra.mxu0 0.0
    %684 = vmatprep.mubr.f32.mxu0 0.0
    %685 = vmatmul.mubr.f32.gmra.mrb[0].mxu0 %v417
    %v686 = vpop.f32.mrb[0].mxu0
    %v687 = vadd.f32 %v618, %v686
    %v688 = vpop.f32.mrb[0].mxu0
    %689 = vmatprep.mubr.f32.mxu0 0.0
    %690 = vmatmul.mubr.f32.gmra.mrb[0].mxu0 %v420
    %v691 = vpop.f32.mrb[0].mxu0
    %v692 = vadd.f32 %v618, %v691
    %v693 = vpop.f32.mrb[0].mxu0
    %694 = vmatprep.mubr.f32.mxu0 0.0
    %695 = vmatmul.mubr.f32.gmra.mrb[0].mxu0 %v423
    %v696 = vpop.f32.mrb[0].mxu0
    %v697 = vadd.f32 %v618, %v696
    %v698 = vpop.f32.mrb[0].mxu0
    %699 = vmatprep.mubr.f32.mxu0 0.0
    %700 = vmatmul.mubr.f32.gmra.mrb[0].mxu0 %v426
    %v701 = vpop.f32.mrb[0].mxu0
    %v702 = vadd.f32 %v618, %v701
    %v703 = vpop.f32.mrb[0].mxu0
    %704 = vdwg.mxu0
    %vm705 = vcmask 64512
    %v707 = vsel %vm705, %v495, 0
    %v710 = vsel %vm705, %v500, 0
    %v713 = vsel %vm705, %v591, 0
    %v716 = vsel %vm705, %v596, 0
    %718 = vmatprep.subr.mxu0 0.0
    %719 = vmatpush1.xpose.msra.mxu0 %v713
    %720 = vmatprep.subr.mxu0 0.0
    %721 = vmatpush1.xpose.msra.mxu0 %v716
    %722 = vmatprep.subr.mxu0 0.0
    %723 = vmatpush1.xpose.msra.mxu0 0.0
    %724 = vmatprep.subr.mxu0 0.0
    %725 = vmatpush1.xpose.msra.mxu0 0.0
    %726 = vmatprep.subr.mxu0 0.0
    %727 = vmatpush1.xpose.msra.mxu0 0.0
    %728 = vmatprep.subr.mxu0 0.0
    %729 = vmatpush1.xpose.msra.mxu0 0.0
    %730 = vmatprep.subr.mxu0 0.0
    %731 = vmatpush1.xpose.msra.mxu0 0.0
    %732 = vmatprep.subr.mxu0 0.0
    %733 = vmatpush1.xpose.msra.mxu0 0.0
    %734 = vmatprep.subr.mxu0 0.0
    %735 = vmatpush1.xpose.msra.mxu0 0.0
    %736 = vmatprep.subr.mxu0 0.0
    %737 = vmatpush1.xpose.msra.mxu0 0.0
    %738 = vmatprep.subr.mxu0 0.0
    %739 = vmatpush1.xpose.msra.mxu0 0.0
    %740 = vmatprep.subr.mxu0 0.0
    %741 = vmatpush1.xpose.msra.mxu0 0.0
    %742 = vmatprep.subr.mxu0 0.0
    %743 = vmatpush1.xpose.msra.mxu0 0.0
    %744 = vmatprep.subr.mxu0 0.0
    %745 = vmatpush1.xpose.msra.mxu0 0.0
    %746 = vmatprep.subr.mxu0 0.0
    %747 = vmatpush1.xpose.msra.mxu0 0.0
    %748 = vmatprep.subr.mxu0 0.0
    %749 = vmatpush1.xpose.msra.mxu0 0.0
    %750 = vmatprep.subr.mxu0 0.0
    %751 = vmatpush1.xpose.msra.mxu0 0.0
    %752 = vmatprep.subr.mxu0 0.0
    %753 = vmatpush1.xpose.msra.mxu0 0.0
    %754 = vmatprep.subr.mxu0 0.0
    %755 = vmatpush1.xpose.msra.mxu0 0.0
    %756 = vmatprep.subr.mxu0 0.0
    %757 = vmatpush1.xpose.msra.mxu0 0.0
    %758 = vmatprep.subr.mxu0 0.0
    %759 = vmatpush1.xpose.msra.mxu0 0.0
    %760 = vmatprep.subr.mxu0 0.0
    %761 = vmatpush1.xpose.msra.mxu0 0.0
    %762 = vmatprep.subr.mxu0 0.0
    %763 = vmatpush1.xpose.msra.mxu0 0.0
    %764 = vmatprep.subr.mxu0 0.0
    %765 = vmatpush1.xpose.msra.mxu0 0.0
    %766 = vmatprep.subr.mxu0 0.0
    %767 = vmatpush1.xpose.msra.mxu0 0.0
    %768 = vmatprep.subr.mxu0 0.0
    %769 = vmatpush1.xpose.msra.mxu0 0.0
    %770 = vmatprep.subr.mxu0 0.0
    %771 = vmatpush1.xpose.msra.mxu0 0.0
    %772 = vmatprep.subr.mxu0 0.0
    %773 = vmatpush1.xpose.msra.mxu0 0.0
    %774 = vmatprep.subr.mxu0 0.0
    %775 = vmatpush1.xpose.msra.mxu0 0.0
    %776 = vmatprep.subr.mxu0 0.0
    %777 = vmatpush1.xpose.msra.mxu0 0.0
    %778 = vmatprep.subr.mxu0 0.0
    %779 = vmatpush1.xpose.msra.mxu0 0.0
    %780 = vmatprep.subr.mxu0 0.0
    %781 = vmatpush1.xpose.msra.mxu0 0.0
    %782 = vmatprep.mubr.f32.mxu0 0.0
    %783 = vmatmul.mubr.f32.gmra.mrb[0].mxu0 %v707
    %v784 = vpop.f32.mrb[0].mxu0
    %v785 = vadd.f32 0.0, %v784
    %v786 = vpop.f32.mrb[0].mxu0
    %787 = vmatprep.mubr.f32.mxu0 0.0
    %788 = vmatmul.mubr.f32.gmra.mrb[0].mxu0 %v710
    %v789 = vpop.f32.mrb[0].mxu0
    %v790 = vadd.f32 0.0, %v789
    %v791 = vpop.f32.mrb[0].mxu0
    %792 = vdwg.mxu0
    %v794 = vsel %vm705, %v505, 0
    %v797 = vsel %vm705, %v510, 0
    %v800 = vsel %vm705, %v601, 0
    %v803 = vsel %vm705, %v606, 0
    %805 = vmatprep.subr.mxu0 0.0
    %806 = vmatpush1.xpose.msra.mxu0 %v800
    %807 = vmatprep.subr.mxu0 0.0
    %808 = vmatpush1.xpose.msra.mxu0 %v803
    %809 = vmatprep.subr.mxu0 0.0
    %810 = vmatpush1.xpose.msra.mxu0 0.0
    %811 = vmatprep.subr.mxu0 0.0
    %812 = vmatpush1.xpose.msra.mxu0 0.0
    %813 = vmatprep.subr.mxu0 0.0
    %814 = vmatpush1.xpose.msra.mxu0 0.0
    %815 = vmatprep.subr.mxu0 0.0
    %816 = vmatpush1.xpose.msra.mxu0 0.0
    %817 = vmatprep.subr.mxu0 0.0
    %818 = vmatpush1.xpose.msra.mxu0 0.0
    %819 = vmatprep.subr.mxu0 0.0
    %820 = vmatpush1.xpose.msra.mxu0 0.0
    %821 = vmatprep.subr.mxu0 0.0
    %822 = vmatpush1.xpose.msra.mxu0 0.0
    %823 = vmatprep.subr.mxu0 0.0
    %824 = vmatpush1.xpose.msra.mxu0 0.0
    %825 = vmatprep.subr.mxu0 0.0
    %826 = vmatpush1.xpose.msra.mxu0 0.0
    %827 = vmatprep.subr.mxu0 0.0
    %828 = vmatpush1.xpose.msra.mxu0 0.0
    %829 = vmatprep.subr.mxu0 0.0
    %830 = vmatpush1.xpose.msra.mxu0 0.0
    %831 = vmatprep.subr.mxu0 0.0
    %832 = vmatpush1.xpose.msra.mxu0 0.0
    %833 = vmatprep.subr.mxu0 0.0
    %834 = vmatpush1.xpose.msra.mxu0 0.0
    %835 = vmatprep.subr.mxu0 0.0
    %836 = vmatpush1.xpose.msra.mxu0 0.0
    %837 = vmatprep.subr.mxu0 0.0
    %838 = vmatpush1.xpose.msra.mxu0 0.0
    %839 = vmatprep.subr.mxu0 0.0
    %840 = vmatpush1.xpose.msra.mxu0 0.0
    %841 = vmatprep.subr.mxu0 0.0
    %842 = vmatpush1.xpose.msra.mxu0 0.0
    %843 = vmatprep.subr.mxu0 0.0
    %844 = vmatpush1.xpose.msra.mxu0 0.0
    %845 = vmatprep.subr.mxu0 0.0
    %846 = vmatpush1.xpose.msra.mxu0 0.0
    %847 = vmatprep.subr.mxu0 0.0
    %848 = vmatpush1.xpose.msra.mxu0 0.0
    %849 = vmatprep.subr.mxu0 0.0
    %850 = vmatpush1.xpose.msra.mxu0 0.0
    %851 = vmatprep.subr.mxu0 0.0
    %852 = vmatpush1.xpose.msra.mxu0 0.0
    %853 = vmatprep.subr.mxu0 0.0
    %854 = vmatpush1.xpose.msra.mxu0 0.0
    %855 = vmatprep.subr.mxu0 0.0
    %856 = vmatpush1.xpose.msra.mxu0 0.0
    %857 = vmatprep.subr.mxu0 0.0
    %858 = vmatpush1.xpose.msra.mxu0 0.0
    %859 = vmatprep.subr.mxu0 0.0
    %860 = vmatpush1.xpose.msra.mxu0 0.0
    %861 = vmatprep.subr.mxu0 0.0
    %862 = vmatpush1.xpose.msra.mxu0 0.0
    %863 = vmatprep.subr.mxu0 0.0
    %864 = vmatpush1.xpose.msra.mxu0 0.0
    %865 = vmatprep.subr.mxu0 0.0
    %866 = vmatpush1.xpose.msra.mxu0 0.0
    %867 = vmatprep.subr.mxu0 0.0
    %868 = vmatpush1.xpose.msra.mxu0 0.0
    %869 = vmatprep.mubr.f32.mxu0 0.0
    %870 = vmatmul.mubr.f32.gmra.mrb[0].mxu0 %v794
    %v871 = vpop.f32.mrb[0].mxu0
    %v872 = vadd.f32 0.0, %v871
    %v873 = vpop.f32.mrb[0].mxu0
    %874 = vmatprep.mubr.f32.mxu0 0.0
    %875 = vmatmul.mubr.f32.gmra.mrb[0].mxu0 %v797
    %v876 = vpop.f32.mrb[0].mxu0
    %v877 = vadd.f32 0.0, %v876
    %v878 = vpop.f32.mrb[0].mxu0
    %879 = vdwg.mxu0
    %v880 = vmul.f32 %v785, 0.35355338
    %v881 = vmul.f32 %v790, 0.35355338
    %v882 = vmul.f32 %v872, 0.35355338
    %v883 = vmul.f32 %v877, 0.35355338
    %vm884 = vcmask 130048
    %v885 = vsel %vm884, %v880, -inf
    %886 = vmax.xlane.f32.xlu0 %v885
    %v887 = vpop.xlane.xlu0 %886
    %v888 = vsel %vm884, %v881, -inf
    %889 = vmax.xlane.f32.xlu0 %v888
    %v890 = vpop.xlane.xlu0 %889
    %v891 = vsel %vm884, %v882, -inf
    %892 = vmax.xlane.f32.xlu0 %v891
    %v893 = vpop.xlane.xlu0 %892
    %v894 = vsel %vm884, %v883, -inf
    %895 = vmax.xlane.f32.xlu0 %v894
    %v896 = vpop.xlane.xlu0 %895
    %v897 = vsub.f32 %v880, %v887
    %v898 = vsub.f32 %v881, %v890
    %v899 = vsub.f32 %v882, %v893
    %v900 = vsub.f32 %v883, %v896
    %v901 = vmul.f32 %v897, 1.442695
    %v902 = vpow.pop %v901
    %v903 = vmul.f32 %v898, 1.442695
    %v904 = vpow.pop %v903
    %v905 = vmul.f32 %v899, 1.442695
    %v906 = vpow.pop %v905
    %v907 = vmul.f32 %v900, 1.442695
    %v908 = vpow.pop %v907
    %v909 = vsel %vm884, %v902, 0.0
    %910 = vadd.xlane.f32.xlu0 %v909
    %v911 = vpop.xlane.xlu0 %910
    %v912 = vsel %vm884, %v904, 0.0
    %913 = vadd.xlane.f32.xlu0 %v912
    %v914 = vpop.xlane.xlu0 %913
    %v915 = vsel %vm884, %v906, 0.0
    %916 = vadd.xlane.f32.xlu0 %v915
    %v917 = vpop.xlane.xlu0 %916
    %v918 = vsel %vm884, %v908, 0.0
    %919 = vadd.xlane.f32.xlu0 %v918
    %v920 = vpop.xlane.xlu0 %919
    %v921 = vrcp.pop %v911
    %v922 = vrcp.pop %v914
    %v923 = vrcp.pop %v917
    %v924 = vrcp.pop %v920
    %v925 = vmul.f32 %v902, %v921
    %v926 = vmul.f32 %v904, %v922
    %v927 = vmul.f32 %v906, %v923
    %v928 = vmul.f32 %v908, %v924
    %v930 = vsel %vm884, %v925, 0
    %v933 = vsel %vm884, %v926, 0
    %935 = vmatprep.subr.mxu0 0.0
    %936 = vmatpush1.msra.mxu0 %v687
    %937 = vmatprep.subr.mxu0 0.0
    %938 = vmatpush1.msra.mxu0 %v692
    %939 = vmatprep.subr.mxu0 0.0
    %940 = vmatpush1.msra.mxu0 0.0
    %941 = vmatprep.subr.mxu0 0.0
    %942 = vmatpush1.msra.mxu0 0.0
    %943 = vmatprep.subr.mxu0 0.0
    %944 = vmatpush1.msra.mxu0 0.0
    %945 = vmatprep.subr.mxu0 0.0
    %946 = vmatpush1.msra.mxu0 0.0
    %947 = vmatprep.subr.mxu0 0.0
    %948 = vmatpush1.msra.mxu0 0.0
    %949 = vmatprep.subr.mxu0 0.0
    %950 = vmatpush1.msra.mxu0 0.0
    %951 = vmatprep.subr.mxu0 0.0
    %952 = vmatpush1.msra.mxu0 0.0
    %953 = vmatprep.subr.mxu0 0.0
    %954 = vmatpush1.msra.mxu0 0.0
    %955 = vmatprep.subr.mxu0 0.0
    %956 = vmatpush1.msra.mxu0 0.0
    %957 = vmatprep.subr.mxu0 0.0
    %958 = vmatpush1.msra.mxu0 0.0
    %959 = vmatprep.subr.mxu0 0.0
    %960 = vmatpush1.msra.mxu0 0.0
    %961 = vmatprep.subr.mxu0 0.0
    %962 = vmatpush1.msra.mxu0 0.0
    %963 = vmatprep.subr.mxu0 0.0
    %964 = vmatpush1.msra.mxu0 0.0
    %965 = vmatprep.subr.mxu0 0.0
    %966 = vmatpush1.msra.mxu0 0.0
    %967 = vmatprep.subr.mxu0 0.0
    %968 = vmatpush1.msra.mxu0 0.0
    %969 = vmatprep.subr.mxu0 0.0
    %970 = vmatpush1.msra.mxu0 0.0
    %971 = vmatprep.subr.mxu0 0.0
    %972 = vmatpush1.msra.mxu0 0.0
    %973 = vmatprep.subr.mxu0 0.0
    %974 = vmatpush1.msra.mxu0 0.0
    %975 = vmatprep.subr.mxu0 0.0
    %976 = vmatpush1.msra.mxu0 0.0
    %977 = vmatprep.subr.mxu0 0.0
    %978 = vmatpush1.msra.mxu0 0.0
    %979 = vmatprep.subr.mxu0 0.0
    %980 = vmatpush1.msra.mxu0 0.0
    %981 = vmatprep.subr.mxu0 0.0
    %982 = vmatpush1.msra.mxu0 0.0
    %983 = vmatprep.subr.mxu0 0.0
    %984 = vmatpush1.msra.mxu0 0.0
    %985 = vmatprep.subr.mxu0 0.0
    %986 = vmatpush1.msra.mxu0 0.0
    %987 = vmatprep.subr.mxu0 0.0
    %988 = vmatpush1.msra.mxu0 0.0
    %989 = vmatprep.subr.mxu0 0.0
    %990 = vmatpush1.msra.mxu0 0.0
    %991 = vmatprep.subr.mxu0 0.0
    %992 = vmatpush1.msra.mxu0 0.0
    %993 = vmatprep.subr.mxu0 0.0
    %994 = vmatpush1.msra.mxu0 0.0
    %995 = vmatprep.subr.mxu0 0.0
    %996 = vmatpush1.msra.mxu0 0.0
    %997 = vmatprep.subr.mxu0 0.0
    %998 = vmatpush1.msra.mxu0 0.0
    %999 = vmatprep.mubr.f32.mxu0 0.0
    %1000 = vmatmul.mubr.f32.gmra.mrb[0].mxu0 %v930
    %v1001 = vpop.f32.mrb[0].mxu0
    %v1002 = vadd.f32 0.0, %v1001
    %v1003 = vpop.f32.mrb[0].mxu0
    %1004 = vmatprep.mubr.f32.mxu0 0.0
    %1005 = vmatmul.mubr.f32.gmra.mrb[0].mxu0 %v933
    %v1006 = vpop.f32.mrb[0].mxu0
    %v1007 = vadd.f32 0.0, %v1006
    %v1008 = vpop.f32.mrb[0].mxu0
    %1009 = vdwg.mxu0
    %v1011 = vsel %vm884, %v927, 0
    %v1014 = vsel %vm884, %v928, 0
    %1016 = vmatprep.subr.mxu0 0.0
    %1017 = vmatpush1.msra.mxu0 %v697
    %1018 = vmatprep.subr.mxu0 0.0
    %1019 = vmatpush1.msra.mxu0 %v702
    %1020 = vmatprep.subr.mxu0 0.0
    %1021 = vmatpush1.msra.mxu0 0.0
    %1022 = vmatprep.subr.mxu0 0.0
    %1023 = vmatpush1.msra.mxu0 0.0
    %1024 = vmatprep.subr.mxu0 0.0
    %1025 = vmatpush1.msra.mxu0 0.0
    %1026 = vmatprep.subr.mxu0 0.0
    %1027 = vmatpush1.msra.mxu0 0.0
    %1028 = vmatprep.subr.mxu0 0.0
    %1029 = vmatpush1.msra.mxu0 0.0
    %1030 = vmatprep.subr.mxu0 0.0
    %1031 = vmatpush1.msra.mxu0 0.0
    %1032 = vmatprep.subr.mxu0 0.0
    %1033 = vmatpush1.msra.mxu0 0.0
    %1034 = vmatprep.subr.mxu0 0.0
    %1035 = vmatpush1.msra.mxu0 0.0
    %1036 = vmatprep.subr.mxu0 0.0
    %1037 = vmatpush1.msra.mxu0 0.0
    %1038 = vmatprep.subr.mxu0 0.0
    %1039 = vmatpush1.msra.mxu0 0.0
    %1040 = vmatprep.subr.mxu0 0.0
    %1041 = vmatpush1.msra.mxu0 0.0
    %1042 = vmatprep.subr.mxu0 0.0
    %1043 = vmatpush1.msra.mxu0 0.0
    %1044 = vmatprep.subr.mxu0 0.0
    %1045 = vmatpush1.msra.mxu0 0.0
    %1046 = vmatprep.subr.mxu0 0.0
    %1047 = vmatpush1.msra.mxu0 0.0
    %1048 = vmatprep.subr.mxu0 0.0
    %1049 = vmatpush1.msra.mxu0 0.0
    %1050 = vmatprep.subr.mxu0 0.0
    %1051 = vmatpush1.msra.mxu0 0.0
    %1052 = vmatprep.subr.mxu0 0.0
    %1053 = vmatpush1.msra.mxu0 0.0
    %1054 = vmatprep.subr.mxu0 0.0
    %1055 = vmatpush1.msra.mxu0 0.0
    %1056 = vmatprep.subr.mxu0 0.0
    %1057 = vmatpush1.msra.mxu0 0.0
    %1058 = vmatprep.subr.mxu0 0.0
    %1059 = vmatpush1.msra.mxu0 0.0
    %1060 = vmatprep.subr.mxu0 0.0
    %1061 = vmatpush1.msra.mxu0 0.0
    %1062 = vmatprep.subr.mxu0 0.0
    %1063 = vmatpush1.msra.mxu0 0.0
    %1064 = vmatprep.subr.mxu0 0.0
    %1065 = vmatpush1.msra.mxu0 0.0
    %1066 = vmatprep.subr.mxu0 0.0
    %1067 = vmatpush1.msra.mxu0 0.0
    %1068 = vmatprep.subr.mxu0 0.0
    %1069 = vmatpush1.msra.mxu0 0.0
    %1070 = vmatprep.subr.mxu0 0.0
    %1071 = vmatpush1.msra.mxu0 0.0
    %1072 = vmatprep.subr.mxu0 0.0
    %1073 = vmatpush1.msra.mxu0 0.0
    %1074 = vmatprep.subr.mxu0 0.0
    %1075 = vmatpush1.msra.mxu0 0.0
    %1076 = vmatprep.subr.mxu0 0.0
    %1077 = vmatpush1.msra.mxu0 0.0
    %1078 = vmatprep.subr.mxu0 0.0
    %1079 = vmatpush1.msra.mxu0 0.0
    %1080 = vmatprep.mubr.f32.mxu0 0.0
    %1081 = vmatmul.mubr.f32.gmra.mrb[0].mxu0 %v1011
    %v1082 = vpop.f32.mrb[0].mxu0
    %v1083 = vadd.f32 0.0, %v1082
    %v1084 = vpop.f32.mrb[0].mxu0
    %1085 = vmatprep.mubr.f32.mxu0 0.0
    %1086 = vmatmul.mubr.f32.gmra.mrb[0].mxu0 %v1014
    %v1087 = vpop.f32.mrb[0].mxu0
    %v1088 = vadd.f32 0.0, %v1087
    %v1089 = vpop.f32.mrb[0].mxu0
    %1090 = vdwg.mxu0
    %v1091 = vld [vmem:[%s12] sm:$0xff]
    %s1092 = scalar_lea.vmem %s6, 32
    %v1093 = vld [vmem:[%s1092] sm:$0xff]
    %v1094 = vld [vmem:[%s1092 + $0x8] sm:$0xff]
    %v1095 = vld [vmem:[%s1092 + $0x10] sm:$0xff]
    %v1096 = vld [vmem:[%s1092 + $0x18] sm:$0xff]
    %s1097 = scalar_lea.vmem %s7, 1
    %v1098 = vld [vmem:[%s1097] sm:$0x1]
    %v1100 = vlaneseq
    %v1101 = vshrl.u32 %v1100, 7
    %v1102 = vsub.s32 0, %v1101
    %v1103 = vrot.slane %v1098, %v1102
    %1105 = vmatprep.subr.mxu0 0.0
    %1106 = vmatpush1.msra.mxu0 %v1093
    %1107 = vmatprep.subr.mxu0 0.0
    %1108 = vmatpush1.msra.mxu0 %v1094
    %1109 = vmatprep.subr.mxu0 0.0
    %1110 = vmatpush1.msra.mxu0 %v1095
    %1111 = vmatprep.subr.mxu0 0.0
    %1112 = vmatpush1.msra.mxu0 %v1096
    %1113 = vmatprep.subr.mxu0 0.0
    %1114 = vmatpush1.msra.mxu0 0.0
    %1115 = vmatprep.subr.mxu0 0.0
    %1116 = vmatpush1.msra.mxu0 0.0
    %1117 = vmatprep.subr.mxu0 0.0
    %1118 = vmatpush1.msra.mxu0 0.0
    %1119 = vmatprep.subr.mxu0 0.0
    %1120 = vmatpush1.msra.mxu0 0.0
    %1121 = vmatprep.subr.mxu0 0.0
    %1122 = vmatpush1.msra.mxu0 0.0
    %1123 = vmatprep.subr.mxu0 0.0
    %1124 = vmatpush1.msra.mxu0 0.0
    %1125 = vmatprep.subr.mxu0 0.0
    %1126 = vmatpush1.msra.mxu0 0.0
    %1127 = vmatprep.subr.mxu0 0.0
    %1128 = vmatpush1.msra.mxu0 0.0
    %1129 = vmatprep.subr.mxu0 0.0
    %1130 = vmatpush1.msra.mxu0 0.0
    %1131 = vmatprep.subr.mxu0 0.0
    %1132 = vmatpush1.msra.mxu0 0.0
    %1133 = vmatprep.subr.mxu0 0.0
    %1134 = vmatpush1.msra.mxu0 0.0
    %1135 = vmatprep.subr.mxu0 0.0
    %1136 = vmatpush1.msra.mxu0 0.0
    %1137 = vmatprep.subr.mxu0 0.0
    %1138 = vmatpush1.msra.mxu0 0.0
    %1139 = vmatprep.subr.mxu0 0.0
    %1140 = vmatpush1.msra.mxu0 0.0
    %1141 = vmatprep.subr.mxu0 0.0
    %1142 = vmatpush1.msra.mxu0 0.0
    %1143 = vmatprep.subr.mxu0 0.0
    %1144 = vmatpush1.msra.mxu0 0.0
    %1145 = vmatprep.subr.mxu0 0.0
    %1146 = vmatpush1.msra.mxu0 0.0
    %1147 = vmatprep.subr.mxu0 0.0
    %1148 = vmatpush1.msra.mxu0 0.0
    %1149 = vmatprep.subr.mxu0 0.0
    %1150 = vmatpush1.msra.mxu0 0.0
    %1151 = vmatprep.subr.mxu0 0.0
    %1152 = vmatpush1.msra.mxu0 0.0
    %1153 = vmatprep.subr.mxu0 0.0
    %1154 = vmatpush1.msra.mxu0 0.0
    %1155 = vmatprep.subr.mxu0 0.0
    %1156 = vmatpush1.msra.mxu0 0.0
    %1157 = vmatprep.subr.mxu0 0.0
    %1158 = vmatpush1.msra.mxu0 0.0
    %1159 = vmatprep.subr.mxu0 0.0
    %1160 = vmatpush1.msra.mxu0 0.0
    %1161 = vmatprep.subr.mxu0 0.0
    %1162 = vmatpush1.msra.mxu0 0.0
    %1163 = vmatprep.subr.mxu0 0.0
    %1164 = vmatpush1.msra.mxu0 0.0
    %1165 = vmatprep.subr.mxu0 0.0
    %1166 = vmatpush1.msra.mxu0 0.0
    %1167 = vmatprep.subr.mxu0 0.0
    %1168 = vmatpush1.msra.mxu0 0.0
    %1169 = vmatprep.mubr.f32.mxu0 0.0
    %1170 = vmatmul.mubr.f32.gmra.mrb[0].mxu0 %v417
    %v1171 = vpop.f32.mrb[0].mxu0
    %v1172 = vadd.f32 %v1103, %v1171
    %v1173 = vpop.f32.mrb[0].mxu0
    %1174 = vmatprep.mubr.f32.mxu0 0.0
    %1175 = vmatmul.mubr.f32.gmra.mrb[0].mxu0 %v420
    %v1176 = vpop.f32.mrb[0].mxu0
    %v1177 = vadd.f32 %v1103, %v1176
    %v1178 = vpop.f32.mrb[0].mxu0
    %1179 = vmatprep.mubr.f32.mxu0 0.0
    %1180 = vmatmul.mubr.f32.gmra.mrb[0].mxu0 %v423
    %v1181 = vpop.f32.mrb[0].mxu0
    %v1182 = vadd.f32 %v1103, %v1181
    %v1183 = vpop.f32.mrb[0].mxu0
    %1184 = vmatprep.mubr.f32.mxu0 0.0
    %1185 = vmatmul.mubr.f32.gmra.mrb[0].mxu0 %v426
    %v1186 = vpop.f32.mrb[0].mxu0
    %v1187 = vadd.f32 %v1103, %v1186
    %v1188 = vpop.f32.mrb[0].mxu0
    %1189 = vdwg.mxu0
    %s1190 = scalar_lea.vmem %s8, 32
    %v1191 = vld [vmem:[%s1190] sm:$0xff]
    %v1192 = vld [vmem:[%s1190 + $0x8] sm:$0xff]
    %v1193 = vld [vmem:[%s1190 + $0x10] sm:$0xff]
    %v1194 = vld [vmem:[%s1190 + $0x18] sm:$0xff]
    %s1195 = scalar_lea.vmem %s9, 1
    %v1196 = vld [vmem:[%s1195] sm:$0x1]
    %v1198 = vlaneseq
    %v1199 = vshrl.u32 %v1198, 7
    %v1200 = vsub.s32 0, %v1199
    %v1201 = vrot.slane %v1196, %v1200
    %1203 = vmatprep.subr.mxu0 0.0
    %1204 = vmatpush1.msra.mxu0 %v1191
    %1205 = vmatprep.subr.mxu0 0.0
    %1206 = vmatpush1.msra.mxu0 %v1192
    %1207 = vmatprep.subr.mxu0 0.0
    %1208 = vmatpush1.msra.mxu0 %v1193
    %1209 = vmatprep.subr.mxu0 0.0
    %1210 = vmatpush1.msra.mxu0 %v1194
    %1211 = vmatprep.subr.mxu0 0.0
    %1212 = vmatpush1.msra.mxu0 0.0
    %1213 = vmatprep.subr.mxu0 0.0
    %1214 = vmatpush1.msra.mxu0 0.0
    %1215 = vmatprep.subr.mxu0 0.0
    %1216 = vmatpush1.msra.mxu0 0.0
    %1217 = vmatprep.subr.mxu0 0.0
    %1218 = vmatpush1.msra.mxu0 0.0
    %1219 = vmatprep.subr.mxu0 0.0
    %1220 = vmatpush1.msra.mxu0 0.0
    %1221 = vmatprep.subr.mxu0 0.0
    %1222 = vmatpush1.msra.mxu0 0.0
    %1223 = vmatprep.subr.mxu0 0.0
    %1224 = vmatpush1.msra.mxu0 0.0
    %1225 = vmatprep.subr.mxu0 0.0
    %1226 = vmatpush1.msra.mxu0 0.0
    %1227 = vmatprep.subr.mxu0 0.0
    %1228 = vmatpush1.msra.mxu0 0.0
    %1229 = vmatprep.subr.mxu0 0.0
    %1230 = vmatpush1.msra.mxu0 0.0
    %1231 = vmatprep.subr.mxu0 0.0
    %1232 = vmatpush1.msra.mxu0 0.0
    %1233 = vmatprep.subr.mxu0 0.0
    %1234 = vmatpush1.msra.mxu0 0.0
    %1235 = vmatprep.subr.mxu0 0.0
    %1236 = vmatpush1.msra.mxu0 0.0
    %1237 = vmatprep.subr.mxu0 0.0
    %1238 = vmatpush1.msra.mxu0 0.0
    %1239 = vmatprep.subr.mxu0 0.0
    %1240 = vmatpush1.msra.mxu0 0.0
    %1241 = vmatprep.subr.mxu0 0.0
    %1242 = vmatpush1.msra.mxu0 0.0
    %1243 = vmatprep.subr.mxu0 0.0
    %1244 = vmatpush1.msra.mxu0 0.0
    %1245 = vmatprep.subr.mxu0 0.0
    %1246 = vmatpush1.msra.mxu0 0.0
    %1247 = vmatprep.subr.mxu0 0.0
    %1248 = vmatpush1.msra.mxu0 0.0
    %1249 = vmatprep.subr.mxu0 0.0
    %1250 = vmatpush1.msra.mxu0 0.0
    %1251 = vmatprep.subr.mxu0 0.0
    %1252 = vmatpush1.msra.mxu0 0.0
    %1253 = vmatprep.subr.mxu0 0.0
    %1254 = vmatpush1.msra.mxu0 0.0
    %1255 = vmatprep.subr.mxu0 0.0
    %1256 = vmatpush1.msra.mxu0 0.0
    %1257 = vmatprep.subr.mxu0 0.0
    %1258 = vmatpush1.msra.mxu0 0.0
    %1259 = vmatprep.subr.mxu0 0.0
    %1260 = vmatpush1.msra.mxu0 0.0
    %1261 = vmatprep.subr.mxu0 0.0
    %1262 = vmatpush1.msra.mxu0 0.0
    %1263 = vmatprep.subr.mxu0 0.0
    %1264 = vmatpush1.msra.mxu0 0.0
    %1265 = vmatprep.subr.mxu0 0.0
    %1266 = vmatpush1.msra.mxu0 0.0
    %1267 = vmatprep.mubr.f32.mxu0 0.0
    %1268 = vmatmul.mubr.f32.gmra.mrb[0].mxu0 %v417
    %v1269 = vpop.f32.mrb[0].mxu0
    %v1270 = vadd.f32 %v1201, %v1269
    %v1271 = vpop.f32.mrb[0].mxu0
    %1272 = vmatprep.mubr.f32.mxu0 0.0
    %1273 = vmatmul.mubr.f32.gmra.mrb[0].mxu0 %v420
    %v1274 = vpop.f32.mrb[0].mxu0
    %v1275 = vadd.f32 %v1201, %v1274
    %v1276 = vpop.f32.mrb[0].mxu0
    %1277 = vmatprep.mubr.f32.mxu0 0.0
    %1278 = vmatmul.mubr.f32.gmra.mrb[0].mxu0 %v423
    %v1279 = vpop.f32.mrb[0].mxu0
    %v1280 = vadd.f32 %v1201, %v1279
    %v1281 = vpop.f32.mrb[0].mxu0
    %1282 = vmatprep.mubr.f32.mxu0 0.0
    %1283 = vmatmul.mubr.f32.gmra.mrb[0].mxu0 %v426
    %v1284 = vpop.f32.mrb[0].mxu0
    %v1285 = vadd.f32 %v1201, %v1284
    %v1286 = vpop.f32.mrb[0].mxu0
    %1287 = vdwg.mxu0
    %s1288 = scalar_lea.vmem %s10, 32
    %v1289 = vld [vmem:[%s1288] sm:$0xff]
    %v1290 = vld [vmem:[%s1288 + $0x8] sm:$0xff]
    %v1291 = vld [vmem:[%s1288 + $0x10] sm:$0xff]
    %v1292 = vld [vmem:[%s1288 + $0x18] sm:$0xff]
    %s1293 = scalar_lea.vmem %s11, 1
    %v1294 = vld [vmem:[%s1293] sm:$0x1]
    %v1296 = vlaneseq
    %v1297 = vshrl.u32 %v1296, 7
    %v1298 = vsub.s32 0, %v1297
    %v1299 = vrot.slane %v1294, %v1298
    %1301 = vmatprep.subr.mxu0 0.0
    %1302 = vmatpush1.msra.mxu0 %v1289
    %1303 = vmatprep.subr.mxu0 0.0
    %1304 = vmatpush1.msra.mxu0 %v1290
    %1305 = vmatprep.subr.mxu0 0.0
    %1306 = vmatpush1.msra.mxu0 %v1291
    %1307 = vmatprep.subr.mxu0 0.0
    %1308 = vmatpush1.msra.mxu0 %v1292
    %1309 = vmatprep.subr.mxu0 0.0
    %1310 = vmatpush1.msra.mxu0 0.0
    %1311 = vmatprep.subr.mxu0 0.0
    %1312 = vmatpush1.msra.mxu0 0.0
    %1313 = vmatprep.subr.mxu0 0.0
    %1314 = vmatpush1.msra.mxu0 0.0
    %1315 = vmatprep.subr.mxu0 0.0
    %1316 = vmatpush1.msra.mxu0 0.0
    %1317 = vmatprep.subr.mxu0 0.0
    %1318 = vmatpush1.msra.mxu0 0.0
    %1319 = vmatprep.subr.mxu0 0.0
    %1320 = vmatpush1.msra.mxu0 0.0
    %1321 = vmatprep.subr.mxu0 0.0
    %1322 = vmatpush1.msra.mxu0 0.0
    %1323 = vmatprep.subr.mxu0 0.0
    %1324 = vmatpush1.msra.mxu0 0.0
    %1325 = vmatprep.subr.mxu0 0.0
    %1326 = vmatpush1.msra.mxu0 0.0
    %1327 = vmatprep.subr.mxu0 0.0
    %1328 = vmatpush1.msra.mxu0 0.0
    %1329 = vmatprep.subr.mxu0 0.0
    %1330 = vmatpush1.msra.mxu0 0.0
    %1331 = vmatprep.subr.mxu0 0.0
    %1332 = vmatpush1.msra.mxu0 0.0
    %1333 = vmatprep.subr.mxu0 0.0
    %1334 = vmatpush1.msra.mxu0 0.0
    %1335 = vmatprep.subr.mxu0 0.0
    %1336 = vmatpush1.msra.mxu0 0.0
    %1337 = vmatprep.subr.mxu0 0.0
    %1338 = vmatpush1.msra.mxu0 0.0
    %1339 = vmatprep.subr.mxu0 0.0
    %1340 = vmatpush1.msra.mxu0 0.0
    %1341 = vmatprep.subr.mxu0 0.0
    %1342 = vmatpush1.msra.mxu0 0.0
    %1343 = vmatprep.subr.mxu0 0.0
    %1344 = vmatpush1.msra.mxu0 0.0
    %1345 = vmatprep.subr.mxu0 0.0
    %1346 = vmatpush1.msra.mxu0 0.0
    %1347 = vmatprep.subr.mxu0 0.0
    %1348 = vmatpush1.msra.mxu0 0.0
    %1349 = vmatprep.subr.mxu0 0.0
    %1350 = vmatpush1.msra.mxu0 0.0
    %1351 = vmatprep.subr.mxu0 0.0
    %1352 = vmatpush1.msra.mxu0 0.0
    %1353 = vmatprep.subr.mxu0 0.0
    %1354 = vmatpush1.msra.mxu0 0.0
    %1355 = vmatprep.subr.mxu0 0.0
    %1356 = vmatpush1.msra.mxu0 0.0
    %1357 = vmatprep.subr.mxu0 0.0
    %1358 = vmatpush1.msra.mxu0 0.0
    %1359 = vmatprep.subr.mxu0 0.0
    %1360 = vmatpush1.msra.mxu0 0.0
    %1361 = vmatprep.subr.mxu0 0.0
    %1362 = vmatpush1.msra.mxu0 0.0
    %1363 = vmatprep.subr.mxu0 0.0
    %1364 = vmatpush1.msra.mxu0 0.0
    %1365 = vmatprep.mubr.f32.mxu0 0.0
    %1366 = vmatmul.mubr.f32.gmra.mrb[0].mxu0 %v417
    %v1367 = vpop.f32.mrb[0].mxu0
    %v1368 = vadd.f32 %v1299, %v1367
    %v1369 = vpop.f32.mrb[0].mxu0
    %1370 = vmatprep.mubr.f32.mxu0 0.0
    %1371 = vmatmul.mubr.f32.gmra.mrb[0].mxu0 %v420
    %v1372 = vpop.f32.mrb[0].mxu0
    %v1373 = vadd.f32 %v1299, %v1372
    %v1374 = vpop.f32.mrb[0].mxu0
    %1375 = vmatprep.mubr.f32.mxu0 0.0
    %1376 = vmatmul.mubr.f32.gmra.mrb[0].mxu0 %v423
    %v1377 = vpop.f32.mrb[0].mxu0
    %v1378 = vadd.f32 %v1299, %v1377
    %v1379 = vpop.f32.mrb[0].mxu0
    %1380 = vmatprep.mubr.f32.mxu0 0.0
    %1381 = vmatmul.mubr.f32.gmra.mrb[0].mxu0 %v426
    %v1382 = vpop.f32.mrb[0].mxu0
    %v1383 = vadd.f32 %v1299, %v1382
    %v1384 = vpop.f32.mrb[0].mxu0
    %1385 = vdwg.mxu0
    %v1387 = vsel %vm705, %v1172, 0
    %v1390 = vsel %vm705, %v1177, 0
    %v1393 = vsel %vm705, %v1270, 0
    %v1396 = vsel %vm705, %v1275, 0
    %1398 = vmatprep.subr.mxu0 0.0
    %1399 = vmatpush1.xpose.msra.mxu0 %v1393
    %1400 = vmatprep.subr.mxu0 0.0
    %1401 = vmatpush1.xpose.msra.mxu0 %v1396
    %1402 = vmatprep.subr.mxu0 0.0
    %1403 = vmatpush1.xpose.msra.mxu0 0.0
    %1404 = vmatprep.subr.mxu0 0.0
    %1405 = vmatpush1.xpose.msra.mxu0 0.0
    %1406 = vmatprep.subr.mxu0 0.0
    %1407 = vmatpush1.xpose.msra.mxu0 0.0
    %1408 = vmatprep.subr.mxu0 0.0
    %1409 = vmatpush1.xpose.msra.mxu0 0.0
    %1410 = vmatprep.subr.mxu0 0.0
    %1411 = vmatpush1.xpose.msra.mxu0 0.0
    %1412 = vmatprep.subr.mxu0 0.0
    %1413 = vmatpush1.xpose.msra.mxu0 0.0
    %1414 = vmatprep.subr.mxu0 0.0
    %1415 = vmatpush1.xpose.msra.mxu0 0.0
    %1416 = vmatprep.subr.mxu0 0.0
    %1417 = vmatpush1.xpose.msra.mxu0 0.0
    %1418 = vmatprep.subr.mxu0 0.0
    %1419 = vmatpush1.xpose.msra.mxu0 0.0
    %1420 = vmatprep.subr.mxu0 0.0
    %1421 = vmatpush1.xpose.msra.mxu0 0.0
    %1422 = vmatprep.subr.mxu0 0.0
    %1423 = vmatpush1.xpose.msra.mxu0 0.0
    %1424 = vmatprep.subr.mxu0 0.0
    %1425 = vmatpush1.xpose.msra.mxu0 0.0
    %1426 = vmatprep.subr.mxu0 0.0
    %1427 = vmatpush1.xpose.msra.mxu0 0.0
    %1428 = vmatprep.subr.mxu0 0.0
    %1429 = vmatpush1.xpose.msra.mxu0 0.0
    %1430 = vmatprep.subr.mxu0 0.0
    %1431 = vmatpush1.xpose.msra.mxu0 0.0
    %1432 = vmatprep.subr.mxu0 0.0
    %1433 = vmatpush1.xpose.msra.mxu0 0.0
    %1434 = vmatprep.subr.mxu0 0.0
    %1435 = vmatpush1.xpose.msra.mxu0 0.0
    %1436 = vmatprep.subr.mxu0 0.0
    %1437 = vmatpush1.xpose.msra.mxu0 0.0
    %1438 = vmatprep.subr.mxu0 0.0
    %1439 = vmatpush1.xpose.msra.mxu0 0.0
    %1440 = vmatprep.subr.mxu0 0.0
    %1441 = vmatpush1.xpose.msra.mxu0 0.0
    %1442 = vmatprep.subr.mxu0 0.0
    %1443 = vmatpush1.xpose.msra.mxu0 0.0
    %1444 = vmatprep.subr.mxu0 0.0
    %1445 = vmatpush1.xpose.msra.mxu0 0.0
    %1446 = vmatprep.subr.mxu0 0.0
    %1447 = vmatpush1.xpose.msra.mxu0 0.0
    %1448 = vmatprep.subr.mxu0 0.0
    %1449 = vmatpush1.xpose.msra.mxu0 0.0
    %1450 = vmatprep.subr.mxu0 0.0
    %1451 = vmatpush1.xpose.msra.mxu0 0.0
    %1452 = vmatprep.subr.mxu0 0.0
    %1453 = vmatpush1.xpose.msra.mxu0 0.0
    %1454 = vmatprep.subr.mxu0 0.0
    %1455 = vmatpush1.xpose.msra.mxu0 0.0
    %1456 = vmatprep.subr.mxu0 0.0
    %1457 = vmatpush1.xpose.msra.mxu0 0.0
    %1458 = vmatprep.subr.mxu0 0.0
    %1459 = vmatpush1.xpose.msra.mxu0 0.0
    %1460 = vmatprep.subr.mxu0 0.0
    %1461 = vmatpush1.xpose.msra.mxu0 0.0
    %1462 = vmatprep.mubr.f32.mxu0 0.0
    %1463 = vmatmul.mubr.f32.gmra.mrb[0].mxu0 %v1387
    %v1464 = vpop.f32.mrb[0].mxu0
    %v1465 = vadd.f32 0.0, %v1464
    %v1466 = vpop.f32.mrb[0].mxu0
    %1467 = vmatprep.mubr.f32.mxu0 0.0
    %1468 = vmatmul.mubr.f32.gmra.mrb[0].mxu0 %v1390
    %v1469 = vpop.f32.mrb[0].mxu0
    %v1470 = vadd.f32 0.0, %v1469
    %v1471 = vpop.f32.mrb[0].mxu0
    %1472 = vdwg.mxu0
    %v1474 = vsel %vm705, %v1182, 0
    %v1477 = vsel %vm705, %v1187, 0
    %v1480 = vsel %vm705, %v1280, 0
    %v1483 = vsel %vm705, %v1285, 0
    %1485 = vmatprep.subr.mxu0 0.0
    %1486 = vmatpush1.xpose.msra.mxu0 %v1480
    %1487 = vmatprep.subr.mxu0 0.0
    %1488 = vmatpush1.xpose.msra.mxu0 %v1483
    %1489 = vmatprep.subr.mxu0 0.0
    %1490 = vmatpush1.xpose.msra.mxu0 0.0
    %1491 = vmatprep.subr.mxu0 0.0
    %1492 = vmatpush1.xpose.msra.mxu0 0.0
    %1493 = vmatprep.subr.mxu0 0.0
    %1494 = vmatpush1.xpose.msra.mxu0 0.0
    %1495 = vmatprep.subr.mxu0 0.0
    %1496 = vmatpush1.xpose.msra.mxu0 0.0
    %1497 = vmatprep.subr.mxu0 0.0
    %1498 = vmatpush1.xpose.msra.mxu0 0.0
    %1499 = vmatprep.subr.mxu0 0.0
    %1500 = vmatpush1.xpose.msra.mxu0 0.0
    %1501 = vmatprep.subr.mxu0 0.0
    %1502 = vmatpush1.xpose.msra.mxu0 0.0
    %1503 = vmatprep.subr.mxu0 0.0
    %1504 = vmatpush1.xpose.msra.mxu0 0.0
    %1505 = vmatprep.subr.mxu0 0.0
    %1506 = vmatpush1.xpose.msra.mxu0 0.0
    %1507 = vmatprep.subr.mxu0 0.0
    %1508 = vmatpush1.xpose.msra.mxu0 0.0
    %1509 = vmatprep.subr.mxu0 0.0
    %1510 = vmatpush1.xpose.msra.mxu0 0.0
    %1511 = vmatprep.subr.mxu0 0.0
    %1512 = vmatpush1.xpose.msra.mxu0 0.0
    %1513 = vmatprep.subr.mxu0 0.0
    %1514 = vmatpush1.xpose.msra.mxu0 0.0
    %1515 = vmatprep.subr.mxu0 0.0
    %1516 = vmatpush1.xpose.msra.mxu0 0.0
    %1517 = vmatprep.subr.mxu0 0.0
    %1518 = vmatpush1.xpose.msra.mxu0 0.0
    %1519 = vmatprep.subr.mxu0 0.0
    %1520 = vmatpush1.xpose.msra.mxu0 0.0
    %1521 = vmatprep.subr.mxu0 0.0
    %1522 = vmatpush1.xpose.msra.mxu0 0.0
    %1523 = vmatprep.subr.mxu0 0.0
    %1524 = vmatpush1.xpose.msra.mxu0 0.0
    %1525 = vmatprep.subr.mxu0 0.0
    %1526 = vmatpush1.xpose.msra.mxu0 0.0
    %1527 = vmatprep.subr.mxu0 0.0
    %1528 = vmatpush1.xpose.msra.mxu0 0.0
    %1529 = vmatprep.subr.mxu0 0.0
    %1530 = vmatpush1.xpose.msra.mxu0 0.0
    %1531 = vmatprep.subr.mxu0 0.0
    %1532 = vmatpush1.xpose.msra.mxu0 0.0
    %1533 = vmatprep.subr.mxu0 0.0
    %1534 = vmatpush1.xpose.msra.mxu0 0.0
    %1535 = vmatprep.subr.mxu0 0.0
    %1536 = vmatpush1.xpose.msra.mxu0 0.0
    %1537 = vmatprep.subr.mxu0 0.0
    %1538 = vmatpush1.xpose.msra.mxu0 0.0
    %1539 = vmatprep.subr.mxu0 0.0
    %1540 = vmatpush1.xpose.msra.mxu0 0.0
    %1541 = vmatprep.subr.mxu0 0.0
    %1542 = vmatpush1.xpose.msra.mxu0 0.0
    %1543 = vmatprep.subr.mxu0 0.0
    %1544 = vmatpush1.xpose.msra.mxu0 0.0
    %1545 = vmatprep.subr.mxu0 0.0
    %1546 = vmatpush1.xpose.msra.mxu0 0.0
    %1547 = vmatprep.subr.mxu0 0.0
    %1548 = vmatpush1.xpose.msra.mxu0 0.0
    %1549 = vmatprep.mubr.f32.mxu0 0.0
    %1550 = vmatmul.mubr.f32.gmra.mrb[0].mxu0 %v1474
    %v1551 = vpop.f32.mrb[0].mxu0
    %v1552 = vadd.f32 0.0, %v1551
    %v1553 = vpop.f32.mrb[0].mxu0
    %1554 = vmatprep.mubr.f32.mxu0 0.0
    %1555 = vmatmul.mubr.f32.gmra.mrb[0].mxu0 %v1477
    %v1556 = vpop.f32.mrb[0].mxu0
    %v1557 = vadd.f32 0.0, %v1556
    %v1558 = vpop.f32.mrb[0].mxu0
    %1559 = vdwg.mxu0
    %v1560 = vmul.f32 %v1465, 0.35355338
    %v1561 = vmul.f32 %v1470, 0.35355338
    %v1562 = vmul.f32 %v1552, 0.35355338
    %v1563 = vmul.f32 %v1557, 0.35355338
    %v1564 = vsel %vm884, %v1560, -inf
    %1565 = vmax.xlane.f32.xlu0 %v1564
    %v1566 = vpop.xlane.xlu0 %1565
    %v1567 = vsel %vm884, %v1561, -inf
    %1568 = vmax.xlane.f32.xlu0 %v1567
    %v1569 = vpop.xlane.xlu0 %1568
    %v1570 = vsel %vm884, %v1562, -inf
    %1571 = vmax.xlane.f32.xlu0 %v1570
    %v1572 = vpop.xlane.xlu0 %1571
    %v1573 = vsel %vm884, %v1563, -inf
    %1574 = vmax.xlane.f32.xlu0 %v1573
    %v1575 = vpop.xlane.xlu0 %1574
    %v1576 = vsub.f32 %v1560, %v1566
    %v1577 = vsub.f32 %v1561, %v1569
    %v1578 = vsub.f32 %v1562, %v1572
    %v1579 = vsub.f32 %v1563, %v1575
    %v1580 = vmul.f32 %v1576, 1.442695
    %v1581 = vpow.pop %v1580
    %v1582 = vmul.f32 %v1577, 1.442695
    %v1583 = vpow.pop %v1582
    %v1584 = vmul.f32 %v1578, 1.442695
    %v1585 = vpow.pop %v1584
    %v1586 = vmul.f32 %v1579, 1.442695
    %v1587 = vpow.pop %v1586
    %v1588 = vsel %vm884, %v1581, 0.0
    %1589 = vadd.xlane.f32.xlu0 %v1588
    %v1590 = vpop.xlane.xlu0 %1589
    %v1591 = vsel %vm884, %v1583, 0.0
    %1592 = vadd.xlane.f32.xlu0 %v1591
    %v1593 = vpop.xlane.xlu0 %1592
    %v1594 = vsel %vm884, %v1585, 0.0
    %1595 = vadd.xlane.f32.xlu0 %v1594
    %v1596 = vpop.xlane.xlu0 %1595
    %v1597 = vsel %vm884, %v1587, 0.0
    %1598 = vadd.xlane.f32.xlu0 %v1597
    %v1599 = vpop.xlane.xlu0 %1598
    %v1600 = vrcp.pop %v1590
    %v1601 = vrcp.pop %v1593
    %v1602 = vrcp.pop %v1596
    %v1603 = vrcp.pop %v1599
    %v1604 = vmul.f32 %v1581, %v1600
    %v1605 = vmul.f32 %v1583, %v1601
    %v1606 = vmul.f32 %v1585, %v1602
    %v1607 = vmul.f32 %v1587, %v1603
    %v1609 = vsel %vm884, %v1604, 0
    %v1612 = vsel %vm884, %v1605, 0
    %1614 = vmatprep.subr.mxu0 0.0
    %1615 = vmatpush1.msra.mxu0 %v1368
    %1616 = vmatprep.subr.mxu0 0.0
    %1617 = vmatpush1.msra.mxu0 %v1373
    %1618 = vmatprep.subr.mxu0 0.0
    %1619 = vmatpush1.msra.mxu0 0.0
    %1620 = vmatprep.subr.mxu0 0.0
    %1621 = vmatpush1.msra.mxu0 0.0
    %1622 = vmatprep.subr.mxu0 0.0
    %1623 = vmatpush1.msra.mxu0 0.0
    %1624 = vmatprep.subr.mxu0 0.0
    %1625 = vmatpush1.msra.mxu0 0.0
    %1626 = vmatprep.subr.mxu0 0.0
    %1627 = vmatpush1.msra.mxu0 0.0
    %1628 = vmatprep.subr.mxu0 0.0
    %1629 = vmatpush1.msra.mxu0 0.0
    %1630 = vmatprep.subr.mxu0 0.0
    %1631 = vmatpush1.msra.mxu0 0.0
    %1632 = vmatprep.subr.mxu0 0.0
    %1633 = vmatpush1.msra.mxu0 0.0
    %1634 = vmatprep.subr.mxu0 0.0
    %1635 = vmatpush1.msra.mxu0 0.0
    %1636 = vmatprep.subr.mxu0 0.0
    %1637 = vmatpush1.msra.mxu0 0.0
    %1638 = vmatprep.subr.mxu0 0.0
    %1639 = vmatpush1.msra.mxu0 0.0
    %1640 = vmatprep.subr.mxu0 0.0
    %1641 = vmatpush1.msra.mxu0 0.0
    %1642 = vmatprep.subr.mxu0 0.0
    %1643 = vmatpush1.msra.mxu0 0.0
    %1644 = vmatprep.subr.mxu0 0.0
    %1645 = vmatpush1.msra.mxu0 0.0
    %1646 = vmatprep.subr.mxu0 0.0
    %1647 = vmatpush1.msra.mxu0 0.0
    %1648 = vmatprep.subr.mxu0 0.0
    %1649 = vmatpush1.msra.mxu0 0.0
    %1650 = vmatprep.subr.mxu0 0.0
    %1651 = vmatpush1.msra.mxu0 0.0
    %1652 = vmatprep.subr.mxu0 0.0
    %1653 = vmatpush1.msra.mxu0 0.0
    %1654 = vmatprep.subr.mxu0 0.0
    %1655 = vmatpush1.msra.mxu0 0.0
    %1656 = vmatprep.subr.mxu0 0.0
    %1657 = vmatpush1.msra.mxu0 0.0
    %1658 = vmatprep.subr.mxu0 0.0
    %1659 = vmatpush1.msra.mxu0 0.0
    %1660 = vmatprep.subr.mxu0 0.0
    %1661 = vmatpush1.msra.mxu0 0.0
    %1662 = vmatprep.subr.mxu0 0.0
    %1663 = vmatpush1.msra.mxu0 0.0
    %1664 = vmatprep.subr.mxu0 0.0
    %1665 = vmatpush1.msra.mxu0 0.0
    %1666 = vmatprep.subr.mxu0 0.0
    %1667 = vmatpush1.msra.mxu0 0.0
    %1668 = vmatprep.subr.mxu0 0.0
    %1669 = vmatpush1.msra.mxu0 0.0
    %1670 = vmatprep.subr.mxu0 0.0
    %1671 = vmatpush1.msra.mxu0 0.0
    %1672 = vmatprep.subr.mxu0 0.0
    %1673 = vmatpush1.msra.mxu0 0.0
    %1674 = vmatprep.subr.mxu0 0.0
    %1675 = vmatpush1.msra.mxu0 0.0
    %1676 = vmatprep.subr.mxu0 0.0
    %1677 = vmatpush1.msra.mxu0 0.0
    %1678 = vmatprep.mubr.f32.mxu0 0.0
    %1679 = vmatmul.mubr.f32.gmra.mrb[0].mxu0 %v1609
    %v1680 = vpop.f32.mrb[0].mxu0
    %v1681 = vadd.f32 0.0, %v1680
    %v1682 = vpop.f32.mrb[0].mxu0
    %1683 = vmatprep.mubr.f32.mxu0 0.0
    %1684 = vmatmul.mubr.f32.gmra.mrb[0].mxu0 %v1612
    %v1685 = vpop.f32.mrb[0].mxu0
    %v1686 = vadd.f32 0.0, %v1685
    %v1687 = vpop.f32.mrb[0].mxu0
    %1688 = vdwg.mxu0
    %v1690 = vsel %vm884, %v1606, 0
    %v1693 = vsel %vm884, %v1607, 0
    %1695 = vmatprep.subr.mxu0 0.0
    %1696 = vmatpush1.msra.mxu0 %v1378
    %1697 = vmatprep.subr.mxu0 0.0
    %1698 = vmatpush1.msra.mxu0 %v1383
    %1699 = vmatprep.subr.mxu0 0.0
    %1700 = vmatpush1.msra.mxu0 0.0
    %1701 = vmatprep.subr.mxu0 0.0
    %1702 = vmatpush1.msra.mxu0 0.0
    %1703 = vmatprep.subr.mxu0 0.0
    %1704 = vmatpush1.msra.mxu0 0.0
    %1705 = vmatprep.subr.mxu0 0.0
    %1706 = vmatpush1.msra.mxu0 0.0
    %1707 = vmatprep.subr.mxu0 0.0
    %1708 = vmatpush1.msra.mxu0 0.0
    %1709 = vmatprep.subr.mxu0 0.0
    %1710 = vmatpush1.msra.mxu0 0.0
    %1711 = vmatprep.subr.mxu0 0.0
    %1712 = vmatpush1.msra.mxu0 0.0
    %1713 = vmatprep.subr.mxu0 0.0
    %1714 = vmatpush1.msra.mxu0 0.0
    %1715 = vmatprep.subr.mxu0 0.0
    %1716 = vmatpush1.msra.mxu0 0.0
    %1717 = vmatprep.subr.mxu0 0.0
    %1718 = vmatpush1.msra.mxu0 0.0
    %1719 = vmatprep.subr.mxu0 0.0
    %1720 = vmatpush1.msra.mxu0 0.0
    %1721 = vmatprep.subr.mxu0 0.0
    %1722 = vmatpush1.msra.mxu0 0.0
    %1723 = vmatprep.subr.mxu0 0.0
    %1724 = vmatpush1.msra.mxu0 0.0
    %1725 = vmatprep.subr.mxu0 0.0
    %1726 = vmatpush1.msra.mxu0 0.0
    %1727 = vmatprep.subr.mxu0 0.0
    %1728 = vmatpush1.msra.mxu0 0.0
    %1729 = vmatprep.subr.mxu0 0.0
    %1730 = vmatpush1.msra.mxu0 0.0
    %1731 = vmatprep.subr.mxu0 0.0
    %1732 = vmatpush1.msra.mxu0 0.0
    %1733 = vmatprep.subr.mxu0 0.0
    %1734 = vmatpush1.msra.mxu0 0.0
    %1735 = vmatprep.subr.mxu0 0.0
    %1736 = vmatpush1.msra.mxu0 0.0
    %1737 = vmatprep.subr.mxu0 0.0
    %1738 = vmatpush1.msra.mxu0 0.0
    %1739 = vmatprep.subr.mxu0 0.0
    %1740 = vmatpush1.msra.mxu0 0.0
    %1741 = vmatprep.subr.mxu0 0.0
    %1742 = vmatpush1.msra.mxu0 0.0
    %1743 = vmatprep.subr.mxu0 0.0
    %1744 = vmatpush1.msra.mxu0 0.0
    %1745 = vmatprep.subr.mxu0 0.0
    %1746 = vmatpush1.msra.mxu0 0.0
    %1747 = vmatprep.subr.mxu0 0.0
    %1748 = vmatpush1.msra.mxu0 0.0
    %1749 = vmatprep.subr.mxu0 0.0
    %1750 = vmatpush1.msra.mxu0 0.0
    %1751 = vmatprep.subr.mxu0 0.0
    %1752 = vmatpush1.msra.mxu0 0.0
    %1753 = vmatprep.subr.mxu0 0.0
    %1754 = vmatpush1.msra.mxu0 0.0
    %1755 = vmatprep.subr.mxu0 0.0
    %1756 = vmatpush1.msra.mxu0 0.0
    %1757 = vmatprep.subr.mxu0 0.0
    %1758 = vmatpush1.msra.mxu0 0.0
    %1759 = vmatprep.mubr.f32.mxu0 0.0
    %1760 = vmatmul.mubr.f32.gmra.mrb[0].mxu0 %v1690
    %v1761 = vpop.f32.mrb[0].mxu0
    %v1762 = vadd.f32 0.0, %v1761
    %v1763 = vpop.f32.mrb[0].mxu0
    %1764 = vmatprep.mubr.f32.mxu0 0.0
    %1765 = vmatmul.mubr.f32.gmra.mrb[0].mxu0 %v1693
    %v1766 = vpop.f32.mrb[0].mxu0
    %v1767 = vadd.f32 0.0, %v1766
    %v1768 = vpop.f32.mrb[0].mxu0
    %1769 = vdwg.mxu0
    %s1770 = scalar_lea.vmem %s12, 8
    %v1771 = vld [vmem:[%s1770] sm:$0xff]
    %v1773 = vsel %vm705, %v1681, 0
    %v1776 = vsel %vm705, %v1686, 0
    %v1779 = vsel %vm705, %v1762, 0
    %v1782 = vsel %vm705, %v1767, 0
    %1784 = vmatprep.subr.mxu0 0.0
    %1785 = vmatpush1.msra.mxu0 %v1771
    %1786 = vmatprep.subr.mxu0 0.0
    %1787 = vmatpush1.msra.mxu0 0.0
    %1788 = vmatprep.subr.mxu0 0.0
    %1789 = vmatpush1.msra.mxu0 0.0
    %1790 = vmatprep.subr.mxu0 0.0
    %1791 = vmatpush1.msra.mxu0 0.0
    %1792 = vmatprep.subr.mxu0 0.0
    %1793 = vmatpush1.msra.mxu0 0.0
    %1794 = vmatprep.subr.mxu0 0.0
    %1795 = vmatpush1.msra.mxu0 0.0
    %1796 = vmatprep.subr.mxu0 0.0
    %1797 = vmatpush1.msra.mxu0 0.0
    %1798 = vmatprep.subr.mxu0 0.0
    %1799 = vmatpush1.msra.mxu0 0.0
    %1800 = vmatprep.subr.mxu0 0.0
    %1801 = vmatpush1.msra.mxu0 0.0
    %1802 = vmatprep.subr.mxu0 0.0
    %1803 = vmatpush1.msra.mxu0 0.0
    %1804 = vmatprep.subr.mxu0 0.0
    %1805 = vmatpush1.msra.mxu0 0.0
    %1806 = vmatprep.subr.mxu0 0.0
    %1807 = vmatpush1.msra.mxu0 0.0
    %1808 = vmatprep.subr.mxu0 0.0
    %1809 = vmatpush1.msra.mxu0 0.0
    %1810 = vmatprep.subr.mxu0 0.0
    %1811 = vmatpush1.msra.mxu0 0.0
    %1812 = vmatprep.subr.mxu0 0.0
    %1813 = vmatpush1.msra.mxu0 0.0
    %1814 = vmatprep.subr.mxu0 0.0
    %1815 = vmatpush1.msra.mxu0 0.0
    %1816 = vmatprep.subr.mxu0 0.0
    %1817 = vmatpush1.msra.mxu0 0.0
    %1818 = vmatprep.subr.mxu0 0.0
    %1819 = vmatpush1.msra.mxu0 0.0
    %1820 = vmatprep.subr.mxu0 0.0
    %1821 = vmatpush1.msra.mxu0 0.0
    %1822 = vmatprep.subr.mxu0 0.0
    %1823 = vmatpush1.msra.mxu0 0.0
    %1824 = vmatprep.subr.mxu0 0.0
    %1825 = vmatpush1.msra.mxu0 0.0
    %1826 = vmatprep.subr.mxu0 0.0
    %1827 = vmatpush1.msra.mxu0 0.0
    %1828 = vmatprep.subr.mxu0 0.0
    %1829 = vmatpush1.msra.mxu0 0.0
    %1830 = vmatprep.subr.mxu0 0.0
    %1831 = vmatpush1.msra.mxu0 0.0
    %1832 = vmatprep.subr.mxu0 0.0
    %1833 = vmatpush1.msra.mxu0 0.0
    %1834 = vmatprep.subr.mxu0 0.0
    %1835 = vmatpush1.msra.mxu0 0.0
    %1836 = vmatprep.subr.mxu0 0.0
    %1837 = vmatpush1.msra.mxu0 0.0
    %1838 = vmatprep.subr.mxu0 0.0
    %1839 = vmatpush1.msra.mxu0 0.0
    %1840 = vmatprep.subr.mxu0 0.0
    %1841 = vmatpush1.msra.mxu0 0.0
    %1842 = vmatprep.subr.mxu0 0.0
    %1843 = vmatpush1.msra.mxu0 0.0
    %1844 = vmatprep.subr.mxu0 0.0
    %1845 = vmatpush1.msra.mxu0 0.0
    %1846 = vmatprep.subr.mxu0 0.0
    %1847 = vmatpush1.msra.mxu0 0.0
    %1848 = vmatprep.mubr.f32.mxu0 0.0
    %1849 = vmatmul.mubr.f32.gmra.mrb[0].mxu0 %v1773
    %v1850 = vpop.f32.mrb[0].mxu0
    %v1851 = vadd.f32 0.0, %v1850
    %v1852 = vpop.f32.mrb[0].mxu0
    %1853 = vmatprep.mubr.f32.mxu0 0.0
    %1854 = vmatmul.mubr.f32.gmra.mrb[0].mxu0 %v1776
    %v1855 = vpop.f32.mrb[0].mxu0
    %v1856 = vadd.f32 0.0, %v1855
    %v1857 = vpop.f32.mrb[0].mxu0
    %1858 = vmatprep.mubr.f32.mxu0 0.0
    %1859 = vmatmul.mubr.f32.gmra.mrb[0].mxu0 %v1779
    %v1860 = vpop.f32.mrb[0].mxu0
    %v1861 = vadd.f32 0.0, %v1860
    %v1862 = vpop.f32.mrb[0].mxu0
    %1863 = vmatprep.mubr.f32.mxu0 0.0
    %1864 = vmatmul.mubr.f32.gmra.mrb[0].mxu0 %v1782
    %v1865 = vpop.f32.mrb[0].mxu0
    %v1866 = vadd.f32 0.0, %v1865
    %v1867 = vpop.f32.mrb[0].mxu0
    %1868 = vdwg.mxu0
    %v1870 = vsel %vm705, %v1002, 0
    %v1873 = vsel %vm705, %v1007, 0
    %v1876 = vsel %vm705, %v1083, 0
    %v1879 = vsel %vm705, %v1088, 0
    %1881 = vmatprep.subr.mxu0 0.0
    %1882 = vmatpush1.msra.mxu0 %v1091
    %1883 = vmatprep.subr.mxu0 0.0
    %1884 = vmatpush1.msra.mxu0 0.0
    %1885 = vmatprep.subr.mxu0 0.0
    %1886 = vmatpush1.msra.mxu0 0.0
    %1887 = vmatprep.subr.mxu0 0.0
    %1888 = vmatpush1.msra.mxu0 0.0
    %1889 = vmatprep.subr.mxu0 0.0
    %1890 = vmatpush1.msra.mxu0 0.0
    %1891 = vmatprep.subr.mxu0 0.0
    %1892 = vmatpush1.msra.mxu0 0.0
    %1893 = vmatprep.subr.mxu0 0.0
    %1894 = vmatpush1.msra.mxu0 0.0
    %1895 = vmatprep.subr.mxu0 0.0
    %1896 = vmatpush1.msra.mxu0 0.0
    %1897 = vmatprep.subr.mxu0 0.0
    %1898 = vmatpush1.msra.mxu0 0.0
    %1899 = vmatprep.subr.mxu0 0.0
    %1900 = vmatpush1.msra.mxu0 0.0
    %1901 = vmatprep.subr.mxu0 0.0
    %1902 = vmatpush1.msra.mxu0 0.0
    %1903 = vmatprep.subr.mxu0 0.0
    %1904 = vmatpush1.msra.mxu0 0.0
    %1905 = vmatprep.subr.mxu0 0.0
    %1906 = vmatpush1.msra.mxu0 0.0
    %1907 = vmatprep.subr.mxu0 0.0
    %1908 = vmatpush1.msra.mxu0 0.0
    %1909 = vmatprep.subr.mxu0 0.0
    %1910 = vmatpush1.msra.mxu0 0.0
    %1911 = vmatprep.subr.mxu0 0.0
    %1912 = vmatpush1.msra.mxu0 0.0
    %1913 = vmatprep.subr.mxu0 0.0
    %1914 = vmatpush1.msra.mxu0 0.0
    %1915 = vmatprep.subr.mxu0 0.0
    %1916 = vmatpush1.msra.mxu0 0.0
    %1917 = vmatprep.subr.mxu0 0.0
    %1918 = vmatpush1.msra.mxu0 0.0
    %1919 = vmatprep.subr.mxu0 0.0
    %1920 = vmatpush1.msra.mxu0 0.0
    %1921 = vmatprep.subr.mxu0 0.0
    %1922 = vmatpush1.msra.mxu0 0.0
    %1923 = vmatprep.subr.mxu0 0.0
    %1924 = vmatpush1.msra.mxu0 0.0
    %1925 = vmatprep.subr.mxu0 0.0
    %1926 = vmatpush1.msra.mxu0 0.0
    %1927 = vmatprep.subr.mxu0 0.0
    %1928 = vmatpush1.msra.mxu0 0.0
    %1929 = vmatprep.subr.mxu0 0.0
    %1930 = vmatpush1.msra.mxu0 0.0
    %1931 = vmatprep.subr.mxu0 0.0
    %1932 = vmatpush1.msra.mxu0 0.0
    %1933 = vmatprep.subr.mxu0 0.0
    %1934 = vmatpush1.msra.mxu0 0.0
    %1935 = vmatprep.subr.mxu0 0.0
    %1936 = vmatpush1.msra.mxu0 0.0
    %1937 = vmatprep.subr.mxu0 0.0
    %1938 = vmatpush1.msra.mxu0 0.0
    %1939 = vmatprep.subr.mxu0 0.0
    %1940 = vmatpush1.msra.mxu0 0.0
    %1941 = vmatprep.subr.mxu0 0.0
    %1942 = vmatpush1.msra.mxu0 0.0
    %1943 = vmatprep.subr.mxu0 0.0
    %1944 = vmatpush1.msra.mxu0 0.0
    %1945 = vmatprep.mubr.f32.mxu0 0.0
    %1946 = vmatmul.mubr.f32.gmra.mrb[0].mxu0 %v1870
    %v1947 = vpop.f32.mrb[0].mxu0
    %v1948 = vadd.f32 %v1851, %v1947
    %v1949 = vpop.f32.mrb[0].mxu0
    %1950 = vmatprep.mubr.f32.mxu0 0.0
    %1951 = vmatmul.mubr.f32.gmra.mrb[0].mxu0 %v1873
    %v1952 = vpop.f32.mrb[0].mxu0
    %v1953 = vadd.f32 %v1856, %v1952
    %v1954 = vpop.f32.mrb[0].mxu0
    %1955 = vmatprep.mubr.f32.mxu0 0.0
    %1956 = vmatmul.mubr.f32.gmra.mrb[0].mxu0 %v1876
    %v1957 = vpop.f32.mrb[0].mxu0
    %v1958 = vadd.f32 %v1861, %v1957
    %v1959 = vpop.f32.mrb[0].mxu0
    %1960 = vmatprep.mubr.f32.mxu0 0.0
    %1961 = vmatmul.mubr.f32.gmra.mrb[0].mxu0 %v1879
    %v1962 = vpop.f32.mrb[0].mxu0
    %v1963 = vadd.f32 %v1866, %v1962
    %v1964 = vpop.f32.mrb[0].mxu0
    %1965 = vdwg.mxu0
    %s1966 = scalar_lea.vmem %s6, 64
    %v1967 = vld [vmem:[%s1966] sm:$0xff]
    %v1968 = vld [vmem:[%s1966 + $0x8] sm:$0xff]
    %v1969 = vld [vmem:[%s1966 + $0x10] sm:$0xff]
    %v1970 = vld [vmem:[%s1966 + $0x18] sm:$0xff]
    %s1971 = scalar_lea.vmem %s7, 2
    %v1972 = vld [vmem:[%s1971] sm:$0x1]
    %v1974 = vlaneseq
    %v1975 = vshrl.u32 %v1974, 7
    %v1976 = vsub.s32 0, %v1975
    %v1977 = vrot.slane %v1972, %v1976
    %1979 = vmatprep.subr.mxu0 0.0
    %1980 = vmatpush1.msra.mxu0 %v1967
    %1981 = vmatprep.subr.mxu0 0.0
    %1982 = vmatpush1.msra.mxu0 %v1968
    %1983 = vmatprep.subr.mxu0 0.0
    %1984 = vmatpush1.msra.mxu0 %v1969
    %1985 = vmatprep.subr.mxu0 0.0
    %1986 = vmatpush1.msra.mxu0 %v1970
    %1987 = vmatprep.subr.mxu0 0.0
    %1988 = vmatpush1.msra.mxu0 0.0
    %1989 = vmatprep.subr.mxu0 0.0
    %1990 = vmatpush1.msra.mxu0 0.0
    %1991 = vmatprep.subr.mxu0 0.0
    %1992 = vmatpush1.msra.mxu0 0.0
    %1993 = vmatprep.subr.mxu0 0.0
    %1994 = vmatpush1.msra.mxu0 0.0
    %1995 = vmatprep.subr.mxu0 0.0
    %1996 = vmatpush1.msra.mxu0 0.0
    %1997 = vmatprep.subr.mxu0 0.0
    %1998 = vmatpush1.msra.mxu0 0.0
    %1999 = vmatprep.subr.mxu0 0.0
    %2000 = vmatpush1.msra.mxu0 0.0
    %2001 = vmatprep.subr.mxu0 0.0
    %2002 = vmatpush1.msra.mxu0 0.0
    %2003 = vmatprep.subr.mxu0 0.0
    %2004 = vmatpush1.msra.mxu0 0.0
    %2005 = vmatprep.subr.mxu0 0.0
    %2006 = vmatpush1.msra.mxu0 0.0
    %2007 = vmatprep.subr.mxu0 0.0
    %2008 = vmatpush1.msra.mxu0 0.0
    %2009 = vmatprep.subr.mxu0 0.0
    %2010 = vmatpush1.msra.mxu0 0.0
    %2011 = vmatprep.subr.mxu0 0.0
    %2012 = vmatpush1.msra.mxu0 0.0
    %2013 = vmatprep.subr.mxu0 0.0
    %2014 = vmatpush1.msra.mxu0 0.0
    %2015 = vmatprep.subr.mxu0 0.0
    %2016 = vmatpush1.msra.mxu0 0.0
    %2017 = vmatprep.subr.mxu0 0.0
    %2018 = vmatpush1.msra.mxu0 0.0
    %2019 = vmatprep.subr.mxu0 0.0
    %2020 = vmatpush1.msra.mxu0 0.0
    %2021 = vmatprep.subr.mxu0 0.0
    %2022 = vmatpush1.msra.mxu0 0.0
    %2023 = vmatprep.subr.mxu0 0.0
    %2024 = vmatpush1.msra.mxu0 0.0
    %2025 = vmatprep.subr.mxu0 0.0
    %2026 = vmatpush1.msra.mxu0 0.0
    %2027 = vmatprep.subr.mxu0 0.0
    %2028 = vmatpush1.msra.mxu0 0.0
    %2029 = vmatprep.subr.mxu0 0.0
    %2030 = vmatpush1.msra.mxu0 0.0
    %2031 = vmatprep.subr.mxu0 0.0
    %2032 = vmatpush1.msra.mxu0 0.0
    %2033 = vmatprep.subr.mxu0 0.0
    %2034 = vmatpush1.msra.mxu0 0.0
    %2035 = vmatprep.subr.mxu0 0.0
    %2036 = vmatpush1.msra.mxu0 0.0
    %2037 = vmatprep.subr.mxu0 0.0
    %2038 = vmatpush1.msra.mxu0 0.0
    %2039 = vmatprep.subr.mxu0 0.0
    %2040 = vmatpush1.msra.mxu0 0.0
    %2041 = vmatprep.subr.mxu0 0.0
    %2042 = vmatpush1.msra.mxu0 0.0
    %2043 = vmatprep.mubr.f32.mxu0 0.0
    %2044 = vmatmul.mubr.f32.gmra.mrb[0].mxu0 %v417
    %v2045 = vpop.f32.mrb[0].mxu0
    %v2046 = vadd.f32 %v1977, %v2045
    %v2047 = vpop.f32.mrb[0].mxu0
    %2048 = vmatprep.mubr.f32.mxu0 0.0
    %2049 = vmatmul.mubr.f32.gmra.mrb[0].mxu0 %v420
    %v2050 = vpop.f32.mrb[0].mxu0
    %v2051 = vadd.f32 %v1977, %v2050
    %v2052 = vpop.f32.mrb[0].mxu0
    %2053 = vmatprep.mubr.f32.mxu0 0.0
    %2054 = vmatmul.mubr.f32.gmra.mrb[0].mxu0 %v423
    %v2055 = vpop.f32.mrb[0].mxu0
    %v2056 = vadd.f32 %v1977, %v2055
    %v2057 = vpop.f32.mrb[0].mxu0
    %2058 = vmatprep.mubr.f32.mxu0 0.0
    %2059 = vmatmul.mubr.f32.gmra.mrb[0].mxu0 %v426
    %v2060 = vpop.f32.mrb[0].mxu0
    %v2061 = vadd.f32 %v1977, %v2060
    %v2062 = vpop.f32.mrb[0].mxu0
    %2063 = vdwg.mxu0
    %s2064 = scalar_lea.vmem %s8, 64
    %v2065 = vld [vmem:[%s2064] sm:$0xff]
    %v2066 = vld [vmem:[%s2064 + $0x8] sm:$0xff]
    %v2067 = vld [vmem:[%s2064 + $0x10] sm:$0xff]
    %v2068 = vld [vmem:[%s2064 + $0x18] sm:$0xff]
    %s2069 = scalar_lea.vmem %s9, 2
    %v2070 = vld [vmem:[%s2069] sm:$0x1]
    %v2072 = vlaneseq
    %v2073 = vshrl.u32 %v2072, 7
    %v2074 = vsub.s32 0, %v2073
    %v2075 = vrot.slane %v2070, %v2074
    %2077 = vmatprep.subr.mxu0 0.0
    %2078 = vmatpush1.msra.mxu0 %v2065
    %2079 = vmatprep.subr.mxu0 0.0
    %2080 = vmatpush1.msra.mxu0 %v2066
    %2081 = vmatprep.subr.mxu0 0.0
    %2082 = vmatpush1.msra.mxu0 %v2067
    %2083 = vmatprep.subr.mxu0 0.0
    %2084 = vmatpush1.msra.mxu0 %v2068
    %2085 = vmatprep.subr.mxu0 0.0
    %2086 = vmatpush1.msra.mxu0 0.0
    %2087 = vmatprep.subr.mxu0 0.0
    %2088 = vmatpush1.msra.mxu0 0.0
    %2089 = vmatprep.subr.mxu0 0.0
    %2090 = vmatpush1.msra.mxu0 0.0
    %2091 = vmatprep.subr.mxu0 0.0
    %2092 = vmatpush1.msra.mxu0 0.0
    %2093 = vmatprep.subr.mxu0 0.0
    %2094 = vmatpush1.msra.mxu0 0.0
    %2095 = vmatprep.subr.mxu0 0.0
    %2096 = vmatpush1.msra.mxu0 0.0
    %2097 = vmatprep.subr.mxu0 0.0
    %2098 = vmatpush1.msra.mxu0 0.0
    %2099 = vmatprep.subr.mxu0 0.0
    %2100 = vmatpush1.msra.mxu0 0.0
    %2101 = vmatprep.subr.mxu0 0.0
    %2102 = vmatpush1.msra.mxu0 0.0
    %2103 = vmatprep.subr.mxu0 0.0
    %2104 = vmatpush1.msra.mxu0 0.0
    %2105 = vmatprep.subr.mxu0 0.0
    %2106 = vmatpush1.msra.mxu0 0.0
    %2107 = vmatprep.subr.mxu0 0.0
    %2108 = vmatpush1.msra.mxu0 0.0
    %2109 = vmatprep.subr.mxu0 0.0
    %2110 = vmatpush1.msra.mxu0 0.0
    %2111 = vmatprep.subr.mxu0 0.0
    %2112 = vmatpush1.msra.mxu0 0.0
    %2113 = vmatprep.subr.mxu0 0.0
    %2114 = vmatpush1.msra.mxu0 0.0
    %2115 = vmatprep.subr.mxu0 0.0
    %2116 = vmatpush1.msra.mxu0 0.0
    %2117 = vmatprep.subr.mxu0 0.0
    %2118 = vmatpush1.msra.mxu0 0.0
    %2119 = vmatprep.subr.mxu0 0.0
    %2120 = vmatpush1.msra.mxu0 0.0
    %2121 = vmatprep.subr.mxu0 0.0
    %2122 = vmatpush1.msra.mxu0 0.0
    %2123 = vmatprep.subr.mxu0 0.0
    %2124 = vmatpush1.msra.mxu0 0.0
    %2125 = vmatprep.subr.mxu0 0.0
    %2126 = vmatpush1.msra.mxu0 0.0
    %2127 = vmatprep.subr.mxu0 0.0
    %2128 = vmatpush1.msra.mxu0 0.0
    %2129 = vmatprep.subr.mxu0 0.0
    %2130 = vmatpush1.msra.mxu0 0.0
    %2131 = vmatprep.subr.mxu0 0.0
    %2132 = vmatpush1.msra.mxu0 0.0
    %2133 = vmatprep.subr.mxu0 0.0
    %2134 = vmatpush1.msra.mxu0 0.0
    %2135 = vmatprep.subr.mxu0 0.0
    %2136 = vmatpush1.msra.mxu0 0.0
    %2137 = vmatprep.subr.mxu0 0.0
    %2138 = vmatpush1.msra.mxu0 0.0
    %2139 = vmatprep.subr.mxu0 0.0
    %2140 = vmatpush1.msra.mxu0 0.0
    %2141 = vmatprep.mubr.f32.mxu0 0.0
    %2142 = vmatmul.mubr.f32.gmra.mrb[0].mxu0 %v417
    %v2143 = vpop.f32.mrb[0].mxu0
    %v2144 = vadd.f32 %v2075, %v2143
    %v2145 = vpop.f32.mrb[0].mxu0
    %2146 = vmatprep.mubr.f32.mxu0 0.0
    %2147 = vmatmul.mubr.f32.gmra.mrb[0].mxu0 %v420
    %v2148 = vpop.f32.mrb[0].mxu0
    %v2149 = vadd.f32 %v2075, %v2148
    %v2150 = vpop.f32.mrb[0].mxu0
    %2151 = vmatprep.mubr.f32.mxu0 0.0
    %2152 = vmatmul.mubr.f32.gmra.mrb[0].mxu0 %v423
    %v2153 = vpop.f32.mrb[0].mxu0
    %v2154 = vadd.f32 %v2075, %v2153
    %v2155 = vpop.f32.mrb[0].mxu0
    %2156 = vmatprep.mubr.f32.mxu0 0.0
    %2157 = vmatmul.mubr.f32.gmra.mrb[0].mxu0 %v426
    %v2158 = vpop.f32.mrb[0].mxu0
    %v2159 = vadd.f32 %v2075, %v2158
    %v2160 = vpop.f32.mrb[0].mxu0
    %2161 = vdwg.mxu0
    %s2162 = scalar_lea.vmem %s10, 64
    %v2163 = vld [vmem:[%s2162] sm:$0xff]
    %v2164 = vld [vmem:[%s2162 + $0x8] sm:$0xff]
    %v2165 = vld [vmem:[%s2162 + $0x10] sm:$0xff]
    %v2166 = vld [vmem:[%s2162 + $0x18] sm:$0xff]
    %s2167 = scalar_lea.vmem %s11, 2
    %v2168 = vld [vmem:[%s2167] sm:$0x1]
    %v2170 = vlaneseq
    %v2171 = vshrl.u32 %v2170, 7
    %v2172 = vsub.s32 0, %v2171
    %v2173 = vrot.slane %v2168, %v2172
    %2175 = vmatprep.subr.mxu0 0.0
    %2176 = vmatpush1.msra.mxu0 %v2163
    %2177 = vmatprep.subr.mxu0 0.0
    %2178 = vmatpush1.msra.mxu0 %v2164
    %2179 = vmatprep.subr.mxu0 0.0
    %2180 = vmatpush1.msra.mxu0 %v2165
    %2181 = vmatprep.subr.mxu0 0.0
    %2182 = vmatpush1.msra.mxu0 %v2166
    %2183 = vmatprep.subr.mxu0 0.0
    %2184 = vmatpush1.msra.mxu0 0.0
    %2185 = vmatprep.subr.mxu0 0.0
    %2186 = vmatpush1.msra.mxu0 0.0
    %2187 = vmatprep.subr.mxu0 0.0
    %2188 = vmatpush1.msra.mxu0 0.0
    %2189 = vmatprep.subr.mxu0 0.0
    %2190 = vmatpush1.msra.mxu0 0.0
    %2191 = vmatprep.subr.mxu0 0.0
    %2192 = vmatpush1.msra.mxu0 0.0
    %2193 = vmatprep.subr.mxu0 0.0
    %2194 = vmatpush1.msra.mxu0 0.0
    %2195 = vmatprep.subr.mxu0 0.0
    %2196 = vmatpush1.msra.mxu0 0.0
    %2197 = vmatprep.subr.mxu0 0.0
    %2198 = vmatpush1.msra.mxu0 0.0
    %2199 = vmatprep.subr.mxu0 0.0
    %2200 = vmatpush1.msra.mxu0 0.0
    %2201 = vmatprep.subr.mxu0 0.0
    %2202 = vmatpush1.msra.mxu0 0.0
    %2203 = vmatprep.subr.mxu0 0.0
    %2204 = vmatpush1.msra.mxu0 0.0
    %2205 = vmatprep.subr.mxu0 0.0
    %2206 = vmatpush1.msra.mxu0 0.0
    %2207 = vmatprep.subr.mxu0 0.0
    %2208 = vmatpush1.msra.mxu0 0.0
    %2209 = vmatprep.subr.mxu0 0.0
    %2210 = vmatpush1.msra.mxu0 0.0
    %2211 = vmatprep.subr.mxu0 0.0
    %2212 = vmatpush1.msra.mxu0 0.0
    %2213 = vmatprep.subr.mxu0 0.0
    %2214 = vmatpush1.msra.mxu0 0.0
    %2215 = vmatprep.subr.mxu0 0.0
    %2216 = vmatpush1.msra.mxu0 0.0
    %2217 = vmatprep.subr.mxu0 0.0
    %2218 = vmatpush1.msra.mxu0 0.0
    %2219 = vmatprep.subr.mxu0 0.0
    %2220 = vmatpush1.msra.mxu0 0.0
    %2221 = vmatprep.subr.mxu0 0.0
    %2222 = vmatpush1.msra.mxu0 0.0
    %2223 = vmatprep.subr.mxu0 0.0
    %2224 = vmatpush1.msra.mxu0 0.0
    %2225 = vmatprep.subr.mxu0 0.0
    %2226 = vmatpush1.msra.mxu0 0.0
    %2227 = vmatprep.subr.mxu0 0.0
    %2228 = vmatpush1.msra.mxu0 0.0
    %2229 = vmatprep.subr.mxu0 0.0
    %2230 = vmatpush1.msra.mxu0 0.0
    %2231 = vmatprep.subr.mxu0 0.0
    %2232 = vmatpush1.msra.mxu0 0.0
    %2233 = vmatprep.subr.mxu0 0.0
    %2234 = vmatpush1.msra.mxu0 0.0
    %2235 = vmatprep.subr.mxu0 0.0
    %2236 = vmatpush1.msra.mxu0 0.0
    %2237 = vmatprep.subr.mxu0 0.0
    %2238 = vmatpush1.msra.mxu0 0.0
    %2239 = vmatprep.mubr.f32.mxu0 0.0
    %2240 = vmatmul.mubr.f32.gmra.mrb[0].mxu0 %v417
    %v2241 = vpop.f32.mrb[0].mxu0
    %v2242 = vadd.f32 %v2173, %v2241
    %v2243 = vpop.f32.mrb[0].mxu0
    %2244 = vmatprep.mubr.f32.mxu0 0.0
    %2245 = vmatmul.mubr.f32.gmra.mrb[0].mxu0 %v420
    %v2246 = vpop.f32.mrb[0].mxu0
    %v2247 = vadd.f32 %v2173, %v2246
    %v2248 = vpop.f32.mrb[0].mxu0
    %2249 = vmatprep.mubr.f32.mxu0 0.0
    %2250 = vmatmul.mubr.f32.gmra.mrb[0].mxu0 %v423
    %v2251 = vpop.f32.mrb[0].mxu0
    %v2252 = vadd.f32 %v2173, %v2251
    %v2253 = vpop.f32.mrb[0].mxu0
    %2254 = vmatprep.mubr.f32.mxu0 0.0
    %2255 = vmatmul.mubr.f32.gmra.mrb[0].mxu0 %v426
    %v2256 = vpop.f32.mrb[0].mxu0
    %v2257 = vadd.f32 %v2173, %v2256
    %v2258 = vpop.f32.mrb[0].mxu0
    %2259 = vdwg.mxu0
    %v2261 = vsel %vm705, %v2046, 0
    %v2264 = vsel %vm705, %v2051, 0
    %v2267 = vsel %vm705, %v2144, 0
    %v2270 = vsel %vm705, %v2149, 0
    %2272 = vmatprep.subr.mxu0 0.0
    %2273 = vmatpush1.xpose.msra.mxu0 %v2267
    %2274 = vmatprep.subr.mxu0 0.0
    %2275 = vmatpush1.xpose.msra.mxu0 %v2270
    %2276 = vmatprep.subr.mxu0 0.0
    %2277 = vmatpush1.xpose.msra.mxu0 0.0
    %2278 = vmatprep.subr.mxu0 0.0
    %2279 = vmatpush1.xpose.msra.mxu0 0.0
    %2280 = vmatprep.subr.mxu0 0.0
    %2281 = vmatpush1.xpose.msra.mxu0 0.0
    %2282 = vmatprep.subr.mxu0 0.0
    %2283 = vmatpush1.xpose.msra.mxu0 0.0
    %2284 = vmatprep.subr.mxu0 0.0
    %2285 = vmatpush1.xpose.msra.mxu0 0.0
    %2286 = vmatprep.subr.mxu0 0.0
    %2287 = vmatpush1.xpose.msra.mxu0 0.0
    %2288 = vmatprep.subr.mxu0 0.0
    %2289 = vmatpush1.xpose.msra.mxu0 0.0
    %2290 = vmatprep.subr.mxu0 0.0
    %2291 = vmatpush1.xpose.msra.mxu0 0.0
    %2292 = vmatprep.subr.mxu0 0.0
    %2293 = vmatpush1.xpose.msra.mxu0 0.0
    %2294 = vmatprep.subr.mxu0 0.0
    %2295 = vmatpush1.xpose.msra.mxu0 0.0
    %2296 = vmatprep.subr.mxu0 0.0
    %2297 = vmatpush1.xpose.msra.mxu0 0.0
    %2298 = vmatprep.subr.mxu0 0.0
    %2299 = vmatpush1.xpose.msra.mxu0 0.0
    %2300 = vmatprep.subr.mxu0 0.0
    %2301 = vmatpush1.xpose.msra.mxu0 0.0
    %2302 = vmatprep.subr.mxu0 0.0
    %2303 = vmatpush1.xpose.msra.mxu0 0.0
    %2304 = vmatprep.subr.mxu0 0.0
    %2305 = vmatpush1.xpose.msra.mxu0 0.0
    %2306 = vmatprep.subr.mxu0 0.0
    %2307 = vmatpush1.xpose.msra.mxu0 0.0
    %2308 = vmatprep.subr.mxu0 0.0
    %2309 = vmatpush1.xpose.msra.mxu0 0.0
    %2310 = vmatprep.subr.mxu0 0.0
    %2311 = vmatpush1.xpose.msra.mxu0 0.0
    %2312 = vmatprep.subr.mxu0 0.0
    %2313 = vmatpush1.xpose.msra.mxu0 0.0
    %2314 = vmatprep.subr.mxu0 0.0
    %2315 = vmatpush1.xpose.msra.mxu0 0.0
    %2316 = vmatprep.subr.mxu0 0.0
    %2317 = vmatpush1.xpose.msra.mxu0 0.0
    %2318 = vmatprep.subr.mxu0 0.0
    %2319 = vmatpush1.xpose.msra.mxu0 0.0
    %2320 = vmatprep.subr.mxu0 0.0
    %2321 = vmatpush1.xpose.msra.mxu0 0.0
    %2322 = vmatprep.subr.mxu0 0.0
    %2323 = vmatpush1.xpose.msra.mxu0 0.0
    %2324 = vmatprep.subr.mxu0 0.0
    %2325 = vmatpush1.xpose.msra.mxu0 0.0
    %2326 = vmatprep.subr.mxu0 0.0
    %2327 = vmatpush1.xpose.msra.mxu0 0.0
    %2328 = vmatprep.subr.mxu0 0.0
    %2329 = vmatpush1.xpose.msra.mxu0 0.0
    %2330 = vmatprep.subr.mxu0 0.0
    %2331 = vmatpush1.xpose.msra.mxu0 0.0
    %2332 = vmatprep.subr.mxu0 0.0
    %2333 = vmatpush1.xpose.msra.mxu0 0.0
    %2334 = vmatprep.subr.mxu0 0.0
    %2335 = vmatpush1.xpose.msra.mxu0 0.0
    %2336 = vmatprep.mubr.f32.mxu0 0.0
    %2337 = vmatmul.mubr.f32.gmra.mrb[0].mxu0 %v2261
    %v2338 = vpop.f32.mrb[0].mxu0
    %v2339 = vadd.f32 0.0, %v2338
    %v2340 = vpop.f32.mrb[0].mxu0
    %2341 = vmatprep.mubr.f32.mxu0 0.0
    %2342 = vmatmul.mubr.f32.gmra.mrb[0].mxu0 %v2264
    %v2343 = vpop.f32.mrb[0].mxu0
    %v2344 = vadd.f32 0.0, %v2343
    %v2345 = vpop.f32.mrb[0].mxu0
    %2346 = vdwg.mxu0
    %v2348 = vsel %vm705, %v2056, 0
    %v2351 = vsel %vm705, %v2061, 0
    %v2354 = vsel %vm705, %v2154, 0
    %v2357 = vsel %vm705, %v2159, 0
    %2359 = vmatprep.subr.mxu0 0.0
    %2360 = vmatpush1.xpose.msra.mxu0 %v2354
    %2361 = vmatprep.subr.mxu0 0.0
    %2362 = vmatpush1.xpose.msra.mxu0 %v2357
    %2363 = vmatprep.subr.mxu0 0.0
    %2364 = vmatpush1.xpose.msra.mxu0 0.0
    %2365 = vmatprep.subr.mxu0 0.0
    %2366 = vmatpush1.xpose.msra.mxu0 0.0
    %2367 = vmatprep.subr.mxu0 0.0
    %2368 = vmatpush1.xpose.msra.mxu0 0.0
    %2369 = vmatprep.subr.mxu0 0.0
    %2370 = vmatpush1.xpose.msra.mxu0 0.0
    %2371 = vmatprep.subr.mxu0 0.0
    %2372 = vmatpush1.xpose.msra.mxu0 0.0
    %2373 = vmatprep.subr.mxu0 0.0
    %2374 = vmatpush1.xpose.msra.mxu0 0.0
    %2375 = vmatprep.subr.mxu0 0.0
    %2376 = vmatpush1.xpose.msra.mxu0 0.0
    %2377 = vmatprep.subr.mxu0 0.0
    %2378 = vmatpush1.xpose.msra.mxu0 0.0
    %2379 = vmatprep.subr.mxu0 0.0
    %2380 = vmatpush1.xpose.msra.mxu0 0.0
    %2381 = vmatprep.subr.mxu0 0.0
    %2382 = vmatpush1.xpose.msra.mxu0 0.0
    %2383 = vmatprep.subr.mxu0 0.0
    %2384 = vmatpush1.xpose.msra.mxu0 0.0
    %2385 = vmatprep.subr.mxu0 0.0
    %2386 = vmatpush1.xpose.msra.mxu0 0.0
    %2387 = vmatprep.subr.mxu0 0.0
    %2388 = vmatpush1.xpose.msra.mxu0 0.0
    %2389 = vmatprep.subr.mxu0 0.0
    %2390 = vmatpush1.xpose.msra.mxu0 0.0
    %2391 = vmatprep.subr.mxu0 0.0
    %2392 = vmatpush1.xpose.msra.mxu0 0.0
    %2393 = vmatprep.subr.mxu0 0.0
    %2394 = vmatpush1.xpose.msra.mxu0 0.0
    %2395 = vmatprep.subr.mxu0 0.0
    %2396 = vmatpush1.xpose.msra.mxu0 0.0
    %2397 = vmatprep.subr.mxu0 0.0
    %2398 = vmatpush1.xpose.msra.mxu0 0.0
    %2399 = vmatprep.subr.mxu0 0.0
    %2400 = vmatpush1.xpose.msra.mxu0 0.0
    %2401 = vmatprep.subr.mxu0 0.0
    %2402 = vmatpush1.xpose.msra.mxu0 0.0
    %2403 = vmatprep.subr.mxu0 0.0
    %2404 = vmatpush1.xpose.msra.mxu0 0.0
    %2405 = vmatprep.subr.mxu0 0.0
    %2406 = vmatpush1.xpose.msra.mxu0 0.0
    %2407 = vmatprep.subr.mxu0 0.0
    %2408 = vmatpush1.xpose.msra.mxu0 0.0
    %2409 = vmatprep.subr.mxu0 0.0
    %2410 = vmatpush1.xpose.msra.mxu0 0.0
    %2411 = vmatprep.subr.mxu0 0.0
    %2412 = vmatpush1.xpose.msra.mxu0 0.0
    %2413 = vmatprep.subr.mxu0 0.0
    %2414 = vmatpush1.xpose.msra.mxu0 0.0
    %2415 = vmatprep.subr.mxu0 0.0
    %2416 = vmatpush1.xpose.msra.mxu0 0.0
    %2417 = vmatprep.subr.mxu0 0.0
    %2418 = vmatpush1.xpose.msra.mxu0 0.0
    %2419 = vmatprep.subr.mxu0 0.0
    %2420 = vmatpush1.xpose.msra.mxu0 0.0
    %2421 = vmatprep.subr.mxu0 0.0
    %2422 = vmatpush1.xpose.msra.mxu0 0.0
    %2423 = vmatprep.mubr.f32.mxu0 0.0
    %2424 = vmatmul.mubr.f32.gmra.mrb[0].mxu0 %v2348
    %v2425 = vpop.f32.mrb[0].mxu0
    %v2426 = vadd.f32 0.0, %v2425
    %v2427 = vpop.f32.mrb[0].mxu0
    %2428 = vmatprep.mubr.f32.mxu0 0.0
    %2429 = vmatmul.mubr.f32.gmra.mrb[0].mxu0 %v2351
    %v2430 = vpop.f32.mrb[0].mxu0
    %v2431 = vadd.f32 0.0, %v2430
    %v2432 = vpop.f32.mrb[0].mxu0
    %2433 = vdwg.mxu0
    %v2434 = vmul.f32 %v2339, 0.35355338
    %v2435 = vmul.f32 %v2344, 0.35355338
    %v2436 = vmul.f32 %v2426, 0.35355338
    %v2437 = vmul.f32 %v2431, 0.35355338
    %v2438 = vsel %vm884, %v2434, -inf
    %2439 = vmax.xlane.f32.xlu0 %v2438
    %v2440 = vpop.xlane.xlu0 %2439
    %v2441 = vsel %vm884, %v2435, -inf
    %2442 = vmax.xlane.f32.xlu0 %v2441
    %v2443 = vpop.xlane.xlu0 %2442
    %v2444 = vsel %vm884, %v2436, -inf
    %2445 = vmax.xlane.f32.xlu0 %v2444
    %v2446 = vpop.xlane.xlu0 %2445
    %v2447 = vsel %vm884, %v2437, -inf
    %2448 = vmax.xlane.f32.xlu0 %v2447
    %v2449 = vpop.xlane.xlu0 %2448
    %v2450 = vsub.f32 %v2434, %v2440
    %v2451 = vsub.f32 %v2435, %v2443
    %v2452 = vsub.f32 %v2436, %v2446
    %v2453 = vsub.f32 %v2437, %v2449
    %v2454 = vmul.f32 %v2450, 1.442695
    %v2455 = vpow.pop %v2454
    %v2456 = vmul.f32 %v2451, 1.442695
    %v2457 = vpow.pop %v2456
    %v2458 = vmul.f32 %v2452, 1.442695
    %v2459 = vpow.pop %v2458
    %v2460 = vmul.f32 %v2453, 1.442695
    %v2461 = vpow.pop %v2460
    %v2462 = vsel %vm884, %v2455, 0.0
    %2463 = vadd.xlane.f32.xlu0 %v2462
    %v2464 = vpop.xlane.xlu0 %2463
    %v2465 = vsel %vm884, %v2457, 0.0
    %2466 = vadd.xlane.f32.xlu0 %v2465
    %v2467 = vpop.xlane.xlu0 %2466
    %v2468 = vsel %vm884, %v2459, 0.0
    %2469 = vadd.xlane.f32.xlu0 %v2468
    %v2470 = vpop.xlane.xlu0 %2469
    %v2471 = vsel %vm884, %v2461, 0.0
    %2472 = vadd.xlane.f32.xlu0 %v2471
    %v2473 = vpop.xlane.xlu0 %2472
    %v2474 = vrcp.pop %v2464
    %v2475 = vrcp.pop %v2467
    %v2476 = vrcp.pop %v2470
    %v2477 = vrcp.pop %v2473
    %v2478 = vmul.f32 %v2455, %v2474
    %v2479 = vmul.f32 %v2457, %v2475
    %v2480 = vmul.f32 %v2459, %v2476
    %v2481 = vmul.f32 %v2461, %v2477
    %v2483 = vsel %vm884, %v2478, 0
    %v2486 = vsel %vm884, %v2479, 0
    %2488 = vmatprep.subr.mxu0 0.0
    %2489 = vmatpush1.msra.mxu0 %v2242
    %2490 = vmatprep.subr.mxu0 0.0
    %2491 = vmatpush1.msra.mxu0 %v2247
    %2492 = vmatprep.subr.mxu0 0.0
    %2493 = vmatpush1.msra.mxu0 0.0
    %2494 = vmatprep.subr.mxu0 0.0
    %2495 = vmatpush1.msra.mxu0 0.0
    %2496 = vmatprep.subr.mxu0 0.0
    %2497 = vmatpush1.msra.mxu0 0.0
    %2498 = vmatprep.subr.mxu0 0.0
    %2499 = vmatpush1.msra.mxu0 0.0
    %2500 = vmatprep.subr.mxu0 0.0
    %2501 = vmatpush1.msra.mxu0 0.0
    %2502 = vmatprep.subr.mxu0 0.0
    %2503 = vmatpush1.msra.mxu0 0.0
    %2504 = vmatprep.subr.mxu0 0.0
    %2505 = vmatpush1.msra.mxu0 0.0
    %2506 = vmatprep.subr.mxu0 0.0
    %2507 = vmatpush1.msra.mxu0 0.0
    %2508 = vmatprep.subr.mxu0 0.0
    %2509 = vmatpush1.msra.mxu0 0.0
    %2510 = vmatprep.subr.mxu0 0.0
    %2511 = vmatpush1.msra.mxu0 0.0
    %2512 = vmatprep.subr.mxu0 0.0
    %2513 = vmatpush1.msra.mxu0 0.0
    %2514 = vmatprep.subr.mxu0 0.0
    %2515 = vmatpush1.msra.mxu0 0.0
    %2516 = vmatprep.subr.mxu0 0.0
    %2517 = vmatpush1.msra.mxu0 0.0
    %2518 = vmatprep.subr.mxu0 0.0
    %2519 = vmatpush1.msra.mxu0 0.0
    %2520 = vmatprep.subr.mxu0 0.0
    %2521 = vmatpush1.msra.mxu0 0.0
    %2522 = vmatprep.subr.mxu0 0.0
    %2523 = vmatpush1.msra.mxu0 0.0
    %2524 = vmatprep.subr.mxu0 0.0
    %2525 = vmatpush1.msra.mxu0 0.0
    %2526 = vmatprep.subr.mxu0 0.0
    %2527 = vmatpush1.msra.mxu0 0.0
    %2528 = vmatprep.subr.mxu0 0.0
    %2529 = vmatpush1.msra.mxu0 0.0
    %2530 = vmatprep.subr.mxu0 0.0
    %2531 = vmatpush1.msra.mxu0 0.0
    %2532 = vmatprep.subr.mxu0 0.0
    %2533 = vmatpush1.msra.mxu0 0.0
    %2534 = vmatprep.subr.mxu0 0.0
    %2535 = vmatpush1.msra.mxu0 0.0
    %2536 = vmatprep.subr.mxu0 0.0
    %2537 = vmatpush1.msra.mxu0 0.0
    %2538 = vmatprep.subr.mxu0 0.0
    %2539 = vmatpush1.msra.mxu0 0.0
    %2540 = vmatprep.subr.mxu0 0.0
    %2541 = vmatpush1.msra.mxu0 0.0
    %2542 = vmatprep.subr.mxu0 0.0
    %2543 = vmatpush1.msra.mxu0 0.0
    %2544 = vmatprep.subr.mxu0 0.0
    %2545 = vmatpush1.msra.mxu0 0.0
    %2546 = vmatprep.subr.mxu0 0.0
    %2547 = vmatpush1.msra.mxu0 0.0
    %2548 = vmatprep.subr.mxu0 0.0
    %2549 = vmatpush1.msra.mxu0 0.0
    %2550 = vmatprep.subr.mxu0 0.0
    %2551 = vmatpush1.msra.mxu0 0.0
    %2552 = vmatprep.mubr.f32.mxu0 0.0
    %2553 = vmatmul.mubr.f32.gmra.mrb[0].mxu0 %v2483
    %v2554 = vpop.f32.mrb[0].mxu0
    %v2555 = vadd.f32 0.0, %v2554
    %v2556 = vpop.f32.mrb[0].mxu0
    %2557 = vmatprep.mubr.f32.mxu0 0.0
    %2558 = vmatmul.mubr.f32.gmra.mrb[0].mxu0 %v2486
    %v2559 = vpop.f32.mrb[0].mxu0
    %v2560 = vadd.f32 0.0, %v2559
    %v2561 = vpop.f32.mrb[0].mxu0
    %2562 = vdwg.mxu0
    %v2564 = vsel %vm884, %v2480, 0
    %v2567 = vsel %vm884, %v2481, 0
    %2569 = vmatprep.subr.mxu0 0.0
    %2570 = vmatpush1.msra.mxu0 %v2252
    %2571 = vmatprep.subr.mxu0 0.0
    %2572 = vmatpush1.msra.mxu0 %v2257
    %2573 = vmatprep.subr.mxu0 0.0
    %2574 = vmatpush1.msra.mxu0 0.0
    %2575 = vmatprep.subr.mxu0 0.0
    %2576 = vmatpush1.msra.mxu0 0.0
    %2577 = vmatprep.subr.mxu0 0.0
    %2578 = vmatpush1.msra.mxu0 0.0
    %2579 = vmatprep.subr.mxu0 0.0
    %2580 = vmatpush1.msra.mxu0 0.0
    %2581 = vmatprep.subr.mxu0 0.0
    %2582 = vmatpush1.msra.mxu0 0.0
    %2583 = vmatprep.subr.mxu0 0.0
    %2584 = vmatpush1.msra.mxu0 0.0
    %2585 = vmatprep.subr.mxu0 0.0
    %2586 = vmatpush1.msra.mxu0 0.0
    %2587 = vmatprep.subr.mxu0 0.0
    %2588 = vmatpush1.msra.mxu0 0.0
    %2589 = vmatprep.subr.mxu0 0.0
    %2590 = vmatpush1.msra.mxu0 0.0
    %2591 = vmatprep.subr.mxu0 0.0
    %2592 = vmatpush1.msra.mxu0 0.0
    %2593 = vmatprep.subr.mxu0 0.0
    %2594 = vmatpush1.msra.mxu0 0.0
    %2595 = vmatprep.subr.mxu0 0.0
    %2596 = vmatpush1.msra.mxu0 0.0
    %2597 = vmatprep.subr.mxu0 0.0
    %2598 = vmatpush1.msra.mxu0 0.0
    %2599 = vmatprep.subr.mxu0 0.0
    %2600 = vmatpush1.msra.mxu0 0.0
    %2601 = vmatprep.subr.mxu0 0.0
    %2602 = vmatpush1.msra.mxu0 0.0
    %2603 = vmatprep.subr.mxu0 0.0
    %2604 = vmatpush1.msra.mxu0 0.0
    %2605 = vmatprep.subr.mxu0 0.0
    %2606 = vmatpush1.msra.mxu0 0.0
    %2607 = vmatprep.subr.mxu0 0.0
    %2608 = vmatpush1.msra.mxu0 0.0
    %2609 = vmatprep.subr.mxu0 0.0
    %2610 = vmatpush1.msra.mxu0 0.0
    %2611 = vmatprep.subr.mxu0 0.0
    %2612 = vmatpush1.msra.mxu0 0.0
    %2613 = vmatprep.subr.mxu0 0.0
    %2614 = vmatpush1.msra.mxu0 0.0
    %2615 = vmatprep.subr.mxu0 0.0
    %2616 = vmatpush1.msra.mxu0 0.0
    %2617 = vmatprep.subr.mxu0 0.0
    %2618 = vmatpush1.msra.mxu0 0.0
    %2619 = vmatprep.subr.mxu0 0.0
    %2620 = vmatpush1.msra.mxu0 0.0
    %2621 = vmatprep.subr.mxu0 0.0
    %2622 = vmatpush1.msra.mxu0 0.0
    %2623 = vmatprep.subr.mxu0 0.0
    %2624 = vmatpush1.msra.mxu0 0.0
    %2625 = vmatprep.subr.mxu0 0.0
    %2626 = vmatpush1.msra.mxu0 0.0
    %2627 = vmatprep.subr.mxu0 0.0
    %2628 = vmatpush1.msra.mxu0 0.0
    %2629 = vmatprep.subr.mxu0 0.0
    %2630 = vmatpush1.msra.mxu0 0.0
    %2631 = vmatprep.subr.mxu0 0.0
    %2632 = vmatpush1.msra.mxu0 0.0
    %2633 = vmatprep.mubr.f32.mxu0 0.0
    %2634 = vmatmul.mubr.f32.gmra.mrb[0].mxu0 %v2564
    %v2635 = vpop.f32.mrb[0].mxu0
    %v2636 = vadd.f32 0.0, %v2635
    %v2637 = vpop.f32.mrb[0].mxu0
    %2638 = vmatprep.mubr.f32.mxu0 0.0
    %2639 = vmatmul.mubr.f32.gmra.mrb[0].mxu0 %v2567
    %v2640 = vpop.f32.mrb[0].mxu0
    %v2641 = vadd.f32 0.0, %v2640
    %v2642 = vpop.f32.mrb[0].mxu0
    %2643 = vdwg.mxu0
    %s2644 = scalar_lea.vmem %s12, 16
    %v2645 = vld [vmem:[%s2644] sm:$0xff]
    %v2647 = vsel %vm705, %v2555, 0
    %v2650 = vsel %vm705, %v2560, 0
    %v2653 = vsel %vm705, %v2636, 0
    %v2656 = vsel %vm705, %v2641, 0
    %2658 = vmatprep.subr.mxu0 0.0
    %2659 = vmatpush1.msra.mxu0 %v2645
    %2660 = vmatprep.subr.mxu0 0.0
    %2661 = vmatpush1.msra.mxu0 0.0
    %2662 = vmatprep.subr.mxu0 0.0
    %2663 = vmatpush1.msra.mxu0 0.0
    %2664 = vmatprep.subr.mxu0 0.0
    %2665 = vmatpush1.msra.mxu0 0.0
    %2666 = vmatprep.subr.mxu0 0.0
    %2667 = vmatpush1.msra.mxu0 0.0
    %2668 = vmatprep.subr.mxu0 0.0
    %2669 = vmatpush1.msra.mxu0 0.0
    %2670 = vmatprep.subr.mxu0 0.0
    %2671 = vmatpush1.msra.mxu0 0.0
    %2672 = vmatprep.subr.mxu0 0.0
    %2673 = vmatpush1.msra.mxu0 0.0
    %2674 = vmatprep.subr.mxu0 0.0
    %2675 = vmatpush1.msra.mxu0 0.0
    %2676 = vmatprep.subr.mxu0 0.0
    %2677 = vmatpush1.msra.mxu0 0.0
    %2678 = vmatprep.subr.mxu0 0.0
    %2679 = vmatpush1.msra.mxu0 0.0
    %2680 = vmatprep.subr.mxu0 0.0
    %2681 = vmatpush1.msra.mxu0 0.0
    %2682 = vmatprep.subr.mxu0 0.0
    %2683 = vmatpush1.msra.mxu0 0.0
    %2684 = vmatprep.subr.mxu0 0.0
    %2685 = vmatpush1.msra.mxu0 0.0
    %2686 = vmatprep.subr.mxu0 0.0
    %2687 = vmatpush1.msra.mxu0 0.0
    %2688 = vmatprep.subr.mxu0 0.0
    %2689 = vmatpush1.msra.mxu0 0.0
    %2690 = vmatprep.subr.mxu0 0.0
    %2691 = vmatpush1.msra.mxu0 0.0
    %2692 = vmatprep.subr.mxu0 0.0
    %2693 = vmatpush1.msra.mxu0 0.0
    %2694 = vmatprep.subr.mxu0 0.0
    %2695 = vmatpush1.msra.mxu0 0.0
    %2696 = vmatprep.subr.mxu0 0.0
    %2697 = vmatpush1.msra.mxu0 0.0
    %2698 = vmatprep.subr.mxu0 0.0
    %2699 = vmatpush1.msra.mxu0 0.0
    %2700 = vmatprep.subr.mxu0 0.0
    %2701 = vmatpush1.msra.mxu0 0.0
    %2702 = vmatprep.subr.mxu0 0.0
    %2703 = vmatpush1.msra.mxu0 0.0
    %2704 = vmatprep.subr.mxu0 0.0
    %2705 = vmatpush1.msra.mxu0 0.0
    %2706 = vmatprep.subr.mxu0 0.0
    %2707 = vmatpush1.msra.mxu0 0.0
    %2708 = vmatprep.subr.mxu0 0.0
    %2709 = vmatpush1.msra.mxu0 0.0
    %2710 = vmatprep.subr.mxu0 0.0
    %2711 = vmatpush1.msra.mxu0 0.0
    %2712 = vmatprep.subr.mxu0 0.0
    %2713 = vmatpush1.msra.mxu0 0.0
    %2714 = vmatprep.subr.mxu0 0.0
    %2715 = vmatpush1.msra.mxu0 0.0
    %2716 = vmatprep.subr.mxu0 0.0
    %2717 = vmatpush1.msra.mxu0 0.0
    %2718 = vmatprep.subr.mxu0 0.0
    %2719 = vmatpush1.msra.mxu0 0.0
    %2720 = vmatprep.subr.mxu0 0.0
    %2721 = vmatpush1.msra.mxu0 0.0
    %2722 = vmatprep.mubr.f32.mxu0 0.0
    %2723 = vmatmul.mubr.f32.gmra.mrb[0].mxu0 %v2647
    %v2724 = vpop.f32.mrb[0].mxu0
    %v2725 = vadd.f32 0.0, %v2724
    %v2726 = vpop.f32.mrb[0].mxu0
    %2727 = vmatprep.mubr.f32.mxu0 0.0
    %2728 = vmatmul.mubr.f32.gmra.mrb[0].mxu0 %v2650
    %v2729 = vpop.f32.mrb[0].mxu0
    %v2730 = vadd.f32 0.0, %v2729
    %v2731 = vpop.f32.mrb[0].mxu0
    %2732 = vmatprep.mubr.f32.mxu0 0.0
    %2733 = vmatmul.mubr.f32.gmra.mrb[0].mxu0 %v2653
    %v2734 = vpop.f32.mrb[0].mxu0
    %v2735 = vadd.f32 0.0, %v2734
    %v2736 = vpop.f32.mrb[0].mxu0
    %2737 = vmatprep.mubr.f32.mxu0 0.0
    %2738 = vmatmul.mubr.f32.gmra.mrb[0].mxu0 %v2656
    %v2739 = vpop.f32.mrb[0].mxu0
    %v2740 = vadd.f32 0.0, %v2739
    %v2741 = vpop.f32.mrb[0].mxu0
    %2742 = vdwg.mxu0
    %v2743 = vadd.f32 %v1948, %v2725
    %v2744 = vadd.f32 %v1953, %v2730
    %v2745 = vadd.f32 %v1958, %v2735
    %v2746 = vadd.f32 %v1963, %v2740
    %s2747 = scalar_lea.vmem %s6, 96
    %v2748 = vld [vmem:[%s2747] sm:$0xff]
    %v2749 = vld [vmem:[%s2747 + $0x8] sm:$0xff]
    %v2750 = vld [vmem:[%s2747 + $0x10] sm:$0xff]
    %v2751 = vld [vmem:[%s2747 + $0x18] sm:$0xff]
    %s2752 = scalar_lea.vmem %s7, 3
    %v2753 = vld [vmem:[%s2752] sm:$0x1]
    %v2755 = vlaneseq
    %v2756 = vshrl.u32 %v2755, 7
    %v2757 = vsub.s32 0, %v2756
    %v2758 = vrot.slane %v2753, %v2757
    %2760 = vmatprep.subr.mxu0 0.0
    %2761 = vmatpush1.msra.mxu0 %v2748
    %2762 = vmatprep.subr.mxu0 0.0
    %2763 = vmatpush1.msra.mxu0 %v2749
    %2764 = vmatprep.subr.mxu0 0.0
    %2765 = vmatpush1.msra.mxu0 %v2750
    %2766 = vmatprep.subr.mxu0 0.0
    %2767 = vmatpush1.msra.mxu0 %v2751
    %2768 = vmatprep.subr.mxu0 0.0
    %2769 = vmatpush1.msra.mxu0 0.0
    %2770 = vmatprep.subr.mxu0 0.0
    %2771 = vmatpush1.msra.mxu0 0.0
    %2772 = vmatprep.subr.mxu0 0.0
    %2773 = vmatpush1.msra.mxu0 0.0
    %2774 = vmatprep.subr.mxu0 0.0
    %2775 = vmatpush1.msra.mxu0 0.0
    %2776 = vmatprep.subr.mxu0 0.0
    %2777 = vmatpush1.msra.mxu0 0.0
    %2778 = vmatprep.subr.mxu0 0.0
    %2779 = vmatpush1.msra.mxu0 0.0
    %2780 = vmatprep.subr.mxu0 0.0
    %2781 = vmatpush1.msra.mxu0 0.0
    %2782 = vmatprep.subr.mxu0 0.0
    %2783 = vmatpush1.msra.mxu0 0.0
    %2784 = vmatprep.subr.mxu0 0.0
    %2785 = vmatpush1.msra.mxu0 0.0
    %2786 = vmatprep.subr.mxu0 0.0
    %2787 = vmatpush1.msra.mxu0 0.0
    %2788 = vmatprep.subr.mxu0 0.0
    %2789 = vmatpush1.msra.mxu0 0.0
    %2790 = vmatprep.subr.mxu0 0.0
    %2791 = vmatpush1.msra.mxu0 0.0
    %2792 = vmatprep.subr.mxu0 0.0
    %2793 = vmatpush1.msra.mxu0 0.0
    %2794 = vmatprep.subr.mxu0 0.0
    %2795 = vmatpush1.msra.mxu0 0.0
    %2796 = vmatprep.subr.mxu0 0.0
    %2797 = vmatpush1.msra.mxu0 0.0
    %2798 = vmatprep.subr.mxu0 0.0
    %2799 = vmatpush1.msra.mxu0 0.0
    %2800 = vmatprep.subr.mxu0 0.0
    %2801 = vmatpush1.msra.mxu0 0.0
    %2802 = vmatprep.subr.mxu0 0.0
    %2803 = vmatpush1.msra.mxu0 0.0
    %2804 = vmatprep.subr.mxu0 0.0
    %2805 = vmatpush1.msra.mxu0 0.0
    %2806 = vmatprep.subr.mxu0 0.0
    %2807 = vmatpush1.msra.mxu0 0.0
    %2808 = vmatprep.subr.mxu0 0.0
    %2809 = vmatpush1.msra.mxu0 0.0
    %2810 = vmatprep.subr.mxu0 0.0
    %2811 = vmatpush1.msra.mxu0 0.0
    %2812 = vmatprep.subr.mxu0 0.0
    %2813 = vmatpush1.msra.mxu0 0.0
    %2814 = vmatprep.subr.mxu0 0.0
    %2815 = vmatpush1.msra.mxu0 0.0
    %2816 = vmatprep.subr.mxu0 0.0
    %2817 = vmatpush1.msra.mxu0 0.0
    %2818 = vmatprep.subr.mxu0 0.0
    %2819 = vmatpush1.msra.mxu0 0.0
    %2820 = vmatprep.subr.mxu0 0.0
    %2821 = vmatpush1.msra.mxu0 0.0
    %2822 = vmatprep.subr.mxu0 0.0
    %2823 = vmatpush1.msra.mxu0 0.0
    %2824 = vmatprep.mubr.f32.mxu0 0.0
    %2825 = vmatmul.mubr.f32.gmra.mrb[0].mxu0 %v417
    %v2826 = vpop.f32.mrb[0].mxu0
    %v2827 = vadd.f32 %v2758, %v2826
    %v2828 = vpop.f32.mrb[0].mxu0
    %2829 = vmatprep.mubr.f32.mxu0 0.0
    %2830 = vmatmul.mubr.f32.gmra.mrb[0].mxu0 %v420
    %v2831 = vpop.f32.mrb[0].mxu0
    %v2832 = vadd.f32 %v2758, %v2831
    %v2833 = vpop.f32.mrb[0].mxu0
    %2834 = vmatprep.mubr.f32.mxu0 0.0
    %2835 = vmatmul.mubr.f32.gmra.mrb[0].mxu0 %v423
    %v2836 = vpop.f32.mrb[0].mxu0
    %v2837 = vadd.f32 %v2758, %v2836
    %v2838 = vpop.f32.mrb[0].mxu0
    %2839 = vmatprep.mubr.f32.mxu0 0.0
    %2840 = vmatmul.mubr.f32.gmra.mrb[0].mxu0 %v426
    %v2841 = vpop.f32.mrb[0].mxu0
    %v2842 = vadd.f32 %v2758, %v2841
    %v2843 = vpop.f32.mrb[0].mxu0
    %2844 = vdwg.mxu0
    %s2845 = scalar_lea.vmem %s8, 96
    %v2846 = vld [vmem:[%s2845] sm:$0xff]
    %v2847 = vld [vmem:[%s2845 + $0x8] sm:$0xff]
    %v2848 = vld [vmem:[%s2845 + $0x10] sm:$0xff]
    %v2849 = vld [vmem:[%s2845 + $0x18] sm:$0xff]
    %s2850 = scalar_lea.vmem %s9, 3
    %v2851 = vld [vmem:[%s2850] sm:$0x1]
    %v2853 = vlaneseq
    %v2854 = vshrl.u32 %v2853, 7
    %v2855 = vsub.s32 0, %v2854
    %v2856 = vrot.slane %v2851, %v2855
    %2858 = vmatprep.subr.mxu0 0.0
    %2859 = vmatpush1.msra.mxu0 %v2846
    %2860 = vmatprep.subr.mxu0 0.0
    %2861 = vmatpush1.msra.mxu0 %v2847
    %2862 = vmatprep.subr.mxu0 0.0
    %2863 = vmatpush1.msra.mxu0 %v2848
    %2864 = vmatprep.subr.mxu0 0.0
    %2865 = vmatpush1.msra.mxu0 %v2849
    %2866 = vmatprep.subr.mxu0 0.0
    %2867 = vmatpush1.msra.mxu0 0.0
    %2868 = vmatprep.subr.mxu0 0.0
    %2869 = vmatpush1.msra.mxu0 0.0
    %2870 = vmatprep.subr.mxu0 0.0
    %2871 = vmatpush1.msra.mxu0 0.0
    %2872 = vmatprep.subr.mxu0 0.0
    %2873 = vmatpush1.msra.mxu0 0.0
    %2874 = vmatprep.subr.mxu0 0.0
    %2875 = vmatpush1.msra.mxu0 0.0
    %2876 = vmatprep.subr.mxu0 0.0
    %2877 = vmatpush1.msra.mxu0 0.0
    %2878 = vmatprep.subr.mxu0 0.0
    %2879 = vmatpush1.msra.mxu0 0.0
    %2880 = vmatprep.subr.mxu0 0.0
    %2881 = vmatpush1.msra.mxu0 0.0
    %2882 = vmatprep.subr.mxu0 0.0
    %2883 = vmatpush1.msra.mxu0 0.0
    %2884 = vmatprep.subr.mxu0 0.0
    %2885 = vmatpush1.msra.mxu0 0.0
    %2886 = vmatprep.subr.mxu0 0.0
    %2887 = vmatpush1.msra.mxu0 0.0
    %2888 = vmatprep.subr.mxu0 0.0
    %2889 = vmatpush1.msra.mxu0 0.0
    %2890 = vmatprep.subr.mxu0 0.0
    %2891 = vmatpush1.msra.mxu0 0.0
    %2892 = vmatprep.subr.mxu0 0.0
    %2893 = vmatpush1.msra.mxu0 0.0
    %2894 = vmatprep.subr.mxu0 0.0
    %2895 = vmatpush1.msra.mxu0 0.0
    %2896 = vmatprep.subr.mxu0 0.0
    %2897 = vmatpush1.msra.mxu0 0.0
    %2898 = vmatprep.subr.mxu0 0.0
    %2899 = vmatpush1.msra.mxu0 0.0
    %2900 = vmatprep.subr.mxu0 0.0
    %2901 = vmatpush1.msra.mxu0 0.0
    %2902 = vmatprep.subr.mxu0 0.0
    %2903 = vmatpush1.msra.mxu0 0.0
    %2904 = vmatprep.subr.mxu0 0.0
    %2905 = vmatpush1.msra.mxu0 0.0
    %2906 = vmatprep.subr.mxu0 0.0
    %2907 = vmatpush1.msra.mxu0 0.0
    %2908 = vmatprep.subr.mxu0 0.0
    %2909 = vmatpush1.msra.mxu0 0.0
    %2910 = vmatprep.subr.mxu0 0.0
    %2911 = vmatpush1.msra.mxu0 0.0
    %2912 = vmatprep.subr.mxu0 0.0
    %2913 = vmatpush1.msra.mxu0 0.0
    %2914 = vmatprep.subr.mxu0 0.0
    %2915 = vmatpush1.msra.mxu0 0.0
    %2916 = vmatprep.subr.mxu0 0.0
    %2917 = vmatpush1.msra.mxu0 0.0
    %2918 = vmatprep.subr.mxu0 0.0
    %2919 = vmatpush1.msra.mxu0 0.0
    %2920 = vmatprep.subr.mxu0 0.0
    %2921 = vmatpush1.msra.mxu0 0.0
    %2922 = vmatprep.mubr.f32.mxu0 0.0
    %2923 = vmatmul.mubr.f32.gmra.mrb[0].mxu0 %v417
    %v2924 = vpop.f32.mrb[0].mxu0
    %v2925 = vadd.f32 %v2856, %v2924
    %v2926 = vpop.f32.mrb[0].mxu0
    %2927 = vmatprep.mubr.f32.mxu0 0.0
    %2928 = vmatmul.mubr.f32.gmra.mrb[0].mxu0 %v420
    %v2929 = vpop.f32.mrb[0].mxu0
    %v2930 = vadd.f32 %v2856, %v2929
    %v2931 = vpop.f32.mrb[0].mxu0
    %2932 = vmatprep.mubr.f32.mxu0 0.0
    %2933 = vmatmul.mubr.f32.gmra.mrb[0].mxu0 %v423
    %v2934 = vpop.f32.mrb[0].mxu0
    %v2935 = vadd.f32 %v2856, %v2934
    %v2936 = vpop.f32.mrb[0].mxu0
    %2937 = vmatprep.mubr.f32.mxu0 0.0
    %2938 = vmatmul.mubr.f32.gmra.mrb[0].mxu0 %v426
    %v2939 = vpop.f32.mrb[0].mxu0
    %v2940 = vadd.f32 %v2856, %v2939
    %v2941 = vpop.f32.mrb[0].mxu0
    %2942 = vdwg.mxu0
    %s2943 = scalar_lea.vmem %s10, 96
    %v2944 = vld [vmem:[%s2943] sm:$0xff]
    %v2945 = vld [vmem:[%s2943 + $0x8] sm:$0xff]
    %v2946 = vld [vmem:[%s2943 + $0x10] sm:$0xff]
    %v2947 = vld [vmem:[%s2943 + $0x18] sm:$0xff]
    %s2948 = scalar_lea.vmem %s11, 3
    %v2949 = vld [vmem:[%s2948] sm:$0x1]
    %v2951 = vlaneseq
    %v2952 = vshrl.u32 %v2951, 7
    %v2953 = vsub.s32 0, %v2952
    %v2954 = vrot.slane %v2949, %v2953
    %2956 = vmatprep.subr.mxu0 0.0
    %2957 = vmatpush1.msra.mxu0 %v2944
    %2958 = vmatprep.subr.mxu0 0.0
    %2959 = vmatpush1.msra.mxu0 %v2945
    %2960 = vmatprep.subr.mxu0 0.0
    %2961 = vmatpush1.msra.mxu0 %v2946
    %2962 = vmatprep.subr.mxu0 0.0
    %2963 = vmatpush1.msra.mxu0 %v2947
    %2964 = vmatprep.subr.mxu0 0.0
    %2965 = vmatpush1.msra.mxu0 0.0
    %2966 = vmatprep.subr.mxu0 0.0
    %2967 = vmatpush1.msra.mxu0 0.0
    %2968 = vmatprep.subr.mxu0 0.0
    %2969 = vmatpush1.msra.mxu0 0.0
    %2970 = vmatprep.subr.mxu0 0.0
    %2971 = vmatpush1.msra.mxu0 0.0
    %2972 = vmatprep.subr.mxu0 0.0
    %2973 = vmatpush1.msra.mxu0 0.0
    %2974 = vmatprep.subr.mxu0 0.0
    %2975 = vmatpush1.msra.mxu0 0.0
    %2976 = vmatprep.subr.mxu0 0.0
    %2977 = vmatpush1.msra.mxu0 0.0
    %2978 = vmatprep.subr.mxu0 0.0
    %2979 = vmatpush1.msra.mxu0 0.0
    %2980 = vmatprep.subr.mxu0 0.0
    %2981 = vmatpush1.msra.mxu0 0.0
    %2982 = vmatprep.subr.mxu0 0.0
    %2983 = vmatpush1.msra.mxu0 0.0
    %2984 = vmatprep.subr.mxu0 0.0
    %2985 = vmatpush1.msra.mxu0 0.0
    %2986 = vmatprep.subr.mxu0 0.0
    %2987 = vmatpush1.msra.mxu0 0.0
    %2988 = vmatprep.subr.mxu0 0.0
    %2989 = vmatpush1.msra.mxu0 0.0
    %2990 = vmatprep.subr.mxu0 0.0
    %2991 = vmatpush1.msra.mxu0 0.0
    %2992 = vmatprep.subr.mxu0 0.0
    %2993 = vmatpush1.msra.mxu0 0.0
    %2994 = vmatprep.subr.mxu0 0.0
    %2995 = vmatpush1.msra.mxu0 0.0
    %2996 = vmatprep.subr.mxu0 0.0
    %2997 = vmatpush1.msra.mxu0 0.0
    %2998 = vmatprep.subr.mxu0 0.0
    %2999 = vmatpush1.msra.mxu0 0.0
    %3000 = vmatprep.subr.mxu0 0.0
    %3001 = vmatpush1.msra.mxu0 0.0
    %3002 = vmatprep.subr.mxu0 0.0
    %3003 = vmatpush1.msra.mxu0 0.0
    %3004 = vmatprep.subr.mxu0 0.0
    %3005 = vmatpush1.msra.mxu0 0.0
    %3006 = vmatprep.subr.mxu0 0.0
    %3007 = vmatpush1.msra.mxu0 0.0
    %3008 = vmatprep.subr.mxu0 0.0
    %3009 = vmatpush1.msra.mxu0 0.0
    %3010 = vmatprep.subr.mxu0 0.0
    %3011 = vmatpush1.msra.mxu0 0.0
    %3012 = vmatprep.subr.mxu0 0.0
    %3013 = vmatpush1.msra.mxu0 0.0
    %3014 = vmatprep.subr.mxu0 0.0
    %3015 = vmatpush1.msra.mxu0 0.0
    %3016 = vmatprep.subr.mxu0 0.0
    %3017 = vmatpush1.msra.mxu0 0.0
    %3018 = vmatprep.subr.mxu0 0.0
    %3019 = vmatpush1.msra.mxu0 0.0
    %3020 = vmatprep.mubr.f32.mxu0 0.0
    %3021 = vmatmul.mubr.f32.gmra.mrb[0].mxu0 %v417
    %v3022 = vpop.f32.mrb[0].mxu0
    %v3023 = vadd.f32 %v2954, %v3022
    %v3024 = vpop.f32.mrb[0].mxu0
    %3025 = vmatprep.mubr.f32.mxu0 0.0
    %3026 = vmatmul.mubr.f32.gmra.mrb[0].mxu0 %v420
    %v3027 = vpop.f32.mrb[0].mxu0
    %v3028 = vadd.f32 %v2954, %v3027
    %v3029 = vpop.f32.mrb[0].mxu0
    %3030 = vmatprep.mubr.f32.mxu0 0.0
    %3031 = vmatmul.mubr.f32.gmra.mrb[0].mxu0 %v423
    %v3032 = vpop.f32.mrb[0].mxu0
    %v3033 = vadd.f32 %v2954, %v3032
    %v3034 = vpop.f32.mrb[0].mxu0
    %3035 = vmatprep.mubr.f32.mxu0 0.0
    %3036 = vmatmul.mubr.f32.gmra.mrb[0].mxu0 %v426
    %v3037 = vpop.f32.mrb[0].mxu0
    %v3038 = vadd.f32 %v2954, %v3037
    %v3039 = vpop.f32.mrb[0].mxu0
    %3040 = vdwg.mxu0
    %v3042 = vsel %vm705, %v2827, 0
    %v3045 = vsel %vm705, %v2832, 0
    %v3048 = vsel %vm705, %v2925, 0
    %v3051 = vsel %vm705, %v2930, 0
    %3053 = vmatprep.subr.mxu0 0.0
    %3054 = vmatpush1.xpose.msra.mxu0 %v3048
    %3055 = vmatprep.subr.mxu0 0.0
    %3056 = vmatpush1.xpose.msra.mxu0 %v3051
    %3057 = vmatprep.subr.mxu0 0.0
    %3058 = vmatpush1.xpose.msra.mxu0 0.0
    %3059 = vmatprep.subr.mxu0 0.0
    %3060 = vmatpush1.xpose.msra.mxu0 0.0
    %3061 = vmatprep.subr.mxu0 0.0
    %3062 = vmatpush1.xpose.msra.mxu0 0.0
    %3063 = vmatprep.subr.mxu0 0.0
    %3064 = vmatpush1.xpose.msra.mxu0 0.0
    %3065 = vmatprep.subr.mxu0 0.0
    %3066 = vmatpush1.xpose.msra.mxu0 0.0
    %3067 = vmatprep.subr.mxu0 0.0
    %3068 = vmatpush1.xpose.msra.mxu0 0.0
    %3069 = vmatprep.subr.mxu0 0.0
    %3070 = vmatpush1.xpose.msra.mxu0 0.0
    %3071 = vmatprep.subr.mxu0 0.0
    %3072 = vmatpush1.xpose.msra.mxu0 0.0
    %3073 = vmatprep.subr.mxu0 0.0
    %3074 = vmatpush1.xpose.msra.mxu0 0.0
    %3075 = vmatprep.subr.mxu0 0.0
    %3076 = vmatpush1.xpose.msra.mxu0 0.0
    %3077 = vmatprep.subr.mxu0 0.0
    %3078 = vmatpush1.xpose.msra.mxu0 0.0
    %3079 = vmatprep.subr.mxu0 0.0
    %3080 = vmatpush1.xpose.msra.mxu0 0.0
    %3081 = vmatprep.subr.mxu0 0.0
    %3082 = vmatpush1.xpose.msra.mxu0 0.0
    %3083 = vmatprep.subr.mxu0 0.0
    %3084 = vmatpush1.xpose.msra.mxu0 0.0
    %3085 = vmatprep.subr.mxu0 0.0
    %3086 = vmatpush1.xpose.msra.mxu0 0.0
    %3087 = vmatprep.subr.mxu0 0.0
    %3088 = vmatpush1.xpose.msra.mxu0 0.0
    %3089 = vmatprep.subr.mxu0 0.0
    %3090 = vmatpush1.xpose.msra.mxu0 0.0
    %3091 = vmatprep.subr.mxu0 0.0
    %3092 = vmatpush1.xpose.msra.mxu0 0.0
    %3093 = vmatprep.subr.mxu0 0.0
    %3094 = vmatpush1.xpose.msra.mxu0 0.0
    %3095 = vmatprep.subr.mxu0 0.0
    %3096 = vmatpush1.xpose.msra.mxu0 0.0
    %3097 = vmatprep.subr.mxu0 0.0
    %3098 = vmatpush1.xpose.msra.mxu0 0.0
    %3099 = vmatprep.subr.mxu0 0.0
    %3100 = vmatpush1.xpose.msra.mxu0 0.0
    %3101 = vmatprep.subr.mxu0 0.0
    %3102 = vmatpush1.xpose.msra.mxu0 0.0
    %3103 = vmatprep.subr.mxu0 0.0
    %3104 = vmatpush1.xpose.msra.mxu0 0.0
    %3105 = vmatprep.subr.mxu0 0.0
    %3106 = vmatpush1.xpose.msra.mxu0 0.0
    %3107 = vmatprep.subr.mxu0 0.0
    %3108 = vmatpush1.xpose.msra.mxu0 0.0
    %3109 = vmatprep.subr.mxu0 0.0
    %3110 = vmatpush1.xpose.msra.mxu0 0.0
    %3111 = vmatprep.subr.mxu0 0.0
    %3112 = vmatpush1.xpose.msra.mxu0 0.0
    %3113 = vmatprep.subr.mxu0 0.0
    %3114 = vmatpush1.xpose.msra.mxu0 0.0
    %3115 = vmatprep.subr.mxu0 0.0
    %3116 = vmatpush1.xpose.msra.mxu0 0.0
    %3117 = vmatprep.mubr.f32.mxu0 0.0
    %3118 = vmatmul.mubr.f32.gmra.mrb[0].mxu0 %v3042
    %v3119 = vpop.f32.mrb[0].mxu0
    %v3120 = vadd.f32 0.0, %v3119
    %v3121 = vpop.f32.mrb[0].mxu0
    %3122 = vmatprep.mubr.f32.mxu0 0.0
    %3123 = vmatmul.mubr.f32.gmra.mrb[0].mxu0 %v3045
    %v3124 = vpop.f32.mrb[0].mxu0
    %v3125 = vadd.f32 0.0, %v3124
    %v3126 = vpop.f32.mrb[0].mxu0
    %3127 = vdwg.mxu0
    %v3129 = vsel %vm705, %v2837, 0
    %v3132 = vsel %vm705, %v2842, 0
    %v3135 = vsel %vm705, %v2935, 0
    %v3138 = vsel %vm705, %v2940, 0
    %3140 = vmatprep.subr.mxu0 0.0
    %3141 = vmatpush1.xpose.msra.mxu0 %v3135
    %3142 = vmatprep.subr.mxu0 0.0
    %3143 = vmatpush1.xpose.msra.mxu0 %v3138
    %3144 = vmatprep.subr.mxu0 0.0
    %3145 = vmatpush1.xpose.msra.mxu0 0.0
    %3146 = vmatprep.subr.mxu0 0.0
    %3147 = vmatpush1.xpose.msra.mxu0 0.0
    %3148 = vmatprep.subr.mxu0 0.0
    %3149 = vmatpush1.xpose.msra.mxu0 0.0
    %3150 = vmatprep.subr.mxu0 0.0
    %3151 = vmatpush1.xpose.msra.mxu0 0.0
    %3152 = vmatprep.subr.mxu0 0.0
    %3153 = vmatpush1.xpose.msra.mxu0 0.0
    %3154 = vmatprep.subr.mxu0 0.0
    %3155 = vmatpush1.xpose.msra.mxu0 0.0
    %3156 = vmatprep.subr.mxu0 0.0
    %3157 = vmatpush1.xpose.msra.mxu0 0.0
    %3158 = vmatprep.subr.mxu0 0.0
    %3159 = vmatpush1.xpose.msra.mxu0 0.0
    %3160 = vmatprep.subr.mxu0 0.0
    %3161 = vmatpush1.xpose.msra.mxu0 0.0
    %3162 = vmatprep.subr.mxu0 0.0
    %3163 = vmatpush1.xpose.msra.mxu0 0.0
    %3164 = vmatprep.subr.mxu0 0.0
    %3165 = vmatpush1.xpose.msra.mxu0 0.0
    %3166 = vmatprep.subr.mxu0 0.0
    %3167 = vmatpush1.xpose.msra.mxu0 0.0
    %3168 = vmatprep.subr.mxu0 0.0
    %3169 = vmatpush1.xpose.msra.mxu0 0.0
    %3170 = vmatprep.subr.mxu0 0.0
    %3171 = vmatpush1.xpose.msra.mxu0 0.0
    %3172 = vmatprep.subr.mxu0 0.0
    %3173 = vmatpush1.xpose.msra.mxu0 0.0
    %3174 = vmatprep.subr.mxu0 0.0
    %3175 = vmatpush1.xpose.msra.mxu0 0.0
    %3176 = vmatprep.subr.mxu0 0.0
    %3177 = vmatpush1.xpose.msra.mxu0 0.0
    %3178 = vmatprep.subr.mxu0 0.0
    %3179 = vmatpush1.xpose.msra.mxu0 0.0
    %3180 = vmatprep.subr.mxu0 0.0
    %3181 = vmatpush1.xpose.msra.mxu0 0.0
    %3182 = vmatprep.subr.mxu0 0.0
    %3183 = vmatpush1.xpose.msra.mxu0 0.0
    %3184 = vmatprep.subr.mxu0 0.0
    %3185 = vmatpush1.xpose.msra.mxu0 0.0
    %3186 = vmatprep.subr.mxu0 0.0
    %3187 = vmatpush1.xpose.msra.mxu0 0.0
    %3188 = vmatprep.subr.mxu0 0.0
    %3189 = vmatpush1.xpose.msra.mxu0 0.0
    %3190 = vmatprep.subr.mxu0 0.0
    %3191 = vmatpush1.xpose.msra.mxu0 0.0
    %3192 = vmatprep.subr.mxu0 0.0
    %3193 = vmatpush1.xpose.msra.mxu0 0.0
    %3194 = vmatprep.subr.mxu0 0.0
    %3195 = vmatpush1.xpose.msra.mxu0 0.0
    %3196 = vmatprep.subr.mxu0 0.0
    %3197 = vmatpush1.xpose.msra.mxu0 0.0
    %3198 = vmatprep.subr.mxu0 0.0
    %3199 = vmatpush1.xpose.msra.mxu0 0.0
    %3200 = vmatprep.subr.mxu0 0.0
    %3201 = vmatpush1.xpose.msra.mxu0 0.0
    %3202 = vmatprep.subr.mxu0 0.0
    %3203 = vmatpush1.xpose.msra.mxu0 0.0
    %3204 = vmatprep.mubr.f32.mxu0 0.0
    %3205 = vmatmul.mubr.f32.gmra.mrb[0].mxu0 %v3129
    %v3206 = vpop.f32.mrb[0].mxu0
    %v3207 = vadd.f32 0.0, %v3206
    %v3208 = vpop.f32.mrb[0].mxu0
    %3209 = vmatprep.mubr.f32.mxu0 0.0
    %3210 = vmatmul.mubr.f32.gmra.mrb[0].mxu0 %v3132
    %v3211 = vpop.f32.mrb[0].mxu0
    %v3212 = vadd.f32 0.0, %v3211
    %v3213 = vpop.f32.mrb[0].mxu0
    %3214 = vdwg.mxu0
    %v3215 = vmul.f32 %v3120, 0.35355338
    %v3216 = vmul.f32 %v3125, 0.35355338
    %v3217 = vmul.f32 %v3207, 0.35355338
    %v3218 = vmul.f32 %v3212, 0.35355338
    %v3219 = vsel %vm884, %v3215, -inf
    %3220 = vmax.xlane.f32.xlu0 %v3219
    %v3221 = vpop.xlane.xlu0 %3220
    %v3222 = vsel %vm884, %v3216, -inf
    %3223 = vmax.xlane.f32.xlu0 %v3222
    %v3224 = vpop.xlane.xlu0 %3223
    %v3225 = vsel %vm884, %v3217, -inf
    %3226 = vmax.xlane.f32.xlu0 %v3225
    %v3227 = vpop.xlane.xlu0 %3226
    %v3228 = vsel %vm884, %v3218, -inf
    %3229 = vmax.xlane.f32.xlu0 %v3228
    %v3230 = vpop.xlane.xlu0 %3229
    %v3231 = vsub.f32 %v3215, %v3221
    %v3232 = vsub.f32 %v3216, %v3224
    %v3233 = vsub.f32 %v3217, %v3227
    %v3234 = vsub.f32 %v3218, %v3230
    %v3235 = vmul.f32 %v3231, 1.442695
    %v3236 = vpow.pop %v3235
    %v3237 = vmul.f32 %v3232, 1.442695
    %v3238 = vpow.pop %v3237
    %v3239 = vmul.f32 %v3233, 1.442695
    %v3240 = vpow.pop %v3239
    %v3241 = vmul.f32 %v3234, 1.442695
    %v3242 = vpow.pop %v3241
    %v3243 = vsel %vm884, %v3236, 0.0
    %3244 = vadd.xlane.f32.xlu0 %v3243
    %v3245 = vpop.xlane.xlu0 %3244
    %v3246 = vsel %vm884, %v3238, 0.0
    %3247 = vadd.xlane.f32.xlu0 %v3246
    %v3248 = vpop.xlane.xlu0 %3247
    %v3249 = vsel %vm884, %v3240, 0.0
    %3250 = vadd.xlane.f32.xlu0 %v3249
    %v3251 = vpop.xlane.xlu0 %3250
    %v3252 = vsel %vm884, %v3242, 0.0
    %3253 = vadd.xlane.f32.xlu0 %v3252
    %v3254 = vpop.xlane.xlu0 %3253
    %v3255 = vrcp.pop %v3245
    %v3256 = vrcp.pop %v3248
    %v3257 = vrcp.pop %v3251
    %v3258 = vrcp.pop %v3254
    %v3259 = vmul.f32 %v3236, %v3255
    %v3260 = vmul.f32 %v3238, %v3256
    %v3261 = vmul.f32 %v3240, %v3257
    %v3262 = vmul.f32 %v3242, %v3258
    %v3264 = vsel %vm884, %v3259, 0
    %v3267 = vsel %vm884, %v3260, 0
    %3269 = vmatprep.subr.mxu0 0.0
    %3270 = vmatpush1.msra.mxu0 %v3023
    %3271 = vmatprep.subr.mxu0 0.0
    %3272 = vmatpush1.msra.mxu0 %v3028
    %3273 = vmatprep.subr.mxu0 0.0
    %3274 = vmatpush1.msra.mxu0 0.0
    %3275 = vmatprep.subr.mxu0 0.0
    %3276 = vmatpush1.msra.mxu0 0.0
    %3277 = vmatprep.subr.mxu0 0.0
    %3278 = vmatpush1.msra.mxu0 0.0
    %3279 = vmatprep.subr.mxu0 0.0
    %3280 = vmatpush1.msra.mxu0 0.0
    %3281 = vmatprep.subr.mxu0 0.0
    %3282 = vmatpush1.msra.mxu0 0.0
    %3283 = vmatprep.subr.mxu0 0.0
    %3284 = vmatpush1.msra.mxu0 0.0
    %3285 = vmatprep.subr.mxu0 0.0
    %3286 = vmatpush1.msra.mxu0 0.0
    %3287 = vmatprep.subr.mxu0 0.0
    %3288 = vmatpush1.msra.mxu0 0.0
    %3289 = vmatprep.subr.mxu0 0.0
    %3290 = vmatpush1.msra.mxu0 0.0
    %3291 = vmatprep.subr.mxu0 0.0
    %3292 = vmatpush1.msra.mxu0 0.0
    %3293 = vmatprep.subr.mxu0 0.0
    %3294 = vmatpush1.msra.mxu0 0.0
    %3295 = vmatprep.subr.mxu0 0.0
    %3296 = vmatpush1.msra.mxu0 0.0
    %3297 = vmatprep.subr.mxu0 0.0
    %3298 = vmatpush1.msra.mxu0 0.0
    %3299 = vmatprep.subr.mxu0 0.0
    %3300 = vmatpush1.msra.mxu0 0.0
    %3301 = vmatprep.subr.mxu0 0.0
    %3302 = vmatpush1.msra.mxu0 0.0
    %3303 = vmatprep.subr.mxu0 0.0
    %3304 = vmatpush1.msra.mxu0 0.0
    %3305 = vmatprep.subr.mxu0 0.0
    %3306 = vmatpush1.msra.mxu0 0.0
    %3307 = vmatprep.subr.mxu0 0.0
    %3308 = vmatpush1.msra.mxu0 0.0
    %3309 = vmatprep.subr.mxu0 0.0
    %3310 = vmatpush1.msra.mxu0 0.0
    %3311 = vmatprep.subr.mxu0 0.0
    %3312 = vmatpush1.msra.mxu0 0.0
    %3313 = vmatprep.subr.mxu0 0.0
    %3314 = vmatpush1.msra.mxu0 0.0
    %3315 = vmatprep.subr.mxu0 0.0
    %3316 = vmatpush1.msra.mxu0 0.0
    %3317 = vmatprep.subr.mxu0 0.0
    %3318 = vmatpush1.msra.mxu0 0.0
    %3319 = vmatprep.subr.mxu0 0.0
    %3320 = vmatpush1.msra.mxu0 0.0
    %3321 = vmatprep.subr.mxu0 0.0
    %3322 = vmatpush1.msra.mxu0 0.0
    %3323 = vmatprep.subr.mxu0 0.0
    %3324 = vmatpush1.msra.mxu0 0.0
    %3325 = vmatprep.subr.mxu0 0.0
    %3326 = vmatpush1.msra.mxu0 0.0
    %3327 = vmatprep.subr.mxu0 0.0
    %3328 = vmatpush1.msra.mxu0 0.0
    %3329 = vmatprep.subr.mxu0 0.0
    %3330 = vmatpush1.msra.mxu0 0.0
    %3331 = vmatprep.subr.mxu0 0.0
    %3332 = vmatpush1.msra.mxu0 0.0
    %3333 = vmatprep.mubr.f32.mxu0 0.0
    %3334 = vmatmul.mubr.f32.gmra.mrb[0].mxu0 %v3264
    %v3335 = vpop.f32.mrb[0].mxu0
    %v3336 = vadd.f32 0.0, %v3335
    %v3337 = vpop.f32.mrb[0].mxu0
    %3338 = vmatprep.mubr.f32.mxu0 0.0
    %3339 = vmatmul.mubr.f32.gmra.mrb[0].mxu0 %v3267
    %v3340 = vpop.f32.mrb[0].mxu0
    %v3341 = vadd.f32 0.0, %v3340
    %v3342 = vpop.f32.mrb[0].mxu0
    %3343 = vdwg.mxu0
    %v3345 = vsel %vm884, %v3261, 0
    %v3348 = vsel %vm884, %v3262, 0
    %3350 = vmatprep.subr.mxu0 0.0
    %3351 = vmatpush1.msra.mxu0 %v3033
    %3352 = vmatprep.subr.mxu0 0.0
    %3353 = vmatpush1.msra.mxu0 %v3038
    %3354 = vmatprep.subr.mxu0 0.0
    %3355 = vmatpush1.msra.mxu0 0.0
    %3356 = vmatprep.subr.mxu0 0.0
    %3357 = vmatpush1.msra.mxu0 0.0
    %3358 = vmatprep.subr.mxu0 0.0
    %3359 = vmatpush1.msra.mxu0 0.0
    %3360 = vmatprep.subr.mxu0 0.0
    %3361 = vmatpush1.msra.mxu0 0.0
    %3362 = vmatprep.subr.mxu0 0.0
    %3363 = vmatpush1.msra.mxu0 0.0
    %3364 = vmatprep.subr.mxu0 0.0
    %3365 = vmatpush1.msra.mxu0 0.0
    %3366 = vmatprep.subr.mxu0 0.0
    %3367 = vmatpush1.msra.mxu0 0.0
    %3368 = vmatprep.subr.mxu0 0.0
    %3369 = vmatpush1.msra.mxu0 0.0
    %3370 = vmatprep.subr.mxu0 0.0
    %3371 = vmatpush1.msra.mxu0 0.0
    %3372 = vmatprep.subr.mxu0 0.0
    %3373 = vmatpush1.msra.mxu0 0.0
    %3374 = vmatprep.subr.mxu0 0.0
    %3375 = vmatpush1.msra.mxu0 0.0
    %3376 = vmatprep.subr.mxu0 0.0
    %3377 = vmatpush1.msra.mxu0 0.0
    %3378 = vmatprep.subr.mxu0 0.0
    %3379 = vmatpush1.msra.mxu0 0.0
    %3380 = vmatprep.subr.mxu0 0.0
    %3381 = vmatpush1.msra.mxu0 0.0
    %3382 = vmatprep.subr.mxu0 0.0
    %3383 = vmatpush1.msra.mxu0 0.0
    %3384 = vmatprep.subr.mxu0 0.0
    %3385 = vmatpush1.msra.mxu0 0.0
    %3386 = vmatprep.subr.mxu0 0.0
    %3387 = vmatpush1.msra.mxu0 0.0
    %3388 = vmatprep.subr.mxu0 0.0
    %3389 = vmatpush1.msra.mxu0 0.0
    %3390 = vmatprep.subr.mxu0 0.0
    %3391 = vmatpush1.msra.mxu0 0.0
    %3392 = vmatprep.subr.mxu0 0.0
    %3393 = vmatpush1.msra.mxu0 0.0
    %3394 = vmatprep.subr.mxu0 0.0
    %3395 = vmatpush1.msra.mxu0 0.0
    %3396 = vmatprep.subr.mxu0 0.0
    %3397 = vmatpush1.msra.mxu0 0.0
    %3398 = vmatprep.subr.mxu0 0.0
    %3399 = vmatpush1.msra.mxu0 0.0
    %3400 = vmatprep.subr.mxu0 0.0
    %3401 = vmatpush1.msra.mxu0 0.0
    %3402 = vmatprep.subr.mxu0 0.0
    %3403 = vmatpush1.msra.mxu0 0.0
    %3404 = vmatprep.subr.mxu0 0.0
    %3405 = vmatpush1.msra.mxu0 0.0
    %3406 = vmatprep.subr.mxu0 0.0
    %3407 = vmatpush1.msra.mxu0 0.0
    %3408 = vmatprep.subr.mxu0 0.0
    %3409 = vmatpush1.msra.mxu0 0.0
    %3410 = vmatprep.subr.mxu0 0.0
    %3411 = vmatpush1.msra.mxu0 0.0
    %3412 = vmatprep.subr.mxu0 0.0
    %3413 = vmatpush1.msra.mxu0 0.0
    %3414 = vmatprep.mubr.f32.mxu0 0.0
    %3415 = vmatmul.mubr.f32.gmra.mrb[0].mxu0 %v3345
    %v3416 = vpop.f32.mrb[0].mxu0
    %v3417 = vadd.f32 0.0, %v3416
    %v3418 = vpop.f32.mrb[0].mxu0
    %3419 = vmatprep.mubr.f32.mxu0 0.0
    %3420 = vmatmul.mubr.f32.gmra.mrb[0].mxu0 %v3348
    %v3421 = vpop.f32.mrb[0].mxu0
    %v3422 = vadd.f32 0.0, %v3421
    %v3423 = vpop.f32.mrb[0].mxu0
    %3424 = vdwg.mxu0
    %s3425 = scalar_lea.vmem %s12, 24
    %v3426 = vld [vmem:[%s3425] sm:$0xff]
    %v3428 = vsel %vm705, %v3336, 0
    %v3431 = vsel %vm705, %v3341, 0
    %v3434 = vsel %vm705, %v3417, 0
    %v3437 = vsel %vm705, %v3422, 0
    %3439 = vmatprep.subr.mxu0 0.0
    %3440 = vmatpush1.msra.mxu0 %v3426
    %3441 = vmatprep.subr.mxu0 0.0
    %3442 = vmatpush1.msra.mxu0 0.0
    %3443 = vmatprep.subr.mxu0 0.0
    %3444 = vmatpush1.msra.mxu0 0.0
    %3445 = vmatprep.subr.mxu0 0.0
    %3446 = vmatpush1.msra.mxu0 0.0
    %3447 = vmatprep.subr.mxu0 0.0
    %3448 = vmatpush1.msra.mxu0 0.0
    %3449 = vmatprep.subr.mxu0 0.0
    %3450 = vmatpush1.msra.mxu0 0.0
    %3451 = vmatprep.subr.mxu0 0.0
    %3452 = vmatpush1.msra.mxu0 0.0
    %3453 = vmatprep.subr.mxu0 0.0
    %3454 = vmatpush1.msra.mxu0 0.0
    %3455 = vmatprep.subr.mxu0 0.0
    %3456 = vmatpush1.msra.mxu0 0.0
    %3457 = vmatprep.subr.mxu0 0.0
    %3458 = vmatpush1.msra.mxu0 0.0
    %3459 = vmatprep.subr.mxu0 0.0
    %3460 = vmatpush1.msra.mxu0 0.0
    %3461 = vmatprep.subr.mxu0 0.0
    %3462 = vmatpush1.msra.mxu0 0.0
    %3463 = vmatprep.subr.mxu0 0.0
    %3464 = vmatpush1.msra.mxu0 0.0
    %3465 = vmatprep.subr.mxu0 0.0
    %3466 = vmatpush1.msra.mxu0 0.0
    %3467 = vmatprep.subr.mxu0 0.0
    %3468 = vmatpush1.msra.mxu0 0.0
    %3469 = vmatprep.subr.mxu0 0.0
    %3470 = vmatpush1.msra.mxu0 0.0
    %3471 = vmatprep.subr.mxu0 0.0
    %3472 = vmatpush1.msra.mxu0 0.0
    %3473 = vmatprep.subr.mxu0 0.0
    %3474 = vmatpush1.msra.mxu0 0.0
    %3475 = vmatprep.subr.mxu0 0.0
    %3476 = vmatpush1.msra.mxu0 0.0
    %3477 = vmatprep.subr.mxu0 0.0
    %3478 = vmatpush1.msra.mxu0 0.0
    %3479 = vmatprep.subr.mxu0 0.0
    %3480 = vmatpush1.msra.mxu0 0.0
    %3481 = vmatprep.subr.mxu0 0.0
    %3482 = vmatpush1.msra.mxu0 0.0
    %3483 = vmatprep.subr.mxu0 0.0
    %3484 = vmatpush1.msra.mxu0 0.0
    %3485 = vmatprep.subr.mxu0 0.0
    %3486 = vmatpush1.msra.mxu0 0.0
    %3487 = vmatprep.subr.mxu0 0.0
    %3488 = vmatpush1.msra.mxu0 0.0
    %3489 = vmatprep.subr.mxu0 0.0
    %3490 = vmatpush1.msra.mxu0 0.0
    %3491 = vmatprep.subr.mxu0 0.0
    %3492 = vmatpush1.msra.mxu0 0.0
    %3493 = vmatprep.subr.mxu0 0.0
    %3494 = vmatpush1.msra.mxu0 0.0
    %3495 = vmatprep.subr.mxu0 0.0
    %3496 = vmatpush1.msra.mxu0 0.0
    %3497 = vmatprep.subr.mxu0 0.0
    %3498 = vmatpush1.msra.mxu0 0.0
    %3499 = vmatprep.subr.mxu0 0.0
    %3500 = vmatpush1.msra.mxu0 0.0
    %3501 = vmatprep.subr.mxu0 0.0
    %3502 = vmatpush1.msra.mxu0 0.0
    %3503 = vmatprep.mubr.f32.mxu0 0.0
    %3504 = vmatmul.mubr.f32.gmra.mrb[0].mxu0 %v3428
    %v3505 = vpop.f32.mrb[0].mxu0
    %v3506 = vadd.f32 0.0, %v3505
    %v3507 = vpop.f32.mrb[0].mxu0
    %3508 = vmatprep.mubr.f32.mxu0 0.0
    %3509 = vmatmul.mubr.f32.gmra.mrb[0].mxu0 %v3431
    %v3510 = vpop.f32.mrb[0].mxu0
    %v3511 = vadd.f32 0.0, %v3510
    %v3512 = vpop.f32.mrb[0].mxu0
    %3513 = vmatprep.mubr.f32.mxu0 0.0
    %3514 = vmatmul.mubr.f32.gmra.mrb[0].mxu0 %v3434
    %v3515 = vpop.f32.mrb[0].mxu0
    %v3516 = vadd.f32 0.0, %v3515
    %v3517 = vpop.f32.mrb[0].mxu0
    %3518 = vmatprep.mubr.f32.mxu0 0.0
    %3519 = vmatmul.mubr.f32.gmra.mrb[0].mxu0 %v3437
    %v3520 = vpop.f32.mrb[0].mxu0
    %v3521 = vadd.f32 0.0, %v3520
    %v3522 = vpop.f32.mrb[0].mxu0
    %3523 = vdwg.mxu0
    %v3524 = vadd.f32 %v2743, %v3506
    %v3525 = vadd.f32 %v2744, %v3511
    %v3526 = vadd.f32 %v2745, %v3516
    %v3527 = vadd.f32 %v2746, %v3521
    %v3528 = vadd.f32 %v325, %v3524
    %v3529 = vadd.f32 %v326, %v3525
    %v3530 = vadd.f32 %v327, %v3526
    %v3531 = vadd.f32 %v328, %v3527
    %v3532 = vld [vmem:[%s13] sm:$0x1]
    %v3534 = vlaneseq
    %v3535 = vshrl.u32 %v3534, 7
    %v3536 = vsub.s32 0, %v3535
    %v3537 = vrot.slane %v3532, %v3536
    %v3539 = vadd.f32 %v3528, %v3537
    %v3540 = vadd.f32 %v3529, %v3537
    %v3541 = vadd.f32 %v3530, %v3537
    %v3542 = vadd.f32 %v3531, %v3537
    %v3543 = vld [vmem:[%s14] sm:$0x1]
    %v3544 = vld [vmem:[%s15] sm:$0x1]
    %v3545 = vsel %vm331, %v3539, 0.0
    %3546 = vadd.xlane.f32.xlu0 %v3545
    %v3547 = vpop.xlane.xlu0 %3546
    %v3548 = vsel %vm331, %v3540, 0.0
    %3549 = vadd.xlane.f32.xlu0 %v3548
    %v3550 = vpop.xlane.xlu0 %3549
    %v3551 = vsel %vm331, %v3541, 0.0
    %3552 = vadd.xlane.f32.xlu0 %v3551
    %v3553 = vpop.xlane.xlu0 %3552
    %v3554 = vsel %vm331, %v3542, 0.0
    %3555 = vadd.xlane.f32.xlu0 %v3554
    %v3556 = vpop.xlane.xlu0 %3555
    %v3557 = vmul.f32 %v3547, %v344
    %v3558 = vmul.f32 %v3550, %v344
    %v3559 = vmul.f32 %v3553, %v344
    %v3560 = vmul.f32 %v3556, %v344
    %v3561 = vsub.f32 %v3539, %v3557
    %v3562 = vsub.f32 %v3540, %v3558
    %v3563 = vsub.f32 %v3541, %v3559
    %v3564 = vsub.f32 %v3542, %v3560
    %v3565 = vmul.f32 %v3561, %v3561
    %v3566 = vmul.f32 %v3562, %v3562
    %v3567 = vmul.f32 %v3563, %v3563
    %v3568 = vmul.f32 %v3564, %v3564
    %v3569 = vsel %vm331, %v3565, 0.0
    %3570 = vadd.xlane.f32.xlu0 %v3569
    %v3571 = vpop.xlane.xlu0 %3570
    %v3572 = vsel %vm331, %v3566, 0.0
    %3573 = vadd.xlane.f32.xlu0 %v3572
    %v3574 = vpop.xlane.xlu0 %3573
    %v3575 = vsel %vm331, %v3567, 0.0
    %3576 = vadd.xlane.f32.xlu0 %v3575
    %v3577 = vpop.xlane.xlu0 %3576
    %v3578 = vsel %vm331, %v3568, 0.0
    %3579 = vadd.xlane.f32.xlu0 %v3578
    %v3580 = vpop.xlane.xlu0 %3579
    %v3581 = vmul.f32 %v3571, %v344
    %v3582 = vmul.f32 %v3574, %v344
    %v3583 = vmul.f32 %v3577, %v344
    %v3584 = vmul.f32 %v3580, %v344
    %v3585 = vadd.f32 %v3581, 1e-05
    %v3586 = vadd.f32 %v3582, 1e-05
    %v3587 = vadd.f32 %v3583, 1e-05
    %v3588 = vadd.f32 %v3584, 1e-05
    %v3589 = vrsqrt.pop %v3585
    %v3590 = vrsqrt.pop %v3586
    %v3591 = vrsqrt.pop %v3587
    %v3592 = vrsqrt.pop %v3588
    %v3593 = vmul.f32 %v3561, %v3589
    %v3594 = vmul.f32 %v3562, %v3590
    %v3595 = vmul.f32 %v3563, %v3591
    %v3596 = vmul.f32 %v3564, %v3592
    %v3598 = vlaneseq
    %v3599 = vshrl.u32 %v3598, 7
    %v3600 = vsub.s32 0, %v3599
    %v3601 = vrot.slane %v3543, %v3600
    %v3603 = vmul.f32 %v3593, %v3601
    %v3604 = vmul.f32 %v3594, %v3601
    %v3605 = vmul.f32 %v3595, %v3601
    %v3606 = vmul.f32 %v3596, %v3601
    %v3608 = vlaneseq
    %v3609 = vshrl.u32 %v3608, 7
    %v3610 = vsub.s32 0, %v3609
    %v3611 = vrot.slane %v3544, %v3610
    %v3613 = vadd.f32 %v3603, %v3611
    %v3614 = vadd.f32 %v3604, %v3611
    %v3615 = vadd.f32 %v3605, %v3611
    %v3616 = vadd.f32 %v3606, %v3611
    %v3617 = vld [vmem:[%s16] sm:$0xff]
    %v3618 = vld [vmem:[%s16 + $0x8] sm:$0xff]
    %v3619 = vld [vmem:[%s16 + $0x10] sm:$0xff]
    %v3620 = vld [vmem:[%s16 + $0x18] sm:$0xff]
    %v3621 = vld [vmem:[%s17] sm:$0x1]
    %v3623 = vlaneseq
    %v3624 = vshrl.u32 %v3623, 7
    %v3625 = vsub.s32 0, %v3624
    %v3626 = vrot.slane %v3621, %v3625
    %v3629 = vsel %vm331, %v3613, 0
    %v3632 = vsel %vm331, %v3614, 0
    %v3635 = vsel %vm331, %v3615, 0
    %v3638 = vsel %vm331, %v3616, 0
    %3640 = vmatprep.subr.mxu0 0.0
    %3641 = vmatpush1.msra.mxu0 %v3617
    %3642 = vmatprep.subr.mxu0 0.0
    %3643 = vmatpush1.msra.mxu0 %v3618
    %3644 = vmatprep.subr.mxu0 0.0
    %3645 = vmatpush1.msra.mxu0 %v3619
    %3646 = vmatprep.subr.mxu0 0.0
    %3647 = vmatpush1.msra.mxu0 %v3620
    %3648 = vmatprep.subr.mxu0 0.0
    %3649 = vmatpush1.msra.mxu0 0.0
    %3650 = vmatprep.subr.mxu0 0.0
    %3651 = vmatpush1.msra.mxu0 0.0
    %3652 = vmatprep.subr.mxu0 0.0
    %3653 = vmatpush1.msra.mxu0 0.0
    %3654 = vmatprep.subr.mxu0 0.0
    %3655 = vmatpush1.msra.mxu0 0.0
    %3656 = vmatprep.subr.mxu0 0.0
    %3657 = vmatpush1.msra.mxu0 0.0
    %3658 = vmatprep.subr.mxu0 0.0
    %3659 = vmatpush1.msra.mxu0 0.0
    %3660 = vmatprep.subr.mxu0 0.0
    %3661 = vmatpush1.msra.mxu0 0.0
    %3662 = vmatprep.subr.mxu0 0.0
    %3663 = vmatpush1.msra.mxu0 0.0
    %3664 = vmatprep.subr.mxu0 0.0
    %3665 = vmatpush1.msra.mxu0 0.0
    %3666 = vmatprep.subr.mxu0 0.0
    %3667 = vmatpush1.msra.mxu0 0.0
    %3668 = vmatprep.subr.mxu0 0.0
    %3669 = vmatpush1.msra.mxu0 0.0
    %3670 = vmatprep.subr.mxu0 0.0
    %3671 = vmatpush1.msra.mxu0 0.0
    %3672 = vmatprep.subr.mxu0 0.0
    %3673 = vmatpush1.msra.mxu0 0.0
    %3674 = vmatprep.subr.mxu0 0.0
    %3675 = vmatpush1.msra.mxu0 0.0
    %3676 = vmatprep.subr.mxu0 0.0
    %3677 = vmatpush1.msra.mxu0 0.0
    %3678 = vmatprep.subr.mxu0 0.0
    %3679 = vmatpush1.msra.mxu0 0.0
    %3680 = vmatprep.subr.mxu0 0.0
    %3681 = vmatpush1.msra.mxu0 0.0
    %3682 = vmatprep.subr.mxu0 0.0
    %3683 = vmatpush1.msra.mxu0 0.0
    %3684 = vmatprep.subr.mxu0 0.0
    %3685 = vmatpush1.msra.mxu0 0.0
    %3686 = vmatprep.subr.mxu0 0.0
    %3687 = vmatpush1.msra.mxu0 0.0
    %3688 = vmatprep.subr.mxu0 0.0
    %3689 = vmatpush1.msra.mxu0 0.0
    %3690 = vmatprep.subr.mxu0 0.0
    %3691 = vmatpush1.msra.mxu0 0.0
    %3692 = vmatprep.subr.mxu0 0.0
    %3693 = vmatpush1.msra.mxu0 0.0
    %3694 = vmatprep.subr.mxu0 0.0
    %3695 = vmatpush1.msra.mxu0 0.0
    %3696 = vmatprep.subr.mxu0 0.0
    %3697 = vmatpush1.msra.mxu0 0.0
    %3698 = vmatprep.subr.mxu0 0.0
    %3699 = vmatpush1.msra.mxu0 0.0
    %3700 = vmatprep.subr.mxu0 0.0
    %3701 = vmatpush1.msra.mxu0 0.0
    %3702 = vmatprep.subr.mxu0 0.0
    %3703 = vmatpush1.msra.mxu0 0.0
    %3704 = vmatprep.mubr.f32.mxu0 0.0
    %3705 = vmatmul.mubr.f32.gmra.mrb[0].mxu0 %v3629
    %v3706 = vpop.f32.mrb[0].mxu0
    %v3707 = vadd.f32 %v3626, %v3706
    %v3708 = vpop.f32.mrb[0].mxu0
    %3709 = vmatprep.mubr.f32.mxu0 0.0
    %3710 = vmatmul.mubr.f32.gmra.mrb[0].mxu0 %v3632
    %v3711 = vpop.f32.mrb[0].mxu0
    %v3712 = vadd.f32 %v3626, %v3711
    %v3713 = vpop.f32.mrb[0].mxu0
    %3714 = vmatprep.mubr.f32.mxu0 0.0
    %3715 = vmatmul.mubr.f32.gmra.mrb[0].mxu0 %v3635
    %v3716 = vpop.f32.mrb[0].mxu0
    %v3717 = vadd.f32 %v3626, %v3716
    %v3718 = vpop.f32.mrb[0].mxu0
    %3719 = vmatprep.mubr.f32.mxu0 0.0
    %3720 = vmatmul.mubr.f32.gmra.mrb[0].mxu0 %v3638
    %v3721 = vpop.f32.mrb[0].mxu0
    %v3722 = vadd.f32 %v3626, %v3721
    %v3723 = vpop.f32.mrb[0].mxu0
    %3724 = vdwg.mxu0
    %v3725 = vmul.f32 %v3707, 0.5
    %v3726 = vmul.f32 %v3712, 0.5
    %v3727 = vmul.f32 %v3717, 0.5
    %v3728 = vmul.f32 %v3722, 0.5
    %v3729 = vmul.f32 %v3707, 0.044715
    %v3730 = vmul.f32 %v3712, 0.044715
    %v3731 = vmul.f32 %v3717, 0.044715
    %v3732 = vmul.f32 %v3722, 0.044715
    %v3733 = vmul.f32 %v3729, %v3707
    %v3734 = vmul.f32 %v3730, %v3712
    %v3735 = vmul.f32 %v3731, %v3717
    %v3736 = vmul.f32 %v3732, %v3722
    %v3737 = vmul.f32 %v3733, %v3707
    %v3738 = vmul.f32 %v3734, %v3712
    %v3739 = vmul.f32 %v3735, %v3717
    %v3740 = vmul.f32 %v3736, %v3722
    %v3741 = vadd.f32 %v3707, %v3737
    %v3742 = vadd.f32 %v3712, %v3738
    %v3743 = vadd.f32 %v3717, %v3739
    %v3744 = vadd.f32 %v3722, %v3740
    %v3745 = vmul.f32 %v3741, 0.7978846
    %v3746 = vmul.f32 %v3742, 0.7978846
    %v3747 = vmul.f32 %v3743, 0.7978846
    %v3748 = vmul.f32 %v3744, 0.7978846
    %v3749 = vtanh.pop %v3745
    %v3750 = vtanh.pop %v3746
    %v3751 = vtanh.pop %v3747
    %v3752 = vtanh.pop %v3748
    %v3753 = vadd.f32 %v3749, 1.0
    %v3754 = vadd.f32 %v3750, 1.0
    %v3755 = vadd.f32 %v3751, 1.0
    %v3756 = vadd.f32 %v3752, 1.0
    %v3757 = vmul.f32 %v3725, %v3753
    %v3758 = vmul.f32 %v3726, %v3754
    %v3759 = vmul.f32 %v3727, %v3755
    %v3760 = vmul.f32 %v3728, %v3756
    %v3761 = vld [vmem:[%s18] sm:$0xff]
    %v3762 = vld [vmem:[%s18 + $0x8] sm:$0xff]
    %v3763 = vld [vmem:[%s18 + $0x10] sm:$0xff]
    %v3764 = vld [vmem:[%s18 + $0x18] sm:$0xff]
    %v3765 = vld [vmem:[%s18 + $0x20] sm:$0xff]
    %v3766 = vld [vmem:[%s18 + $0x28] sm:$0xff]
    %v3767 = vld [vmem:[%s18 + $0x30] sm:$0xff]
    %v3768 = vld [vmem:[%s18 + $0x38] sm:$0xff]
    %v3769 = vld [vmem:[%s18 + $0x40] sm:$0xff]
    %v3770 = vld [vmem:[%s18 + $0x48] sm:$0xff]
    %v3771 = vld [vmem:[%s18 + $0x50] sm:$0xff]
    %v3772 = vld [vmem:[%s18 + $0x58] sm:$0xff]
    %v3773 = vld [vmem:[%s18 + $0x60] sm:$0xff]
    %v3774 = vld [vmem:[%s18 + $0x68] sm:$0xff]
    %v3775 = vld [vmem:[%s18 + $0x70] sm:$0xff]
    %v3776 = vld [vmem:[%s18 + $0x78] sm:$0xff]
    %v3777 = vld [vmem:[%s19] sm:$0x1]
    %v3779 = vlaneseq
    %v3780 = vshrl.u32 %v3779, 7
    %v3781 = vsub.s32 0, %v3780
    %v3782 = vrot.slane %v3777, %v3781
    %3784 = vmatprep.subr.mxu0 0.0
    %3785 = vmatpush1.msra.mxu0 %v3761
    %3786 = vmatprep.subr.mxu0 0.0
    %3787 = vmatpush1.msra.mxu0 %v3762
    %3788 = vmatprep.subr.mxu0 0.0
    %3789 = vmatpush1.msra.mxu0 %v3763
    %3790 = vmatprep.subr.mxu0 0.0
    %3791 = vmatpush1.msra.mxu0 %v3764
    %3792 = vmatprep.subr.mxu0 0.0
    %3793 = vmatpush1.msra.mxu0 %v3765
    %3794 = vmatprep.subr.mxu0 0.0
    %3795 = vmatpush1.msra.mxu0 %v3766
    %3796 = vmatprep.subr.mxu0 0.0
    %3797 = vmatpush1.msra.mxu0 %v3767
    %3798 = vmatprep.subr.mxu0 0.0
    %3799 = vmatpush1.msra.mxu0 %v3768
    %3800 = vmatprep.subr.mxu0 0.0
    %3801 = vmatpush1.msra.mxu0 %v3769
    %3802 = vmatprep.subr.mxu0 0.0
    %3803 = vmatpush1.msra.mxu0 %v3770
    %3804 = vmatprep.subr.mxu0 0.0
    %3805 = vmatpush1.msra.mxu0 %v3771
    %3806 = vmatprep.subr.mxu0 0.0
    %3807 = vmatpush1.msra.mxu0 %v3772
    %3808 = vmatprep.subr.mxu0 0.0
    %3809 = vmatpush1.msra.mxu0 %v3773
    %3810 = vmatprep.subr.mxu0 0.0
    %3811 = vmatpush1.msra.mxu0 %v3774
    %3812 = vmatprep.subr.mxu0 0.0
    %3813 = vmatpush1.msra.mxu0 %v3775
    %3814 = vmatprep.subr.mxu0 0.0
    %3815 = vmatpush1.msra.mxu0 %v3776
    %3816 = vmatprep.subr.mxu0 0.0
    %3817 = vmatpush1.msra.mxu0 0.0
    %3818 = vmatprep.subr.mxu0 0.0
    %3819 = vmatpush1.msra.mxu0 0.0
    %3820 = vmatprep.subr.mxu0 0.0
    %3821 = vmatpush1.msra.mxu0 0.0
    %3822 = vmatprep.subr.mxu0 0.0
    %3823 = vmatpush1.msra.mxu0 0.0
    %3824 = vmatprep.subr.mxu0 0.0
    %3825 = vmatpush1.msra.mxu0 0.0
    %3826 = vmatprep.subr.mxu0 0.0
    %3827 = vmatpush1.msra.mxu0 0.0
    %3828 = vmatprep.subr.mxu0 0.0
    %3829 = vmatpush1.msra.mxu0 0.0
    %3830 = vmatprep.subr.mxu0 0.0
    %3831 = vmatpush1.msra.mxu0 0.0
    %3832 = vmatprep.subr.mxu0 0.0
    %3833 = vmatpush1.msra.mxu0 0.0
    %3834 = vmatprep.subr.mxu0 0.0
    %3835 = vmatpush1.msra.mxu0 0.0
    %3836 = vmatprep.subr.mxu0 0.0
    %3837 = vmatpush1.msra.mxu0 0.0
    %3838 = vmatprep.subr.mxu0 0.0
    %3839 = vmatpush1.msra.mxu0 0.0
    %3840 = vmatprep.subr.mxu0 0.0
    %3841 = vmatpush1.msra.mxu0 0.0
    %3842 = vmatprep.subr.mxu0 0.0
    %3843 = vmatpush1.msra.mxu0 0.0
    %3844 = vmatprep.subr.mxu0 0.0
    %3845 = vmatpush1.msra.mxu0 0.0
    %3846 = vmatprep.subr.mxu0 0.0
    %3847 = vmatpush1.msra.mxu0 0.0
    %3848 = vmatprep.mubr.f32.mxu0 0.0
    %3849 = vmatmul.mubr.f32.gmra.mrb[0].mxu0 %v3757
    %v3850 = vpop.f32.mrb[0].mxu0
    %v3851 = vadd.f32 %v3782, %v3850
    %v3852 = vpop.f32.mrb[0].mxu0
    %3853 = vmatprep.mubr.f32.mxu0 0.0
    %3854 = vmatmul.mubr.f32.gmra.mrb[0].mxu0 %v3758
    %v3855 = vpop.f32.mrb[0].mxu0
    %v3856 = vadd.f32 %v3782, %v3855
    %v3857 = vpop.f32.mrb[0].mxu0
    %3858 = vmatprep.mubr.f32.mxu0 0.0
    %3859 = vmatmul.mubr.f32.gmra.mrb[0].mxu0 %v3759
    %v3860 = vpop.f32.mrb[0].mxu0
    %v3861 = vadd.f32 %v3782, %v3860
    %v3862 = vpop.f32.mrb[0].mxu0
    %3863 = vmatprep.mubr.f32.mxu0 0.0
    %3864 = vmatmul.mubr.f32.gmra.mrb[0].mxu0 %v3760
    %v3865 = vpop.f32.mrb[0].mxu0
    %v3866 = vadd.f32 %v3782, %v3865
    %v3867 = vpop.f32.mrb[0].mxu0
    %3868 = vdwg.mxu0
    %v3869 = vadd.f32 %v3539, %v3851
    %v3870 = vadd.f32 %v3540, %v3856
    %v3871 = vadd.f32 %v3541, %v3861
    %v3872 = vadd.f32 %v3542, %v3866
    %s3873 = scalar_lea.vmem %s4, 1
    %v3874 = vld [vmem:[%s3873] sm:$0x1]
    %s3875 = scalar_lea.vmem %s5, 1
    %v3876 = vld [vmem:[%s3875] sm:$0x1]
    %v3877 = vsel %vm331, %v3869, 0.0
    %3878 = vadd.xlane.f32.xlu0 %v3877
    %v3879 = vpop.xlane.xlu0 %3878
    %v3880 = vsel %vm331, %v3870, 0.0
    %3881 = vadd.xlane.f32.xlu0 %v3880
    %v3882 = vpop.xlane.xlu0 %3881
    %v3883 = vsel %vm331, %v3871, 0.0
    %3884 = vadd.xlane.f32.xlu0 %v3883
    %v3885 = vpop.xlane.xlu0 %3884
    %v3886 = vsel %vm331, %v3872, 0.0
    %3887 = vadd.xlane.f32.xlu0 %v3886
    %v3888 = vpop.xlane.xlu0 %3887
    %v3889 = vmul.f32 %v3879, %v344
    %v3890 = vmul.f32 %v3882, %v344
    %v3891 = vmul.f32 %v3885, %v344
    %v3892 = vmul.f32 %v3888, %v344
    %v3893 = vsub.f32 %v3869, %v3889
    %v3894 = vsub.f32 %v3870, %v3890
    %v3895 = vsub.f32 %v3871, %v3891
    %v3896 = vsub.f32 %v3872, %v3892
    %v3897 = vmul.f32 %v3893, %v3893
    %v3898 = vmul.f32 %v3894, %v3894
    %v3899 = vmul.f32 %v3895, %v3895
    %v3900 = vmul.f32 %v3896, %v3896
    %v3901 = vsel %vm331, %v3897, 0.0
    %3902 = vadd.xlane.f32.xlu0 %v3901
    %v3903 = vpop.xlane.xlu0 %3902
    %v3904 = vsel %vm331, %v3898, 0.0
    %3905 = vadd.xlane.f32.xlu0 %v3904
    %v3906 = vpop.xlane.xlu0 %3905
    %v3907 = vsel %vm331, %v3899, 0.0
    %3908 = vadd.xlane.f32.xlu0 %v3907
    %v3909 = vpop.xlane.xlu0 %3908
    %v3910 = vsel %vm331, %v3900, 0.0
    %3911 = vadd.xlane.f32.xlu0 %v3910
    %v3912 = vpop.xlane.xlu0 %3911
    %v3913 = vmul.f32 %v3903, %v344
    %v3914 = vmul.f32 %v3906, %v344
    %v3915 = vmul.f32 %v3909, %v344
    %v3916 = vmul.f32 %v3912, %v344
    %v3917 = vadd.f32 %v3913, 1e-05
    %v3918 = vadd.f32 %v3914, 1e-05
    %v3919 = vadd.f32 %v3915, 1e-05
    %v3920 = vadd.f32 %v3916, 1e-05
    %v3921 = vrsqrt.pop %v3917
    %v3922 = vrsqrt.pop %v3918
    %v3923 = vrsqrt.pop %v3919
    %v3924 = vrsqrt.pop %v3920
    %v3925 = vmul.f32 %v3893, %v3921
    %v3926 = vmul.f32 %v3894, %v3922
    %v3927 = vmul.f32 %v3895, %v3923
    %v3928 = vmul.f32 %v3896, %v3924
    %v3930 = vlaneseq
    %v3931 = vshrl.u32 %v3930, 7
    %v3932 = vsub.s32 0, %v3931
    %v3933 = vrot.slane %v3874, %v3932
    %v3935 = vmul.f32 %v3925, %v3933
    %v3936 = vmul.f32 %v3926, %v3933
    %v3937 = vmul.f32 %v3927, %v3933
    %v3938 = vmul.f32 %v3928, %v3933
    %v3940 = vlaneseq
    %v3941 = vshrl.u32 %v3940, 7
    %v3942 = vsub.s32 0, %v3941
    %v3943 = vrot.slane %v3876, %v3942
    %v3945 = vadd.f32 %v3935, %v3943
    %v3946 = vadd.f32 %v3936, %v3943
    %v3947 = vadd.f32 %v3937, %v3943
    %v3948 = vadd.f32 %v3938, %v3943
    %s3949 = scalar_lea.vmem %s6, 128
    %v3950 = vld [vmem:[%s3949] sm:$0xff]
    %v3951 = vld [vmem:[%s3949 + $0x8] sm:$0xff]
    %v3952 = vld [vmem:[%s3949 + $0x10] sm:$0xff]
    %v3953 = vld [vmem:[%s3949 + $0x18] sm:$0xff]
    %s3954 = scalar_lea.vmem %s7, 4
    %v3955 = vld [vmem:[%s3954] sm:$0x1]
    %v3957 = vlaneseq
    %v3958 = vshrl.u32 %v3957, 7
    %v3959 = vsub.s32 0, %v3958
    %v3960 = vrot.slane %v3955, %v3959
    %v3963 = vsel %vm331, %v3945, 0
    %v3966 = vsel %vm331, %v3946, 0
    %v3969 = vsel %vm331, %v3947, 0
    %v3972 = vsel %vm331, %v3948, 0
    %3974 = vmatprep.subr.mxu0 0.0
    %3975 = vmatpush1.msra.mxu0 %v3950
    %3976 = vmatprep.subr.mxu0 0.0
    %3977 = vmatpush1.msra.mxu0 %v3951
    %3978 = vmatprep.subr.mxu0 0.0
    %3979 = vmatpush1.msra.mxu0 %v3952
    %3980 = vmatprep.subr.mxu0 0.0
    %3981 = vmatpush1.msra.mxu0 %v3953
    %3982 = vmatprep.subr.mxu0 0.0
    %3983 = vmatpush1.msra.mxu0 0.0
    %3984 = vmatprep.subr.mxu0 0.0
    %3985 = vmatpush1.msra.mxu0 0.0
    %3986 = vmatprep.subr.mxu0 0.0
    %3987 = vmatpush1.msra.mxu0 0.0
    %3988 = vmatprep.subr.mxu0 0.0
    %3989 = vmatpush1.msra.mxu0 0.0
    %3990 = vmatprep.subr.mxu0 0.0
    %3991 = vmatpush1.msra.mxu0 0.0
    %3992 = vmatprep.subr.mxu0 0.0
    %3993 = vmatpush1.msra.mxu0 0.0
    %3994 = vmatprep.subr.mxu0 0.0
    %3995 = vmatpush1.msra.mxu0 0.0
    %3996 = vmatprep.subr.mxu0 0.0
    %3997 = vmatpush1.msra.mxu0 0.0
    %3998 = vmatprep.subr.mxu0 0.0
    %3999 = vmatpush1.msra.mxu0 0.0
    %4000 = vmatprep.subr.mxu0 0.0
    %4001 = vmatpush1.msra.mxu0 0.0
    %4002 = vmatprep.subr.mxu0 0.0
    %4003 = vmatpush1.msra.mxu0 0.0
    %4004 = vmatprep.subr.mxu0 0.0
    %4005 = vmatpush1.msra.mxu0 0.0
    %4006 = vmatprep.subr.mxu0 0.0
    %4007 = vmatpush1.msra.mxu0 0.0
    %4008 = vmatprep.subr.mxu0 0.0
    %4009 = vmatpush1.msra.mxu0 0.0
    %4010 = vmatprep.subr.mxu0 0.0
    %4011 = vmatpush1.msra.mxu0 0.0
    %4012 = vmatprep.subr.mxu0 0.0
    %4013 = vmatpush1.msra.mxu0 0.0
    %4014 = vmatprep.subr.mxu0 0.0
    %4015 = vmatpush1.msra.mxu0 0.0
    %4016 = vmatprep.subr.mxu0 0.0
    %4017 = vmatpush1.msra.mxu0 0.0
    %4018 = vmatprep.subr.mxu0 0.0
    %4019 = vmatpush1.msra.mxu0 0.0
    %4020 = vmatprep.subr.mxu0 0.0
    %4021 = vmatpush1.msra.mxu0 0.0
    %4022 = vmatprep.subr.mxu0 0.0
    %4023 = vmatpush1.msra.mxu0 0.0
    %4024 = vmatprep.subr.mxu0 0.0
    %4025 = vmatpush1.msra.mxu0 0.0
    %4026 = vmatprep.subr.mxu0 0.0
    %4027 = vmatpush1.msra.mxu0 0.0
    %4028 = vmatprep.subr.mxu0 0.0
    %4029 = vmatpush1.msra.mxu0 0.0
    %4030 = vmatprep.subr.mxu0 0.0
    %4031 = vmatpush1.msra.mxu0 0.0
    %4032 = vmatprep.subr.mxu0 0.0
    %4033 = vmatpush1.msra.mxu0 0.0
    %4034 = vmatprep.subr.mxu0 0.0
    %4035 = vmatpush1.msra.mxu0 0.0
    %4036 = vmatprep.subr.mxu0 0.0
    %4037 = vmatpush1.msra.mxu0 0.0
    %4038 = vmatprep.mubr.f32.mxu0 0.0
    %4039 = vmatmul.mubr.f32.gmra.mrb[0].mxu0 %v3963
    %v4040 = vpop.f32.mrb[0].mxu0
    %v4041 = vadd.f32 %v3960, %v4040
    %v4042 = vpop.f32.mrb[0].mxu0
    %4043 = vmatprep.mubr.f32.mxu0 0.0
    %4044 = vmatmul.mubr.f32.gmra.mrb[0].mxu0 %v3966
    %v4045 = vpop.f32.mrb[0].mxu0
    %v4046 = vadd.f32 %v3960, %v4045
    %v4047 = vpop.f32.mrb[0].mxu0
    %4048 = vmatprep.mubr.f32.mxu0 0.0
    %4049 = vmatmul.mubr.f32.gmra.mrb[0].mxu0 %v3969
    %v4050 = vpop.f32.mrb[0].mxu0
    %v4051 = vadd.f32 %v3960, %v4050
    %v4052 = vpop.f32.mrb[0].mxu0
    %4053 = vmatprep.mubr.f32.mxu0 0.0
    %4054 = vmatmul.mubr.f32.gmra.mrb[0].mxu0 %v3972
    %v4055 = vpop.f32.mrb[0].mxu0
    %v4056 = vadd.f32 %v3960, %v4055
    %v4057 = vpop.f32.mrb[0].mxu0
    %4058 = vdwg.mxu0
    %s4059 = scalar_lea.vmem %s8, 128
    %v4060 = vld [vmem:[%s4059] sm:$0xff]
    %v4061 = vld [vmem:[%s4059 + $0x8] sm:$0xff]
    %v4062 = vld [vmem:[%s4059 + $0x10] sm:$0xff]
    %v4063 = vld [vmem:[%s4059 + $0x18] sm:$0xff]
    %s4064 = scalar_lea.vmem %s9, 4
    %v4065 = vld [vmem:[%s4064] sm:$0x1]
    %v4067 = vlaneseq
    %v4068 = vshrl.u32 %v4067, 7
    %v4069 = vsub.s32 0, %v4068
    %v4070 = vrot.slane %v4065, %v4069
    %4072 = vmatprep.subr.mxu0 0.0
    %4073 = vmatpush1.msra.mxu0 %v4060
    %4074 = vmatprep.subr.mxu0 0.0
    %4075 = vmatpush1.msra.mxu0 %v4061
    %4076 = vmatprep.subr.mxu0 0.0
    %4077 = vmatpush1.msra.mxu0 %v4062
    %4078 = vmatprep.subr.mxu0 0.0
    %4079 = vmatpush1.msra.mxu0 %v4063
    %4080 = vmatprep.subr.mxu0 0.0
    %4081 = vmatpush1.msra.mxu0 0.0
    %4082 = vmatprep.subr.mxu0 0.0
    %4083 = vmatpush1.msra.mxu0 0.0
    %4084 = vmatprep.subr.mxu0 0.0
    %4085 = vmatpush1.msra.mxu0 0.0
    %4086 = vmatprep.subr.mxu0 0.0
    %4087 = vmatpush1.msra.mxu0 0.0
    %4088 = vmatprep.subr.mxu0 0.0
    %4089 = vmatpush1.msra.mxu0 0.0
    %4090 = vmatprep.subr.mxu0 0.0
    %4091 = vmatpush1.msra.mxu0 0.0
    %4092 = vmatprep.subr.mxu0 0.0
    %4093 = vmatpush1.msra.mxu0 0.0
    %4094 = vmatprep.subr.mxu0 0.0
    %4095 = vmatpush1.msra.mxu0 0.0
    %4096 = vmatprep.subr.mxu0 0.0
    %4097 = vmatpush1.msra.mxu0 0.0
    %4098 = vmatprep.subr.mxu0 0.0
    %4099 = vmatpush1.msra.mxu0 0.0
    %4100 = vmatprep.subr.mxu0 0.0
    %4101 = vmatpush1.msra.mxu0 0.0
    %4102 = vmatprep.subr.mxu0 0.0
    %4103 = vmatpush1.msra.mxu0 0.0
    %4104 = vmatprep.subr.mxu0 0.0
    %4105 = vmatpush1.msra.mxu0 0.0
    %4106 = vmatprep.subr.mxu0 0.0
    %4107 = vmatpush1.msra.mxu0 0.0
    %4108 = vmatprep.subr.mxu0 0.0
    %4109 = vmatpush1.msra.mxu0 0.0
    %4110 = vmatprep.subr.mxu0 0.0
    %4111 = vmatpush1.msra.mxu0 0.0
    %4112 = vmatprep.subr.mxu0 0.0
    %4113 = vmatpush1.msra.mxu0 0.0
    %4114 = vmatprep.subr.mxu0 0.0
    %4115 = vmatpush1.msra.mxu0 0.0
    %4116 = vmatprep.subr.mxu0 0.0
    %4117 = vmatpush1.msra.mxu0 0.0
    %4118 = vmatprep.subr.mxu0 0.0
    %4119 = vmatpush1.msra.mxu0 0.0
    %4120 = vmatprep.subr.mxu0 0.0
    %4121 = vmatpush1.msra.mxu0 0.0
    %4122 = vmatprep.subr.mxu0 0.0
    %4123 = vmatpush1.msra.mxu0 0.0
    %4124 = vmatprep.subr.mxu0 0.0
    %4125 = vmatpush1.msra.mxu0 0.0
    %4126 = vmatprep.subr.mxu0 0.0
    %4127 = vmatpush1.msra.mxu0 0.0
    %4128 = vmatprep.subr.mxu0 0.0
    %4129 = vmatpush1.msra.mxu0 0.0
    %4130 = vmatprep.subr.mxu0 0.0
    %4131 = vmatpush1.msra.mxu0 0.0
    %4132 = vmatprep.subr.mxu0 0.0
    %4133 = vmatpush1.msra.mxu0 0.0
    %4134 = vmatprep.subr.mxu0 0.0
    %4135 = vmatpush1.msra.mxu0 0.0
    %4136 = vmatprep.mubr.f32.mxu0 0.0
    %4137 = vmatmul.mubr.f32.gmra.mrb[0].mxu0 %v3963
    %v4138 = vpop.f32.mrb[0].mxu0
    %v4139 = vadd.f32 %v4070, %v4138
    %v4140 = vpop.f32.mrb[0].mxu0
    %4141 = vmatprep.mubr.f32.mxu0 0.0
    %4142 = vmatmul.mubr.f32.gmra.mrb[0].mxu0 %v3966
    %v4143 = vpop.f32.mrb[0].mxu0
    %v4144 = vadd.f32 %v4070, %v4143
    %v4145 = vpop.f32.mrb[0].mxu0
    %4146 = vmatprep.mubr.f32.mxu0 0.0
    %4147 = vmatmul.mubr.f32.gmra.mrb[0].mxu0 %v3969
    %v4148 = vpop.f32.mrb[0].mxu0
    %v4149 = vadd.f32 %v4070, %v4148
    %v4150 = vpop.f32.mrb[0].mxu0
    %4151 = vmatprep.mubr.f32.mxu0 0.0
    %4152 = vmatmul.mubr.f32.gmra.mrb[0].mxu0 %v3972
    %v4153 = vpop.f32.mrb[0].mxu0
    %v4154 = vadd.f32 %v4070, %v4153
    %v4155 = vpop.f32.mrb[0].mxu0
    %4156 = vdwg.mxu0
    %s4157 = scalar_lea.vmem %s10, 128
    %v4158 = vld [vmem:[%s4157] sm:$0xff]
    %v4159 = vld [vmem:[%s4157 + $0x8] sm:$0xff]
    %v4160 = vld [vmem:[%s4157 + $0x10] sm:$0xff]
    %v4161 = vld [vmem:[%s4157 + $0x18] sm:$0xff]
    %s4162 = scalar_lea.vmem %s11, 4
    %v4163 = vld [vmem:[%s4162] sm:$0x1]
    %v4165 = vlaneseq
    %v4166 = vshrl.u32 %v4165, 7
    %v4167 = vsub.s32 0, %v4166
    %v4168 = vrot.slane %v4163, %v4167
    %4170 = vmatprep.subr.mxu0 0.0
    %4171 = vmatpush1.msra.mxu0 %v4158
    %4172 = vmatprep.subr.mxu0 0.0
    %4173 = vmatpush1.msra.mxu0 %v4159
    %4174 = vmatprep.subr.mxu0 0.0
    %4175 = vmatpush1.msra.mxu0 %v4160
    %4176 = vmatprep.subr.mxu0 0.0
    %4177 = vmatpush1.msra.mxu0 %v4161
    %4178 = vmatprep.subr.mxu0 0.0
    %4179 = vmatpush1.msra.mxu0 0.0
    %4180 = vmatprep.subr.mxu0 0.0
    %4181 = vmatpush1.msra.mxu0 0.0
    %4182 = vmatprep.subr.mxu0 0.0
    %4183 = vmatpush1.msra.mxu0 0.0
    %4184 = vmatprep.subr.mxu0 0.0
    %4185 = vmatpush1.msra.mxu0 0.0
    %4186 = vmatprep.subr.mxu0 0.0
    %4187 = vmatpush1.msra.mxu0 0.0
    %4188 = vmatprep.subr.mxu0 0.0
    %4189 = vmatpush1.msra.mxu0 0.0
    %4190 = vmatprep.subr.mxu0 0.0
    %4191 = vmatpush1.msra.mxu0 0.0
    %4192 = vmatprep.subr.mxu0 0.0
    %4193 = vmatpush1.msra.mxu0 0.0
    %4194 = vmatprep.subr.mxu0 0.0
    %4195 = vmatpush1.msra.mxu0 0.0
    %4196 = vmatprep.subr.mxu0 0.0
    %4197 = vmatpush1.msra.mxu0 0.0
    %4198 = vmatprep.subr.mxu0 0.0
    %4199 = vmatpush1.msra.mxu0 0.0
    %4200 = vmatprep.subr.mxu0 0.0
    %4201 = vmatpush1.msra.mxu0 0.0
    %4202 = vmatprep.subr.mxu0 0.0
    %4203 = vmatpush1.msra.mxu0 0.0
    %4204 = vmatprep.subr.mxu0 0.0
    %4205 = vmatpush1.msra.mxu0 0.0
    %4206 = vmatprep.subr.mxu0 0.0
    %4207 = vmatpush1.msra.mxu0 0.0
    %4208 = vmatprep.subr.mxu0 0.0
    %4209 = vmatpush1.msra.mxu0 0.0
    %4210 = vmatprep.subr.mxu0 0.0
    %4211 = vmatpush1.msra.mxu0 0.0
    %4212 = vmatprep.subr.mxu0 0.0
    %4213 = vmatpush1.msra.mxu0 0.0
    %4214 = vmatprep.subr.mxu0 0.0
    %4215 = vmatpush1.msra.mxu0 0.0
    %4216 = vmatprep.subr.mxu0 0.0
    %4217 = vmatpush1.msra.mxu0 0.0
    %4218 = vmatprep.subr.mxu0 0.0
    %4219 = vmatpush1.msra.mxu0 0.0
    %4220 = vmatprep.subr.mxu0 0.0
    %4221 = vmatpush1.msra.mxu0 0.0
    %4222 = vmatprep.subr.mxu0 0.0
    %4223 = vmatpush1.msra.mxu0 0.0
    %4224 = vmatprep.subr.mxu0 0.0
    %4225 = vmatpush1.msra.mxu0 0.0
    %4226 = vmatprep.subr.mxu0 0.0
    %4227 = vmatpush1.msra.mxu0 0.0
    %4228 = vmatprep.subr.mxu0 0.0
    %4229 = vmatpush1.msra.mxu0 0.0
    %4230 = vmatprep.subr.mxu0 0.0
    %4231 = vmatpush1.msra.mxu0 0.0
    %4232 = vmatprep.subr.mxu0 0.0
    %4233 = vmatpush1.msra.mxu0 0.0
    %4234 = vmatprep.mubr.f32.mxu0 0.0
    %4235 = vmatmul.mubr.f32.gmra.mrb[0].mxu0 %v3963
    %v4236 = vpop.f32.mrb[0].mxu0
    %v4237 = vadd.f32 %v4168, %v4236
    %v4238 = vpop.f32.mrb[0].mxu0
    %4239 = vmatprep.mubr.f32.mxu0 0.0
    %4240 = vmatmul.mubr.f32.gmra.mrb[0].mxu0 %v3966
    %v4241 = vpop.f32.mrb[0].mxu0
    %v4242 = vadd.f32 %v4168, %v4241
    %v4243 = vpop.f32.mrb[0].mxu0
    %4244 = vmatprep.mubr.f32.mxu0 0.0
    %4245 = vmatmul.mubr.f32.gmra.mrb[0].mxu0 %v3969
    %v4246 = vpop.f32.mrb[0].mxu0
    %v4247 = vadd.f32 %v4168, %v4246
    %v4248 = vpop.f32.mrb[0].mxu0
    %4249 = vmatprep.mubr.f32.mxu0 0.0
    %4250 = vmatmul.mubr.f32.gmra.mrb[0].mxu0 %v3972
    %v4251 = vpop.f32.mrb[0].mxu0
    %v4252 = vadd.f32 %v4168, %v4251
    %v4253 = vpop.f32.mrb[0].mxu0
    %4254 = vdwg.mxu0
    %v4256 = vsel %vm705, %v4041, 0
    %v4259 = vsel %vm705, %v4046, 0
    %v4262 = vsel %vm705, %v4139, 0
    %v4265 = vsel %vm705, %v4144, 0
    %4267 = vmatprep.subr.mxu0 0.0
    %4268 = vmatpush1.xpose.msra.mxu0 %v4262
    %4269 = vmatprep.subr.mxu0 0.0
    %4270 = vmatpush1.xpose.msra.mxu0 %v4265
    %4271 = vmatprep.subr.mxu0 0.0
    %4272 = vmatpush1.xpose.msra.mxu0 0.0
    %4273 = vmatprep.subr.mxu0 0.0
    %4274 = vmatpush1.xpose.msra.mxu0 0.0
    %4275 = vmatprep.subr.mxu0 0.0
    %4276 = vmatpush1.xpose.msra.mxu0 0.0
    %4277 = vmatprep.subr.mxu0 0.0
    %4278 = vmatpush1.xpose.msra.mxu0 0.0
    %4279 = vmatprep.subr.mxu0 0.0
    %4280 = vmatpush1.xpose.msra.mxu0 0.0
    %4281 = vmatprep.subr.mxu0 0.0
    %4282 = vmatpush1.xpose.msra.mxu0 0.0
    %4283 = vmatprep.subr.mxu0 0.0
    %4284 = vmatpush1.xpose.msra.mxu0 0.0
    %4285 = vmatprep.subr.mxu0 0.0
    %4286 = vmatpush1.xpose.msra.mxu0 0.0
    %4287 = vmatprep.subr.mxu0 0.0
    %4288 = vmatpush1.xpose.msra.mxu0 0.0
    %4289 = vmatprep.subr.mxu0 0.0
    %4290 = vmatpush1.xpose.msra.mxu0 0.0
    %4291 = vmatprep.subr.mxu0 0.0
    %4292 = vmatpush1.xpose.msra.mxu0 0.0
    %4293 = vmatprep.subr.mxu0 0.0
    %4294 = vmatpush1.xpose.msra.mxu0 0.0
    %4295 = vmatprep.subr.mxu0 0.0
    %4296 = vmatpush1.xpose.msra.mxu0 0.0
    %4297 = vmatprep.subr.mxu0 0.0
    %4298 = vmatpush1.xpose.msra.mxu0 0.0
    %4299 = vmatprep.subr.mxu0 0.0
    %4300 = vmatpush1.xpose.msra.mxu0 0.0
    %4301 = vmatprep.subr.mxu0 0.0
    %4302 = vmatpush1.xpose.msra.mxu0 0.0
    %4303 = vmatprep.subr.mxu0 0.0
    %4304 = vmatpush1.xpose.msra.mxu0 0.0
    %4305 = vmatprep.subr.mxu0 0.0
    %4306 = vmatpush1.xpose.msra.mxu0 0.0
    %4307 = vmatprep.subr.mxu0 0.0
    %4308 = vmatpush1.xpose.msra.mxu0 0.0
    %4309 = vmatprep.subr.mxu0 0.0
    %4310 = vmatpush1.xpose.msra.mxu0 0.0
    %4311 = vmatprep.subr.mxu0 0.0
    %4312 = vmatpush1.xpose.msra.mxu0 0.0
    %4313 = vmatprep.subr.mxu0 0.0
    %4314 = vmatpush1.xpose.msra.mxu0 0.0
    %4315 = vmatprep.subr.mxu0 0.0
    %4316 = vmatpush1.xpose.msra.mxu0 0.0
    %4317 = vmatprep.subr.mxu0 0.0
    %4318 = vmatpush1.xpose.msra.mxu0 0.0
    %4319 = vmatprep.subr.mxu0 0.0
    %4320 = vmatpush1.xpose.msra.mxu0 0.0
    %4321 = vmatprep.subr.mxu0 0.0
    %4322 = vmatpush1.xpose.msra.mxu0 0.0
    %4323 = vmatprep.subr.mxu0 0.0
    %4324 = vmatpush1.xpose.msra.mxu0 0.0
    %4325 = vmatprep.subr.mxu0 0.0
    %4326 = vmatpush1.xpose.msra.mxu0 0.0
    %4327 = vmatprep.subr.mxu0 0.0
    %4328 = vmatpush1.xpose.msra.mxu0 0.0
    %4329 = vmatprep.subr.mxu0 0.0
    %4330 = vmatpush1.xpose.msra.mxu0 0.0
    %4331 = vmatprep.mubr.f32.mxu0 0.0
    %4332 = vmatmul.mubr.f32.gmra.mrb[0].mxu0 %v4256
    %v4333 = vpop.f32.mrb[0].mxu0
    %v4334 = vadd.f32 0.0, %v4333
    %v4335 = vpop.f32.mrb[0].mxu0
    %4336 = vmatprep.mubr.f32.mxu0 0.0
    %4337 = vmatmul.mubr.f32.gmra.mrb[0].mxu0 %v4259
    %v4338 = vpop.f32.mrb[0].mxu0
    %v4339 = vadd.f32 0.0, %v4338
    %v4340 = vpop.f32.mrb[0].mxu0
    %4341 = vdwg.mxu0
    %v4343 = vsel %vm705, %v4051, 0
    %v4346 = vsel %vm705, %v4056, 0
    %v4349 = vsel %vm705, %v4149, 0
    %v4352 = vsel %vm705, %v4154, 0
    %4354 = vmatprep.subr.mxu0 0.0
    %4355 = vmatpush1.xpose.msra.mxu0 %v4349
    %4356 = vmatprep.subr.mxu0 0.0
    %4357 = vmatpush1.xpose.msra.mxu0 %v4352
    %4358 = vmatprep.subr.mxu0 0.0
    %4359 = vmatpush1.xpose.msra.mxu0 0.0
    %4360 = vmatprep.subr.mxu0 0.0
    %4361 = vmatpush1.xpose.msra.mxu0 0.0
    %4362 = vmatprep.subr.mxu0 0.0
    %4363 = vmatpush1.xpose.msra.mxu0 0.0
    %4364 = vmatprep.subr.mxu0 0.0
    %4365 = vmatpush1.xpose.msra.mxu0 0.0
    %4366 = vmatprep.subr.mxu0 0.0
    %4367 = vmatpush1.xpose.msra.mxu0 0.0
    %4368 = vmatprep.subr.mxu0 0.0
    %4369 = vmatpush1.xpose.msra.mxu0 0.0
    %4370 = vmatprep.subr.mxu0 0.0
    %4371 = vmatpush1.xpose.msra.mxu0 0.0
    %4372 = vmatprep.subr.mxu0 0.0
    %4373 = vmatpush1.xpose.msra.mxu0 0.0
    %4374 = vmatprep.subr.mxu0 0.0
    %4375 = vmatpush1.xpose.msra.mxu0 0.0
    %4376 = vmatprep.subr.mxu0 0.0
    %4377 = vmatpush1.xpose.msra.mxu0 0.0
    %4378 = vmatprep.subr.mxu0 0.0
    %4379 = vmatpush1.xpose.msra.mxu0 0.0
    %4380 = vmatprep.subr.mxu0 0.0
    %4381 = vmatpush1.xpose.msra.mxu0 0.0
    %4382 = vmatprep.subr.mxu0 0.0
    %4383 = vmatpush1.xpose.msra.mxu0 0.0
    %4384 = vmatprep.subr.mxu0 0.0
    %4385 = vmatpush1.xpose.msra.mxu0 0.0
    %4386 = vmatprep.subr.mxu0 0.0
    %4387 = vmatpush1.xpose.msra.mxu0 0.0
    %4388 = vmatprep.subr.mxu0 0.0
    %4389 = vmatpush1.xpose.msra.mxu0 0.0
    %4390 = vmatprep.subr.mxu0 0.0
    %4391 = vmatpush1.xpose.msra.mxu0 0.0
    %4392 = vmatprep.subr.mxu0 0.0
    %4393 = vmatpush1.xpose.msra.mxu0 0.0
    %4394 = vmatprep.subr.mxu0 0.0
    %4395 = vmatpush1.xpose.msra.mxu0 0.0
    %4396 = vmatprep.subr.mxu0 0.0
    %4397 = vmatpush1.xpose.msra.mxu0 0.0
    %4398 = vmatprep.subr.mxu0 0.0
    %4399 = vmatpush1.xpose.msra.mxu0 0.0
    %4400 = vmatprep.subr.mxu0 0.0
    %4401 = vmatpush1.xpose.msra.mxu0 0.0
    %4402 = vmatprep.subr.mxu0 0.0
    %4403 = vmatpush1.xpose.msra.mxu0 0.0
    %4404 = vmatprep.subr.mxu0 0.0
    %4405 = vmatpush1.xpose.msra.mxu0 0.0
    %4406 = vmatprep.subr.mxu0 0.0
    %4407 = vmatpush1.xpose.msra.mxu0 0.0
    %4408 = vmatprep.subr.mxu0 0.0
    %4409 = vmatpush1.xpose.msra.mxu0 0.0
    %4410 = vmatprep.subr.mxu0 0.0
    %4411 = vmatpush1.xpose.msra.mxu0 0.0
    %4412 = vmatprep.subr.mxu0 0.0
    %4413 = vmatpush1.xpose.msra.mxu0 0.0
    %4414 = vmatprep.subr.mxu0 0.0
    %4415 = vmatpush1.xpose.msra.mxu0 0.0
    %4416 = vmatprep.subr.mxu0 0.0
    %4417 = vmatpush1.xpose.msra.mxu0 0.0
    %4418 = vmatprep.mubr.f32.mxu0 0.0
    %4419 = vmatmul.mubr.f32.gmra.mrb[0].mxu0 %v4343
    %v4420 = vpop.f32.mrb[0].mxu0
    %v4421 = vadd.f32 0.0, %v4420
    %v4422 = vpop.f32.mrb[0].mxu0
    %4423 = vmatprep.mubr.f32.mxu0 0.0
    %4424 = vmatmul.mubr.f32.gmra.mrb[0].mxu0 %v4346
    %v4425 = vpop.f32.mrb[0].mxu0
    %v4426 = vadd.f32 0.0, %v4425
    %v4427 = vpop.f32.mrb[0].mxu0
    %4428 = vdwg.mxu0
    %v4429 = vmul.f32 %v4334, 0.35355338
    %v4430 = vmul.f32 %v4339, 0.35355338
    %v4431 = vmul.f32 %v4421, 0.35355338
    %v4432 = vmul.f32 %v4426, 0.35355338
    %v4433 = vsel %vm884, %v4429, -inf
    %4434 = vmax.xlane.f32.xlu0 %v4433
    %v4435 = vpop.xlane.xlu0 %4434
    %v4436 = vsel %vm884, %v4430, -inf
    %4437 = vmax.xlane.f32.xlu0 %v4436
    %v4438 = vpop.xlane.xlu0 %4437
    %v4439 = vsel %vm884, %v4431, -inf
    %4440 = vmax.xlane.f32.xlu0 %v4439
    %v4441 = vpop.xlane.xlu0 %4440
    %v4442 = vsel %vm884, %v4432, -inf
    %4443 = vmax.xlane.f32.xlu0 %v4442
    %v4444 = vpop.xlane.xlu0 %4443
    %v4445 = vsub.f32 %v4429, %v4435
    %v4446 = vsub.f32 %v4430, %v4438
    %v4447 = vsub.f32 %v4431, %v4441
    %v4448 = vsub.f32 %v4432, %v4444
    %v4449 = vmul.f32 %v4445, 1.442695
    %v4450 = vpow.pop %v4449
    %v4451 = vmul.f32 %v4446, 1.442695
    %v4452 = vpow.pop %v4451
    %v4453 = vmul.f32 %v4447, 1.442695
    %v4454 = vpow.pop %v4453
    %v4455 = vmul.f32 %v4448, 1.442695
    %v4456 = vpow.pop %v4455
    %v4457 = vsel %vm884, %v4450, 0.0
    %4458 = vadd.xlane.f32.xlu0 %v4457
    %v4459 = vpop.xlane.xlu0 %4458
    %v4460 = vsel %vm884, %v4452, 0.0
    %4461 = vadd.xlane.f32.xlu0 %v4460
    %v4462 = vpop.xlane.xlu0 %4461
    %v4463 = vsel %vm884, %v4454, 0.0
    %4464 = vadd.xlane.f32.xlu0 %v4463
    %v4465 = vpop.xlane.xlu0 %4464
    %v4466 = vsel %vm884, %v4456, 0.0
    %4467 = vadd.xlane.f32.xlu0 %v4466
    %v4468 = vpop.xlane.xlu0 %4467
    %v4469 = vrcp.pop %v4459
    %v4470 = vrcp.pop %v4462
    %v4471 = vrcp.pop %v4465
    %v4472 = vrcp.pop %v4468
    %v4473 = vmul.f32 %v4450, %v4469
    %v4474 = vmul.f32 %v4452, %v4470
    %v4475 = vmul.f32 %v4454, %v4471
    %v4476 = vmul.f32 %v4456, %v4472
    %v4478 = vsel %vm884, %v4473, 0
    %v4481 = vsel %vm884, %v4474, 0
    %4483 = vmatprep.subr.mxu0 0.0
    %4484 = vmatpush1.msra.mxu0 %v4237
    %4485 = vmatprep.subr.mxu0 0.0
    %4486 = vmatpush1.msra.mxu0 %v4242
    %4487 = vmatprep.subr.mxu0 0.0
    %4488 = vmatpush1.msra.mxu0 0.0
    %4489 = vmatprep.subr.mxu0 0.0
    %4490 = vmatpush1.msra.mxu0 0.0
    %4491 = vmatprep.subr.mxu0 0.0
    %4492 = vmatpush1.msra.mxu0 0.0
    %4493 = vmatprep.subr.mxu0 0.0
    %4494 = vmatpush1.msra.mxu0 0.0
    %4495 = vmatprep.subr.mxu0 0.0
    %4496 = vmatpush1.msra.mxu0 0.0
    %4497 = vmatprep.subr.mxu0 0.0
    %4498 = vmatpush1.msra.mxu0 0.0
    %4499 = vmatprep.subr.mxu0 0.0
    %4500 = vmatpush1.msra.mxu0 0.0
    %4501 = vmatprep.subr.mxu0 0.0
    %4502 = vmatpush1.msra.mxu0 0.0
    %4503 = vmatprep.subr.mxu0 0.0
    %4504 = vmatpush1.msra.mxu0 0.0
    %4505 = vmatprep.subr.mxu0 0.0
    %4506 = vmatpush1.msra.mxu0 0.0
    %4507 = vmatprep.subr.mxu0 0.0
    %4508 = vmatpush1.msra.mxu0 0.0
    %4509 = vmatprep.subr.mxu0 0.0
    %4510 = vmatpush1.msra.mxu0 0.0
    %4511 = vmatprep.subr.mxu0 0.0
    %4512 = vmatpush1.msra.mxu0 0.0
    %4513 = vmatprep.subr.mxu0 0.0
    %4514 = vmatpush1.msra.mxu0 0.0
    %4515 = vmatprep.subr.mxu0 0.0
    %4516 = vmatpush1.msra.mxu0 0.0
    %4517 = vmatprep.subr.mxu0 0.0
    %4518 = vmatpush1.msra.mxu0 0.0
    %4519 = vmatprep.subr.mxu0 0.0
    %4520 = vmatpush1.msra.mxu0 0.0
    %4521 = vmatprep.subr.mxu0 0.0
    %4522 = vmatpush1.msra.mxu0 0.0
    %4523 = vmatprep.subr.mxu0 0.0
    %4524 = vmatpush1.msra.mxu0 0.0
    %4525 = vmatprep.subr.mxu0 0.0
    %4526 = vmatpush1.msra.mxu0 0.0
    %4527 = vmatprep.subr.mxu0 0.0
    %4528 = vmatpush1.msra.mxu0 0.0
    %4529 = vmatprep.subr.mxu0 0.0
    %4530 = vmatpush1.msra.mxu0 0.0
    %4531 = vmatprep.subr.mxu0 0.0
    %4532 = vmatpush1.msra.mxu0 0.0
    %4533 = vmatprep.subr.mxu0 0.0
    %4534 = vmatpush1.msra.mxu0 0.0
    %4535 = vmatprep.subr.mxu0 0.0
    %4536 = vmatpush1.msra.mxu0 0.0
    %4537 = vmatprep.subr.mxu0 0.0
    %4538 = vmatpush1.msra.mxu0 0.0
    %4539 = vmatprep.subr.mxu0 0.0
    %4540 = vmatpush1.msra.mxu0 0.0
    %4541 = vmatprep.subr.mxu0 0.0
    %4542 = vmatpush1.msra.mxu0 0.0
    %4543 = vmatprep.subr.mxu0 0.0
    %4544 = vmatpush1.msra.mxu0 0.0
    %4545 = vmatprep.subr.mxu0 0.0
    %4546 = vmatpush1.msra.mxu0 0.0
    %4547 = vmatprep.mubr.f32.mxu0 0.0
    %4548 = vmatmul.mubr.f32.gmra.mrb[0].mxu0 %v4478
    %v4549 = vpop.f32.mrb[0].mxu0
    %v4550 = vadd.f32 0.0, %v4549
    %v4551 = vpop.f32.mrb[0].mxu0
    %4552 = vmatprep.mubr.f32.mxu0 0.0
    %4553 = vmatmul.mubr.f32.gmra.mrb[0].mxu0 %v4481
    %v4554 = vpop.f32.mrb[0].mxu0
    %v4555 = vadd.f32 0.0, %v4554
    %v4556 = vpop.f32.mrb[0].mxu0
    %4557 = vdwg.mxu0
    %v4559 = vsel %vm884, %v4475, 0
    %v4562 = vsel %vm884, %v4476, 0
    %4564 = vmatprep.subr.mxu0 0.0
    %4565 = vmatpush1.msra.mxu0 %v4247
    %4566 = vmatprep.subr.mxu0 0.0
    %4567 = vmatpush1.msra.mxu0 %v4252
    %4568 = vmatprep.subr.mxu0 0.0
    %4569 = vmatpush1.msra.mxu0 0.0
    %4570 = vmatprep.subr.mxu0 0.0
    %4571 = vmatpush1.msra.mxu0 0.0
    %4572 = vmatprep.subr.mxu0 0.0
    %4573 = vmatpush1.msra.mxu0 0.0
    %4574 = vmatprep.subr.mxu0 0.0
    %4575 = vmatpush1.msra.mxu0 0.0
    %4576 = vmatprep.subr.mxu0 0.0
    %4577 = vmatpush1.msra.mxu0 0.0
    %4578 = vmatprep.subr.mxu0 0.0
    %4579 = vmatpush1.msra.mxu0 0.0
    %4580 = vmatprep.subr.mxu0 0.0
    %4581 = vmatpush1.msra.mxu0 0.0
    %4582 = vmatprep.subr.mxu0 0.0
    %4583 = vmatpush1.msra.mxu0 0.0
    %4584 = vmatprep.subr.mxu0 0.0
    %4585 = vmatpush1.msra.mxu0 0.0
    %4586 = vmatprep.subr.mxu0 0.0
    %4587 = vmatpush1.msra.mxu0 0.0
    %4588 = vmatprep.subr.mxu0 0.0
    %4589 = vmatpush1.msra.mxu0 0.0
    %4590 = vmatprep.subr.mxu0 0.0
    %4591 = vmatpush1.msra.mxu0 0.0
    %4592 = vmatprep.subr.mxu0 0.0
    %4593 = vmatpush1.msra.mxu0 0.0
    %4594 = vmatprep.subr.mxu0 0.0
    %4595 = vmatpush1.msra.mxu0 0.0
    %4596 = vmatprep.subr.mxu0 0.0
    %4597 = vmatpush1.msra.mxu0 0.0
    %4598 = vmatprep.subr.mxu0 0.0
    %4599 = vmatpush1.msra.mxu0 0.0
    %4600 = vmatprep.subr.mxu0 0.0
    %4601 = vmatpush1.msra.mxu0 0.0
    %4602 = vmatprep.subr.mxu0 0.0
    %4603 = vmatpush1.msra.mxu0 0.0
    %4604 = vmatprep.subr.mxu0 0.0
    %4605 = vmatpush1.msra.mxu0 0.0
    %4606 = vmatprep.subr.mxu0 0.0
    %4607 = vmatpush1.msra.mxu0 0.0
    %4608 = vmatprep.subr.mxu0 0.0
    %4609 = vmatpush1.msra.mxu0 0.0
    %4610 = vmatprep.subr.mxu0 0.0
    %4611 = vmatpush1.msra.mxu0 0.0
    %4612 = vmatprep.subr.mxu0 0.0
    %4613 = vmatpush1.msra.mxu0 0.0
    %4614 = vmatprep.subr.mxu0 0.0
    %4615 = vmatpush1.msra.mxu0 0.0
    %4616 = vmatprep.subr.mxu0 0.0
    %4617 = vmatpush1.msra.mxu0 0.0
    %4618 = vmatprep.subr.mxu0 0.0
    %4619 = vmatpush1.msra.mxu0 0.0
    %4620 = vmatprep.subr.mxu0 0.0
    %4621 = vmatpush1.msra.mxu0 0.0
    %4622 = vmatprep.subr.mxu0 0.0
    %4623 = vmatpush1.msra.mxu0 0.0
    %4624 = vmatprep.subr.mxu0 0.0
    %4625 = vmatpush1.msra.mxu0 0.0
    %4626 = vmatprep.subr.mxu0 0.0
    %4627 = vmatpush1.msra.mxu0 0.0
    %4628 = vmatprep.mubr.f32.mxu0 0.0
    %4629 = vmatmul.mubr.f32.gmra.mrb[0].mxu0 %v4559
    %v4630 = vpop.f32.mrb[0].mxu0
    %v4631 = vadd.f32 0.0, %v4630
    %v4632 = vpop.f32.mrb[0].mxu0
    %4633 = vmatprep.mubr.f32.mxu0 0.0
    %4634 = vmatmul.mubr.f32.gmra.mrb[0].mxu0 %v4562
    %v4635 = vpop.f32.mrb[0].mxu0
    %v4636 = vadd.f32 0.0, %v4635
    %v4637 = vpop.f32.mrb[0].mxu0
    %4638 = vdwg.mxu0
    %s4639 = scalar_lea.vmem %s12, 32
    %v4640 = vld [vmem:[%s4639] sm:$0xff]
    %s4641 = scalar_lea.vmem %s6, 160
    %v4642 = vld [vmem:[%s4641] sm:$0xff]
    %v4643 = vld [vmem:[%s4641 + $0x8] sm:$0xff]
    %v4644 = vld [vmem:[%s4641 + $0x10] sm:$0xff]
    %v4645 = vld [vmem:[%s4641 + $0x18] sm:$0xff]
    %s4646 = scalar_lea.vmem %s7, 5
    %v4647 = vld [vmem:[%s4646] sm:$0x1]
    %v4649 = vlaneseq
    %v4650 = vshrl.u32 %v4649, 7
    %v4651 = vsub.s32 0, %v4650
    %v4652 = vrot.slane %v4647, %v4651
    %4654 = vmatprep.subr.mxu0 0.0
    %4655 = vmatpush1.msra.mxu0 %v4642
    %4656 = vmatprep.subr.mxu0 0.0
    %4657 = vmatpush1.msra.mxu0 %v4643
    %4658 = vmatprep.subr.mxu0 0.0
    %4659 = vmatpush1.msra.mxu0 %v4644
    %4660 = vmatprep.subr.mxu0 0.0
    %4661 = vmatpush1.msra.mxu0 %v4645
    %4662 = vmatprep.subr.mxu0 0.0
    %4663 = vmatpush1.msra.mxu0 0.0
    %4664 = vmatprep.subr.mxu0 0.0
    %4665 = vmatpush1.msra.mxu0 0.0
    %4666 = vmatprep.subr.mxu0 0.0
    %4667 = vmatpush1.msra.mxu0 0.0
    %4668 = vmatprep.subr.mxu0 0.0
    %4669 = vmatpush1.msra.mxu0 0.0
    %4670 = vmatprep.subr.mxu0 0.0
    %4671 = vmatpush1.msra.mxu0 0.0
    %4672 = vmatprep.subr.mxu0 0.0
    %4673 = vmatpush1.msra.mxu0 0.0
    %4674 = vmatprep.subr.mxu0 0.0
    %4675 = vmatpush1.msra.mxu0 0.0
    %4676 = vmatprep.subr.mxu0 0.0
    %4677 = vmatpush1.msra.mxu0 0.0
    %4678 = vmatprep.subr.mxu0 0.0
    %4679 = vmatpush1.msra.mxu0 0.0
    %4680 = vmatprep.subr.mxu0 0.0
    %4681 = vmatpush1.msra.mxu0 0.0
    %4682 = vmatprep.subr.mxu0 0.0
    %4683 = vmatpush1.msra.mxu0 0.0
    %4684 = vmatprep.subr.mxu0 0.0
    %4685 = vmatpush1.msra.mxu0 0.0
    %4686 = vmatprep.subr.mxu0 0.0
    %4687 = vmatpush1.msra.mxu0 0.0
    %4688 = vmatprep.subr.mxu0 0.0
    %4689 = vmatpush1.msra.mxu0 0.0
    %4690 = vmatprep.subr.mxu0 0.0
    %4691 = vmatpush1.msra.mxu0 0.0
    %4692 = vmatprep.subr.mxu0 0.0
    %4693 = vmatpush1.msra.mxu0 0.0
    %4694 = vmatprep.subr.mxu0 0.0
    %4695 = vmatpush1.msra.mxu0 0.0
    %4696 = vmatprep.subr.mxu0 0.0
    %4697 = vmatpush1.msra.mxu0 0.0
    %4698 = vmatprep.subr.mxu0 0.0
    %4699 = vmatpush1.msra.mxu0 0.0
    %4700 = vmatprep.subr.mxu0 0.0
    %4701 = vmatpush1.msra.mxu0 0.0
    %4702 = vmatprep.subr.mxu0 0.0
    %4703 = vmatpush1.msra.mxu0 0.0
    %4704 = vmatprep.subr.mxu0 0.0
    %4705 = vmatpush1.msra.mxu0 0.0
    %4706 = vmatprep.subr.mxu0 0.0
    %4707 = vmatpush1.msra.mxu0 0.0
    %4708 = vmatprep.subr.mxu0 0.0
    %4709 = vmatpush1.msra.mxu0 0.0
    %4710 = vmatprep.subr.mxu0 0.0
    %4711 = vmatpush1.msra.mxu0 0.0
    %4712 = vmatprep.subr.mxu0 0.0
    %4713 = vmatpush1.msra.mxu0 0.0
    %4714 = vmatprep.subr.mxu0 0.0
    %4715 = vmatpush1.msra.mxu0 0.0
    %4716 = vmatprep.subr.mxu0 0.0
    %4717 = vmatpush1.msra.mxu0 0.0
    %4718 = vmatprep.mubr.f32.mxu0 0.0
    %4719 = vmatmul.mubr.f32.gmra.mrb[0].mxu0 %v3963
    %v4720 = vpop.f32.mrb[0].mxu0
    %v4721 = vadd.f32 %v4652, %v4720
    %v4722 = vpop.f32.mrb[0].mxu0
    %4723 = vmatprep.mubr.f32.mxu0 0.0
    %4724 = vmatmul.mubr.f32.gmra.mrb[0].mxu0 %v3966
    %v4725 = vpop.f32.mrb[0].mxu0
    %v4726 = vadd.f32 %v4652, %v4725
    %v4727 = vpop.f32.mrb[0].mxu0
    %4728 = vmatprep.mubr.f32.mxu0 0.0
    %4729 = vmatmul.mubr.f32.gmra.mrb[0].mxu0 %v3969
    %v4730 = vpop.f32.mrb[0].mxu0
    %v4731 = vadd.f32 %v4652, %v4730
    %v4732 = vpop.f32.mrb[0].mxu0
    %4733 = vmatprep.mubr.f32.mxu0 0.0
    %4734 = vmatmul.mubr.f32.gmra.mrb[0].mxu0 %v3972
    %v4735 = vpop.f32.mrb[0].mxu0
    %v4736 = vadd.f32 %v4652, %v4735
    %v4737 = vpop.f32.mrb[0].mxu0
    %4738 = vdwg.mxu0
    %s4739 = scalar_lea.vmem %s8, 160
    %v4740 = vld [vmem:[%s4739] sm:$0xff]
    %v4741 = vld [vmem:[%s4739 + $0x8] sm:$0xff]
    %v4742 = vld [vmem:[%s4739 + $0x10] sm:$0xff]
    %v4743 = vld [vmem:[%s4739 + $0x18] sm:$0xff]
    %s4744 = scalar_lea.vmem %s9, 5
    %v4745 = vld [vmem:[%s4744] sm:$0x1]
    %v4747 = vlaneseq
    %v4748 = vshrl.u32 %v4747, 7
    %v4749 = vsub.s32 0, %v4748
    %v4750 = vrot.slane %v4745, %v4749
    %4752 = vmatprep.subr.mxu0 0.0
    %4753 = vmatpush1.msra.mxu0 %v4740
    %4754 = vmatprep.subr.mxu0 0.0
    %4755 = vmatpush1.msra.mxu0 %v4741
    %4756 = vmatprep.subr.mxu0 0.0
    %4757 = vmatpush1.msra.mxu0 %v4742
    %4758 = vmatprep.subr.mxu0 0.0
    %4759 = vmatpush1.msra.mxu0 %v4743
    %4760 = vmatprep.subr.mxu0 0.0
    %4761 = vmatpush1.msra.mxu0 0.0
    %4762 = vmatprep.subr.mxu0 0.0
    %4763 = vmatpush1.msra.mxu0 0.0
    %4764 = vmatprep.subr.mxu0 0.0
    %4765 = vmatpush1.msra.mxu0 0.0
    %4766 = vmatprep.subr.mxu0 0.0
    %4767 = vmatpush1.msra.mxu0 0.0
    %4768 = vmatprep.subr.mxu0 0.0
    %4769 = vmatpush1.msra.mxu0 0.0
    %4770 = vmatprep.subr.mxu0 0.0
    %4771 = vmatpush1.msra.mxu0 0.0
    %4772 = vmatprep.subr.mxu0 0.0
    %4773 = vmatpush1.msra.mxu0 0.0
    %4774 = vmatprep.subr.mxu0 0.0
    %4775 = vmatpush1.msra.mxu0 0.0
    %4776 = vmatprep.subr.mxu0 0.0
    %4777 = vmatpush1.msra.mxu0 0.0
    %4778 = vmatprep.subr.mxu0 0.0
    %4779 = vmatpush1.msra.mxu0 0.0
    %4780 = vmatprep.subr.mxu0 0.0
    %4781 = vmatpush1.msra.mxu0 0.0
    %4782 = vmatprep.subr.mxu0 0.0
    %4783 = vmatpush1.msra.mxu0 0.0
    %4784 = vmatprep.subr.mxu0 0.0
    %4785 = vmatpush1.msra.mxu0 0.0
    %4786 = vmatprep.subr.mxu0 0.0
    %4787 = vmatpush1.msra.mxu0 0.0
    %4788 = vmatprep.subr.mxu0 0.0
    %4789 = vmatpush1.msra.mxu0 0.0
    %4790 = vmatprep.subr.mxu0 0.0
    %4791 = vmatpush1.msra.mxu0 0.0
    %4792 = vmatprep.subr.mxu0 0.0
    %4793 = vmatpush1.msra.mxu0 0.0
    %4794 = vmatprep.subr.mxu0 0.0
    %4795 = vmatpush1.msra.mxu0 0.0
    %4796 = vmatprep.subr.mxu0 0.0
    %4797 = vmatpush1.msra.mxu0 0.0
    %4798 = vmatprep.subr.mxu0 0.0
    %4799 = vmatpush1.msra.mxu0 0.0
    %4800 = vmatprep.subr.mxu0 0.0
    %4801 = vmatpush1.msra.mxu0 0.0
    %4802 = vmatprep.subr.mxu0 0.0
    %4803 = vmatpush1.msra.mxu0 0.0
    %4804 = vmatprep.subr.mxu0 0.0
    %4805 = vmatpush1.msra.mxu0 0.0
    %4806 = vmatprep.subr.mxu0 0.0
    %4807 = vmatpush1.msra.mxu0 0.0
    %4808 = vmatprep.subr.mxu0 0.0
    %4809 = vmatpush1.msra.mxu0 0.0
    %4810 = vmatprep.subr.mxu0 0.0
    %4811 = vmatpush1.msra.mxu0 0.0
    %4812 = vmatprep.subr.mxu0 0.0
    %4813 = vmatpush1.msra.mxu0 0.0
    %4814 = vmatprep.subr.mxu0 0.0
    %4815 = vmatpush1.msra.mxu0 0.0
    %4816 = vmatprep.mubr.f32.mxu0 0.0
    %4817 = vmatmul.mubr.f32.gmra.mrb[0].mxu0 %v3963
    %v4818 = vpop.f32.mrb[0].mxu0
    %v4819 = vadd.f32 %v4750, %v4818
    %v4820 = vpop.f32.mrb[0].mxu0
    %4821 = vmatprep.mubr.f32.mxu0 0.0
    %4822 = vmatmul.mubr.f32.gmra.mrb[0].mxu0 %v3966
    %v4823 = vpop.f32.mrb[0].mxu0
    %v4824 = vadd.f32 %v4750, %v4823
    %v4825 = vpop.f32.mrb[0].mxu0
    %4826 = vmatprep.mubr.f32.mxu0 0.0
    %4827 = vmatmul.mubr.f32.gmra.mrb[0].mxu0 %v3969
    %v4828 = vpop.f32.mrb[0].mxu0
    %v4829 = vadd.f32 %v4750, %v4828
    %v4830 = vpop.f32.mrb[0].mxu0
    %4831 = vmatprep.mubr.f32.mxu0 0.0
    %4832 = vmatmul.mubr.f32.gmra.mrb[0].mxu0 %v3972
    %v4833 = vpop.f32.mrb[0].mxu0
    %v4834 = vadd.f32 %v4750, %v4833
    %v4835 = vpop.f32.mrb[0].mxu0
    %4836 = vdwg.mxu0
    %s4837 = scalar_lea.vmem %s10, 160
    %v4838 = vld [vmem:[%s4837] sm:$0xff]
    %v4839 = vld [vmem:[%s4837 + $0x8] sm:$0xff]
    %v4840 = vld [vmem:[%s4837 + $0x10] sm:$0xff]
    %v4841 = vld [vmem:[%s4837 + $0x18] sm:$0xff]
    %s4842 = scalar_lea.vmem %s11, 5
    %v4843 = vld [vmem:[%s4842] sm:$0x1]
    %v4845 = vlaneseq
    %v4846 = vshrl.u32 %v4845, 7
    %v4847 = vsub.s32 0, %v4846
    %v4848 = vrot.slane %v4843, %v4847
    %4850 = vmatprep.subr.mxu0 0.0
    %4851 = vmatpush1.msra.mxu0 %v4838
    %4852 = vmatprep.subr.mxu0 0.0
    %4853 = vmatpush1.msra.mxu0 %v4839
    %4854 = vmatprep.subr.mxu0 0.0
    %4855 = vmatpush1.msra.mxu0 %v4840
    %4856 = vmatprep.subr.mxu0 0.0
    %4857 = vmatpush1.msra.mxu0 %v4841
    %4858 = vmatprep.subr.mxu0 0.0
    %4859 = vmatpush1.msra.mxu0 0.0
    %4860 = vmatprep.subr.mxu0 0.0
    %4861 = vmatpush1.msra.mxu0 0.0
    %4862 = vmatprep.subr.mxu0 0.0
    %4863 = vmatpush1.msra.mxu0 0.0
    %4864 = vmatprep.subr.mxu0 0.0
    %4865 = vmatpush1.msra.mxu0 0.0
    %4866 = vmatprep.subr.mxu0 0.0
    %4867 = vmatpush1.msra.mxu0 0.0
    %4868 = vmatprep.subr.mxu0 0.0
    %4869 = vmatpush1.msra.mxu0 0.0
    %4870 = vmatprep.subr.mxu0 0.0
    %4871 = vmatpush1.msra.mxu0 0.0
    %4872 = vmatprep.subr.mxu0 0.0
    %4873 = vmatpush1.msra.mxu0 0.0
    %4874 = vmatprep.subr.mxu0 0.0
    %4875 = vmatpush1.msra.mxu0 0.0
    %4876 = vmatprep.subr.mxu0 0.0
    %4877 = vmatpush1.msra.mxu0 0.0
    %4878 = vmatprep.subr.mxu0 0.0
    %4879 = vmatpush1.msra.mxu0 0.0
    %4880 = vmatprep.subr.mxu0 0.0
    %4881 = vmatpush1.msra.mxu0 0.0
    %4882 = vmatprep.subr.mxu0 0.0
    %4883 = vmatpush1.msra.mxu0 0.0
    %4884 = vmatprep.subr.mxu0 0.0
    %4885 = vmatpush1.msra.mxu0 0.0
    %4886 = vmatprep.subr.mxu0 0.0
    %4887 = vmatpush1.msra.mxu0 0.0
    %4888 = vmatprep.subr.mxu0 0.0
    %4889 = vmatpush1.msra.mxu0 0.0
    %4890 = vmatprep.subr.mxu0 0.0
    %4891 = vmatpush1.msra.mxu0 0.0
    %4892 = vmatprep.subr.mxu0 0.0
    %4893 = vmatpush1.msra.mxu0 0.0
    %4894 = vmatprep.subr.mxu0 0.0
    %4895 = vmatpush1.msra.mxu0 0.0
    %4896 = vmatprep.subr.mxu0 0.0
    %4897 = vmatpush1.msra.mxu0 0.0
    %4898 = vmatprep.subr.mxu0 0.0
    %4899 = vmatpush1.msra.mxu0 0.0
    %4900 = vmatprep.subr.mxu0 0.0
    %4901 = vmatpush1.msra.mxu0 0.0
    %4902 = vmatprep.subr.mxu0 0.0
    %4903 = vmatpush1.msra.mxu0 0.0
    %4904 = vmatprep.subr.mxu0 0.0
    %4905 = vmatpush1.msra.mxu0 0.0
    %4906 = vmatprep.subr.mxu0 0.0
    %4907 = vmatpush1.msra.mxu0 0.0
    %4908 = vmatprep.subr.mxu0 0.0
    %4909 = vmatpush1.msra.mxu0 0.0
    %4910 = vmatprep.subr.mxu0 0.0
    %4911 = vmatpush1.msra.mxu0 0.0
    %4912 = vmatprep.subr.mxu0 0.0
    %4913 = vmatpush1.msra.mxu0 0.0
    %4914 = vmatprep.mubr.f32.mxu0 0.0
    %4915 = vmatmul.mubr.f32.gmra.mrb[0].mxu0 %v3963
    %v4916 = vpop.f32.mrb[0].mxu0
    %v4917 = vadd.f32 %v4848, %v4916
    %v4918 = vpop.f32.mrb[0].mxu0
    %4919 = vmatprep.mubr.f32.mxu0 0.0
    %4920 = vmatmul.mubr.f32.gmra.mrb[0].mxu0 %v3966
    %v4921 = vpop.f32.mrb[0].mxu0
    %v4922 = vadd.f32 %v4848, %v4921
    %v4923 = vpop.f32.mrb[0].mxu0
    %4924 = vmatprep.mubr.f32.mxu0 0.0
    %4925 = vmatmul.mubr.f32.gmra.mrb[0].mxu0 %v3969
    %v4926 = vpop.f32.mrb[0].mxu0
    %v4927 = vadd.f32 %v4848, %v4926
    %v4928 = vpop.f32.mrb[0].mxu0
    %4929 = vmatprep.mubr.f32.mxu0 0.0
    %4930 = vmatmul.mubr.f32.gmra.mrb[0].mxu0 %v3972
    %v4931 = vpop.f32.mrb[0].mxu0
    %v4932 = vadd.f32 %v4848, %v4931
    %v4933 = vpop.f32.mrb[0].mxu0
    %4934 = vdwg.mxu0
    %v4936 = vsel %vm705, %v4721, 0
    %v4939 = vsel %vm705, %v4726, 0
    %v4942 = vsel %vm705, %v4819, 0
    %v4945 = vsel %vm705, %v4824, 0
    %4947 = vmatprep.subr.mxu0 0.0
    %4948 = vmatpush1.xpose.msra.mxu0 %v4942
    %4949 = vmatprep.subr.mxu0 0.0
    %4950 = vmatpush1.xpose.msra.mxu0 %v4945
    %4951 = vmatprep.subr.mxu0 0.0
    %4952 = vmatpush1.xpose.msra.mxu0 0.0
    %4953 = vmatprep.subr.mxu0 0.0
    %4954 = vmatpush1.xpose.msra.mxu0 0.0
    %4955 = vmatprep.subr.mxu0 0.0
    %4956 = vmatpush1.xpose.msra.mxu0 0.0
    %4957 = vmatprep.subr.mxu0 0.0
    %4958 = vmatpush1.xpose.msra.mxu0 0.0
    %4959 = vmatprep.subr.mxu0 0.0
    %4960 = vmatpush1.xpose.msra.mxu0 0.0
    %4961 = vmatprep.subr.mxu0 0.0
    %4962 = vmatpush1.xpose.msra.mxu0 0.0
    %4963 = vmatprep.subr.mxu0 0.0
    %4964 = vmatpush1.xpose.msra.mxu0 0.0
    %4965 = vmatprep.subr.mxu0 0.0
    %4966 = vmatpush1.xpose.msra.mxu0 0.0
    %4967 = vmatprep.subr.mxu0 0.0
    %4968 = vmatpush1.xpose.msra.mxu0 0.0
    %4969 = vmatprep.subr.mxu0 0.0
    %4970 = vmatpush1.xpose.msra.mxu0 0.0
    %4971 = vmatprep.subr.mxu0 0.0
    %4972 = vmatpush1.xpose.msra.mxu0 0.0
    %4973 = vmatprep.subr.mxu0 0.0
    %4974 = vmatpush1.xpose.msra.mxu0 0.0
    %4975 = vmatprep.subr.mxu0 0.0
    %4976 = vmatpush1.xpose.msra.mxu0 0.0
    %4977 = vmatprep.subr.mxu0 0.0
    %4978 = vmatpush1.xpose.msra.mxu0 0.0
    %4979 = vmatprep.subr.mxu0 0.0
    %4980 = vmatpush1.xpose.msra.mxu0 0.0
    %4981 = vmatprep.subr.mxu0 0.0
    %4982 = vmatpush1.xpose.msra.mxu0 0.0
    %4983 = vmatprep.subr.mxu0 0.0
    %4984 = vmatpush1.xpose.msra.mxu0 0.0
    %4985 = vmatprep.subr.mxu0 0.0
    %4986 = vmatpush1.xpose.msra.mxu0 0.0
    %4987 = vmatprep.subr.mxu0 0.0
    %4988 = vmatpush1.xpose.msra.mxu0 0.0
    %4989 = vmatprep.subr.mxu0 0.0
    %4990 = vmatpush1.xpose.msra.mxu0 0.0
    %4991 = vmatprep.subr.mxu0 0.0
    %4992 = vmatpush1.xpose.msra.mxu0 0.0
    %4993 = vmatprep.subr.mxu0 0.0
    %4994 = vmatpush1.xpose.msra.mxu0 0.0
    %4995 = vmatprep.subr.mxu0 0.0
    %4996 = vmatpush1.xpose.msra.mxu0 0.0
    %4997 = vmatprep.subr.mxu0 0.0
    %4998 = vmatpush1.xpose.msra.mxu0 0.0
    %4999 = vmatprep.subr.mxu0 0.0
    %5000 = vmatpush1.xpose.msra.mxu0 0.0
    %5001 = vmatprep.subr.mxu0 0.0
    %5002 = vmatpush1.xpose.msra.mxu0 0.0
    %5003 = vmatprep.subr.mxu0 0.0
    %5004 = vmatpush1.xpose.msra.mxu0 0.0
    %5005 = vmatprep.subr.mxu0 0.0
    %5006 = vmatpush1.xpose.msra.mxu0 0.0
    %5007 = vmatprep.subr.mxu0 0.0
    %5008 = vmatpush1.xpose.msra.mxu0 0.0
    %5009 = vmatprep.subr.mxu0 0.0
    %5010 = vmatpush1.xpose.msra.mxu0 0.0
    %5011 = vmatprep.mubr.f32.mxu0 0.0
    %5012 = vmatmul.mubr.f32.gmra.mrb[0].mxu0 %v4936
    %v5013 = vpop.f32.mrb[0].mxu0
    %v5014 = vadd.f32 0.0, %v5013
    %v5015 = vpop.f32.mrb[0].mxu0
    %5016 = vmatprep.mubr.f32.mxu0 0.0
    %5017 = vmatmul.mubr.f32.gmra.mrb[0].mxu0 %v4939
    %v5018 = vpop.f32.mrb[0].mxu0
    %v5019 = vadd.f32 0.0, %v5018
    %v5020 = vpop.f32.mrb[0].mxu0
    %5021 = vdwg.mxu0
    %v5023 = vsel %vm705, %v4731, 0
    %v5026 = vsel %vm705, %v4736, 0
    %v5029 = vsel %vm705, %v4829, 0
    %v5032 = vsel %vm705, %v4834, 0
    %5034 = vmatprep.subr.mxu0 0.0
    %5035 = vmatpush1.xpose.msra.mxu0 %v5029
    %5036 = vmatprep.subr.mxu0 0.0
    %5037 = vmatpush1.xpose.msra.mxu0 %v5032
    %5038 = vmatprep.subr.mxu0 0.0
    %5039 = vmatpush1.xpose.msra.mxu0 0.0
    %5040 = vmatprep.subr.mxu0 0.0
    %5041 = vmatpush1.xpose.msra.mxu0 0.0
    %5042 = vmatprep.subr.mxu0 0.0
    %5043 = vmatpush1.xpose.msra.mxu0 0.0
    %5044 = vmatprep.subr.mxu0 0.0
    %5045 = vmatpush1.xpose.msra.mxu0 0.0
    %5046 = vmatprep.subr.mxu0 0.0
    %5047 = vmatpush1.xpose.msra.mxu0 0.0
    %5048 = vmatprep.subr.mxu0 0.0
    %5049 = vmatpush1.xpose.msra.mxu0 0.0
    %5050 = vmatprep.subr.mxu0 0.0
    %5051 = vmatpush1.xpose.msra.mxu0 0.0
    %5052 = vmatprep.subr.mxu0 0.0
    %5053 = vmatpush1.xpose.msra.mxu0 0.0
    %5054 = vmatprep.subr.mxu0 0.0
    %5055 = vmatpush1.xpose.msra.mxu0 0.0
    %5056 = vmatprep.subr.mxu0 0.0
    %5057 = vmatpush1.xpose.msra.mxu0 0.0
    %5058 = vmatprep.subr.mxu0 0.0
    %5059 = vmatpush1.xpose.msra.mxu0 0.0
    %5060 = vmatprep.subr.mxu0 0.0
    %5061 = vmatpush1.xpose.msra.mxu0 0.0
    %5062 = vmatprep.subr.mxu0 0.0
    %5063 = vmatpush1.xpose.msra.mxu0 0.0
    %5064 = vmatprep.subr.mxu0 0.0
    %5065 = vmatpush1.xpose.msra.mxu0 0.0
    %5066 = vmatprep.subr.mxu0 0.0
    %5067 = vmatpush1.xpose.msra.mxu0 0.0
    %5068 = vmatprep.subr.mxu0 0.0
    %5069 = vmatpush1.xpose.msra.mxu0 0.0
    %5070 = vmatprep.subr.mxu0 0.0
    %5071 = vmatpush1.xpose.msra.mxu0 0.0
    %5072 = vmatprep.subr.mxu0 0.0
    %5073 = vmatpush1.xpose.msra.mxu0 0.0
    %5074 = vmatprep.subr.mxu0 0.0
    %5075 = vmatpush1.xpose.msra.mxu0 0.0
    %5076 = vmatprep.subr.mxu0 0.0
    %5077 = vmatpush1.xpose.msra.mxu0 0.0
    %5078 = vmatprep.subr.mxu0 0.0
    %5079 = vmatpush1.xpose.msra.mxu0 0.0
    %5080 = vmatprep.subr.mxu0 0.0
    %5081 = vmatpush1.xpose.msra.mxu0 0.0
    %5082 = vmatprep.subr.mxu0 0.0
    %5083 = vmatpush1.xpose.msra.mxu0 0.0
    %5084 = vmatprep.subr.mxu0 0.0
    %5085 = vmatpush1.xpose.msra.mxu0 0.0
    %5086 = vmatprep.subr.mxu0 0.0
    %5087 = vmatpush1.xpose.msra.mxu0 0.0
    %5088 = vmatprep.subr.mxu0 0.0
    %5089 = vmatpush1.xpose.msra.mxu0 0.0
    %5090 = vmatprep.subr.mxu0 0.0
    %5091 = vmatpush1.xpose.msra.mxu0 0.0
    %5092 = vmatprep.subr.mxu0 0.0
    %5093 = vmatpush1.xpose.msra.mxu0 0.0
    %5094 = vmatprep.subr.mxu0 0.0
    %5095 = vmatpush1.xpose.msra.mxu0 0.0
    %5096 = vmatprep.subr.mxu0 0.0
    %5097 = vmatpush1.xpose.msra.mxu0 0.0
    %5098 = vmatprep.mubr.f32.mxu0 0.0
    %5099 = vmatmul.mubr.f32.gmra.mrb[0].mxu0 %v5023
    %v5100 = vpop.f32.mrb[0].mxu0
    %v5101 = vadd.f32 0.0, %v5100
    %v5102 = vpop.f32.mrb[0].mxu0
    %5103 = vmatprep.mubr.f32.mxu0 0.0
    %5104 = vmatmul.mubr.f32.gmra.mrb[0].mxu0 %v5026
    %v5105 = vpop.f32.mrb[0].mxu0
    %v5106 = vadd.f32 0.0, %v5105
    %v5107 = vpop.f32.mrb[0].mxu0
    %5108 = vdwg.mxu0
    %v5109 = vmul.f32 %v5014, 0.35355338
    %v5110 = vmul.f32 %v5019, 0.35355338
    %v5111 = vmul.f32 %v5101, 0.35355338
    %v5112 = vmul.f32 %v5106, 0.35355338
    %v5113 = vsel %vm884, %v5109, -inf
    %5114 = vmax.xlane.f32.xlu0 %v5113
    %v5115 = vpop.xlane.xlu0 %5114
    %v5116 = vsel %vm884, %v5110, -inf
    %5117 = vmax.xlane.f32.xlu0 %v5116
    %v5118 = vpop.xlane.xlu0 %5117
    %v5119 = vsel %vm884, %v5111, -inf
    %5120 = vmax.xlane.f32.xlu0 %v5119
    %v5121 = vpop.xlane.xlu0 %5120
    %v5122 = vsel %vm884, %v5112, -inf
    %5123 = vmax.xlane.f32.xlu0 %v5122
    %v5124 = vpop.xlane.xlu0 %5123
    %v5125 = vsub.f32 %v5109, %v5115
    %v5126 = vsub.f32 %v5110, %v5118
    %v5127 = vsub.f32 %v5111, %v5121
    %v5128 = vsub.f32 %v5112, %v5124
    %v5129 = vmul.f32 %v5125, 1.442695
    %v5130 = vpow.pop %v5129
    %v5131 = vmul.f32 %v5126, 1.442695
    %v5132 = vpow.pop %v5131
    %v5133 = vmul.f32 %v5127, 1.442695
    %v5134 = vpow.pop %v5133
    %v5135 = vmul.f32 %v5128, 1.442695
    %v5136 = vpow.pop %v5135
    %v5137 = vsel %vm884, %v5130, 0.0
    %5138 = vadd.xlane.f32.xlu0 %v5137
    %v5139 = vpop.xlane.xlu0 %5138
    %v5140 = vsel %vm884, %v5132, 0.0
    %5141 = vadd.xlane.f32.xlu0 %v5140
    %v5142 = vpop.xlane.xlu0 %5141
    %v5143 = vsel %vm884, %v5134, 0.0
    %5144 = vadd.xlane.f32.xlu0 %v5143
    %v5145 = vpop.xlane.xlu0 %5144
    %v5146 = vsel %vm884, %v5136, 0.0
    %5147 = vadd.xlane.f32.xlu0 %v5146
    %v5148 = vpop.xlane.xlu0 %5147
    %v5149 = vrcp.pop %v5139
    %v5150 = vrcp.pop %v5142
    %v5151 = vrcp.pop %v5145
    %v5152 = vrcp.pop %v5148
    %v5153 = vmul.f32 %v5130, %v5149
    %v5154 = vmul.f32 %v5132, %v5150
    %v5155 = vmul.f32 %v5134, %v5151
    %v5156 = vmul.f32 %v5136, %v5152
    %v5158 = vsel %vm884, %v5153, 0
    %v5161 = vsel %vm884, %v5154, 0
    %5163 = vmatprep.subr.mxu0 0.0
    %5164 = vmatpush1.msra.mxu0 %v4917
    %5165 = vmatprep.subr.mxu0 0.0
    %5166 = vmatpush1.msra.mxu0 %v4922
    %5167 = vmatprep.subr.mxu0 0.0
    %5168 = vmatpush1.msra.mxu0 0.0
    %5169 = vmatprep.subr.mxu0 0.0
    %5170 = vmatpush1.msra.mxu0 0.0
    %5171 = vmatprep.subr.mxu0 0.0
    %5172 = vmatpush1.msra.mxu0 0.0
    %5173 = vmatprep.subr.mxu0 0.0
    %5174 = vmatpush1.msra.mxu0 0.0
    %5175 = vmatprep.subr.mxu0 0.0
    %5176 = vmatpush1.msra.mxu0 0.0
    %5177 = vmatprep.subr.mxu0 0.0
    %5178 = vmatpush1.msra.mxu0 0.0
    %5179 = vmatprep.subr.mxu0 0.0
    %5180 = vmatpush1.msra.mxu0 0.0
    %5181 = vmatprep.subr.mxu0 0.0
    %5182 = vmatpush1.msra.mxu0 0.0
    %5183 = vmatprep.subr.mxu0 0.0
    %5184 = vmatpush1.msra.mxu0 0.0
    %5185 = vmatprep.subr.mxu0 0.0
    %5186 = vmatpush1.msra.mxu0 0.0
    %5187 = vmatprep.subr.mxu0 0.0
    %5188 = vmatpush1.msra.mxu0 0.0
    %5189 = vmatprep.subr.mxu0 0.0
    %5190 = vmatpush1.msra.mxu0 0.0
    %5191 = vmatprep.subr.mxu0 0.0
    %5192 = vmatpush1.msra.mxu0 0.0
    %5193 = vmatprep.subr.mxu0 0.0
    %5194 = vmatpush1.msra.mxu0 0.0
    %5195 = vmatprep.subr.mxu0 0.0
    %5196 = vmatpush1.msra.mxu0 0.0
    %5197 = vmatprep.subr.mxu0 0.0
    %5198 = vmatpush1.msra.mxu0 0.0
    %5199 = vmatprep.subr.mxu0 0.0
    %5200 = vmatpush1.msra.mxu0 0.0
    %5201 = vmatprep.subr.mxu0 0.0
    %5202 = vmatpush1.msra.mxu0 0.0
    %5203 = vmatprep.subr.mxu0 0.0
    %5204 = vmatpush1.msra.mxu0 0.0
    %5205 = vmatprep.subr.mxu0 0.0
    %5206 = vmatpush1.msra.mxu0 0.0
    %5207 = vmatprep.subr.mxu0 0.0
    %5208 = vmatpush1.msra.mxu0 0.0
    %5209 = vmatprep.subr.mxu0 0.0
    %5210 = vmatpush1.msra.mxu0 0.0
    %5211 = vmatprep.subr.mxu0 0.0
    %5212 = vmatpush1.msra.mxu0 0.0
    %5213 = vmatprep.subr.mxu0 0.0
    %5214 = vmatpush1.msra.mxu0 0.0
    %5215 = vmatprep.subr.mxu0 0.0
    %5216 = vmatpush1.msra.mxu0 0.0
    %5217 = vmatprep.subr.mxu0 0.0
    %5218 = vmatpush1.msra.mxu0 0.0
    %5219 = vmatprep.subr.mxu0 0.0
    %5220 = vmatpush1.msra.mxu0 0.0
    %5221 = vmatprep.subr.mxu0 0.0
    %5222 = vmatpush1.msra.mxu0 0.0
    %5223 = vmatprep.subr.mxu0 0.0
    %5224 = vmatpush1.msra.mxu0 0.0
    %5225 = vmatprep.subr.mxu0 0.0
    %5226 = vmatpush1.msra.mxu0 0.0
    %5227 = vmatprep.mubr.f32.mxu0 0.0
    %5228 = vmatmul.mubr.f32.gmra.mrb[0].mxu0 %v5158
    %v5229 = vpop.f32.mrb[0].mxu0
    %v5230 = vadd.f32 0.0, %v5229
    %v5231 = vpop.f32.mrb[0].mxu0
    %5232 = vmatprep.mubr.f32.mxu0 0.0
    %5233 = vmatmul.mubr.f32.gmra.mrb[0].mxu0 %v5161
    %v5234 = vpop.f32.mrb[0].mxu0
    %v5235 = vadd.f32 0.0, %v5234
    %v5236 = vpop.f32.mrb[0].mxu0
    %5237 = vdwg.mxu0
    %v5239 = vsel %vm884, %v5155, 0
    %v5242 = vsel %vm884, %v5156, 0
    %5244 = vmatprep.subr.mxu0 0.0
    %5245 = vmatpush1.msra.mxu0 %v4927
    %5246 = vmatprep.subr.mxu0 0.0
    %5247 = vmatpush1.msra.mxu0 %v4932
    %5248 = vmatprep.subr.mxu0 0.0
    %5249 = vmatpush1.msra.mxu0 0.0
    %5250 = vmatprep.subr.mxu0 0.0
    %5251 = vmatpush1.msra.mxu0 0.0
    %5252 = vmatprep.subr.mxu0 0.0
    %5253 = vmatpush1.msra.mxu0 0.0
    %5254 = vmatprep.subr.mxu0 0.0
    %5255 = vmatpush1.msra.mxu0 0.0
    %5256 = vmatprep.subr.mxu0 0.0
    %5257 = vmatpush1.msra.mxu0 0.0
    %5258 = vmatprep.subr.mxu0 0.0
    %5259 = vmatpush1.msra.mxu0 0.0
    %5260 = vmatprep.subr.mxu0 0.0
    %5261 = vmatpush1.msra.mxu0 0.0
    %5262 = vmatprep.subr.mxu0 0.0
    %5263 = vmatpush1.msra.mxu0 0.0
    %5264 = vmatprep.subr.mxu0 0.0
    %5265 = vmatpush1.msra.mxu0 0.0
    %5266 = vmatprep.subr.mxu0 0.0
    %5267 = vmatpush1.msra.mxu0 0.0
    %5268 = vmatprep.subr.mxu0 0.0
    %5269 = vmatpush1.msra.mxu0 0.0
    %5270 = vmatprep.subr.mxu0 0.0
    %5271 = vmatpush1.msra.mxu0 0.0
    %5272 = vmatprep.subr.mxu0 0.0
    %5273 = vmatpush1.msra.mxu0 0.0
    %5274 = vmatprep.subr.mxu0 0.0
    %5275 = vmatpush1.msra.mxu0 0.0
    %5276 = vmatprep.subr.mxu0 0.0
    %5277 = vmatpush1.msra.mxu0 0.0
    %5278 = vmatprep.subr.mxu0 0.0
    %5279 = vmatpush1.msra.mxu0 0.0
    %5280 = vmatprep.subr.mxu0 0.0
    %5281 = vmatpush1.msra.mxu0 0.0
    %5282 = vmatprep.subr.mxu0 0.0
    %5283 = vmatpush1.msra.mxu0 0.0
    %5284 = vmatprep.subr.mxu0 0.0
    %5285 = vmatpush1.msra.mxu0 0.0
    %5286 = vmatprep.subr.mxu0 0.0
    %5287 = vmatpush1.msra.mxu0 0.0
    %5288 = vmatprep.subr.mxu0 0.0
    %5289 = vmatpush1.msra.mxu0 0.0
    %5290 = vmatprep.subr.mxu0 0.0
    %5291 = vmatpush1.msra.mxu0 0.0
    %5292 = vmatprep.subr.mxu0 0.0
    %5293 = vmatpush1.msra.mxu0 0.0
    %5294 = vmatprep.subr.mxu0 0.0
    %5295 = vmatpush1.msra.mxu0 0.0
    %5296 = vmatprep.subr.mxu0 0.0
    %5297 = vmatpush1.msra.mxu0 0.0
    %5298 = vmatprep.subr.mxu0 0.0
    %5299 = vmatpush1.msra.mxu0 0.0
    %5300 = vmatprep.subr.mxu0 0.0
    %5301 = vmatpush1.msra.mxu0 0.0
    %5302 = vmatprep.subr.mxu0 0.0
    %5303 = vmatpush1.msra.mxu0 0.0
    %5304 = vmatprep.subr.mxu0 0.0
    %5305 = vmatpush1.msra.mxu0 0.0
    %5306 = vmatprep.subr.mxu0 0.0
    %5307 = vmatpush1.msra.mxu0 0.0
    %5308 = vmatprep.mubr.f32.mxu0 0.0
    %5309 = vmatmul.mubr.f32.gmra.mrb[0].mxu0 %v5239
    %v5310 = vpop.f32.mrb[0].mxu0
    %v5311 = vadd.f32 0.0, %v5310
    %v5312 = vpop.f32.mrb[0].mxu0
    %5313 = vmatprep.mubr.f32.mxu0 0.0
    %5314 = vmatmul.mubr.f32.gmra.mrb[0].mxu0 %v5242
    %v5315 = vpop.f32.mrb[0].mxu0
    %v5316 = vadd.f32 0.0, %v5315
    %v5317 = vpop.f32.mrb[0].mxu0
    %5318 = vdwg.mxu0
    %s5319 = scalar_lea.vmem %s12, 40
    %v5320 = vld [vmem:[%s5319] sm:$0xff]
    %v5322 = vsel %vm705, %v5230, 0
    %v5325 = vsel %vm705, %v5235, 0
    %v5328 = vsel %vm705, %v5311, 0
    %v5331 = vsel %vm705, %v5316, 0
    %5333 = vmatprep.subr.mxu0 0.0
    %5334 = vmatpush1.msra.mxu0 %v5320
    %5335 = vmatprep.subr.mxu0 0.0
    %5336 = vmatpush1.msra.mxu0 0.0
    %5337 = vmatprep.subr.mxu0 0.0
    %5338 = vmatpush1.msra.mxu0 0.0
    %5339 = vmatprep.subr.mxu0 0.0
    %5340 = vmatpush1.msra.mxu0 0.0
    %5341 = vmatprep.subr.mxu0 0.0
    %5342 = vmatpush1.msra.mxu0 0.0
    %5343 = vmatprep.subr.mxu0 0.0
    %5344 = vmatpush1.msra.mxu0 0.0
    %5345 = vmatprep.subr.mxu0 0.0
    %5346 = vmatpush1.msra.mxu0 0.0
    %5347 = vmatprep.subr.mxu0 0.0
    %5348 = vmatpush1.msra.mxu0 0.0
    %5349 = vmatprep.subr.mxu0 0.0
    %5350 = vmatpush1.msra.mxu0 0.0
    %5351 = vmatprep.subr.mxu0 0.0
    %5352 = vmatpush1.msra.mxu0 0.0
    %5353 = vmatprep.subr.mxu0 0.0
    %5354 = vmatpush1.msra.mxu0 0.0
    %5355 = vmatprep.subr.mxu0 0.0
    %5356 = vmatpush1.msra.mxu0 0.0
    %5357 = vmatprep.subr.mxu0 0.0
    %5358 = vmatpush1.msra.mxu0 0.0
    %5359 = vmatprep.subr.mxu0 0.0
    %5360 = vmatpush1.msra.mxu0 0.0
    %5361 = vmatprep.subr.mxu0 0.0
    %5362 = vmatpush1.msra.mxu0 0.0
    %5363 = vmatprep.subr.mxu0 0.0
    %5364 = vmatpush1.msra.mxu0 0.0
    %5365 = vmatprep.subr.mxu0 0.0
    %5366 = vmatpush1.msra.mxu0 0.0
    %5367 = vmatprep.subr.mxu0 0.0
    %5368 = vmatpush1.msra.mxu0 0.0
    %5369 = vmatprep.subr.mxu0 0.0
    %5370 = vmatpush1.msra.mxu0 0.0
    %5371 = vmatprep.subr.mxu0 0.0
    %5372 = vmatpush1.msra.mxu0 0.0
    %5373 = vmatprep.subr.mxu0 0.0
    %5374 = vmatpush1.msra.mxu0 0.0
    %5375 = vmatprep.subr.mxu0 0.0
    %5376 = vmatpush1.msra.mxu0 0.0
    %5377 = vmatprep.subr.mxu0 0.0
    %5378 = vmatpush1.msra.mxu0 0.0
    %5379 = vmatprep.subr.mxu0 0.0
    %5380 = vmatpush1.msra.mxu0 0.0
    %5381 = vmatprep.subr.mxu0 0.0
    %5382 = vmatpush1.msra.mxu0 0.0
    %5383 = vmatprep.subr.mxu0 0.0
    %5384 = vmatpush1.msra.mxu0 0.0
    %5385 = vmatprep.subr.mxu0 0.0
    %5386 = vmatpush1.msra.mxu0 0.0
    %5387 = vmatprep.subr.mxu0 0.0
    %5388 = vmatpush1.msra.mxu0 0.0
    %5389 = vmatprep.subr.mxu0 0.0
    %5390 = vmatpush1.msra.mxu0 0.0
    %5391 = vmatprep.subr.mxu0 0.0
    %5392 = vmatpush1.msra.mxu0 0.0
    %5393 = vmatprep.subr.mxu0 0.0
    %5394 = vmatpush1.msra.mxu0 0.0
    %5395 = vmatprep.subr.mxu0 0.0
    %5396 = vmatpush1.msra.mxu0 0.0
    %5397 = vmatprep.mubr.f32.mxu0 0.0
    %5398 = vmatmul.mubr.f32.gmra.mrb[0].mxu0 %v5322
    %v5399 = vpop.f32.mrb[0].mxu0
    %v5400 = vadd.f32 0.0, %v5399
    %v5401 = vpop.f32.mrb[0].mxu0
    %5402 = vmatprep.mubr.f32.mxu0 0.0
    %5403 = vmatmul.mubr.f32.gmra.mrb[0].mxu0 %v5325
    %v5404 = vpop.f32.mrb[0].mxu0
    %v5405 = vadd.f32 0.0, %v5404
    %v5406 = vpop.f32.mrb[0].mxu0
    %5407 = vmatprep.mubr.f32.mxu0 0.0
    %5408 = vmatmul.mubr.f32.gmra.mrb[0].mxu0 %v5328
    %v5409 = vpop.f32.mrb[0].mxu0
    %v5410 = vadd.f32 0.0, %v5409
    %v5411 = vpop.f32.mrb[0].mxu0
    %5412 = vmatprep.mubr.f32.mxu0 0.0
    %5413 = vmatmul.mubr.f32.gmra.mrb[0].mxu0 %v5331
    %v5414 = vpop.f32.mrb[0].mxu0
    %v5415 = vadd.f32 0.0, %v5414
    %v5416 = vpop.f32.mrb[0].mxu0
    %5417 = vdwg.mxu0
    %v5419 = vsel %vm705, %v4550, 0
    %v5422 = vsel %vm705, %v4555, 0
    %v5425 = vsel %vm705, %v4631, 0
    %v5428 = vsel %vm705, %v4636, 0
    %5430 = vmatprep.subr.mxu0 0.0
    %5431 = vmatpush1.msra.mxu0 %v4640
    %5432 = vmatprep.subr.mxu0 0.0
    %5433 = vmatpush1.msra.mxu0 0.0
    %5434 = vmatprep.subr.mxu0 0.0
    %5435 = vmatpush1.msra.mxu0 0.0
    %5436 = vmatprep.subr.mxu0 0.0
    %5437 = vmatpush1.msra.mxu0 0.0
    %5438 = vmatprep.subr.mxu0 0.0
    %5439 = vmatpush1.msra.mxu0 0.0
    %5440 = vmatprep.subr.mxu0 0.0
    %5441 = vmatpush1.msra.mxu0 0.0
    %5442 = vmatprep.subr.mxu0 0.0
    %5443 = vmatpush1.msra.mxu0 0.0
    %5444 = vmatprep.subr.mxu0 0.0
    %5445 = vmatpush1.msra.mxu0 0.0
    %5446 = vmatprep.subr.mxu0 0.0
    %5447 = vmatpush1.msra.mxu0 0.0
    %5448 = vmatprep.subr.mxu0 0.0
    %5449 = vmatpush1.msra.mxu0 0.0
    %5450 = vmatprep.subr.mxu0 0.0
    %5451 = vmatpush1.msra.mxu0 0.0
    %5452 = vmatprep.subr.mxu0 0.0
    %5453 = vmatpush1.msra.mxu0 0.0
    %5454 = vmatprep.subr.mxu0 0.0
    %5455 = vmatpush1.msra.mxu0 0.0
    %5456 = vmatprep.subr.mxu0 0.0
    %5457 = vmatpush1.msra.mxu0 0.0
    %5458 = vmatprep.subr.mxu0 0.0
    %5459 = vmatpush1.msra.mxu0 0.0
    %5460 = vmatprep.subr.mxu0 0.0
    %5461 = vmatpush1.msra.mxu0 0.0
    %5462 = vmatprep.subr.mxu0 0.0
    %5463 = vmatpush1.msra.mxu0 0.0
    %5464 = vmatprep.subr.mxu0 0.0
    %5465 = vmatpush1.msra.mxu0 0.0
    %5466 = vmatprep.subr.mxu0 0.0
    %5467 = vmatpush1.msra.mxu0 0.0
    %5468 = vmatprep.subr.mxu0 0.0
    %5469 = vmatpush1.msra.mxu0 0.0
    %5470 = vmatprep.subr.mxu0 0.0
    %5471 = vmatpush1.msra.mxu0 0.0
    %5472 = vmatprep.subr.mxu0 0.0
    %5473 = vmatpush1.msra.mxu0 0.0
    %5474 = vmatprep.subr.mxu0 0.0
    %5475 = vmatpush1.msra.mxu0 0.0
    %5476 = vmatprep.subr.mxu0 0.0
    %5477 = vmatpush1.msra.mxu0 0.0
    %5478 = vmatprep.subr.mxu0 0.0
    %5479 = vmatpush1.msra.mxu0 0.0
    %5480 = vmatprep.subr.mxu0 0.0
    %5481 = vmatpush1.msra.mxu0 0.0
    %5482 = vmatprep.subr.mxu0 0.0
    %5483 = vmatpush1.msra.mxu0 0.0
    %5484 = vmatprep.subr.mxu0 0.0
    %5485 = vmatpush1.msra.mxu0 0.0
    %5486 = vmatprep.subr.mxu0 0.0
    %5487 = vmatpush1.msra.mxu0 0.0
    %5488 = vmatprep.subr.mxu0 0.0
    %5489 = vmatpush1.msra.mxu0 0.0
    %5490 = vmatprep.subr.mxu0 0.0
    %5491 = vmatpush1.msra.mxu0 0.0
    %5492 = vmatprep.subr.mxu0 0.0
    %5493 = vmatpush1.msra.mxu0 0.0
    %5494 = vmatprep.mubr.f32.mxu0 0.0
    %5495 = vmatmul.mubr.f32.gmra.mrb[0].mxu0 %v5419
    %v5496 = vpop.f32.mrb[0].mxu0
    %v5497 = vadd.f32 %v5400, %v5496
    %v5498 = vpop.f32.mrb[0].mxu0
    %5499 = vmatprep.mubr.f32.mxu0 0.0
    %5500 = vmatmul.mubr.f32.gmra.mrb[0].mxu0 %v5422
    %v5501 = vpop.f32.mrb[0].mxu0
    %v5502 = vadd.f32 %v5405, %v5501
    %v5503 = vpop.f32.mrb[0].mxu0
    %5504 = vmatprep.mubr.f32.mxu0 0.0
    %5505 = vmatmul.mubr.f32.gmra.mrb[0].mxu0 %v5425
    %v5506 = vpop.f32.mrb[0].mxu0
    %v5507 = vadd.f32 %v5410, %v5506
    %v5508 = vpop.f32.mrb[0].mxu0
    %5509 = vmatprep.mubr.f32.mxu0 0.0
    %5510 = vmatmul.mubr.f32.gmra.mrb[0].mxu0 %v5428
    %v5511 = vpop.f32.mrb[0].mxu0
    %v5512 = vadd.f32 %v5415, %v5511
    %v5513 = vpop.f32.mrb[0].mxu0
    %5514 = vdwg.mxu0
    %s5515 = scalar_lea.vmem %s6, 192
    %v5516 = vld [vmem:[%s5515] sm:$0xff]
    %v5517 = vld [vmem:[%s5515 + $0x8] sm:$0xff]
    %v5518 = vld [vmem:[%s5515 + $0x10] sm:$0xff]
    %v5519 = vld [vmem:[%s5515 + $0x18] sm:$0xff]
    %s5520 = scalar_lea.vmem %s7, 6
    %v5521 = vld [vmem:[%s5520] sm:$0x1]
    %v5523 = vlaneseq
    %v5524 = vshrl.u32 %v5523, 7
    %v5525 = vsub.s32 0, %v5524
    %v5526 = vrot.slane %v5521, %v5525
    %5528 = vmatprep.subr.mxu0 0.0
    %5529 = vmatpush1.msra.mxu0 %v5516
    %5530 = vmatprep.subr.mxu0 0.0
    %5531 = vmatpush1.msra.mxu0 %v5517
    %5532 = vmatprep.subr.mxu0 0.0
    %5533 = vmatpush1.msra.mxu0 %v5518
    %5534 = vmatprep.subr.mxu0 0.0
    %5535 = vmatpush1.msra.mxu0 %v5519
    %5536 = vmatprep.subr.mxu0 0.0
    %5537 = vmatpush1.msra.mxu0 0.0
    %5538 = vmatprep.subr.mxu0 0.0
    %5539 = vmatpush1.msra.mxu0 0.0
    %5540 = vmatprep.subr.mxu0 0.0
    %5541 = vmatpush1.msra.mxu0 0.0
    %5542 = vmatprep.subr.mxu0 0.0
    %5543 = vmatpush1.msra.mxu0 0.0
    %5544 = vmatprep.subr.mxu0 0.0
    %5545 = vmatpush1.msra.mxu0 0.0
    %5546 = vmatprep.subr.mxu0 0.0
    %5547 = vmatpush1.msra.mxu0 0.0
    %5548 = vmatprep.subr.mxu0 0.0
    %5549 = vmatpush1.msra.mxu0 0.0
    %5550 = vmatprep.subr.mxu0 0.0
    %5551 = vmatpush1.msra.mxu0 0.0
    %5552 = vmatprep.subr.mxu0 0.0
    %5553 = vmatpush1.msra.mxu0 0.0
    %5554 = vmatprep.subr.mxu0 0.0
    %5555 = vmatpush1.msra.mxu0 0.0
    %5556 = vmatprep.subr.mxu0 0.0
    %5557 = vmatpush1.msra.mxu0 0.0
    %5558 = vmatprep.subr.mxu0 0.0
    %5559 = vmatpush1.msra.mxu0 0.0
    %5560 = vmatprep.subr.mxu0 0.0
    %5561 = vmatpush1.msra.mxu0 0.0
    %5562 = vmatprep.subr.mxu0 0.0
    %5563 = vmatpush1.msra.mxu0 0.0
    %5564 = vmatprep.subr.mxu0 0.0
    %5565 = vmatpush1.msra.mxu0 0.0
    %5566 = vmatprep.subr.mxu0 0.0
    %5567 = vmatpush1.msra.mxu0 0.0
    %5568 = vmatprep.subr.mxu0 0.0
    %5569 = vmatpush1.msra.mxu0 0.0
    %5570 = vmatprep.subr.mxu0 0.0
    %5571 = vmatpush1.msra.mxu0 0.0
    %5572 = vmatprep.subr.mxu0 0.0
    %5573 = vmatpush1.msra.mxu0 0.0
    %5574 = vmatprep.subr.mxu0 0.0
    %5575 = vmatpush1.msra.mxu0 0.0
    %5576 = vmatprep.subr.mxu0 0.0
    %5577 = vmatpush1.msra.mxu0 0.0
    %5578 = vmatprep.subr.mxu0 0.0
    %5579 = vmatpush1.msra.mxu0 0.0
    %5580 = vmatprep.subr.mxu0 0.0
    %5581 = vmatpush1.msra.mxu0 0.0
    %5582 = vmatprep.subr.mxu0 0.0
    %5583 = vmatpush1.msra.mxu0 0.0
    %5584 = vmatprep.subr.mxu0 0.0
    %5585 = vmatpush1.msra.mxu0 0.0
    %5586 = vmatprep.subr.mxu0 0.0
    %5587 = vmatpush1.msra.mxu0 0.0
    %5588 = vmatprep.subr.mxu0 0.0
    %5589 = vmatpush1.msra.mxu0 0.0
    %5590 = vmatprep.subr.mxu0 0.0
    %5591 = vmatpush1.msra.mxu0 0.0
    %5592 = vmatprep.mubr.f32.mxu0 0.0
    %5593 = vmatmul.mubr.f32.gmra.mrb[0].mxu0 %v3963
    %v5594 = vpop.f32.mrb[0].mxu0
    %v5595 = vadd.f32 %v5526, %v5594
    %v5596 = vpop.f32.mrb[0].mxu0
    %5597 = vmatprep.mubr.f32.mxu0 0.0
    %5598 = vmatmul.mubr.f32.gmra.mrb[0].mxu0 %v3966
    %v5599 = vpop.f32.mrb[0].mxu0
    %v5600 = vadd.f32 %v5526, %v5599
    %v5601 = vpop.f32.mrb[0].mxu0
    %5602 = vmatprep.mubr.f32.mxu0 0.0
    %5603 = vmatmul.mubr.f32.gmra.mrb[0].mxu0 %v3969
    %v5604 = vpop.f32.mrb[0].mxu0
    %v5605 = vadd.f32 %v5526, %v5604
    %v5606 = vpop.f32.mrb[0].mxu0
    %5607 = vmatprep.mubr.f32.mxu0 0.0
    %5608 = vmatmul.mubr.f32.gmra.mrb[0].mxu0 %v3972
    %v5609 = vpop.f32.mrb[0].mxu0
    %v5610 = vadd.f32 %v5526, %v5609
    %v5611 = vpop.f32.mrb[0].mxu0
    %5612 = vdwg.mxu0
    %s5613 = scalar_lea.vmem %s8, 192
    %v5614 = vld [vmem:[%s5613] sm:$0xff]
    %v5615 = vld [vmem:[%s5613 + $0x8] sm:$0xff]
    %v5616 = vld [vmem:[%s5613 + $0x10] sm:$0xff]
    %v5617 = vld [vmem:[%s5613 + $0x18] sm:$0xff]
    %s5618 = scalar_lea.vmem %s9, 6
    %v5619 = vld [vmem:[%s5618] sm:$0x1]
    %v5621 = vlaneseq
    %v5622 = vshrl.u32 %v5621, 7
    %v5623 = vsub.s32 0, %v5622
    %v5624 = vrot.slane %v5619, %v5623
    %5626 = vmatprep.subr.mxu0 0.0
    %5627 = vmatpush1.msra.mxu0 %v5614
    %5628 = vmatprep.subr.mxu0 0.0
    %5629 = vmatpush1.msra.mxu0 %v5615
    %5630 = vmatprep.subr.mxu0 0.0
    %5631 = vmatpush1.msra.mxu0 %v5616
    %5632 = vmatprep.subr.mxu0 0.0
    %5633 = vmatpush1.msra.mxu0 %v5617
    %5634 = vmatprep.subr.mxu0 0.0
    %5635 = vmatpush1.msra.mxu0 0.0
    %5636 = vmatprep.subr.mxu0 0.0
    %5637 = vmatpush1.msra.mxu0 0.0
    %5638 = vmatprep.subr.mxu0 0.0
    %5639 = vmatpush1.msra.mxu0 0.0
    %5640 = vmatprep.subr.mxu0 0.0
    %5641 = vmatpush1.msra.mxu0 0.0
    %5642 = vmatprep.subr.mxu0 0.0
    %5643 = vmatpush1.msra.mxu0 0.0
    %5644 = vmatprep.subr.mxu0 0.0
    %5645 = vmatpush1.msra.mxu0 0.0
    %5646 = vmatprep.subr.mxu0 0.0
    %5647 = vmatpush1.msra.mxu0 0.0
    %5648 = vmatprep.subr.mxu0 0.0
    %5649 = vmatpush1.msra.mxu0 0.0
    %5650 = vmatprep.subr.mxu0 0.0
    %5651 = vmatpush1.msra.mxu0 0.0
    %5652 = vmatprep.subr.mxu0 0.0
    %5653 = vmatpush1.msra.mxu0 0.0
    %5654 = vmatprep.subr.mxu0 0.0
    %5655 = vmatpush1.msra.mxu0 0.0
    %5656 = vmatprep.subr.mxu0 0.0
    %5657 = vmatpush1.msra.mxu0 0.0
    %5658 = vmatprep.subr.mxu0 0.0
    %5659 = vmatpush1.msra.mxu0 0.0
    %5660 = vmatprep.subr.mxu0 0.0
    %5661 = vmatpush1.msra.mxu0 0.0
    %5662 = vmatprep.subr.mxu0 0.0
    %5663 = vmatpush1.msra.mxu0 0.0
    %5664 = vmatprep.subr.mxu0 0.0
    %5665 = vmatpush1.msra.mxu0 0.0
    %5666 = vmatprep.subr.mxu0 0.0
    %5667 = vmatpush1.msra.mxu0 0.0
    %5668 = vmatprep.subr.mxu0 0.0
    %5669 = vmatpush1.msra.mxu0 0.0
    %5670 = vmatprep.subr.mxu0 0.0
    %5671 = vmatpush1.msra.mxu0 0.0
    %5672 = vmatprep.subr.mxu0 0.0
    %5673 = vmatpush1.msra.mxu0 0.0
    %5674 = vmatprep.subr.mxu0 0.0
    %5675 = vmatpush1.msra.mxu0 0.0
    %5676 = vmatprep.subr.mxu0 0.0
    %5677 = vmatpush1.msra.mxu0 0.0
    %5678 = vmatprep.subr.mxu0 0.0
    %5679 = vmatpush1.msra.mxu0 0.0
    %5680 = vmatprep.subr.mxu0 0.0
    %5681 = vmatpush1.msra.mxu0 0.0
    %5682 = vmatprep.subr.mxu0 0.0
    %5683 = vmatpush1.msra.mxu0 0.0
    %5684 = vmatprep.subr.mxu0 0.0
    %5685 = vmatpush1.msra.mxu0 0.0
    %5686 = vmatprep.subr.mxu0 0.0
    %5687 = vmatpush1.msra.mxu0 0.0
    %5688 = vmatprep.subr.mxu0 0.0
    %5689 = vmatpush1.msra.mxu0 0.0
    %5690 = vmatprep.mubr.f32.mxu0 0.0
    %5691 = vmatmul.mubr.f32.gmra.mrb[0].mxu0 %v3963
    %v5692 = vpop.f32.mrb[0].mxu0
    %v5693 = vadd.f32 %v5624, %v5692
    %v5694 = vpop.f32.mrb[0].mxu0
    %5695 = vmatprep.mubr.f32.mxu0 0.0
    %5696 = vmatmul.mubr.f32.gmra.mrb[0].mxu0 %v3966
    %v5697 = vpop.f32.mrb[0].mxu0
    %v5698 = vadd.f32 %v5624, %v5697
    %v5699 = vpop.f32.mrb[0].mxu0
    %5700 = vmatprep.mubr.f32.mxu0 0.0
    %5701 = vmatmul.mubr.f32.gmra.mrb[0].mxu0 %v3969
    %v5702 = vpop.f32.mrb[0].mxu0
    %v5703 = vadd.f32 %v5624, %v5702
    %v5704 = vpop.f32.mrb[0].mxu0
    %5705 = vmatprep.mubr.f32.mxu0 0.0
    %5706 = vmatmul.mubr.f32.gmra.mrb[0].mxu0 %v3972
    %v5707 = vpop.f32.mrb[0].mxu0
    %v5708 = vadd.f32 %v5624, %v5707
    %v5709 = vpop.f32.mrb[0].mxu0
    %5710 = vdwg.mxu0
    %s5711 = scalar_lea.vmem %s10, 192
    %v5712 = vld [vmem:[%s5711] sm:$0xff]
    %v5713 = vld [vmem:[%s5711 + $0x8] sm:$0xff]
    %v5714 = vld [vmem:[%s5711 + $0x10] sm:$0xff]
    %v5715 = vld [vmem:[%s5711 + $0x18] sm:$0xff]
    %s5716 = scalar_lea.vmem %s11, 6
    %v5717 = vld [vmem:[%s5716] sm:$0x1]
    %v5719 = vlaneseq
    %v5720 = vshrl.u32 %v5719, 7
    %v5721 = vsub.s32 0, %v5720
    %v5722 = vrot.slane %v5717, %v5721
    %5724 = vmatprep.subr.mxu0 0.0
    %5725 = vmatpush1.msra.mxu0 %v5712
    %5726 = vmatprep.subr.mxu0 0.0
    %5727 = vmatpush1.msra.mxu0 %v5713
    %5728 = vmatprep.subr.mxu0 0.0
    %5729 = vmatpush1.msra.mxu0 %v5714
    %5730 = vmatprep.subr.mxu0 0.0
    %5731 = vmatpush1.msra.mxu0 %v5715
    %5732 = vmatprep.subr.mxu0 0.0
    %5733 = vmatpush1.msra.mxu0 0.0
    %5734 = vmatprep.subr.mxu0 0.0
    %5735 = vmatpush1.msra.mxu0 0.0
    %5736 = vmatprep.subr.mxu0 0.0
    %5737 = vmatpush1.msra.mxu0 0.0
    %5738 = vmatprep.subr.mxu0 0.0
    %5739 = vmatpush1.msra.mxu0 0.0
    %5740 = vmatprep.subr.mxu0 0.0
    %5741 = vmatpush1.msra.mxu0 0.0
    %5742 = vmatprep.subr.mxu0 0.0
    %5743 = vmatpush1.msra.mxu0 0.0
    %5744 = vmatprep.subr.mxu0 0.0
    %5745 = vmatpush1.msra.mxu0 0.0
    %5746 = vmatprep.subr.mxu0 0.0
    %5747 = vmatpush1.msra.mxu0 0.0
    %5748 = vmatprep.subr.mxu0 0.0
    %5749 = vmatpush1.msra.mxu0 0.0
    %5750 = vmatprep.subr.mxu0 0.0
    %5751 = vmatpush1.msra.mxu0 0.0
    %5752 = vmatprep.subr.mxu0 0.0
    %5753 = vmatpush1.msra.mxu0 0.0
    %5754 = vmatprep.subr.mxu0 0.0
    %5755 = vmatpush1.msra.mxu0 0.0
    %5756 = vmatprep.subr.mxu0 0.0
    %5757 = vmatpush1.msra.mxu0 0.0
    %5758 = vmatprep.subr.mxu0 0.0
    %5759 = vmatpush1.msra.mxu0 0.0
    %5760 = vmatprep.subr.mxu0 0.0
    %5761 = vmatpush1.msra.mxu0 0.0
    %5762 = vmatprep.subr.mxu0 0.0
    %5763 = vmatpush1.msra.mxu0 0.0
    %5764 = vmatprep.subr.mxu0 0.0
    %5765 = vmatpush1.msra.mxu0 0.0
    %5766 = vmatprep.subr.mxu0 0.0
    %5767 = vmatpush1.msra.mxu0 0.0
    %5768 = vmatprep.subr.mxu0 0.0
    %5769 = vmatpush1.msra.mxu0 0.0
    %5770 = vmatprep.subr.mxu0 0.0
    %5771 = vmatpush1.msra.mxu0 0.0
    %5772 = vmatprep.subr.mxu0 0.0
    %5773 = vmatpush1.msra.mxu0 0.0
    %5774 = vmatprep.subr.mxu0 0.0
    %5775 = vmatpush1.msra.mxu0 0.0
    %5776 = vmatprep.subr.mxu0 0.0
    %5777 = vmatpush1.msra.mxu0 0.0
    %5778 = vmatprep.subr.mxu0 0.0
    %5779 = vmatpush1.msra.mxu0 0.0
    %5780 = vmatprep.subr.mxu0 0.0
    %5781 = vmatpush1.msra.mxu0 0.0
    %5782 = vmatprep.subr.mxu0 0.0
    %5783 = vmatpush1.msra.mxu0 0.0
    %5784 = vmatprep.subr.mxu0 0.0
    %5785 = vmatpush1.msra.mxu0 0.0
    %5786 = vmatprep.subr.mxu0 0.0
    %5787 = vmatpush1.msra.mxu0 0.0
    %5788 = vmatprep.mubr.f32.mxu0 0.0
    %5789 = vmatmul.mubr.f32.gmra.mrb[0].mxu0 %v3963
    %v5790 = vpop.f32.mrb[0].mxu0
    %v5791 = vadd.f32 %v5722, %v5790
    %v5792 = vpop.f32.mrb[0].mxu0
    %5793 = vmatprep.mubr.f32.mxu0 0.0
    %5794 = vmatmul.mubr.f32.gmra.mrb[0].mxu0 %v3966
    %v5795 = vpop.f32.mrb[0].mxu0
    %v5796 = vadd.f32 %v5722, %v5795
    %v5797 = vpop.f32.mrb[0].mxu0
    %5798 = vmatprep.mubr.f32.mxu0 0.0
    %5799 = vmatmul.mubr.f32.gmra.mrb[0].mxu0 %v3969
    %v5800 = vpop.f32.mrb[0].mxu0
    %v5801 = vadd.f32 %v5722, %v5800
    %v5802 = vpop.f32.mrb[0].mxu0
    %5803 = vmatprep.mubr.f32.mxu0 0.0
    %5804 = vmatmul.mubr.f32.gmra.mrb[0].mxu0 %v3972
    %v5805 = vpop.f32.mrb[0].mxu0
    %v5806 = vadd.f32 %v5722, %v5805
    %v5807 = vpop.f32.mrb[0].mxu0
    %5808 = vdwg.mxu0
    %v5810 = vsel %vm705, %v5595, 0
    %v5813 = vsel %vm705, %v5600, 0
    %v5816 = vsel %vm705, %v5693, 0
    %v5819 = vsel %vm705, %v5698, 0
    %5821 = vmatprep.subr.mxu0 0.0
    %5822 = vmatpush1.xpose.msra.mxu0 %v5816
    %5823 = vmatprep.subr.mxu0 0.0
    %5824 = vmatpush1.xpose.msra.mxu0 %v5819
    %5825 = vmatprep.subr.mxu0 0.0
    %5826 = vmatpush1.xpose.msra.mxu0 0.0
    %5827 = vmatprep.subr.mxu0 0.0
    %5828 = vmatpush1.xpose.msra.mxu0 0.0
    %5829 = vmatprep.subr.mxu0 0.0
    %5830 = vmatpush1.xpose.msra.mxu0 0.0
    %5831 = vmatprep.subr.mxu0 0.0
    %5832 = vmatpush1.xpose.msra.mxu0 0.0
    %5833 = vmatprep.subr.mxu0 0.0
    %5834 = vmatpush1.xpose.msra.mxu0 0.0
    %5835 = vmatprep.subr.mxu0 0.0
    %5836 = vmatpush1.xpose.msra.mxu0 0.0
    %5837 = vmatprep.subr.mxu0 0.0
    %5838 = vmatpush1.xpose.msra.mxu0 0.0
    %5839 = vmatprep.subr.mxu0 0.0
    %5840 = vmatpush1.xpose.msra.mxu0 0.0
    %5841 = vmatprep.subr.mxu0 0.0
    %5842 = vmatpush1.xpose.msra.mxu0 0.0
    %5843 = vmatprep.subr.mxu0 0.0
    %5844 = vmatpush1.xpose.msra.mxu0 0.0
    %5845 = vmatprep.subr.mxu0 0.0
    %5846 = vmatpush1.xpose.msra.mxu0 0.0
    %5847 = vmatprep.subr.mxu0 0.0
    %5848 = vmatpush1.xpose.msra.mxu0 0.0
    %5849 = vmatprep.subr.mxu0 0.0
    %5850 = vmatpush1.xpose.msra.mxu0 0.0
    %5851 = vmatprep.subr.mxu0 0.0
    %5852 = vmatpush1.xpose.msra.mxu0 0.0
    %5853 = vmatprep.subr.mxu0 0.0
    %5854 = vmatpush1.xpose.msra.mxu0 0.0
    %5855 = vmatprep.subr.mxu0 0.0
    %5856 = vmatpush1.xpose.msra.mxu0 0.0
    %5857 = vmatprep.subr.mxu0 0.0
    %5858 = vmatpush1.xpose.msra.mxu0 0.0
    %5859 = vmatprep.subr.mxu0 0.0
    %5860 = vmatpush1.xpose.msra.mxu0 0.0
    %5861 = vmatprep.subr.mxu0 0.0
    %5862 = vmatpush1.xpose.msra.mxu0 0.0
    %5863 = vmatprep.subr.mxu0 0.0
    %5864 = vmatpush1.xpose.msra.mxu0 0.0
    %5865 = vmatprep.subr.mxu0 0.0
    %5866 = vmatpush1.xpose.msra.mxu0 0.0
    %5867 = vmatprep.subr.mxu0 0.0
    %5868 = vmatpush1.xpose.msra.mxu0 0.0
    %5869 = vmatprep.subr.mxu0 0.0
    %5870 = vmatpush1.xpose.msra.mxu0 0.0
    %5871 = vmatprep.subr.mxu0 0.0
    %5872 = vmatpush1.xpose.msra.mxu0 0.0
    %5873 = vmatprep.subr.mxu0 0.0
    %5874 = vmatpush1.xpose.msra.mxu0 0.0
    %5875 = vmatprep.subr.mxu0 0.0
    %5876 = vmatpush1.xpose.msra.mxu0 0.0
    %5877 = vmatprep.subr.mxu0 0.0
    %5878 = vmatpush1.xpose.msra.mxu0 0.0
    %5879 = vmatprep.subr.mxu0 0.0
    %5880 = vmatpush1.xpose.msra.mxu0 0.0
    %5881 = vmatprep.subr.mxu0 0.0
    %5882 = vmatpush1.xpose.msra.mxu0 0.0
    %5883 = vmatprep.subr.mxu0 0.0
    %5884 = vmatpush1.xpose.msra.mxu0 0.0
    %5885 = vmatprep.mubr.f32.mxu0 0.0
    %5886 = vmatmul.mubr.f32.gmra.mrb[0].mxu0 %v5810
    %v5887 = vpop.f32.mrb[0].mxu0
    %v5888 = vadd.f32 0.0, %v5887
    %v5889 = vpop.f32.mrb[0].mxu0
    %5890 = vmatprep.mubr.f32.mxu0 0.0
    %5891 = vmatmul.mubr.f32.gmra.mrb[0].mxu0 %v5813
    %v5892 = vpop.f32.mrb[0].mxu0
    %v5893 = vadd.f32 0.0, %v5892
    %v5894 = vpop.f32.mrb[0].mxu0
    %5895 = vdwg.mxu0
    %v5897 = vsel %vm705, %v5605, 0
    %v5900 = vsel %vm705, %v5610, 0
    %v5903 = vsel %vm705, %v5703, 0
    %v5906 = vsel %vm705, %v5708, 0
    %5908 = vmatprep.subr.mxu0 0.0
    %5909 = vmatpush1.xpose.msra.mxu0 %v5903
    %5910 = vmatprep.subr.mxu0 0.0
    %5911 = vmatpush1.xpose.msra.mxu0 %v5906
    %5912 = vmatprep.subr.mxu0 0.0
    %5913 = vmatpush1.xpose.msra.mxu0 0.0
    %5914 = vmatprep.subr.mxu0 0.0
    %5915 = vmatpush1.xpose.msra.mxu0 0.0
    %5916 = vmatprep.subr.mxu0 0.0
    %5917 = vmatpush1.xpose.msra.mxu0 0.0
    %5918 = vmatprep.subr.mxu0 0.0
    %5919 = vmatpush1.xpose.msra.mxu0 0.0
    %5920 = vmatprep.subr.mxu0 0.0
    %5921 = vmatpush1.xpose.msra.mxu0 0.0
    %5922 = vmatprep.subr.mxu0 0.0
    %5923 = vmatpush1.xpose.msra.mxu0 0.0
    %5924 = vmatprep.subr.mxu0 0.0
    %5925 = vmatpush1.xpose.msra.mxu0 0.0
    %5926 = vmatprep.subr.mxu0 0.0
    %5927 = vmatpush1.xpose.msra.mxu0 0.0
    %5928 = vmatprep.subr.mxu0 0.0
    %5929 = vmatpush1.xpose.msra.mxu0 0.0
    %5930 = vmatprep.subr.mxu0 0.0
    %5931 = vmatpush1.xpose.msra.mxu0 0.0
    %5932 = vmatprep.subr.mxu0 0.0
    %5933 = vmatpush1.xpose.msra.mxu0 0.0
    %5934 = vmatprep.subr.mxu0 0.0
    %5935 = vmatpush1.xpose.msra.mxu0 0.0
    %5936 = vmatprep.subr.mxu0 0.0
    %5937 = vmatpush1.xpose.msra.mxu0 0.0
    %5938 = vmatprep.subr.mxu0 0.0
    %5939 = vmatpush1.xpose.msra.mxu0 0.0
    %5940 = vmatprep.subr.mxu0 0.0
    %5941 = vmatpush1.xpose.msra.mxu0 0.0
    %5942 = vmatprep.subr.mxu0 0.0
    %5943 = vmatpush1.xpose.msra.mxu0 0.0
    %5944 = vmatprep.subr.mxu0 0.0
    %5945 = vmatpush1.xpose.msra.mxu0 0.0
    %5946 = vmatprep.subr.mxu0 0.0
    %5947 = vmatpush1.xpose.msra.mxu0 0.0
    %5948 = vmatprep.subr.mxu0 0.0
    %5949 = vmatpush1.xpose.msra.mxu0 0.0
    %5950 = vmatprep.subr.mxu0 0.0
    %5951 = vmatpush1.xpose.msra.mxu0 0.0
    %5952 = vmatprep.subr.mxu0 0.0
    %5953 = vmatpush1.xpose.msra.mxu0 0.0
    %5954 = vmatprep.subr.mxu0 0.0
    %5955 = vmatpush1.xpose.msra.mxu0 0.0
    %5956 = vmatprep.subr.mxu0 0.0
    %5957 = vmatpush1.xpose.msra.mxu0 0.0
    %5958 = vmatprep.subr.mxu0 0.0
    %5959 = vmatpush1.xpose.msra.mxu0 0.0
    %5960 = vmatprep.subr.mxu0 0.0
    %5961 = vmatpush1.xpose.msra.mxu0 0.0
    %5962 = vmatprep.subr.mxu0 0.0
    %5963 = vmatpush1.xpose.msra.mxu0 0.0
    %5964 = vmatprep.subr.mxu0 0.0
    %5965 = vmatpush1.xpose.msra.mxu0 0.0
    %5966 = vmatprep.subr.mxu0 0.0
    %5967 = vmatpush1.xpose.msra.mxu0 0.0
    %5968 = vmatprep.subr.mxu0 0.0
    %5969 = vmatpush1.xpose.msra.mxu0 0.0
    %5970 = vmatprep.subr.mxu0 0.0
    %5971 = vmatpush1.xpose.msra.mxu0 0.0
    %5972 = vmatprep.mubr.f32.mxu0 0.0
    %5973 = vmatmul.mubr.f32.gmra.mrb[0].mxu0 %v5897
    %v5974 = vpop.f32.mrb[0].mxu0
    %v5975 = vadd.f32 0.0, %v5974
    %v5976 = vpop.f32.mrb[0].mxu0
    %5977 = vmatprep.mubr.f32.mxu0 0.0
    %5978 = vmatmul.mubr.f32.gmra.mrb[0].mxu0 %v5900
    %v5979 = vpop.f32.mrb[0].mxu0
    %v5980 = vadd.f32 0.0, %v5979
    %v5981 = vpop.f32.mrb[0].mxu0
    %5982 = vdwg.mxu0
    %v5983 = vmul.f32 %v5888, 0.35355338
    %v5984 = vmul.f32 %v5893, 0.35355338
    %v5985 = vmul.f32 %v5975, 0.35355338
    %v5986 = vmul.f32 %v5980, 0.35355338
    %v5987 = vsel %vm884, %v5983, -inf
    %5988 = vmax.xlane.f32.xlu0 %v5987
    %v5989 = vpop.xlane.xlu0 %5988
    %v5990 = vsel %vm884, %v5984, -inf
    %5991 = vmax.xlane.f32.xlu0 %v5990
    %v5992 = vpop.xlane.xlu0 %5991
    %v5993 = vsel %vm884, %v5985, -inf
    %5994 = vmax.xlane.f32.xlu0 %v5993
    %v5995 = vpop.xlane.xlu0 %5994
    %v5996 = vsel %vm884, %v5986, -inf
    %5997 = vmax.xlane.f32.xlu0 %v5996
    %v5998 = vpop.xlane.xlu0 %5997
    %v5999 = vsub.f32 %v5983, %v5989
    %v6000 = vsub.f32 %v5984, %v5992
    %v6001 = vsub.f32 %v5985, %v5995
    %v6002 = vsub.f32 %v5986, %v5998
    %v6003 = vmul.f32 %v5999, 1.442695
    %v6004 = vpow.pop %v6003
    %v6005 = vmul.f32 %v6000, 1.442695
    %v6006 = vpow.pop %v6005
    %v6007 = vmul.f32 %v6001, 1.442695
    %v6008 = vpow.pop %v6007
    %v6009 = vmul.f32 %v6002, 1.442695
    %v6010 = vpow.pop %v6009
    %v6011 = vsel %vm884, %v6004, 0.0
    %6012 = vadd.xlane.f32.xlu0 %v6011
    %v6013 = vpop.xlane.xlu0 %6012
    %v6014 = vsel %vm884, %v6006, 0.0
    %6015 = vadd.xlane.f32.xlu0 %v6014
    %v6016 = vpop.xlane.xlu0 %6015
    %v6017 = vsel %vm884, %v6008, 0.0
    %6018 = vadd.xlane.f32.xlu0 %v6017
    %v6019 = vpop.xlane.xlu0 %6018
    %v6020 = vsel %vm884, %v6010, 0.0
    %6021 = vadd.xlane.f32.xlu0 %v6020
    %v6022 = vpop.xlane.xlu0 %6021
    %v6023 = vrcp.pop %v6013
    %v6024 = vrcp.pop %v6016
    %v6025 = vrcp.pop %v6019
    %v6026 = vrcp.pop %v6022
    %v6027 = vmul.f32 %v6004, %v6023
    %v6028 = vmul.f32 %v6006, %v6024
    %v6029 = vmul.f32 %v6008, %v6025
    %v6030 = vmul.f32 %v6010, %v6026
    %v6032 = vsel %vm884, %v6027, 0
    %v6035 = vsel %vm884, %v6028, 0
    %6037 = vmatprep.subr.mxu0 0.0
    %6038 = vmatpush1.msra.mxu0 %v5791
    %6039 = vmatprep.subr.mxu0 0.0
    %6040 = vmatpush1.msra.mxu0 %v5796
    %6041 = vmatprep.subr.mxu0 0.0
    %6042 = vmatpush1.msra.mxu0 0.0
    %6043 = vmatprep.subr.mxu0 0.0
    %6044 = vmatpush1.msra.mxu0 0.0
    %6045 = vmatprep.subr.mxu0 0.0
    %6046 = vmatpush1.msra.mxu0 0.0
    %6047 = vmatprep.subr.mxu0 0.0
    %6048 = vmatpush1.msra.mxu0 0.0
    %6049 = vmatprep.subr.mxu0 0.0
    %6050 = vmatpush1.msra.mxu0 0.0
    %6051 = vmatprep.subr.mxu0 0.0
    %6052 = vmatpush1.msra.mxu0 0.0
    %6053 = vmatprep.subr.mxu0 0.0
    %6054 = vmatpush1.msra.mxu0 0.0
    %6055 = vmatprep.subr.mxu0 0.0
    %6056 = vmatpush1.msra.mxu0 0.0
    %6057 = vmatprep.subr.mxu0 0.0
    %6058 = vmatpush1.msra.mxu0 0.0
    %6059 = vmatprep.subr.mxu0 0.0
    %6060 = vmatpush1.msra.mxu0 0.0
    %6061 = vmatprep.subr.mxu0 0.0
    %6062 = vmatpush1.msra.mxu0 0.0
    %6063 = vmatprep.subr.mxu0 0.0
    %6064 = vmatpush1.msra.mxu0 0.0
    %6065 = vmatprep.subr.mxu0 0.0
    %6066 = vmatpush1.msra.mxu0 0.0
    %6067 = vmatprep.subr.mxu0 0.0
    %6068 = vmatpush1.msra.mxu0 0.0
    %6069 = vmatprep.subr.mxu0 0.0
    %6070 = vmatpush1.msra.mxu0 0.0
    %6071 = vmatprep.subr.mxu0 0.0
    %6072 = vmatpush1.msra.mxu0 0.0
    %6073 = vmatprep.subr.mxu0 0.0
    %6074 = vmatpush1.msra.mxu0 0.0
    %6075 = vmatprep.subr.mxu0 0.0
    %6076 = vmatpush1.msra.mxu0 0.0
    %6077 = vmatprep.subr.mxu0 0.0
    %6078 = vmatpush1.msra.mxu0 0.0
    %6079 = vmatprep.subr.mxu0 0.0
    %6080 = vmatpush1.msra.mxu0 0.0
    %6081 = vmatprep.subr.mxu0 0.0
    %6082 = vmatpush1.msra.mxu0 0.0
    %6083 = vmatprep.subr.mxu0 0.0
    %6084 = vmatpush1.msra.mxu0 0.0
    %6085 = vmatprep.subr.mxu0 0.0
    %6086 = vmatpush1.msra.mxu0 0.0
    %6087 = vmatprep.subr.mxu0 0.0
    %6088 = vmatpush1.msra.mxu0 0.0
    %6089 = vmatprep.subr.mxu0 0.0
    %6090 = vmatpush1.msra.mxu0 0.0
    %6091 = vmatprep.subr.mxu0 0.0
    %6092 = vmatpush1.msra.mxu0 0.0
    %6093 = vmatprep.subr.mxu0 0.0
    %6094 = vmatpush1.msra.mxu0 0.0
    %6095 = vmatprep.subr.mxu0 0.0
    %6096 = vmatpush1.msra.mxu0 0.0
    %6097 = vmatprep.subr.mxu0 0.0
    %6098 = vmatpush1.msra.mxu0 0.0
    %6099 = vmatprep.subr.mxu0 0.0
    %6100 = vmatpush1.msra.mxu0 0.0
    %6101 = vmatprep.mubr.f32.mxu0 0.0
    %6102 = vmatmul.mubr.f32.gmra.mrb[0].mxu0 %v6032
    %v6103 = vpop.f32.mrb[0].mxu0
    %v6104 = vadd.f32 0.0, %v6103
    %v6105 = vpop.f32.mrb[0].mxu0
    %6106 = vmatprep.mubr.f32.mxu0 0.0
    %6107 = vmatmul.mubr.f32.gmra.mrb[0].mxu0 %v6035
    %v6108 = vpop.f32.mrb[0].mxu0
    %v6109 = vadd.f32 0.0, %v6108
    %v6110 = vpop.f32.mrb[0].mxu0
    %6111 = vdwg.mxu0
    %v6113 = vsel %vm884, %v6029, 0
    %v6116 = vsel %vm884, %v6030, 0
    %6118 = vmatprep.subr.mxu0 0.0
    %6119 = vmatpush1.msra.mxu0 %v5801
    %6120 = vmatprep.subr.mxu0 0.0
    %6121 = vmatpush1.msra.mxu0 %v5806
    %6122 = vmatprep.subr.mxu0 0.0
    %6123 = vmatpush1.msra.mxu0 0.0
    %6124 = vmatprep.subr.mxu0 0.0
    %6125 = vmatpush1.msra.mxu0 0.0
    %6126 = vmatprep.subr.mxu0 0.0
    %6127 = vmatpush1.msra.mxu0 0.0
    %6128 = vmatprep.subr.mxu0 0.0
    %6129 = vmatpush1.msra.mxu0 0.0
    %6130 = vmatprep.subr.mxu0 0.0
    %6131 = vmatpush1.msra.mxu0 0.0
    %6132 = vmatprep.subr.mxu0 0.0
    %6133 = vmatpush1.msra.mxu0 0.0
    %6134 = vmatprep.subr.mxu0 0.0
    %6135 = vmatpush1.msra.mxu0 0.0
    %6136 = vmatprep.subr.mxu0 0.0
    %6137 = vmatpush1.msra.mxu0 0.0
    %6138 = vmatprep.subr.mxu0 0.0
    %6139 = vmatpush1.msra.mxu0 0.0
    %6140 = vmatprep.subr.mxu0 0.0
    %6141 = vmatpush1.msra.mxu0 0.0
    %6142 = vmatprep.subr.mxu0 0.0
    %6143 = vmatpush1.msra.mxu0 0.0
    %6144 = vmatprep.subr.mxu0 0.0
    %6145 = vmatpush1.msra.mxu0 0.0
    %6146 = vmatprep.subr.mxu0 0.0
    %6147 = vmatpush1.msra.mxu0 0.0
    %6148 = vmatprep.subr.mxu0 0.0
    %6149 = vmatpush1.msra.mxu0 0.0
    %6150 = vmatprep.subr.mxu0 0.0
    %6151 = vmatpush1.msra.mxu0 0.0
    %6152 = vmatprep.subr.mxu0 0.0
    %6153 = vmatpush1.msra.mxu0 0.0
    %6154 = vmatprep.subr.mxu0 0.0
    %6155 = vmatpush1.msra.mxu0 0.0
    %6156 = vmatprep.subr.mxu0 0.0
    %6157 = vmatpush1.msra.mxu0 0.0
    %6158 = vmatprep.subr.mxu0 0.0
    %6159 = vmatpush1.msra.mxu0 0.0
    %6160 = vmatprep.subr.mxu0 0.0
    %6161 = vmatpush1.msra.mxu0 0.0
    %6162 = vmatprep.subr.mxu0 0.0
    %6163 = vmatpush1.msra.mxu0 0.0
    %6164 = vmatprep.subr.mxu0 0.0
    %6165 = vmatpush1.msra.mxu0 0.0
    %6166 = vmatprep.subr.mxu0 0.0
    %6167 = vmatpush1.msra.mxu0 0.0
    %6168 = vmatprep.subr.mxu0 0.0
    %6169 = vmatpush1.msra.mxu0 0.0
    %6170 = vmatprep.subr.mxu0 0.0
    %6171 = vmatpush1.msra.mxu0 0.0
    %6172 = vmatprep.subr.mxu0 0.0
    %6173 = vmatpush1.msra.mxu0 0.0
    %6174 = vmatprep.subr.mxu0 0.0
    %6175 = vmatpush1.msra.mxu0 0.0
    %6176 = vmatprep.subr.mxu0 0.0
    %6177 = vmatpush1.msra.mxu0 0.0
    %6178 = vmatprep.subr.mxu0 0.0
    %6179 = vmatpush1.msra.mxu0 0.0
    %6180 = vmatprep.subr.mxu0 0.0
    %6181 = vmatpush1.msra.mxu0 0.0
    %6182 = vmatprep.mubr.f32.mxu0 0.0
    %6183 = vmatmul.mubr.f32.gmra.mrb[0].mxu0 %v6113
    %v6184 = vpop.f32.mrb[0].mxu0
    %v6185 = vadd.f32 0.0, %v6184
    %v6186 = vpop.f32.mrb[0].mxu0
    %6187 = vmatprep.mubr.f32.mxu0 0.0
    %6188 = vmatmul.mubr.f32.gmra.mrb[0].mxu0 %v6116
    %v6189 = vpop.f32.mrb[0].mxu0
    %v6190 = vadd.f32 0.0, %v6189
    %v6191 = vpop.f32.mrb[0].mxu0
    %6192 = vdwg.mxu0
    %s6193 = scalar_lea.vmem %s12, 48
    %v6194 = vld [vmem:[%s6193] sm:$0xff]
    %v6196 = vsel %vm705, %v6104, 0
    %v6199 = vsel %vm705, %v6109, 0
    %v6202 = vsel %vm705, %v6185, 0
    %v6205 = vsel %vm705, %v6190, 0
    %6207 = vmatprep.subr.mxu0 0.0
    %6208 = vmatpush1.msra.mxu0 %v6194
    %6209 = vmatprep.subr.mxu0 0.0
    %6210 = vmatpush1.msra.mxu0 0.0
    %6211 = vmatprep.subr.mxu0 0.0
    %6212 = vmatpush1.msra.mxu0 0.0
    %6213 = vmatprep.subr.mxu0 0.0
    %6214 = vmatpush1.msra.mxu0 0.0
    %6215 = vmatprep.subr.mxu0 0.0
    %6216 = vmatpush1.msra.mxu0 0.0
    %6217 = vmatprep.subr.mxu0 0.0
    %6218 = vmatpush1.msra.mxu0 0.0
    %6219 = vmatprep.subr.mxu0 0.0
    %6220 = vmatpush1.msra.mxu0 0.0
    %6221 = vmatprep.subr.mxu0 0.0
    %6222 = vmatpush1.msra.mxu0 0.0
    %6223 = vmatprep.subr.mxu0 0.0
    %6224 = vmatpush1.msra.mxu0 0.0
    %6225 = vmatprep.subr.mxu0 0.0
    %6226 = vmatpush1.msra.mxu0 0.0
    %6227 = vmatprep.subr.mxu0 0.0
    %6228 = vmatpush1.msra.mxu0 0.0
    %6229 = vmatprep.subr.mxu0 0.0
    %6230 = vmatpush1.msra.mxu0 0.0
    %6231 = vmatprep.subr.mxu0 0.0
    %6232 = vmatpush1.msra.mxu0 0.0
    %6233 = vmatprep.subr.mxu0 0.0
    %6234 = vmatpush1.msra.mxu0 0.0
    %6235 = vmatprep.subr.mxu0 0.0
    %6236 = vmatpush1.msra.mxu0 0.0
    %6237 = vmatprep.subr.mxu0 0.0
    %6238 = vmatpush1.msra.mxu0 0.0
    %6239 = vmatprep.subr.mxu0 0.0
    %6240 = vmatpush1.msra.mxu0 0.0
    %6241 = vmatprep.subr.mxu0 0.0
    %6242 = vmatpush1.msra.mxu0 0.0
    %6243 = vmatprep.subr.mxu0 0.0
    %6244 = vmatpush1.msra.mxu0 0.0
    %6245 = vmatprep.subr.mxu0 0.0
    %6246 = vmatpush1.msra.mxu0 0.0
    %6247 = vmatprep.subr.mxu0 0.0
    %6248 = vmatpush1.msra.mxu0 0.0
    %6249 = vmatprep.subr.mxu0 0.0
    %6250 = vmatpush1.msra.mxu0 0.0
    %6251 = vmatprep.subr.mxu0 0.0
    %6252 = vmatpush1.msra.mxu0 0.0
    %6253 = vmatprep.subr.mxu0 0.0
    %6254 = vmatpush1.msra.mxu0 0.0
    %6255 = vmatprep.subr.mxu0 0.0
    %6256 = vmatpush1.msra.mxu0 0.0
    %6257 = vmatprep.subr.mxu0 0.0
    %6258 = vmatpush1.msra.mxu0 0.0
    %6259 = vmatprep.subr.mxu0 0.0
    %6260 = vmatpush1.msra.mxu0 0.0
    %6261 = vmatprep.subr.mxu0 0.0
    %6262 = vmatpush1.msra.mxu0 0.0
    %6263 = vmatprep.subr.mxu0 0.0
    %6264 = vmatpush1.msra.mxu0 0.0
    %6265 = vmatprep.subr.mxu0 0.0
    %6266 = vmatpush1.msra.mxu0 0.0
    %6267 = vmatprep.subr.mxu0 0.0
    %6268 = vmatpush1.msra.mxu0 0.0
    %6269 = vmatprep.subr.mxu0 0.0
    %6270 = vmatpush1.msra.mxu0 0.0
    %6271 = vmatprep.mubr.f32.mxu0 0.0
    %6272 = vmatmul.mubr.f32.gmra.mrb[0].mxu0 %v6196
    %v6273 = vpop.f32.mrb[0].mxu0
    %v6274 = vadd.f32 0.0, %v6273
    %v6275 = vpop.f32.mrb[0].mxu0
    %6276 = vmatprep.mubr.f32.mxu0 0.0
    %6277 = vmatmul.mubr.f32.gmra.mrb[0].mxu0 %v6199
    %v6278 = vpop.f32.mrb[0].mxu0
    %v6279 = vadd.f32 0.0, %v6278
    %v6280 = vpop.f32.mrb[0].mxu0
    %6281 = vmatprep.mubr.f32.mxu0 0.0
    %6282 = vmatmul.mubr.f32.gmra.mrb[0].mxu0 %v6202
    %v6283 = vpop.f32.mrb[0].mxu0
    %v6284 = vadd.f32 0.0, %v6283
    %v6285 = vpop.f32.mrb[0].mxu0
    %6286 = vmatprep.mubr.f32.mxu0 0.0
    %6287 = vmatmul.mubr.f32.gmra.mrb[0].mxu0 %v6205
    %v6288 = vpop.f32.mrb[0].mxu0
    %v6289 = vadd.f32 0.0, %v6288
    %v6290 = vpop.f32.mrb[0].mxu0
    %6291 = vdwg.mxu0
    %v6292 = vadd.f32 %v5497, %v6274
    %v6293 = vadd.f32 %v5502, %v6279
    %v6294 = vadd.f32 %v5507, %v6284
    %v6295 = vadd.f32 %v5512, %v6289
    %s6296 = scalar_lea.vmem %s6, 224
    %v6297 = vld [vmem:[%s6296] sm:$0xff]
    %v6298 = vld [vmem:[%s6296 + $0x8] sm:$0xff]
    %v6299 = vld [vmem:[%s6296 + $0x10] sm:$0xff]
    %v6300 = vld [vmem:[%s6296 + $0x18] sm:$0xff]
    %s6301 = scalar_lea.vmem %s7, 7
    %v6302 = vld [vmem:[%s6301] sm:$0x1]
    %v6304 = vlaneseq
    %v6305 = vshrl.u32 %v6304, 7
    %v6306 = vsub.s32 0, %v6305
    %v6307 = vrot.slane %v6302, %v6306
    %6309 = vmatprep.subr.mxu0 0.0
    %6310 = vmatpush1.msra.mxu0 %v6297
    %6311 = vmatprep.subr.mxu0 0.0
    %6312 = vmatpush1.msra.mxu0 %v6298
    %6313 = vmatprep.subr.mxu0 0.0
    %6314 = vmatpush1.msra.mxu0 %v6299
    %6315 = vmatprep.subr.mxu0 0.0
    %6316 = vmatpush1.msra.mxu0 %v6300
    %6317 = vmatprep.subr.mxu0 0.0
    %6318 = vmatpush1.msra.mxu0 0.0
    %6319 = vmatprep.subr.mxu0 0.0
    %6320 = vmatpush1.msra.mxu0 0.0
    %6321 = vmatprep.subr.mxu0 0.0
    %6322 = vmatpush1.msra.mxu0 0.0
    %6323 = vmatprep.subr.mxu0 0.0
    %6324 = vmatpush1.msra.mxu0 0.0
    %6325 = vmatprep.subr.mxu0 0.0
    %6326 = vmatpush1.msra.mxu0 0.0
    %6327 = vmatprep.subr.mxu0 0.0
    %6328 = vmatpush1.msra.mxu0 0.0
    %6329 = vmatprep.subr.mxu0 0.0
    %6330 = vmatpush1.msra.mxu0 0.0
    %6331 = vmatprep.subr.mxu0 0.0
    %6332 = vmatpush1.msra.mxu0 0.0
    %6333 = vmatprep.subr.mxu0 0.0
    %6334 = vmatpush1.msra.mxu0 0.0
    %6335 = vmatprep.subr.mxu0 0.0
    %6336 = vmatpush1.msra.mxu0 0.0
    %6337 = vmatprep.subr.mxu0 0.0
    %6338 = vmatpush1.msra.mxu0 0.0
    %6339 = vmatprep.subr.mxu0 0.0
    %6340 = vmatpush1.msra.mxu0 0.0
    %6341 = vmatprep.subr.mxu0 0.0
    %6342 = vmatpush1.msra.mxu0 0.0
    %6343 = vmatprep.subr.mxu0 0.0
    %6344 = vmatpush1.msra.mxu0 0.0
    %6345 = vmatprep.subr.mxu0 0.0
    %6346 = vmatpush1.msra.mxu0 0.0
    %6347 = vmatprep.subr.mxu0 0.0
    %6348 = vmatpush1.msra.mxu0 0.0
    %6349 = vmatprep.subr.mxu0 0.0
    %6350 = vmatpush1.msra.mxu0 0.0
    %6351 = vmatprep.subr.mxu0 0.0
    %6352 = vmatpush1.msra.mxu0 0.0
    %6353 = vmatprep.subr.mxu0 0.0
    %6354 = vmatpush1.msra.mxu0 0.0
    %6355 = vmatprep.subr.mxu0 0.0
    %6356 = vmatpush1.msra.mxu0 0.0
    %6357 = vmatprep.subr.mxu0 0.0
    %6358 = vmatpush1.msra.mxu0 0.0
    %6359 = vmatprep.subr.mxu0 0.0
    %6360 = vmatpush1.msra.mxu0 0.0
    %6361 = vmatprep.subr.mxu0 0.0
    %6362 = vmatpush1.msra.mxu0 0.0
    %6363 = vmatprep.subr.mxu0 0.0
    %6364 = vmatpush1.msra.mxu0 0.0
    %6365 = vmatprep.subr.mxu0 0.0
    %6366 = vmatpush1.msra.mxu0 0.0
    %6367 = vmatprep.subr.mxu0 0.0
    %6368 = vmatpush1.msra.mxu0 0.0
    %6369 = vmatprep.subr.mxu0 0.0
    %6370 = vmatpush1.msra.mxu0 0.0
    %6371 = vmatprep.subr.mxu0 0.0
    %6372 = vmatpush1.msra.mxu0 0.0
    %6373 = vmatprep.mubr.f32.mxu0 0.0
    %6374 = vmatmul.mubr.f32.gmra.mrb[0].mxu0 %v3963
    %v6375 = vpop.f32.mrb[0].mxu0
    %v6376 = vadd.f32 %v6307, %v6375
    %v6377 = vpop.f32.mrb[0].mxu0
    %6378 = vmatprep.mubr.f32.mxu0 0.0
    %6379 = vmatmul.mubr.f32.gmra.mrb[0].mxu0 %v3966
    %v6380 = vpop.f32.mrb[0].mxu0
    %v6381 = vadd.f32 %v6307, %v6380
    %v6382 = vpop.f32.mrb[0].mxu0
    %6383 = vmatprep.mubr.f32.mxu0 0.0
    %6384 = vmatmul.mubr.f32.gmra.mrb[0].mxu0 %v3969
    %v6385 = vpop.f32.mrb[0].mxu0
    %v6386 = vadd.f32 %v6307, %v6385
    %v6387 = vpop.f32.mrb[0].mxu0
    %6388 = vmatprep.mubr.f32.mxu0 0.0
    %6389 = vmatmul.mubr.f32.gmra.mrb[0].mxu0 %v3972
    %v6390 = vpop.f32.mrb[0].mxu0
    %v6391 = vadd.f32 %v6307, %v6390
    %v6392 = vpop.f32.mrb[0].mxu0
    %6393 = vdwg.mxu0
    %s6394 = scalar_lea.vmem %s8, 224
    %v6395 = vld [vmem:[%s6394] sm:$0xff]
    %v6396 = vld [vmem:[%s6394 + $0x8] sm:$0xff]
    %v6397 = vld [vmem:[%s6394 + $0x10] sm:$0xff]
    %v6398 = vld [vmem:[%s6394 + $0x18] sm:$0xff]
    %s6399 = scalar_lea.vmem %s9, 7
    %v6400 = vld [vmem:[%s6399] sm:$0x1]
    %v6402 = vlaneseq
    %v6403 = vshrl.u32 %v6402, 7
    %v6404 = vsub.s32 0, %v6403
    %v6405 = vrot.slane %v6400, %v6404
    %6407 = vmatprep.subr.mxu0 0.0
    %6408 = vmatpush1.msra.mxu0 %v6395
    %6409 = vmatprep.subr.mxu0 0.0
    %6410 = vmatpush1.msra.mxu0 %v6396
    %6411 = vmatprep.subr.mxu0 0.0
    %6412 = vmatpush1.msra.mxu0 %v6397
    %6413 = vmatprep.subr.mxu0 0.0
    %6414 = vmatpush1.msra.mxu0 %v6398
    %6415 = vmatprep.subr.mxu0 0.0
    %6416 = vmatpush1.msra.mxu0 0.0
    %6417 = vmatprep.subr.mxu0 0.0
    %6418 = vmatpush1.msra.mxu0 0.0
    %6419 = vmatprep.subr.mxu0 0.0
    %6420 = vmatpush1.msra.mxu0 0.0
    %6421 = vmatprep.subr.mxu0 0.0
    %6422 = vmatpush1.msra.mxu0 0.0
    %6423 = vmatprep.subr.mxu0 0.0
    %6424 = vmatpush1.msra.mxu0 0.0
    %6425 = vmatprep.subr.mxu0 0.0
    %6426 = vmatpush1.msra.mxu0 0.0
    %6427 = vmatprep.subr.mxu0 0.0
    %6428 = vmatpush1.msra.mxu0 0.0
    %6429 = vmatprep.subr.mxu0 0.0
    %6430 = vmatpush1.msra.mxu0 0.0
    %6431 = vmatprep.subr.mxu0 0.0
    %6432 = vmatpush1.msra.mxu0 0.0
    %6433 = vmatprep.subr.mxu0 0.0
    %6434 = vmatpush1.msra.mxu0 0.0
    %6435 = vmatprep.subr.mxu0 0.0
    %6436 = vmatpush1.msra.mxu0 0.0
    %6437 = vmatprep.subr.mxu0 0.0
    %6438 = vmatpush1.msra.mxu0 0.0
    %6439 = vmatprep.subr.mxu0 0.0
    %6440 = vmatpush1.msra.mxu0 0.0
    %6441 = vmatprep.subr.mxu0 0.0
    %6442 = vmatpush1.msra.mxu0 0.0
    %6443 = vmatprep.subr.mxu0 0.0
    %6444 = vmatpush1.msra.mxu0 0.0
    %6445 = vmatprep.subr.mxu0 0.0
    %6446 = vmatpush1.msra.mxu0 0.0
    %6447 = vmatprep.subr.mxu0 0.0
    %6448 = vmatpush1.msra.mxu0 0.0
    %6449 = vmatprep.subr.mxu0 0.0
    %6450 = vmatpush1.msra.mxu0 0.0
    %6451 = vmatprep.subr.mxu0 0.0
    %6452 = vmatpush1.msra.mxu0 0.0
    %6453 = vmatprep.subr.mxu0 0.0
    %6454 = vmatpush1.msra.mxu0 0.0
    %6455 = vmatprep.subr.mxu0 0.0
    %6456 = vmatpush1.msra.mxu0 0.0
    %6457 = vmatprep.subr.mxu0 0.0
    %6458 = vmatpush1.msra.mxu0 0.0
    %6459 = vmatprep.subr.mxu0 0.0
    %6460 = vmatpush1.msra.mxu0 0.0
    %6461 = vmatprep.subr.mxu0 0.0
    %6462 = vmatpush1.msra.mxu0 0.0
    %6463 = vmatprep.subr.mxu0 0.0
    %6464 = vmatpush1.msra.mxu0 0.0
    %6465 = vmatprep.subr.mxu0 0.0
    %6466 = vmatpush1.msra.mxu0 0.0
    %6467 = vmatprep.subr.mxu0 0.0
    %6468 = vmatpush1.msra.mxu0 0.0
    %6469 = vmatprep.subr.mxu0 0.0
    %6470 = vmatpush1.msra.mxu0 0.0
    %6471 = vmatprep.mubr.f32.mxu0 0.0
    %6472 = vmatmul.mubr.f32.gmra.mrb[0].mxu0 %v3963
    %v6473 = vpop.f32.mrb[0].mxu0
    %v6474 = vadd.f32 %v6405, %v6473
    %v6475 = vpop.f32.mrb[0].mxu0
    %6476 = vmatprep.mubr.f32.mxu0 0.0
    %6477 = vmatmul.mubr.f32.gmra.mrb[0].mxu0 %v3966
    %v6478 = vpop.f32.mrb[0].mxu0
    %v6479 = vadd.f32 %v6405, %v6478
    %v6480 = vpop.f32.mrb[0].mxu0
    %6481 = vmatprep.mubr.f32.mxu0 0.0
    %6482 = vmatmul.mubr.f32.gmra.mrb[0].mxu0 %v3969
    %v6483 = vpop.f32.mrb[0].mxu0
    %v6484 = vadd.f32 %v6405, %v6483
    %v6485 = vpop.f32.mrb[0].mxu0
    %6486 = vmatprep.mubr.f32.mxu0 0.0
    %6487 = vmatmul.mubr.f32.gmra.mrb[0].mxu0 %v3972
    %v6488 = vpop.f32.mrb[0].mxu0
    %v6489 = vadd.f32 %v6405, %v6488
    %v6490 = vpop.f32.mrb[0].mxu0
    %6491 = vdwg.mxu0
    %s6492 = scalar_lea.vmem %s10, 224
    %v6493 = vld [vmem:[%s6492] sm:$0xff]
    %v6494 = vld [vmem:[%s6492 + $0x8] sm:$0xff]
    %v6495 = vld [vmem:[%s6492 + $0x10] sm:$0xff]
    %v6496 = vld [vmem:[%s6492 + $0x18] sm:$0xff]
    %s6497 = scalar_lea.vmem %s11, 7
    %v6498 = vld [vmem:[%s6497] sm:$0x1]
    %v6500 = vlaneseq
    %v6501 = vshrl.u32 %v6500, 7
    %v6502 = vsub.s32 0, %v6501
    %v6503 = vrot.slane %v6498, %v6502
    %6505 = vmatprep.subr.mxu0 0.0
    %6506 = vmatpush1.msra.mxu0 %v6493
    %6507 = vmatprep.subr.mxu0 0.0
    %6508 = vmatpush1.msra.mxu0 %v6494
    %6509 = vmatprep.subr.mxu0 0.0
    %6510 = vmatpush1.msra.mxu0 %v6495
    %6511 = vmatprep.subr.mxu0 0.0
    %6512 = vmatpush1.msra.mxu0 %v6496
    %6513 = vmatprep.subr.mxu0 0.0
    %6514 = vmatpush1.msra.mxu0 0.0
    %6515 = vmatprep.subr.mxu0 0.0
    %6516 = vmatpush1.msra.mxu0 0.0
    %6517 = vmatprep.subr.mxu0 0.0
    %6518 = vmatpush1.msra.mxu0 0.0
    %6519 = vmatprep.subr.mxu0 0.0
    %6520 = vmatpush1.msra.mxu0 0.0
    %6521 = vmatprep.subr.mxu0 0.0
    %6522 = vmatpush1.msra.mxu0 0.0
    %6523 = vmatprep.subr.mxu0 0.0
    %6524 = vmatpush1.msra.mxu0 0.0
    %6525 = vmatprep.subr.mxu0 0.0
    %6526 = vmatpush1.msra.mxu0 0.0
    %6527 = vmatprep.subr.mxu0 0.0
    %6528 = vmatpush1.msra.mxu0 0.0
    %6529 = vmatprep.subr.mxu0 0.0
    %6530 = vmatpush1.msra.mxu0 0.0
    %6531 = vmatprep.subr.mxu0 0.0
    %6532 = vmatpush1.msra.mxu0 0.0
    %6533 = vmatprep.subr.mxu0 0.0
    %6534 = vmatpush1.msra.mxu0 0.0
    %6535 = vmatprep.subr.mxu0 0.0
    %6536 = vmatpush1.msra.mxu0 0.0
    %6537 = vmatprep.subr.mxu0 0.0
    %6538 = vmatpush1.msra.mxu0 0.0
    %6539 = vmatprep.subr.mxu0 0.0
    %6540 = vmatpush1.msra.mxu0 0.0
    %6541 = vmatprep.subr.mxu0 0.0
    %6542 = vmatpush1.msra.mxu0 0.0
    %6543 = vmatprep.subr.mxu0 0.0
    %6544 = vmatpush1.msra.mxu0 0.0
    %6545 = vmatprep.subr.mxu0 0.0
    %6546 = vmatpush1.msra.mxu0 0.0
    %6547 = vmatprep.subr.mxu0 0.0
    %6548 = vmatpush1.msra.mxu0 0.0
    %6549 = vmatprep.subr.mxu0 0.0
    %6550 = vmatpush1.msra.mxu0 0.0
    %6551 = vmatprep.subr.mxu0 0.0
    %6552 = vmatpush1.msra.mxu0 0.0
    %6553 = vmatprep.subr.mxu0 0.0
    %6554 = vmatpush1.msra.mxu0 0.0
    %6555 = vmatprep.subr.mxu0 0.0
    %6556 = vmatpush1.msra.mxu0 0.0
    %6557 = vmatprep.subr.mxu0 0.0
    %6558 = vmatpush1.msra.mxu0 0.0
    %6559 = vmatprep.subr.mxu0 0.0
    %6560 = vmatpush1.msra.mxu0 0.0
    %6561 = vmatprep.subr.mxu0 0.0
    %6562 = vmatpush1.msra.mxu0 0.0
    %6563 = vmatprep.subr.mxu0 0.0
    %6564 = vmatpush1.msra.mxu0 0.0
    %6565 = vmatprep.subr.mxu0 0.0
    %6566 = vmatpush1.msra.mxu0 0.0
    %6567 = vmatprep.subr.mxu0 0.0
    %6568 = vmatpush1.msra.mxu0 0.0
    %6569 = vmatprep.mubr.f32.mxu0 0.0
    %6570 = vmatmul.mubr.f32.gmra.mrb[0].mxu0 %v3963
    %v6571 = vpop.f32.mrb[0].mxu0
    %v6572 = vadd.f32 %v6503, %v6571
    %v6573 = vpop.f32.mrb[0].mxu0
    %6574 = vmatprep.mubr.f32.mxu0 0.0
    %6575 = vmatmul.mubr.f32.gmra.mrb[0].mxu0 %v3966
    %v6576 = vpop.f32.mrb[0].mxu0
    %v6577 = vadd.f32 %v6503, %v6576
    %v6578 = vpop.f32.mrb[0].mxu0
    %6579 = vmatprep.mubr.f32.mxu0 0.0
    %6580 = vmatmul.mubr.f32.gmra.mrb[0].mxu0 %v3969
    %v6581 = vpop.f32.mrb[0].mxu0
    %v6582 = vadd.f32 %v6503, %v6581
    %v6583 = vpop.f32.mrb[0].mxu0
    %6584 = vmatprep.mubr.f32.mxu0 0.0
    %6585 = vmatmul.mubr.f32.gmra.mrb[0].mxu0 %v3972
    %v6586 = vpop.f32.mrb[0].mxu0
    %v6587 = vadd.f32 %v6503, %v6586
    %v6588 = vpop.f32.mrb[0].mxu0
    %6589 = vdwg.mxu0
    %v6591 = vsel %vm705, %v6376, 0
    %v6594 = vsel %vm705, %v6381, 0
    %v6597 = vsel %vm705, %v6474, 0
    %v6600 = vsel %vm705, %v6479, 0
    %6602 = vmatprep.subr.mxu0 0.0
    %6603 = vmatpush1.xpose.msra.mxu0 %v6597
    %6604 = vmatprep.subr.mxu0 0.0
    %6605 = vmatpush1.xpose.msra.mxu0 %v6600
    %6606 = vmatprep.subr.mxu0 0.0
    %6607 = vmatpush1.xpose.msra.mxu0 0.0
    %6608 = vmatprep.subr.mxu0 0.0
    %6609 = vmatpush1.xpose.msra.mxu0 0.0
    %6610 = vmatprep.subr.mxu0 0.0
    %6611 = vmatpush1.xpose.msra.mxu0 0.0
    %6612 = vmatprep.subr.mxu0 0.0
    %6613 = vmatpush1.xpose.msra.mxu0 0.0
    %6614 = vmatprep.subr.mxu0 0.0
    %6615 = vmatpush1.xpose.msra.mxu0 0.0
    %6616 = vmatprep.subr.mxu0 0.0
    %6617 = vmatpush1.xpose.msra.mxu0 0.0
    %6618 = vmatprep.subr.mxu0 0.0
    %6619 = vmatpush1.xpose.msra.mxu0 0.0
    %6620 = vmatprep.subr.mxu0 0.0
    %6621 = vmatpush1.xpose.msra.mxu0 0.0
    %6622 = vmatprep.subr.mxu0 0.0
    %6623 = vmatpush1.xpose.msra.mxu0 0.0
    %6624 = vmatprep.subr.mxu0 0.0
    %6625 = vmatpush1.xpose.msra.mxu0 0.0
    %6626 = vmatprep.subr.mxu0 0.0
    %6627 = vmatpush1.xpose.msra.mxu0 0.0
    %6628 = vmatprep.subr.mxu0 0.0
    %6629 = vmatpush1.xpose.msra.mxu0 0.0
    %6630 = vmatprep.subr.mxu0 0.0
    %6631 = vmatpush1.xpose.msra.mxu0 0.0
    %6632 = vmatprep.subr.mxu0 0.0
    %6633 = vmatpush1.xpose.msra.mxu0 0.0
    %6634 = vmatprep.subr.mxu0 0.0
    %6635 = vmatpush1.xpose.msra.mxu0 0.0
    %6636 = vmatprep.subr.mxu0 0.0
    %6637 = vmatpush1.xpose.msra.mxu0 0.0
    %6638 = vmatprep.subr.mxu0 0.0
    %6639 = vmatpush1.xpose.msra.mxu0 0.0
    %6640 = vmatprep.subr.mxu0 0.0
    %6641 = vmatpush1.xpose.msra.mxu0 0.0
    %6642 = vmatprep.subr.mxu0 0.0
    %6643 = vmatpush1.xpose.msra.mxu0 0.0
    %6644 = vmatprep.subr.mxu0 0.0
    %6645 = vmatpush1.xpose.msra.mxu0 0.0
    %6646 = vmatprep.subr.mxu0 0.0
    %6647 = vmatpush1.xpose.msra.mxu0 0.0
    %6648 = vmatprep.subr.mxu0 0.0
    %6649 = vmatpush1.xpose.msra.mxu0 0.0
    %6650 = vmatprep.subr.mxu0 0.0
    %6651 = vmatpush1.xpose.msra.mxu0 0.0
    %6652 = vmatprep.subr.mxu0 0.0
    %6653 = vmatpush1.xpose.msra.mxu0 0.0
    %6654 = vmatprep.subr.mxu0 0.0
    %6655 = vmatpush1.xpose.msra.mxu0 0.0
    %6656 = vmatprep.subr.mxu0 0.0
    %6657 = vmatpush1.xpose.msra.mxu0 0.0
    %6658 = vmatprep.subr.mxu0 0.0
    %6659 = vmatpush1.xpose.msra.mxu0 0.0
    %6660 = vmatprep.subr.mxu0 0.0
    %6661 = vmatpush1.xpose.msra.mxu0 0.0
    %6662 = vmatprep.subr.mxu0 0.0
    %6663 = vmatpush1.xpose.msra.mxu0 0.0
    %6664 = vmatprep.subr.mxu0 0.0
    %6665 = vmatpush1.xpose.msra.mxu0 0.0
    %6666 = vmatprep.mubr.f32.mxu0 0.0
    %6667 = vmatmul.mubr.f32.gmra.mrb[0].mxu0 %v6591
    %v6668 = vpop.f32.mrb[0].mxu0
    %v6669 = vadd.f32 0.0, %v6668
    %v6670 = vpop.f32.mrb[0].mxu0
    %6671 = vmatprep.mubr.f32.mxu0 0.0
    %6672 = vmatmul.mubr.f32.gmra.mrb[0].mxu0 %v6594
    %v6673 = vpop.f32.mrb[0].mxu0
    %v6674 = vadd.f32 0.0, %v6673
    %v6675 = vpop.f32.mrb[0].mxu0
    %6676 = vdwg.mxu0
    %v6678 = vsel %vm705, %v6386, 0
    %v6681 = vsel %vm705, %v6391, 0
    %v6684 = vsel %vm705, %v6484, 0
    %v6687 = vsel %vm705, %v6489, 0
    %6689 = vmatprep.subr.mxu0 0.0
    %6690 = vmatpush1.xpose.msra.mxu0 %v6684
    %6691 = vmatprep.subr.mxu0 0.0
    %6692 = vmatpush1.xpose.msra.mxu0 %v6687
    %6693 = vmatprep.subr.mxu0 0.0
    %6694 = vmatpush1.xpose.msra.mxu0 0.0
    %6695 = vmatprep.subr.mxu0 0.0
    %6696 = vmatpush1.xpose.msra.mxu0 0.0
    %6697 = vmatprep.subr.mxu0 0.0
    %6698 = vmatpush1.xpose.msra.mxu0 0.0
    %6699 = vmatprep.subr.mxu0 0.0
    %6700 = vmatpush1.xpose.msra.mxu0 0.0
    %6701 = vmatprep.subr.mxu0 0.0
    %6702 = vmatpush1.xpose.msra.mxu0 0.0
    %6703 = vmatprep.subr.mxu0 0.0
    %6704 = vmatpush1.xpose.msra.mxu0 0.0
    %6705 = vmatprep.subr.mxu0 0.0
    %6706 = vmatpush1.xpose.msra.mxu0 0.0
    %6707 = vmatprep.subr.mxu0 0.0
    %6708 = vmatpush1.xpose.msra.mxu0 0.0
    %6709 = vmatprep.subr.mxu0 0.0
    %6710 = vmatpush1.xpose.msra.mxu0 0.0
    %6711 = vmatprep.subr.mxu0 0.0
    %6712 = vmatpush1.xpose.msra.mxu0 0.0
    %6713 = vmatprep.subr.mxu0 0.0
    %6714 = vmatpush1.xpose.msra.mxu0 0.0
    %6715 = vmatprep.subr.mxu0 0.0
    %6716 = vmatpush1.xpose.msra.mxu0 0.0
    %6717 = vmatprep.subr.mxu0 0.0
    %6718 = vmatpush1.xpose.msra.mxu0 0.0
    %6719 = vmatprep.subr.mxu0 0.0
    %6720 = vmatpush1.xpose.msra.mxu0 0.0
    %6721 = vmatprep.subr.mxu0 0.0
    %6722 = vmatpush1.xpose.msra.mxu0 0.0
    %6723 = vmatprep.subr.mxu0 0.0
    %6724 = vmatpush1.xpose.msra.mxu0 0.0
    %6725 = vmatprep.subr.mxu0 0.0
    %6726 = vmatpush1.xpose.msra.mxu0 0.0
    %6727 = vmatprep.subr.mxu0 0.0
    %6728 = vmatpush1.xpose.msra.mxu0 0.0
    %6729 = vmatprep.subr.mxu0 0.0
    %6730 = vmatpush1.xpose.msra.mxu0 0.0
    %6731 = vmatprep.subr.mxu0 0.0
    %6732 = vmatpush1.xpose.msra.mxu0 0.0
    %6733 = vmatprep.subr.mxu0 0.0
    %6734 = vmatpush1.xpose.msra.mxu0 0.0
    %6735 = vmatprep.subr.mxu0 0.0
    %6736 = vmatpush1.xpose.msra.mxu0 0.0
    %6737 = vmatprep.subr.mxu0 0.0
    %6738 = vmatpush1.xpose.msra.mxu0 0.0
    %6739 = vmatprep.subr.mxu0 0.0
    %6740 = vmatpush1.xpose.msra.mxu0 0.0
    %6741 = vmatprep.subr.mxu0 0.0
    %6742 = vmatpush1.xpose.msra.mxu0 0.0
    %6743 = vmatprep.subr.mxu0 0.0
    %6744 = vmatpush1.xpose.msra.mxu0 0.0
    %6745 = vmatprep.subr.mxu0 0.0
    %6746 = vmatpush1.xpose.msra.mxu0 0.0
    %6747 = vmatprep.subr.mxu0 0.0
    %6748 = vmatpush1.xpose.msra.mxu0 0.0
    %6749 = vmatprep.subr.mxu0 0.0
    %6750 = vmatpush1.xpose.msra.mxu0 0.0
    %6751 = vmatprep.subr.mxu0 0.0
    %6752 = vmatpush1.xpose.msra.mxu0 0.0
    %6753 = vmatprep.mubr.f32.mxu0 0.0
    %6754 = vmatmul.mubr.f32.gmra.mrb[0].mxu0 %v6678
    %v6755 = vpop.f32.mrb[0].mxu0
    %v6756 = vadd.f32 0.0, %v6755
    %v6757 = vpop.f32.mrb[0].mxu0
    %6758 = vmatprep.mubr.f32.mxu0 0.0
    %6759 = vmatmul.mubr.f32.gmra.mrb[0].mxu0 %v6681
    %v6760 = vpop.f32.mrb[0].mxu0
    %v6761 = vadd.f32 0.0, %v6760
    %v6762 = vpop.f32.mrb[0].mxu0
    %6763 = vdwg.mxu0
    %v6764 = vmul.f32 %v6669, 0.35355338
    %v6765 = vmul.f32 %v6674, 0.35355338
    %v6766 = vmul.f32 %v6756, 0.35355338
    %v6767 = vmul.f32 %v6761, 0.35355338
    %v6768 = vsel %vm884, %v6764, -inf
    %6769 = vmax.xlane.f32.xlu0 %v6768
    %v6770 = vpop.xlane.xlu0 %6769
    %v6771 = vsel %vm884, %v6765, -inf
    %6772 = vmax.xlane.f32.xlu0 %v6771
    %v6773 = vpop.xlane.xlu0 %6772
    %v6774 = vsel %vm884, %v6766, -inf
    %6775 = vmax.xlane.f32.xlu0 %v6774
    %v6776 = vpop.xlane.xlu0 %6775
    %v6777 = vsel %vm884, %v6767, -inf
    %6778 = vmax.xlane.f32.xlu0 %v6777
    %v6779 = vpop.xlane.xlu0 %6778
    %v6780 = vsub.f32 %v6764, %v6770
    %v6781 = vsub.f32 %v6765, %v6773
    %v6782 = vsub.f32 %v6766, %v6776
    %v6783 = vsub.f32 %v6767, %v6779
    %v6784 = vmul.f32 %v6780, 1.442695
    %v6785 = vpow.pop %v6784
    %v6786 = vmul.f32 %v6781, 1.442695
    %v6787 = vpow.pop %v6786
    %v6788 = vmul.f32 %v6782, 1.442695
    %v6789 = vpow.pop %v6788
    %v6790 = vmul.f32 %v6783, 1.442695
    %v6791 = vpow.pop %v6790
    %v6792 = vsel %vm884, %v6785, 0.0
    %6793 = vadd.xlane.f32.xlu0 %v6792
    %v6794 = vpop.xlane.xlu0 %6793
    %v6795 = vsel %vm884, %v6787, 0.0
    %6796 = vadd.xlane.f32.xlu0 %v6795
    %v6797 = vpop.xlane.xlu0 %6796
    %v6798 = vsel %vm884, %v6789, 0.0
    %6799 = vadd.xlane.f32.xlu0 %v6798
    %v6800 = vpop.xlane.xlu0 %6799
    %v6801 = vsel %vm884, %v6791, 0.0
    %6802 = vadd.xlane.f32.xlu0 %v6801
    %v6803 = vpop.xlane.xlu0 %6802
    %v6804 = vrcp.pop %v6794
    %v6805 = vrcp.pop %v6797
    %v6806 = vrcp.pop %v6800
    %v6807 = vrcp.pop %v6803
    %v6808 = vmul.f32 %v6785, %v6804
    %v6809 = vmul.f32 %v6787, %v6805
    %v6810 = vmul.f32 %v6789, %v6806
    %v6811 = vmul.f32 %v6791, %v6807
    %v6813 = vsel %vm884, %v6808, 0
    %v6816 = vsel %vm884, %v6809, 0
    %6818 = vmatprep.subr.mxu0 0.0
    %6819 = vmatpush1.msra.mxu0 %v6572
    %6820 = vmatprep.subr.mxu0 0.0
    %6821 = vmatpush1.msra.mxu0 %v6577
    %6822 = vmatprep.subr.mxu0 0.0
    %6823 = vmatpush1.msra.mxu0 0.0
    %6824 = vmatprep.subr.mxu0 0.0
    %6825 = vmatpush1.msra.mxu0 0.0
    %6826 = vmatprep.subr.mxu0 0.0
    %6827 = vmatpush1.msra.mxu0 0.0
    %6828 = vmatprep.subr.mxu0 0.0
    %6829 = vmatpush1.msra.mxu0 0.0
    %6830 = vmatprep.subr.mxu0 0.0
    %6831 = vmatpush1.msra.mxu0 0.0
    %6832 = vmatprep.subr.mxu0 0.0
    %6833 = vmatpush1.msra.mxu0 0.0
    %6834 = vmatprep.subr.mxu0 0.0
    %6835 = vmatpush1.msra.mxu0 0.0
    %6836 = vmatprep.subr.mxu0 0.0
    %6837 = vmatpush1.msra.mxu0 0.0
    %6838 = vmatprep.subr.mxu0 0.0
    %6839 = vmatpush1.msra.mxu0 0.0
    %6840 = vmatprep.subr.mxu0 0.0
    %6841 = vmatpush1.msra.mxu0 0.0
    %6842 = vmatprep.subr.mxu0 0.0
    %6843 = vmatpush1.msra.mxu0 0.0
    %6844 = vmatprep.subr.mxu0 0.0
    %6845 = vmatpush1.msra.mxu0 0.0
    %6846 = vmatprep.subr.mxu0 0.0
    %6847 = vmatpush1.msra.mxu0 0.0
    %6848 = vmatprep.subr.mxu0 0.0
    %6849 = vmatpush1.msra.mxu0 0.0
    %6850 = vmatprep.subr.mxu0 0.0
    %6851 = vmatpush1.msra.mxu0 0.0
    %6852 = vmatprep.subr.mxu0 0.0
    %6853 = vmatpush1.msra.mxu0 0.0
    %6854 = vmatprep.subr.mxu0 0.0
    %6855 = vmatpush1.msra.mxu0 0.0
    %6856 = vmatprep.subr.mxu0 0.0
    %6857 = vmatpush1.msra.mxu0 0.0
    %6858 = vmatprep.subr.mxu0 0.0
    %6859 = vmatpush1.msra.mxu0 0.0
    %6860 = vmatprep.subr.mxu0 0.0
    %6861 = vmatpush1.msra.mxu0 0.0
    %6862 = vmatprep.subr.mxu0 0.0
    %6863 = vmatpush1.msra.mxu0 0.0
    %6864 = vmatprep.subr.mxu0 0.0
    %6865 = vmatpush1.msra.mxu0 0.0
    %6866 = vmatprep.subr.mxu0 0.0
    %6867 = vmatpush1.msra.mxu0 0.0
    %6868 = vmatprep.subr.mxu0 0.0
    %6869 = vmatpush1.msra.mxu0 0.0
    %6870 = vmatprep.subr.mxu0 0.0
    %6871 = vmatpush1.msra.mxu0 0.0
    %6872 = vmatprep.subr.mxu0 0.0
    %6873 = vmatpush1.msra.mxu0 0.0
    %6874 = vmatprep.subr.mxu0 0.0
    %6875 = vmatpush1.msra.mxu0 0.0
    %6876 = vmatprep.subr.mxu0 0.0
    %6877 = vmatpush1.msra.mxu0 0.0
    %6878 = vmatprep.subr.mxu0 0.0
    %6879 = vmatpush1.msra.mxu0 0.0
    %6880 = vmatprep.subr.mxu0 0.0
    %6881 = vmatpush1.msra.mxu0 0.0
    %6882 = vmatprep.mubr.f32.mxu0 0.0
    %6883 = vmatmul.mubr.f32.gmra.mrb[0].mxu0 %v6813
    %v6884 = vpop.f32.mrb[0].mxu0
    %v6885 = vadd.f32 0.0, %v6884
    %v6886 = vpop.f32.mrb[0].mxu0
    %6887 = vmatprep.mubr.f32.mxu0 0.0
    %6888 = vmatmul.mubr.f32.gmra.mrb[0].mxu0 %v6816
    %v6889 = vpop.f32.mrb[0].mxu0
    %v6890 = vadd.f32 0.0, %v6889
    %v6891 = vpop.f32.mrb[0].mxu0
    %6892 = vdwg.mxu0
    %v6894 = vsel %vm884, %v6810, 0
    %v6897 = vsel %vm884, %v6811, 0
    %6899 = vmatprep.subr.mxu0 0.0
    %6900 = vmatpush1.msra.mxu0 %v6582
    %6901 = vmatprep.subr.mxu0 0.0
    %6902 = vmatpush1.msra.mxu0 %v6587
    %6903 = vmatprep.subr.mxu0 0.0
    %6904 = vmatpush1.msra.mxu0 0.0
    %6905 = vmatprep.subr.mxu0 0.0
    %6906 = vmatpush1.msra.mxu0 0.0
    %6907 = vmatprep.subr.mxu0 0.0
    %6908 = vmatpush1.msra.mxu0 0.0
    %6909 = vmatprep.subr.mxu0 0.0
    %6910 = vmatpush1.msra.mxu0 0.0
    %6911 = vmatprep.subr.mxu0 0.0
    %6912 = vmatpush1.msra.mxu0 0.0
    %6913 = vmatprep.subr.mxu0 0.0
    %6914 = vmatpush1.msra.mxu0 0.0
    %6915 = vmatprep.subr.mxu0 0.0
    %6916 = vmatpush1.msra.mxu0 0.0
    %6917 = vmatprep.subr.mxu0 0.0
    %6918 = vmatpush1.msra.mxu0 0.0
    %6919 = vmatprep.subr.mxu0 0.0
    %6920 = vmatpush1.msra.mxu0 0.0
    %6921 = vmatprep.subr.mxu0 0.0
    %6922 = vmatpush1.msra.mxu0 0.0
    %6923 = vmatprep.subr.mxu0 0.0
    %6924 = vmatpush1.msra.mxu0 0.0
    %6925 = vmatprep.subr.mxu0 0.0
    %6926 = vmatpush1.msra.mxu0 0.0
    %6927 = vmatprep.subr.mxu0 0.0
    %6928 = vmatpush1.msra.mxu0 0.0
    %6929 = vmatprep.subr.mxu0 0.0
    %6930 = vmatpush1.msra.mxu0 0.0
    %6931 = vmatprep.subr.mxu0 0.0
    %6932 = vmatpush1.msra.mxu0 0.0
    %6933 = vmatprep.subr.mxu0 0.0
    %6934 = vmatpush1.msra.mxu0 0.0
    %6935 = vmatprep.subr.mxu0 0.0
    %6936 = vmatpush1.msra.mxu0 0.0
    %6937 = vmatprep.subr.mxu0 0.0
    %6938 = vmatpush1.msra.mxu0 0.0
    %6939 = vmatprep.subr.mxu0 0.0
    %6940 = vmatpush1.msra.mxu0 0.0
    %6941 = vmatprep.subr.mxu0 0.0
    %6942 = vmatpush1.msra.mxu0 0.0
    %6943 = vmatprep.subr.mxu0 0.0
    %6944 = vmatpush1.msra.mxu0 0.0
    %6945 = vmatprep.subr.mxu0 0.0
    %6946 = vmatpush1.msra.mxu0 0.0
    %6947 = vmatprep.subr.mxu0 0.0
    %6948 = vmatpush1.msra.mxu0 0.0
    %6949 = vmatprep.subr.mxu0 0.0
    %6950 = vmatpush1.msra.mxu0 0.0
    %6951 = vmatprep.subr.mxu0 0.0
    %6952 = vmatpush1.msra.mxu0 0.0
    %6953 = vmatprep.subr.mxu0 0.0
    %6954 = vmatpush1.msra.mxu0 0.0
    %6955 = vmatprep.subr.mxu0 0.0
    %6956 = vmatpush1.msra.mxu0 0.0
    %6957 = vmatprep.subr.mxu0 0.0
    %6958 = vmatpush1.msra.mxu0 0.0
    %6959 = vmatprep.subr.mxu0 0.0
    %6960 = vmatpush1.msra.mxu0 0.0
    %6961 = vmatprep.subr.mxu0 0.0
    %6962 = vmatpush1.msra.mxu0 0.0
    %6963 = vmatprep.mubr.f32.mxu0 0.0
    %6964 = vmatmul.mubr.f32.gmra.mrb[0].mxu0 %v6894
    %v6965 = vpop.f32.mrb[0].mxu0
    %v6966 = vadd.f32 0.0, %v6965
    %v6967 = vpop.f32.mrb[0].mxu0
    %6968 = vmatprep.mubr.f32.mxu0 0.0
    %6969 = vmatmul.mubr.f32.gmra.mrb[0].mxu0 %v6897
    %v6970 = vpop.f32.mrb[0].mxu0
    %v6971 = vadd.f32 0.0, %v6970
    %v6972 = vpop.f32.mrb[0].mxu0
    %6973 = vdwg.mxu0
    %s6974 = scalar_lea.vmem %s12, 56
    %v6975 = vld [vmem:[%s6974] sm:$0xff]
    %v6977 = vsel %vm705, %v6885, 0
    %v6980 = vsel %vm705, %v6890, 0
    %v6983 = vsel %vm705, %v6966, 0
    %v6986 = vsel %vm705, %v6971, 0
    %6988 = vmatprep.subr.mxu0 0.0
    %6989 = vmatpush1.msra.mxu0 %v6975
    %6990 = vmatprep.subr.mxu0 0.0
    %6991 = vmatpush1.msra.mxu0 0.0
    %6992 = vmatprep.subr.mxu0 0.0
    %6993 = vmatpush1.msra.mxu0 0.0
    %6994 = vmatprep.subr.mxu0 0.0
    %6995 = vmatpush1.msra.mxu0 0.0
    %6996 = vmatprep.subr.mxu0 0.0
    %6997 = vmatpush1.msra.mxu0 0.0
    %6998 = vmatprep.subr.mxu0 0.0
    %6999 = vmatpush1.msra.mxu0 0.0
    %7000 = vmatprep.subr.mxu0 0.0
    %7001 = vmatpush1.msra.mxu0 0.0
    %7002 = vmatprep.subr.mxu0 0.0
    %7003 = vmatpush1.msra.mxu0 0.0
    %7004 = vmatprep.subr.mxu0 0.0
    %7005 = vmatpush1.msra.mxu0 0.0
    %7006 = vmatprep.subr.mxu0 0.0
    %7007 = vmatpush1.msra.mxu0 0.0
    %7008 = vmatprep.subr.mxu0 0.0
    %7009 = vmatpush1.msra.mxu0 0.0
    %7010 = vmatprep.subr.mxu0 0.0
    %7011 = vmatpush1.msra.mxu0 0.0
    %7012 = vmatprep.subr.mxu0 0.0
    %7013 = vmatpush1.msra.mxu0 0.0
    %7014 = vmatprep.subr.mxu0 0.0
    %7015 = vmatpush1.msra.mxu0 0.0
    %7016 = vmatprep.subr.mxu0 0.0
    %7017 = vmatpush1.msra.mxu0 0.0
    %7018 = vmatprep.subr.mxu0 0.0
    %7019 = vmatpush1.msra.mxu0 0.0
    %7020 = vmatprep.subr.mxu0 0.0
    %7021 = vmatpush1.msra.mxu0 0.0
    %7022 = vmatprep.subr.mxu0 0.0
    %7023 = vmatpush1.msra.mxu0 0.0
    %7024 = vmatprep.subr.mxu0 0.0
    %7025 = vmatpush1.msra.mxu0 0.0
    %7026 = vmatprep.subr.mxu0 0.0
    %7027 = vmatpush1.msra.mxu0 0.0
    %7028 = vmatprep.subr.mxu0 0.0
    %7029 = vmatpush1.msra.mxu0 0.0
    %7030 = vmatprep.subr.mxu0 0.0
    %7031 = vmatpush1.msra.mxu0 0.0
    %7032 = vmatprep.subr.mxu0 0.0
    %7033 = vmatpush1.msra.mxu0 0.0
    %7034 = vmatprep.subr.mxu0 0.0
    %7035 = vmatpush1.msra.mxu0 0.0
    %7036 = vmatprep.subr.mxu0 0.0
    %7037 = vmatpush1.msra.mxu0 0.0
    %7038 = vmatprep.subr.mxu0 0.0
    %7039 = vmatpush1.msra.mxu0 0.0
    %7040 = vmatprep.subr.mxu0 0.0
    %7041 = vmatpush1.msra.mxu0 0.0
    %7042 = vmatprep.subr.mxu0 0.0
    %7043 = vmatpush1.msra.mxu0 0.0
    %7044 = vmatprep.subr.mxu0 0.0
    %7045 = vmatpush1.msra.mxu0 0.0
    %7046 = vmatprep.subr.mxu0 0.0
    %7047 = vmatpush1.msra.mxu0 0.0
    %7048 = vmatprep.subr.mxu0 0.0
    %7049 = vmatpush1.msra.mxu0 0.0
    %7050 = vmatprep.subr.mxu0 0.0
    %7051 = vmatpush1.msra.mxu0 0.0
    %7052 = vmatprep.mubr.f32.mxu0 0.0
    %7053 = vmatmul.mubr.f32.gmra.mrb[0].mxu0 %v6977
    %v7054 = vpop.f32.mrb[0].mxu0
    %v7055 = vadd.f32 0.0, %v7054
    %v7056 = vpop.f32.mrb[0].mxu0
    %7057 = vmatprep.mubr.f32.mxu0 0.0
    %7058 = vmatmul.mubr.f32.gmra.mrb[0].mxu0 %v6980
    %v7059 = vpop.f32.mrb[0].mxu0
    %v7060 = vadd.f32 0.0, %v7059
    %v7061 = vpop.f32.mrb[0].mxu0
    %7062 = vmatprep.mubr.f32.mxu0 0.0
    %7063 = vmatmul.mubr.f32.gmra.mrb[0].mxu0 %v6983
    %v7064 = vpop.f32.mrb[0].mxu0
    %v7065 = vadd.f32 0.0, %v7064
    %v7066 = vpop.f32.mrb[0].mxu0
    %7067 = vmatprep.mubr.f32.mxu0 0.0
    %7068 = vmatmul.mubr.f32.gmra.mrb[0].mxu0 %v6986
    %v7069 = vpop.f32.mrb[0].mxu0
    %v7070 = vadd.f32 0.0, %v7069
    %v7071 = vpop.f32.mrb[0].mxu0
    %7072 = vdwg.mxu0
    %v7073 = vadd.f32 %v6292, %v7055
    %v7074 = vadd.f32 %v6293, %v7060
    %v7075 = vadd.f32 %v6294, %v7065
    %v7076 = vadd.f32 %v6295, %v7070
    %v7077 = vadd.f32 %v3869, %v7073
    %v7078 = vadd.f32 %v3870, %v7074
    %v7079 = vadd.f32 %v3871, %v7075
    %v7080 = vadd.f32 %v3872, %v7076
    %s7081 = scalar_lea.vmem %s13, 1
    %v7082 = vld [vmem:[%s7081] sm:$0x1]
    %v7084 = vlaneseq
    %v7085 = vshrl.u32 %v7084, 7
    %v7086 = vsub.s32 0, %v7085
    %v7087 = vrot.slane %v7082, %v7086
    %v7089 = vadd.f32 %v7077, %v7087
    %v7090 = vadd.f32 %v7078, %v7087
    %v7091 = vadd.f32 %v7079, %v7087
    %v7092 = vadd.f32 %v7080, %v7087
    %s7093 = scalar_lea.vmem %s14, 1
    %v7094 = vld [vmem:[%s7093] sm:$0x1]
    %s7095 = scalar_lea.vmem %s15, 1
    %v7096 = vld [vmem:[%s7095] sm:$0x1]
    %v7097 = vsel %vm331, %v7089, 0.0
    %7098 = vadd.xlane.f32.xlu0 %v7097
    %v7099 = vpop.xlane.xlu0 %7098
    %v7100 = vsel %vm331, %v7090, 0.0
    %7101 = vadd.xlane.f32.xlu0 %v7100
    %v7102 = vpop.xlane.xlu0 %7101
    %v7103 = vsel %vm331, %v7091, 0.0
    %7104 = vadd.xlane.f32.xlu0 %v7103
    %v7105 = vpop.xlane.xlu0 %7104
    %v7106 = vsel %vm331, %v7092, 0.0
    %7107 = vadd.xlane.f32.xlu0 %v7106
    %v7108 = vpop.xlane.xlu0 %7107
    %v7109 = vmul.f32 %v7099, %v344
    %v7110 = vmul.f32 %v7102, %v344
    %v7111 = vmul.f32 %v7105, %v344
    %v7112 = vmul.f32 %v7108, %v344
    %v7113 = vsub.f32 %v7089, %v7109
    %v7114 = vsub.f32 %v7090, %v7110
    %v7115 = vsub.f32 %v7091, %v7111
    %v7116 = vsub.f32 %v7092, %v7112
    %v7117 = vmul.f32 %v7113, %v7113
    %v7118 = vmul.f32 %v7114, %v7114
    %v7119 = vmul.f32 %v7115, %v7115
    %v7120 = vmul.f32 %v7116, %v7116
    %v7121 = vsel %vm331, %v7117, 0.0
    %7122 = vadd.xlane.f32.xlu0 %v7121
    %v7123 = vpop.xlane.xlu0 %7122
    %v7124 = vsel %vm331, %v7118, 0.0
    %7125 = vadd.xlane.f32.xlu0 %v7124
    %v7126 = vpop.xlane.xlu0 %7125
    %v7127 = vsel %vm331, %v7119, 0.0
    %7128 = vadd.xlane.f32.xlu0 %v7127
    %v7129 = vpop.xlane.xlu0 %7128
    %v7130 = vsel %vm331, %v7120, 0.0
    %7131 = vadd.xlane.f32.xlu0 %v7130
    %v7132 = vpop.xlane.xlu0 %7131
    %v7133 = vmul.f32 %v7123, %v344
    %v7134 = vmul.f32 %v7126, %v344
    %v7135 = vmul.f32 %v7129, %v344
    %v7136 = vmul.f32 %v7132, %v344
    %v7137 = vadd.f32 %v7133, 1e-05
    %v7138 = vadd.f32 %v7134, 1e-05
    %v7139 = vadd.f32 %v7135, 1e-05
    %v7140 = vadd.f32 %v7136, 1e-05
    %v7141 = vrsqrt.pop %v7137
    %v7142 = vrsqrt.pop %v7138
    %v7143 = vrsqrt.pop %v7139
    %v7144 = vrsqrt.pop %v7140
    %v7145 = vmul.f32 %v7113, %v7141
    %v7146 = vmul.f32 %v7114, %v7142
    %v7147 = vmul.f32 %v7115, %v7143
    %v7148 = vmul.f32 %v7116, %v7144
    %v7150 = vlaneseq
    %v7151 = vshrl.u32 %v7150, 7
    %v7152 = vsub.s32 0, %v7151
    %v7153 = vrot.slane %v7094, %v7152
    %v7155 = vmul.f32 %v7145, %v7153
    %v7156 = vmul.f32 %v7146, %v7153
    %v7157 = vmul.f32 %v7147, %v7153
    %v7158 = vmul.f32 %v7148, %v7153
    %v7160 = vlaneseq
    %v7161 = vshrl.u32 %v7160, 7
    %v7162 = vsub.s32 0, %v7161
    %v7163 = vrot.slane %v7096, %v7162
    %v7165 = vadd.f32 %v7155, %v7163
    %v7166 = vadd.f32 %v7156, %v7163
    %v7167 = vadd.f32 %v7157, %v7163
    %v7168 = vadd.f32 %v7158, %v7163
    %s7169 = scalar_lea.vmem %s16, 32
    %v7170 = vld [vmem:[%s7169] sm:$0xff]
    %v7171 = vld [vmem:[%s7169 + $0x8] sm:$0xff]
    %v7172 = vld [vmem:[%s7169 + $0x10] sm:$0xff]
    %v7173 = vld [vmem:[%s7169 + $0x18] sm:$0xff]
    %s7174 = scalar_lea.vmem %s17, 1
    %v7175 = vld [vmem:[%s7174] sm:$0x1]
    %v7177 = vlaneseq
    %v7178 = vshrl.u32 %v7177, 7
    %v7179 = vsub.s32 0, %v7178
    %v7180 = vrot.slane %v7175, %v7179
    %v7183 = vsel %vm331, %v7165, 0
    %v7186 = vsel %vm331, %v7166, 0
    %v7189 = vsel %vm331, %v7167, 0
    %v7192 = vsel %vm331, %v7168, 0
    %7194 = vmatprep.subr.mxu0 0.0
    %7195 = vmatpush1.msra.mxu0 %v7170
    %7196 = vmatprep.subr.mxu0 0.0
    %7197 = vmatpush1.msra.mxu0 %v7171
    %7198 = vmatprep.subr.mxu0 0.0
    %7199 = vmatpush1.msra.mxu0 %v7172
    %7200 = vmatprep.subr.mxu0 0.0
    %7201 = vmatpush1.msra.mxu0 %v7173
    %7202 = vmatprep.subr.mxu0 0.0
    %7203 = vmatpush1.msra.mxu0 0.0
    %7204 = vmatprep.subr.mxu0 0.0
    %7205 = vmatpush1.msra.mxu0 0.0
    %7206 = vmatprep.subr.mxu0 0.0
    %7207 = vmatpush1.msra.mxu0 0.0
    %7208 = vmatprep.subr.mxu0 0.0
    %7209 = vmatpush1.msra.mxu0 0.0
    %7210 = vmatprep.subr.mxu0 0.0
    %7211 = vmatpush1.msra.mxu0 0.0
    %7212 = vmatprep.subr.mxu0 0.0
    %7213 = vmatpush1.msra.mxu0 0.0
    %7214 = vmatprep.subr.mxu0 0.0
    %7215 = vmatpush1.msra.mxu0 0.0
    %7216 = vmatprep.subr.mxu0 0.0
    %7217 = vmatpush1.msra.mxu0 0.0
    %7218 = vmatprep.subr.mxu0 0.0
    %7219 = vmatpush1.msra.mxu0 0.0
    %7220 = vmatprep.subr.mxu0 0.0
    %7221 = vmatpush1.msra.mxu0 0.0
    %7222 = vmatprep.subr.mxu0 0.0
    %7223 = vmatpush1.msra.mxu0 0.0
    %7224 = vmatprep.subr.mxu0 0.0
    %7225 = vmatpush1.msra.mxu0 0.0
    %7226 = vmatprep.subr.mxu0 0.0
    %7227 = vmatpush1.msra.mxu0 0.0
    %7228 = vmatprep.subr.mxu0 0.0
    %7229 = vmatpush1.msra.mxu0 0.0
    %7230 = vmatprep.subr.mxu0 0.0
    %7231 = vmatpush1.msra.mxu0 0.0
    %7232 = vmatprep.subr.mxu0 0.0
    %7233 = vmatpush1.msra.mxu0 0.0
    %7234 = vmatprep.subr.mxu0 0.0
    %7235 = vmatpush1.msra.mxu0 0.0
    %7236 = vmatprep.subr.mxu0 0.0
    %7237 = vmatpush1.msra.mxu0 0.0
    %7238 = vmatprep.subr.mxu0 0.0
    %7239 = vmatpush1.msra.mxu0 0.0
    %7240 = vmatprep.subr.mxu0 0.0
    %7241 = vmatpush1.msra.mxu0 0.0
    %7242 = vmatprep.subr.mxu0 0.0
    %7243 = vmatpush1.msra.mxu0 0.0
    %7244 = vmatprep.subr.mxu0 0.0
    %7245 = vmatpush1.msra.mxu0 0.0
    %7246 = vmatprep.subr.mxu0 0.0
    %7247 = vmatpush1.msra.mxu0 0.0
    %7248 = vmatprep.subr.mxu0 0.0
    %7249 = vmatpush1.msra.mxu0 0.0
    %7250 = vmatprep.subr.mxu0 0.0
    %7251 = vmatpush1.msra.mxu0 0.0
    %7252 = vmatprep.subr.mxu0 0.0
    %7253 = vmatpush1.msra.mxu0 0.0
    %7254 = vmatprep.subr.mxu0 0.0
    %7255 = vmatpush1.msra.mxu0 0.0
    %7256 = vmatprep.subr.mxu0 0.0
    %7257 = vmatpush1.msra.mxu0 0.0
    %7258 = vmatprep.mubr.f32.mxu0 0.0
    %7259 = vmatmul.mubr.f32.gmra.mrb[0].mxu0 %v7183
    %v7260 = vpop.f32.mrb[0].mxu0
    %v7261 = vadd.f32 %v7180, %v7260
    %v7262 = vpop.f32.mrb[0].mxu0
    %7263 = vmatprep.mubr.f32.mxu0 0.0
    %7264 = vmatmul.mubr.f32.gmra.mrb[0].mxu0 %v7186
    %v7265 = vpop.f32.mrb[0].mxu0
    %v7266 = vadd.f32 %v7180, %v7265
    %v7267 = vpop.f32.mrb[0].mxu0
    %7268 = vmatprep.mubr.f32.mxu0 0.0
    %7269 = vmatmul.mubr.f32.gmra.mrb[0].mxu0 %v7189
    %v7270 = vpop.f32.mrb[0].mxu0
    %v7271 = vadd.f32 %v7180, %v7270
    %v7272 = vpop.f32.mrb[0].mxu0
    %7273 = vmatprep.mubr.f32.mxu0 0.0
    %7274 = vmatmul.mubr.f32.gmra.mrb[0].mxu0 %v7192
    %v7275 = vpop.f32.mrb[0].mxu0
    %v7276 = vadd.f32 %v7180, %v7275
    %v7277 = vpop.f32.mrb[0].mxu0
    %7278 = vdwg.mxu0
    %v7279 = vmul.f32 %v7261, 0.5
    %v7280 = vmul.f32 %v7266, 0.5
    %v7281 = vmul.f32 %v7271, 0.5
    %v7282 = vmul.f32 %v7276, 0.5
    %v7283 = vmul.f32 %v7261, 0.044715
    %v7284 = vmul.f32 %v7266, 0.044715
    %v7285 = vmul.f32 %v7271, 0.044715
    %v7286 = vmul.f32 %v7276, 0.044715
    %v7287 = vmul.f32 %v7283, %v7261
    %v7288 = vmul.f32 %v7284, %v7266
    %v7289 = vmul.f32 %v7285, %v7271
    %v7290 = vmul.f32 %v7286, %v7276
    %v7291 = vmul.f32 %v7287, %v7261
    %v7292 = vmul.f32 %v7288, %v7266
    %v7293 = vmul.f32 %v7289, %v7271
    %v7294 = vmul.f32 %v7290, %v7276
    %v7295 = vadd.f32 %v7261, %v7291
    %v7296 = vadd.f32 %v7266, %v7292
    %v7297 = vadd.f32 %v7271, %v7293
    %v7298 = vadd.f32 %v7276, %v7294
    %v7299 = vmul.f32 %v7295, 0.7978846
    %v7300 = vmul.f32 %v7296, 0.7978846
    %v7301 = vmul.f32 %v7297, 0.7978846
    %v7302 = vmul.f32 %v7298, 0.7978846
    %v7303 = vtanh.pop %v7299
    %v7304 = vtanh.pop %v7300
    %v7305 = vtanh.pop %v7301
    %v7306 = vtanh.pop %v7302
    %v7307 = vadd.f32 %v7303, 1.0
    %v7308 = vadd.f32 %v7304, 1.0
    %v7309 = vadd.f32 %v7305, 1.0
    %v7310 = vadd.f32 %v7306, 1.0
    %v7311 = vmul.f32 %v7279, %v7307
    %v7312 = vmul.f32 %v7280, %v7308
    %v7313 = vmul.f32 %v7281, %v7309
    %v7314 = vmul.f32 %v7282, %v7310
    %s7315 = scalar_lea.vmem %s18, 128
    %v7316 = vld [vmem:[%s7315] sm:$0xff]
    %v7317 = vld [vmem:[%s7315 + $0x8] sm:$0xff]
    %v7318 = vld [vmem:[%s7315 + $0x10] sm:$0xff]
    %v7319 = vld [vmem:[%s7315 + $0x18] sm:$0xff]
    %v7320 = vld [vmem:[%s7315 + $0x20] sm:$0xff]
    %v7321 = vld [vmem:[%s7315 + $0x28] sm:$0xff]
    %v7322 = vld [vmem:[%s7315 + $0x30] sm:$0xff]
    %v7323 = vld [vmem:[%s7315 + $0x38] sm:$0xff]
    %v7324 = vld [vmem:[%s7315 + $0x40] sm:$0xff]
    %v7325 = vld [vmem:[%s7315 + $0x48] sm:$0xff]
    %v7326 = vld [vmem:[%s7315 + $0x50] sm:$0xff]
    %v7327 = vld [vmem:[%s7315 + $0x58] sm:$0xff]
    %v7328 = vld [vmem:[%s7315 + $0x60] sm:$0xff]
    %v7329 = vld [vmem:[%s7315 + $0x68] sm:$0xff]
    %v7330 = vld [vmem:[%s7315 + $0x70] sm:$0xff]
    %v7331 = vld [vmem:[%s7315 + $0x78] sm:$0xff]
    %s7332 = scalar_lea.vmem %s19, 1
    %v7333 = vld [vmem:[%s7332] sm:$0x1]
    %v7335 = vlaneseq
    %v7336 = vshrl.u32 %v7335, 7
    %v7337 = vsub.s32 0, %v7336
    %v7338 = vrot.slane %v7333, %v7337
    %7340 = vmatprep.subr.mxu0 0.0
    %7341 = vmatpush1.msra.mxu0 %v7316
    %7342 = vmatprep.subr.mxu0 0.0
    %7343 = vmatpush1.msra.mxu0 %v7317
    %7344 = vmatprep.subr.mxu0 0.0
    %7345 = vmatpush1.msra.mxu0 %v7318
    %7346 = vmatprep.subr.mxu0 0.0
    %7347 = vmatpush1.msra.mxu0 %v7319
    %7348 = vmatprep.subr.mxu0 0.0
    %7349 = vmatpush1.msra.mxu0 %v7320
    %7350 = vmatprep.subr.mxu0 0.0
    %7351 = vmatpush1.msra.mxu0 %v7321
    %7352 = vmatprep.subr.mxu0 0.0
    %7353 = vmatpush1.msra.mxu0 %v7322
    %7354 = vmatprep.subr.mxu0 0.0
    %7355 = vmatpush1.msra.mxu0 %v7323
    %7356 = vmatprep.subr.mxu0 0.0
    %7357 = vmatpush1.msra.mxu0 %v7324
    %7358 = vmatprep.subr.mxu0 0.0
    %7359 = vmatpush1.msra.mxu0 %v7325
    %7360 = vmatprep.subr.mxu0 0.0
    %7361 = vmatpush1.msra.mxu0 %v7326
    %7362 = vmatprep.subr.mxu0 0.0
    %7363 = vmatpush1.msra.mxu0 %v7327
    %7364 = vmatprep.subr.mxu0 0.0
    %7365 = vmatpush1.msra.mxu0 %v7328
    %7366 = vmatprep.subr.mxu0 0.0
    %7367 = vmatpush1.msra.mxu0 %v7329
    %7368 = vmatprep.subr.mxu0 0.0
    %7369 = vmatpush1.msra.mxu0 %v7330
    %7370 = vmatprep.subr.mxu0 0.0
    %7371 = vmatpush1.msra.mxu0 %v7331
    %7372 = vmatprep.subr.mxu0 0.0
    %7373 = vmatpush1.msra.mxu0 0.0
    %7374 = vmatprep.subr.mxu0 0.0
    %7375 = vmatpush1.msra.mxu0 0.0
    %7376 = vmatprep.subr.mxu0 0.0
    %7377 = vmatpush1.msra.mxu0 0.0
    %7378 = vmatprep.subr.mxu0 0.0
    %7379 = vmatpush1.msra.mxu0 0.0
    %7380 = vmatprep.subr.mxu0 0.0
    %7381 = vmatpush1.msra.mxu0 0.0
    %7382 = vmatprep.subr.mxu0 0.0
    %7383 = vmatpush1.msra.mxu0 0.0
    %7384 = vmatprep.subr.mxu0 0.0
    %7385 = vmatpush1.msra.mxu0 0.0
    %7386 = vmatprep.subr.mxu0 0.0
    %7387 = vmatpush1.msra.mxu0 0.0
    %7388 = vmatprep.subr.mxu0 0.0
    %7389 = vmatpush1.msra.mxu0 0.0
    %7390 = vmatprep.subr.mxu0 0.0
    %7391 = vmatpush1.msra.mxu0 0.0
    %7392 = vmatprep.subr.mxu0 0.0
    %7393 = vmatpush1.msra.mxu0 0.0
    %7394 = vmatprep.subr.mxu0 0.0
    %7395 = vmatpush1.msra.mxu0 0.0
    %7396 = vmatprep.subr.mxu0 0.0
    %7397 = vmatpush1.msra.mxu0 0.0
    %7398 = vmatprep.subr.mxu0 0.0
    %7399 = vmatpush1.msra.mxu0 0.0
    %7400 = vmatprep.subr.mxu0 0.0
    %7401 = vmatpush1.msra.mxu0 0.0
    %7402 = vmatprep.subr.mxu0 0.0
    %7403 = vmatpush1.msra.mxu0 0.0
    %7404 = vmatprep.mubr.f32.mxu0 0.0
    %7405 = vmatmul.mubr.f32.gmra.mrb[0].mxu0 %v7311
    %v7406 = vpop.f32.mrb[0].mxu0
    %v7407 = vadd.f32 %v7338, %v7406
    %v7408 = vpop.f32.mrb[0].mxu0
    %7409 = vmatprep.mubr.f32.mxu0 0.0
    %7410 = vmatmul.mubr.f32.gmra.mrb[0].mxu0 %v7312
    %v7411 = vpop.f32.mrb[0].mxu0
    %v7412 = vadd.f32 %v7338, %v7411
    %v7413 = vpop.f32.mrb[0].mxu0
    %7414 = vmatprep.mubr.f32.mxu0 0.0
    %7415 = vmatmul.mubr.f32.gmra.mrb[0].mxu0 %v7313
    %v7416 = vpop.f32.mrb[0].mxu0
    %v7417 = vadd.f32 %v7338, %v7416
    %v7418 = vpop.f32.mrb[0].mxu0
    %7419 = vmatprep.mubr.f32.mxu0 0.0
    %7420 = vmatmul.mubr.f32.gmra.mrb[0].mxu0 %v7314
    %v7421 = vpop.f32.mrb[0].mxu0
    %v7422 = vadd.f32 %v7338, %v7421
    %v7423 = vpop.f32.mrb[0].mxu0
    %7424 = vdwg.mxu0
    %v7425 = vadd.f32 %v7089, %v7407
    %v7426 = vadd.f32 %v7090, %v7412
    %v7427 = vadd.f32 %v7091, %v7417
    %v7428 = vadd.f32 %v7092, %v7422
    %v7429 = vld [vmem:[%s20] sm:$0x1]
    %v7430 = vld [vmem:[%s21] sm:$0x1]
    %v7431 = vsel %vm331, %v7425, 0.0
    %7432 = vadd.xlane.f32.xlu0 %v7431
    %v7433 = vpop.xlane.xlu0 %7432
    %v7434 = vsel %vm331, %v7426, 0.0
    %7435 = vadd.xlane.f32.xlu0 %v7434
    %v7436 = vpop.xlane.xlu0 %7435
    %v7437 = vsel %vm331, %v7427, 0.0
    %7438 = vadd.xlane.f32.xlu0 %v7437
    %v7439 = vpop.xlane.xlu0 %7438
    %v7440 = vsel %vm331, %v7428, 0.0
    %7441 = vadd.xlane.f32.xlu0 %v7440
    %v7442 = vpop.xlane.xlu0 %7441
    %v7443 = vmul.f32 %v7433, %v344
    %v7444 = vmul.f32 %v7436, %v344
    %v7445 = vmul.f32 %v7439, %v344
    %v7446 = vmul.f32 %v7442, %v344
    %v7447 = vsub.f32 %v7425, %v7443
    %v7448 = vsub.f32 %v7426, %v7444
    %v7449 = vsub.f32 %v7427, %v7445
    %v7450 = vsub.f32 %v7428, %v7446
    %v7451 = vmul.f32 %v7447, %v7447
    %v7452 = vmul.f32 %v7448, %v7448
    %v7453 = vmul.f32 %v7449, %v7449
    %v7454 = vmul.f32 %v7450, %v7450
    %v7455 = vsel %vm331, %v7451, 0.0
    %7456 = vadd.xlane.f32.xlu0 %v7455
    %v7457 = vpop.xlane.xlu0 %7456
    %v7458 = vsel %vm331, %v7452, 0.0
    %7459 = vadd.xlane.f32.xlu0 %v7458
    %v7460 = vpop.xlane.xlu0 %7459
    %v7461 = vsel %vm331, %v7453, 0.0
    %7462 = vadd.xlane.f32.xlu0 %v7461
    %v7463 = vpop.xlane.xlu0 %7462
    %v7464 = vsel %vm331, %v7454, 0.0
    %7465 = vadd.xlane.f32.xlu0 %v7464
    %v7466 = vpop.xlane.xlu0 %7465
    %v7467 = vmul.f32 %v7457, %v344
    %v7468 = vmul.f32 %v7460, %v344
    %v7469 = vmul.f32 %v7463, %v344
    %v7470 = vmul.f32 %v7466, %v344
    %v7471 = vadd.f32 %v7467, 1e-05
    %v7472 = vadd.f32 %v7468, 1e-05
    %v7473 = vadd.f32 %v7469, 1e-05
    %v7474 = vadd.f32 %v7470, 1e-05
    %v7475 = vrsqrt.pop %v7471
    %v7476 = vrsqrt.pop %v7472
    %v7477 = vrsqrt.pop %v7473
    %v7478 = vrsqrt.pop %v7474
    %v7479 = vmul.f32 %v7447, %v7475
    %v7480 = vmul.f32 %v7448, %v7476
    %v7481 = vmul.f32 %v7449, %v7477
    %v7482 = vmul.f32 %v7450, %v7478
    %v7484 = vlaneseq
    %v7485 = vshrl.u32 %v7484, 7
    %v7486 = vsub.s32 0, %v7485
    %v7487 = vrot.slane %v7429, %v7486
    %v7489 = vmul.f32 %v7479, %v7487
    %v7490 = vmul.f32 %v7480, %v7487
    %v7491 = vmul.f32 %v7481, %v7487
    %v7492 = vmul.f32 %v7482, %v7487
    %v7494 = vlaneseq
    %v7495 = vshrl.u32 %v7494, 7
    %v7496 = vsub.s32 0, %v7495
    %v7497 = vrot.slane %v7430, %v7496
    %v7499 = vadd.f32 %v7489, %v7497
    %v7500 = vadd.f32 %v7490, %v7497
    %v7501 = vadd.f32 %v7491, %v7497
    %v7502 = vadd.f32 %v7492, %v7497
    %v7503 = vld [vmem:[%s22] sm:$0xff]
    %v7504 = vld [vmem:[%s22 + $0x8] sm:$0xff]
    %v7505 = vld [vmem:[%s22 + $0x10] sm:$0xff]
    %v7506 = vld [vmem:[%s22 + $0x18] sm:$0xff]
    %v7507 = vld [vmem:[%s23] sm:$0x1]
    %v7509 = vlaneseq
    %v7510 = vshrl.u32 %v7509, 7
    %v7511 = vsub.s32 0, %v7510
    %v7512 = vrot.slane %v7507, %v7511
    %v7515 = vsel %vm331, %v7499, 0
    %v7518 = vsel %vm331, %v7500, 0
    %v7521 = vsel %vm331, %v7501, 0
    %v7524 = vsel %vm331, %v7502, 0
    %7526 = vmatprep.subr.mxu0 0.0
    %7527 = vmatpush1.msra.mxu0 %v7503
    %7528 = vmatprep.subr.mxu0 0.0
    %7529 = vmatpush1.msra.mxu0 %v7504
    %7530 = vmatprep.subr.mxu0 0.0
    %7531 = vmatpush1.msra.mxu0 %v7505
    %7532 = vmatprep.subr.mxu0 0.0
    %7533 = vmatpush1.msra.mxu0 %v7506
    %7534 = vmatprep.subr.mxu0 0.0
    %7535 = vmatpush1.msra.mxu0 0.0
    %7536 = vmatprep.subr.mxu0 0.0
    %7537 = vmatpush1.msra.mxu0 0.0
    %7538 = vmatprep.subr.mxu0 0.0
    %7539 = vmatpush1.msra.mxu0 0.0
    %7540 = vmatprep.subr.mxu0 0.0
    %7541 = vmatpush1.msra.mxu0 0.0
    %7542 = vmatprep.subr.mxu0 0.0
    %7543 = vmatpush1.msra.mxu0 0.0
    %7544 = vmatprep.subr.mxu0 0.0
    %7545 = vmatpush1.msra.mxu0 0.0
    %7546 = vmatprep.subr.mxu0 0.0
    %7547 = vmatpush1.msra.mxu0 0.0
    %7548 = vmatprep.subr.mxu0 0.0
    %7549 = vmatpush1.msra.mxu0 0.0
    %7550 = vmatprep.subr.mxu0 0.0
    %7551 = vmatpush1.msra.mxu0 0.0
    %7552 = vmatprep.subr.mxu0 0.0
    %7553 = vmatpush1.msra.mxu0 0.0
    %7554 = vmatprep.subr.mxu0 0.0
    %7555 = vmatpush1.msra.mxu0 0.0
    %7556 = vmatprep.subr.mxu0 0.0
    %7557 = vmatpush1.msra.mxu0 0.0
    %7558 = vmatprep.subr.mxu0 0.0
    %7559 = vmatpush1.msra.mxu0 0.0
    %7560 = vmatprep.subr.mxu0 0.0
    %7561 = vmatpush1.msra.mxu0 0.0
    %7562 = vmatprep.subr.mxu0 0.0
    %7563 = vmatpush1.msra.mxu0 0.0
    %7564 = vmatprep.subr.mxu0 0.0
    %7565 = vmatpush1.msra.mxu0 0.0
    %7566 = vmatprep.subr.mxu0 0.0
    %7567 = vmatpush1.msra.mxu0 0.0
    %7568 = vmatprep.subr.mxu0 0.0
    %7569 = vmatpush1.msra.mxu0 0.0
    %7570 = vmatprep.subr.mxu0 0.0
    %7571 = vmatpush1.msra.mxu0 0.0
    %7572 = vmatprep.subr.mxu0 0.0
    %7573 = vmatpush1.msra.mxu0 0.0
    %7574 = vmatprep.subr.mxu0 0.0
    %7575 = vmatpush1.msra.mxu0 0.0
    %7576 = vmatprep.subr.mxu0 0.0
    %7577 = vmatpush1.msra.mxu0 0.0
    %7578 = vmatprep.subr.mxu0 0.0
    %7579 = vmatpush1.msra.mxu0 0.0
    %7580 = vmatprep.subr.mxu0 0.0
    %7581 = vmatpush1.msra.mxu0 0.0
    %7582 = vmatprep.subr.mxu0 0.0
    %7583 = vmatpush1.msra.mxu0 0.0
    %7584 = vmatprep.subr.mxu0 0.0
    %7585 = vmatpush1.msra.mxu0 0.0
    %7586 = vmatprep.subr.mxu0 0.0
    %7587 = vmatpush1.msra.mxu0 0.0
    %7588 = vmatprep.subr.mxu0 0.0
    %7589 = vmatpush1.msra.mxu0 0.0
    %7590 = vmatprep.mubr.f32.mxu0 0.0
    %7591 = vmatmul.mubr.f32.gmra.mrb[0].mxu0 %v7515
    %v7592 = vpop.f32.mrb[0].mxu0
    %v7593 = vadd.f32 %v7512, %v7592
    %v7594 = vpop.f32.mrb[0].mxu0
    %7595 = vmatprep.mubr.f32.mxu0 0.0
    %7596 = vmatmul.mubr.f32.gmra.mrb[0].mxu0 %v7518
    %v7597 = vpop.f32.mrb[0].mxu0
    %v7598 = vadd.f32 %v7512, %v7597
    %v7599 = vpop.f32.mrb[0].mxu0
    %7600 = vmatprep.mubr.f32.mxu0 0.0
    %7601 = vmatmul.mubr.f32.gmra.mrb[0].mxu0 %v7521
    %v7602 = vpop.f32.mrb[0].mxu0
    %v7603 = vadd.f32 %v7512, %v7602
    %v7604 = vpop.f32.mrb[0].mxu0
    %7605 = vmatprep.mubr.f32.mxu0 0.0
    %7606 = vmatmul.mubr.f32.gmra.mrb[0].mxu0 %v7524
    %v7607 = vpop.f32.mrb[0].mxu0
    %v7608 = vadd.f32 %v7512, %v7607
    %v7609 = vpop.f32.mrb[0].mxu0
    %7610 = vdwg.mxu0
    %7611 = vst [vmem:[#allocation2] sm:$0xff] %v7593
    %7612 = vst [vmem:[#allocation2 + $0x8] sm:$0xff] %v7598
    %7613 = vst [vmem:[#allocation2 + $0x10] sm:$0xff] %v7603
    %7614 = vst [vmem:[#allocation2 + $0x18] sm:$0xff] %v7608
    // Predicated region
    $region98: #{tpu_custom_call.1} parent=1 // pred_check
      _
    $region99: #{tpu_custom_call.1} parent=1 // pred_check_branch
      %7616 = sbr.rel (0) target = $region101
    $region100: #{tpu_custom_call.1} parent=1 // pred_region
      %s7618 = ssub.s32 512, 512
      %7619 = vsyncadd [#allocation3], %s7618
      %s7620 = sshll.u32 [#allocation2], 4
      %s7621 = int_to_ptr.vmem [resolvable:$true] %s7620
      %7626 = dma.vmem_to_hbm [thread:$0]  %s7621, 512, %s24, [#allocation3], 128, 128, 8
    $region101: #{tpu_custom_call.1} parent=1 // pred_fallthru
      _
    // Predicated region
    $region102: #{tpu_custom_call.1} parent=1 // pred_check
      _
    $region103: #{tpu_custom_call.1} parent=1 // pred_check_branch
      %7628 = sbr.rel (0) target = $region105
    $region104: #{tpu_custom_call.1} parent=1 // pred_region
      %7629 = dma.done [#allocation3], 512
    $region105: #{tpu_custom_call.1} parent=1 // pred_fallthru
      _
    %7630 = vsyncpa [#allocation3], 1

</llo_original>
